<compile_context>
chip_gen: v5e
topology: v5e:2x2
jax: 0.10.0
libtpu: 0.0.40
codegen_flags: <defaults>
</compile_context>

<pallas_src>
import jax
import jax.numpy as jnp
from jax import lax
from jax.experimental import pallas as pl
from jax.experimental.pallas import tpu as pltpu
import numpy as np

NEG_SLOPE = 0.01  # ns in the PyTorch module


def dblock_kernel(x_ref, w1_ref, w2_ref, o_ref):
    # x_ref : [1, H, W, Cin]     one image (grid over N)
    # w1_ref: [9, Cin, OC]       conv1 taps, (kh, kw) row-major
    # w2_ref: [9, OC,  OC]       conv2 taps, (kh, kw) row-major
    # o_ref : [1, Ho2, Wo2, OC]  compact (un-padded) output channels
    _, h, w, _ = x_ref.shape
    oc = w1_ref.shape[-1]
    ho1, wo1 = h - 2, w - 2
    ho2, wo2 = ho1 - 2, wo1 - 2
    dims = (((2,), (0,)), ((), ()))  # contract last lhs dim with first rhs dim
    taps = [(kh, kw) for kh in range(3) for kw in range(3)]

    x = x_ref[0]                                           # [H, W, Cin]

    # ---- conv1: 9 per-tap accumulating MXU matmuls (total K = 9*Cin) --------
    h1 = None
    for t, (kh, kw) in enumerate(taps):
        part = lax.dot_general(
            x[kh:kh + ho1, kw:kw + wo1, :], w1_ref[t], dims,
            preferred_element_type=jnp.float32)            # [Ho1, Wo1, OC]
        h1 = part if h1 is None else h1 + part

    # ---- LeakyReLU(0.01): single vmax on the VPU ----------------------------
    h1 = jnp.maximum(h1, NEG_SLOPE * h1)

    # ---- conv2: 9 per-tap accumulating MXU matmuls (total K = 9*OC) ---------
    acc = None
    for t, (kh, kw) in enumerate(taps):
        part = lax.dot_general(
            h1[kh:kh + ho2, kw:kw + wo2, :], w2_ref[t], dims,
            preferred_element_type=jnp.float32)            # [Ho2, Wo2, OC]
        acc = part if acc is None else acc + part

    o_ref[0] = acc.astype(o_ref.dtype)


def prepare_weights(w1_oihw, w2_oihw):
    """PyTorch OIHW -> per-tap [9, in, out]. Call once at parameter load."""
    def to_taps(w):
        o, i, kh, kw = w.shape
        return (jnp.transpose(w, (2, 3, 1, 0))              # HWIO
                .reshape(kh * kw, i, o)
                .astype(jnp.float32))
    return to_taps(w1_oihw), to_taps(w2_oihw)


@jax.jit
def dblock_forward(x_nchw, w1_taps, w2_taps):
    """x_nchw: [N, Cin, H, W]; weights from prepare_weights(); returns NCHW."""
    n, cin, h, w = x_nchw.shape
    oc = w1_taps.shape[-1]
    ho2, wo2 = h - 4, w - 4

    x = jnp.transpose(x_nchw, (0, 2, 3, 1)).astype(jnp.float32)   # NCHW -> NHWC

    out_nhwc = pl.pallas_call(
        dblock_kernel,
        out_shape=jax.ShapeDtypeStruct((n, ho2, wo2, oc), jnp.float32),
        grid=(n,),
        in_specs=[
            pl.BlockSpec((1, h, w, cin), lambda b: (b, 0, 0, 0)),
            pl.BlockSpec((9, cin, oc), lambda b: (0, 0, 0)),
            pl.BlockSpec((9, oc, oc), lambda b: (0, 0, 0)),
        ],
        out_specs=pl.BlockSpec((1, ho2, wo2, oc), lambda b: (b, 0, 0, 0)),
        compiler_params=pltpu.CompilerParams(
            dimension_semantics=("parallel",)),
    )(x, w1_taps, w2_taps)

    return jnp.transpose(out_nhwc, (0, 3, 1, 2)).astype(x_nchw.dtype)


def _reference(x_nchw, w1_oihw, w2_oihw):
    """Pure-JAX reference matching nn.Conv2d semantics (NCHW, OIHW)."""
    dn = lax.conv_dimension_numbers(x_nchw.shape, w1_oihw.shape,
                                    ("NCHW", "OIHW", "NCHW"))
    h = lax.conv_general_dilated(x_nchw, w1_oihw, (1, 1), "VALID",
                                 dimension_numbers=dn)
    h = jnp.where(h >= 0, h, NEG_SLOPE * h)
    return lax.conv_general_dilated(h, w2_oihw, (1, 1), "VALID",
                                    dimension_numbers=dn)


if __name__ == "__main__":
    # Deterministic synthetic parameters / inputs (no checkpoint load).
    N, IC, OC, H, W = 2, 4, 8, 16, 16
    key = jax.random.PRNGKey(0)
    kx, k1, k2 = jax.random.split(key, 3)

    x = jax.random.normal(kx, (N, IC, H, W), dtype=jnp.float32)
    # Kaiming-ish scaling (deterministic): std = sqrt(2 / fan_in)
    w1 = jax.random.normal(k1, (OC, IC, 3, 3), dtype=jnp.float32) * (2.0 / (IC * 9)) ** 0.5
    w2 = jax.random.normal(k2, (OC, OC, 3, 3), dtype=jnp.float32) * (2.0 / (OC * 9)) ** 0.5

    # One-time weight preprocessing (hoisted out of the per-call path).
    w1_taps, w2_taps = prepare_weights(w1, w2)

    out = jax.block_until_ready(dblock_forward(x, w1_taps, w2_taps))

    ref = jax.block_until_ready(_reference(x, w1, w2))
    np.testing.assert_allclose(np.asarray(out), np.asarray(ref),
                               rtol=1e-4, atol=1e-4)
    assert out.shape == (N, OC, H - 4, W - 4)

    print("KERNEL_OK")
</pallas_src>

<mosaic_0001>
module attributes {stable_mosaic.version = 11 : i64} {
  func.func @dblock_kernel(%arg0: i32, %arg1: memref<1x16x16x4xf32, #tpu.memory_space<vmem>>, %arg2: memref<9x4x8xf32, #tpu.memory_space<vmem>>, %arg3: memref<9x8x8xf32, #tpu.memory_space<vmem>>, %arg4: memref<1x12x12x8xf32, #tpu.memory_space<vmem>>) attributes {dimension_semantics = [#tpu.dimension_semantics<parallel>], iteration_bounds = array<i64: 2>, scalar_prefetch = 0 : i64, scratch_operands = 0 : i64, tpu.core_type = #tpu.core_type<tc>, window_params = [{transform_indices = @transform_0, window_bounds = array<i64: 1, 16, 16, 4>}, {pipeline_mode = #tpu.pipeline_mode<synchronous>, transform_indices = @transform_1, window_bounds = array<i64: 9, 4, 8>}, {pipeline_mode = #tpu.pipeline_mode<synchronous>, transform_indices = @transform_2, window_bounds = array<i64: 9, 8, 8>}, {transform_indices = @transform_3, window_bounds = array<i64: 1, 12, 12, 8>}]} {
    %c0 = arith.constant 0 : index
    %c0_0 = arith.constant 0 : index
    %c0_1 = arith.constant 0 : index
    %c0_2 = arith.constant 0 : index
    %0 = vector.load %arg1[%c0, %c0_0, %c0_1, %c0_2] : memref<1x16x16x4xf32, #tpu.memory_space<vmem>>, vector<1x16x16x4xf32>
    %1 = vector.shape_cast %0 : vector<1x16x16x4xf32> to vector<16x16x4xf32>
    %2 = vector.extract_strided_slice %1 {offsets = [0, 0, 0], sizes = [14, 14, 4], strides = [1, 1, 1]} : vector<16x16x4xf32> to vector<14x14x4xf32>
    %c0_3 = arith.constant 0 : index
    %c0_4 = arith.constant 0 : index
    %c0_5 = arith.constant 0 : index
    %3 = vector.load %arg2[%c0_3, %c0_4, %c0_5] : memref<9x4x8xf32, #tpu.memory_space<vmem>>, vector<1x4x8xf32>
    %4 = vector.shape_cast %3 : vector<1x4x8xf32> to vector<4x8xf32>
    %cst = arith.constant dense<0.000000e+00> : vector<14x14x8xf32>
    %5 = tpu.matmul %2, %4, %cst {dimension_numbers = #tpu.dot_dimension_numbers<[2], [0], [0, 1], [1], [0, 0, 0, 1, 1, 1], [], []>} : vector<14x14x4xf32>, vector<4x8xf32>, vector<14x14x8xf32> -> vector<14x14x8xf32>
    %6 = vector.extract_strided_slice %1 {offsets = [0, 1, 0], sizes = [14, 14, 4], strides = [1, 1, 1]} : vector<16x16x4xf32> to vector<14x14x4xf32>
    %c1 = arith.constant 1 : index
    %c0_6 = arith.constant 0 : index
    %c0_7 = arith.constant 0 : index
    %7 = vector.load %arg2[%c1, %c0_6, %c0_7] : memref<9x4x8xf32, #tpu.memory_space<vmem>>, vector<1x4x8xf32>
    %8 = vector.shape_cast %7 : vector<1x4x8xf32> to vector<4x8xf32>
    %cst_8 = arith.constant dense<0.000000e+00> : vector<14x14x8xf32>
    %9 = tpu.matmul %6, %8, %cst_8 {dimension_numbers = #tpu.dot_dimension_numbers<[2], [0], [0, 1], [1], [0, 0, 0, 1, 1, 1], [], []>} : vector<14x14x4xf32>, vector<4x8xf32>, vector<14x14x8xf32> -> vector<14x14x8xf32>
    %10 = arith.addf %5, %9 : vector<14x14x8xf32>
    %11 = vector.extract_strided_slice %1 {offsets = [0, 2, 0], sizes = [14, 14, 4], strides = [1, 1, 1]} : vector<16x16x4xf32> to vector<14x14x4xf32>
    %c2 = arith.constant 2 : index
    %c0_9 = arith.constant 0 : index
    %c0_10 = arith.constant 0 : index
    %12 = vector.load %arg2[%c2, %c0_9, %c0_10] : memref<9x4x8xf32, #tpu.memory_space<vmem>>, vector<1x4x8xf32>
    %13 = vector.shape_cast %12 : vector<1x4x8xf32> to vector<4x8xf32>
    %cst_11 = arith.constant dense<0.000000e+00> : vector<14x14x8xf32>
    %14 = tpu.matmul %11, %13, %cst_11 {dimension_numbers = #tpu.dot_dimension_numbers<[2], [0], [0, 1], [1], [0, 0, 0, 1, 1, 1], [], []>} : vector<14x14x4xf32>, vector<4x8xf32>, vector<14x14x8xf32> -> vector<14x14x8xf32>
    %15 = arith.addf %10, %14 : vector<14x14x8xf32>
    %16 = vector.extract_strided_slice %1 {offsets = [1, 0, 0], sizes = [14, 14, 4], strides = [1, 1, 1]} : vector<16x16x4xf32> to vector<14x14x4xf32>
    %c3 = arith.constant 3 : index
    %c0_12 = arith.constant 0 : index
    %c0_13 = arith.constant 0 : index
    %17 = vector.load %arg2[%c3, %c0_12, %c0_13] : memref<9x4x8xf32, #tpu.memory_space<vmem>>, vector<1x4x8xf32>
    %18 = vector.shape_cast %17 : vector<1x4x8xf32> to vector<4x8xf32>
    %cst_14 = arith.constant dense<0.000000e+00> : vector<14x14x8xf32>
    %19 = tpu.matmul %16, %18, %cst_14 {dimension_numbers = #tpu.dot_dimension_numbers<[2], [0], [0, 1], [1], [0, 0, 0, 1, 1, 1], [], []>} : vector<14x14x4xf32>, vector<4x8xf32>, vector<14x14x8xf32> -> vector<14x14x8xf32>
    %20 = arith.addf %15, %19 : vector<14x14x8xf32>
    %21 = vector.extract_strided_slice %1 {offsets = [1, 1, 0], sizes = [14, 14, 4], strides = [1, 1, 1]} : vector<16x16x4xf32> to vector<14x14x4xf32>
    %c4 = arith.constant 4 : index
    %c0_15 = arith.constant 0 : index
    %c0_16 = arith.constant 0 : index
    %22 = vector.load %arg2[%c4, %c0_15, %c0_16] : memref<9x4x8xf32, #tpu.memory_space<vmem>>, vector<1x4x8xf32>
    %23 = vector.shape_cast %22 : vector<1x4x8xf32> to vector<4x8xf32>
    %cst_17 = arith.constant dense<0.000000e+00> : vector<14x14x8xf32>
    %24 = tpu.matmul %21, %23, %cst_17 {dimension_numbers = #tpu.dot_dimension_numbers<[2], [0], [0, 1], [1], [0, 0, 0, 1, 1, 1], [], []>} : vector<14x14x4xf32>, vector<4x8xf32>, vector<14x14x8xf32> -> vector<14x14x8xf32>
    %25 = arith.addf %20, %24 : vector<14x14x8xf32>
    %26 = vector.extract_strided_slice %1 {offsets = [1, 2, 0], sizes = [14, 14, 4], strides = [1, 1, 1]} : vector<16x16x4xf32> to vector<14x14x4xf32>
    %c5 = arith.constant 5 : index
    %c0_18 = arith.constant 0 : index
    %c0_19 = arith.constant 0 : index
    %27 = vector.load %arg2[%c5, %c0_18, %c0_19] : memref<9x4x8xf32, #tpu.memory_space<vmem>>, vector<1x4x8xf32>
    %28 = vector.shape_cast %27 : vector<1x4x8xf32> to vector<4x8xf32>
    %cst_20 = arith.constant dense<0.000000e+00> : vector<14x14x8xf32>
    %29 = tpu.matmul %26, %28, %cst_20 {dimension_numbers = #tpu.dot_dimension_numbers<[2], [0], [0, 1], [1], [0, 0, 0, 1, 1, 1], [], []>} : vector<14x14x4xf32>, vector<4x8xf32>, vector<14x14x8xf32> -> vector<14x14x8xf32>
    %30 = arith.addf %25, %29 : vector<14x14x8xf32>
    %31 = vector.extract_strided_slice %1 {offsets = [2, 0, 0], sizes = [14, 14, 4], strides = [1, 1, 1]} : vector<16x16x4xf32> to vector<14x14x4xf32>
    %c6 = arith.constant 6 : index
    %c0_21 = arith.constant 0 : index
    %c0_22 = arith.constant 0 : index
    %32 = vector.load %arg2[%c6, %c0_21, %c0_22] : memref<9x4x8xf32, #tpu.memory_space<vmem>>, vector<1x4x8xf32>
    %33 = vector.shape_cast %32 : vector<1x4x8xf32> to vector<4x8xf32>
    %cst_23 = arith.constant dense<0.000000e+00> : vector<14x14x8xf32>
    %34 = tpu.matmul %31, %33, %cst_23 {dimension_numbers = #tpu.dot_dimension_numbers<[2], [0], [0, 1], [1], [0, 0, 0, 1, 1, 1], [], []>} : vector<14x14x4xf32>, vector<4x8xf32>, vector<14x14x8xf32> -> vector<14x14x8xf32>
    %35 = arith.addf %30, %34 : vector<14x14x8xf32>
    %36 = vector.extract_strided_slice %1 {offsets = [2, 1, 0], sizes = [14, 14, 4], strides = [1, 1, 1]} : vector<16x16x4xf32> to vector<14x14x4xf32>
    %c7 = arith.constant 7 : index
    %c0_24 = arith.constant 0 : index
    %c0_25 = arith.constant 0 : index
    %37 = vector.load %arg2[%c7, %c0_24, %c0_25] : memref<9x4x8xf32, #tpu.memory_space<vmem>>, vector<1x4x8xf32>
    %38 = vector.shape_cast %37 : vector<1x4x8xf32> to vector<4x8xf32>
    %cst_26 = arith.constant dense<0.000000e+00> : vector<14x14x8xf32>
    %39 = tpu.matmul %36, %38, %cst_26 {dimension_numbers = #tpu.dot_dimension_numbers<[2], [0], [0, 1], [1], [0, 0, 0, 1, 1, 1], [], []>} : vector<14x14x4xf32>, vector<4x8xf32>, vector<14x14x8xf32> -> vector<14x14x8xf32>
    %40 = arith.addf %35, %39 : vector<14x14x8xf32>
    %41 = vector.extract_strided_slice %1 {offsets = [2, 2, 0], sizes = [14, 14, 4], strides = [1, 1, 1]} : vector<16x16x4xf32> to vector<14x14x4xf32>
    %c8 = arith.constant 8 : index
    %c0_27 = arith.constant 0 : index
    %c0_28 = arith.constant 0 : index
    %42 = vector.load %arg2[%c8, %c0_27, %c0_28] : memref<9x4x8xf32, #tpu.memory_space<vmem>>, vector<1x4x8xf32>
    %43 = vector.shape_cast %42 : vector<1x4x8xf32> to vector<4x8xf32>
    %cst_29 = arith.constant dense<0.000000e+00> : vector<14x14x8xf32>
    %44 = tpu.matmul %41, %43, %cst_29 {dimension_numbers = #tpu.dot_dimension_numbers<[2], [0], [0, 1], [1], [0, 0, 0, 1, 1, 1], [], []>} : vector<14x14x4xf32>, vector<4x8xf32>, vector<14x14x8xf32> -> vector<14x14x8xf32>
    %45 = arith.addf %40, %44 : vector<14x14x8xf32>
    %cst_30 = arith.constant 0.00999999977 : f32
    %46 = vector.broadcast %cst_30 : f32 to vector<14x14x8xf32>
    %47 = arith.mulf %46, %45 : vector<14x14x8xf32>
    %48 = arith.maximumf %45, %47 : vector<14x14x8xf32>
    %49 = vector.extract_strided_slice %48 {offsets = [0, 0, 0], sizes = [12, 12, 8], strides = [1, 1, 1]} : vector<14x14x8xf32> to vector<12x12x8xf32>
    %c0_31 = arith.constant 0 : index
    %c0_32 = arith.constant 0 : index
    %c0_33 = arith.constant 0 : index
    %50 = vector.load %arg3[%c0_31, %c0_32, %c0_33] : memref<9x8x8xf32, #tpu.memory_space<vmem>>, vector<1x8x8xf32>
    %51 = vector.shape_cast %50 : vector<1x8x8xf32> to vector<8x8xf32>
    %cst_34 = arith.constant dense<0.000000e+00> : vector<12x12x8xf32>
    %52 = tpu.matmul %49, %51, %cst_34 {dimension_numbers = #tpu.dot_dimension_numbers<[2], [0], [0, 1], [1], [0, 0, 0, 1, 1, 1], [], []>} : vector<12x12x8xf32>, vector<8x8xf32>, vector<12x12x8xf32> -> vector<12x12x8xf32>
    %53 = vector.extract_strided_slice %48 {offsets = [0, 1, 0], sizes = [12, 12, 8], strides = [1, 1, 1]} : vector<14x14x8xf32> to vector<12x12x8xf32>
    %c1_35 = arith.constant 1 : index
    %c0_36 = arith.constant 0 : index
    %c0_37 = arith.constant 0 : index
    %54 = vector.load %arg3[%c1_35, %c0_36, %c0_37] : memref<9x8x8xf32, #tpu.memory_space<vmem>>, vector<1x8x8xf32>
    %55 = vector.shape_cast %54 : vector<1x8x8xf32> to vector<8x8xf32>
    %cst_38 = arith.constant dense<0.000000e+00> : vector<12x12x8xf32>
    %56 = tpu.matmul %53, %55, %cst_38 {dimension_numbers = #tpu.dot_dimension_numbers<[2], [0], [0, 1], [1], [0, 0, 0, 1, 1, 1], [], []>} : vector<12x12x8xf32>, vector<8x8xf32>, vector<12x12x8xf32> -> vector<12x12x8xf32>
    %57 = arith.addf %52, %56 : vector<12x12x8xf32>
    %58 = vector.extract_strided_slice %48 {offsets = [0, 2, 0], sizes = [12, 12, 8], strides = [1, 1, 1]} : vector<14x14x8xf32> to vector<12x12x8xf32>
    %c2_39 = arith.constant 2 : index
    %c0_40 = arith.constant 0 : index
    %c0_41 = arith.constant 0 : index
    %59 = vector.load %arg3[%c2_39, %c0_40, %c0_41] : memref<9x8x8xf32, #tpu.memory_space<vmem>>, vector<1x8x8xf32>
    %60 = vector.shape_cast %59 : vector<1x8x8xf32> to vector<8x8xf32>
    %cst_42 = arith.constant dense<0.000000e+00> : vector<12x12x8xf32>
    %61 = tpu.matmul %58, %60, %cst_42 {dimension_numbers = #tpu.dot_dimension_numbers<[2], [0], [0, 1], [1], [0, 0, 0, 1, 1, 1], [], []>} : vector<12x12x8xf32>, vector<8x8xf32>, vector<12x12x8xf32> -> vector<12x12x8xf32>
    %62 = arith.addf %57, %61 : vector<12x12x8xf32>
    %63 = vector.extract_strided_slice %48 {offsets = [1, 0, 0], sizes = [12, 12, 8], strides = [1, 1, 1]} : vector<14x14x8xf32> to vector<12x12x8xf32>
    %c3_43 = arith.constant 3 : index
    %c0_44 = arith.constant 0 : index
    %c0_45 = arith.constant 0 : index
    %64 = vector.load %arg3[%c3_43, %c0_44, %c0_45] : memref<9x8x8xf32, #tpu.memory_space<vmem>>, vector<1x8x8xf32>
    %65 = vector.shape_cast %64 : vector<1x8x8xf32> to vector<8x8xf32>
    %cst_46 = arith.constant dense<0.000000e+00> : vector<12x12x8xf32>
    %66 = tpu.matmul %63, %65, %cst_46 {dimension_numbers = #tpu.dot_dimension_numbers<[2], [0], [0, 1], [1], [0, 0, 0, 1, 1, 1], [], []>} : vector<12x12x8xf32>, vector<8x8xf32>, vector<12x12x8xf32> -> vector<12x12x8xf32>
    %67 = arith.addf %62, %66 : vector<12x12x8xf32>
    %68 = vector.extract_strided_slice %48 {offsets = [1, 1, 0], sizes = [12, 12, 8], strides = [1, 1, 1]} : vector<14x14x8xf32> to vector<12x12x8xf32>
    %c4_47 = arith.constant 4 : index
    %c0_48 = arith.constant 0 : index
    %c0_49 = arith.constant 0 : index
    %69 = vector.load %arg3[%c4_47, %c0_48, %c0_49] : memref<9x8x8xf32, #tpu.memory_space<vmem>>, vector<1x8x8xf32>
    %70 = vector.shape_cast %69 : vector<1x8x8xf32> to vector<8x8xf32>
    %cst_50 = arith.constant dense<0.000000e+00> : vector<12x12x8xf32>
    %71 = tpu.matmul %68, %70, %cst_50 {dimension_numbers = #tpu.dot_dimension_numbers<[2], [0], [0, 1], [1], [0, 0, 0, 1, 1, 1], [], []>} : vector<12x12x8xf32>, vector<8x8xf32>, vector<12x12x8xf32> -> vector<12x12x8xf32>
    %72 = arith.addf %67, %71 : vector<12x12x8xf32>
    %73 = vector.extract_strided_slice %48 {offsets = [1, 2, 0], sizes = [12, 12, 8], strides = [1, 1, 1]} : vector<14x14x8xf32> to vector<12x12x8xf32>
    %c5_51 = arith.constant 5 : index
    %c0_52 = arith.constant 0 : index
    %c0_53 = arith.constant 0 : index
    %74 = vector.load %arg3[%c5_51, %c0_52, %c0_53] : memref<9x8x8xf32, #tpu.memory_space<vmem>>, vector<1x8x8xf32>
    %75 = vector.shape_cast %74 : vector<1x8x8xf32> to vector<8x8xf32>
    %cst_54 = arith.constant dense<0.000000e+00> : vector<12x12x8xf32>
    %76 = tpu.matmul %73, %75, %cst_54 {dimension_numbers = #tpu.dot_dimension_numbers<[2], [0], [0, 1], [1], [0, 0, 0, 1, 1, 1], [], []>} : vector<12x12x8xf32>, vector<8x8xf32>, vector<12x12x8xf32> -> vector<12x12x8xf32>
    %77 = arith.addf %72, %76 : vector<12x12x8xf32>
    %78 = vector.extract_strided_slice %48 {offsets = [2, 0, 0], sizes = [12, 12, 8], strides = [1, 1, 1]} : vector<14x14x8xf32> to vector<12x12x8xf32>
    %c6_55 = arith.constant 6 : index
    %c0_56 = arith.constant 0 : index
    %c0_57 = arith.constant 0 : index
    %79 = vector.load %arg3[%c6_55, %c0_56, %c0_57] : memref<9x8x8xf32, #tpu.memory_space<vmem>>, vector<1x8x8xf32>
    %80 = vector.shape_cast %79 : vector<1x8x8xf32> to vector<8x8xf32>
    %cst_58 = arith.constant dense<0.000000e+00> : vector<12x12x8xf32>
    %81 = tpu.matmul %78, %80, %cst_58 {dimension_numbers = #tpu.dot_dimension_numbers<[2], [0], [0, 1], [1], [0, 0, 0, 1, 1, 1], [], []>} : vector<12x12x8xf32>, vector<8x8xf32>, vector<12x12x8xf32> -> vector<12x12x8xf32>
    %82 = arith.addf %77, %81 : vector<12x12x8xf32>
    %83 = vector.extract_strided_slice %48 {offsets = [2, 1, 0], sizes = [12, 12, 8], strides = [1, 1, 1]} : vector<14x14x8xf32> to vector<12x12x8xf32>
    %c7_59 = arith.constant 7 : index
    %c0_60 = arith.constant 0 : index
    %c0_61 = arith.constant 0 : index
    %84 = vector.load %arg3[%c7_59, %c0_60, %c0_61] : memref<9x8x8xf32, #tpu.memory_space<vmem>>, vector<1x8x8xf32>
    %85 = vector.shape_cast %84 : vector<1x8x8xf32> to vector<8x8xf32>
    %cst_62 = arith.constant dense<0.000000e+00> : vector<12x12x8xf32>
    %86 = tpu.matmul %83, %85, %cst_62 {dimension_numbers = #tpu.dot_dimension_numbers<[2], [0], [0, 1], [1], [0, 0, 0, 1, 1, 1], [], []>} : vector<12x12x8xf32>, vector<8x8xf32>, vector<12x12x8xf32> -> vector<12x12x8xf32>
    %87 = arith.addf %82, %86 : vector<12x12x8xf32>
    %88 = vector.extract_strided_slice %48 {offsets = [2, 2, 0], sizes = [12, 12, 8], strides = [1, 1, 1]} : vector<14x14x8xf32> to vector<12x12x8xf32>
    %c8_63 = arith.constant 8 : index
    %c0_64 = arith.constant 0 : index
    %c0_65 = arith.constant 0 : index
    %89 = vector.load %arg3[%c8_63, %c0_64, %c0_65] : memref<9x8x8xf32, #tpu.memory_space<vmem>>, vector<1x8x8xf32>
    %90 = vector.shape_cast %89 : vector<1x8x8xf32> to vector<8x8xf32>
    %cst_66 = arith.constant dense<0.000000e+00> : vector<12x12x8xf32>
    %91 = tpu.matmul %88, %90, %cst_66 {dimension_numbers = #tpu.dot_dimension_numbers<[2], [0], [0, 1], [1], [0, 0, 0, 1, 1, 1], [], []>} : vector<12x12x8xf32>, vector<8x8xf32>, vector<12x12x8xf32> -> vector<12x12x8xf32>
    %92 = arith.addf %87, %91 : vector<12x12x8xf32>
    %c0_67 = arith.constant 0 : index
    %c0_68 = arith.constant 0 : index
    %c0_69 = arith.constant 0 : index
    %c0_70 = arith.constant 0 : index
    %93 = vector.load %arg4[%c0_67, %c0_68, %c0_69, %c0_70] : memref<1x12x12x8xf32, #tpu.memory_space<vmem>>, vector<1x12x12x8xf32>
    %94 = vector.shape_cast %93 : vector<1x12x12x8xf32> to vector<12x12x8xf32>
    %95 = vector.shape_cast %92 : vector<12x12x8xf32> to vector<1x12x12x8xf32>
    tpu.vector_store %arg4[%c0_67, %c0_68, %c0_69, %c0_70], %95 {strides = array<i32>} : memref<1x12x12x8xf32, #tpu.memory_space<vmem>>, vector<1x12x12x8xf32>,
    return
  }
  func.func @transform_0(%arg0: i32) -> (i32, i32, i32, i32) {
    %c0_i32 = arith.constant 0 : i32
    %c0_i32_0 = arith.constant 0 : i32
    %c0_i32_1 = arith.constant 0 : i32
    %c0_i32_2 = arith.constant 0 : i32
    return %arg0, %c0_i32, %c0_i32_0, %c0_i32_1 : i32, i32, i32, i32
  }
  func.func @transform_1(%arg0: i32) -> (i32, i32, i32) {
    %c0_i32 = arith.constant 0 : i32
    %c0_i32_0 = arith.constant 0 : i32
    %c0_i32_1 = arith.constant 0 : i32
    %c0_i32_2 = arith.constant 0 : i32
    return %c0_i32, %c0_i32_0, %c0_i32_1 : i32, i32, i32
  }
  func.func @transform_2(%arg0: i32) -> (i32, i32, i32) {
    %c0_i32 = arith.constant 0 : i32
    %c0_i32_0 = arith.constant 0 : i32
    %c0_i32_1 = arith.constant 0 : i32
    %c0_i32_2 = arith.constant 0 : i32
    return %c0_i32, %c0_i32_0, %c0_i32_1 : i32, i32, i32
  }
  func.func @transform_3(%arg0: i32) -> (i32, i32, i32, i32) {
    %c0_i32 = arith.constant 0 : i32
    %c0_i32_0 = arith.constant 0 : i32
    %c0_i32_1 = arith.constant 0 : i32
    %c0_i32_2 = arith.constant 0 : i32
    return %arg0, %c0_i32, %c0_i32_0, %c0_i32_1 : i32, i32, i32, i32
  }
}

</mosaic_0001>

<llo_original>
// kernel: dblock_forward.1
$region0: #{dblock_forward.1}
  #allocation0 [shape = 'u32[]', space=smem, size = 0x4, offset = 0x4, fixed_abs, tag = 'smem constant byte address 0x4 - core index']
  #allocation1 [shape = 'u32[72,128]{1,0:T(1,128)}', space=vmem, size = 0x9000, scoped, tag = 'internal scratch']
  %s0 = inlined_call_operand.vmem [shape: f32[2,16,16,4], index: 0, kind: input, shape index: {}]
  %s1 = inlined_call_operand.vmem [shape: f32[9,4,8], index: 1, kind: input, shape index: {}]
  %s2 = inlined_call_operand.vmem [shape: f32[9,8,8], index: 2, kind: input, shape index: {}]
  %s3 = inlined_call_operand.vmem [shape: f32[2,12,12,8], index: 3, kind: output, shape index: {}]
  %s4 = sld [smem:[#allocation0]]
  $region45: #{dblock_forward.1} parent=0
    _
  %s6 = ssub.s32 1, %s4
  %s7 = scalar_select 0, %s6, %s4
  loop: start=0, step=1, limit=4
  $region2: #{dblock_forward.1} parent=0 // loop_pre_header
    _
  $region3: #{dblock_forward.1} parent=0 // loop_header
    %s9 = sphi 0, %s13
    %p10 = scmp.ge.s32.totalorder %s9, 4
    %s19 = sphi 0, %s21
    %s22 = sphi 0, %s19
    %s23 = sphi 0, %s22
    %s39 = sphi 0, %s23
    %s43 = sphi 0, %s43
    %s45 = sphi 0, %s43
    %s46 = sphi 0, %s45
    %s60 = sphi 0, %s46
    %s64 = sphi 0, %s64
    %s66 = sphi 0, %s64
    %s67 = sphi 0, %s66
    %s81 = sphi 0, %s67
    %s87 = sphi 0, %s89
    %s90 = sphi 0, %s87
    %s91 = sphi 0, %s90
    %s107 = sphi 0, %s91
  $region4: #{dblock_forward.1} parent=0 // loop_header_branch
    %12 = sbr.rel (%p10) target = $region8
  $region5: #{dblock_forward.1} parent=0 // loop_body
    %s14 = ssub.s32 %s9, 1
    %s15 = ssub.s32 %s9, 2
    %s16 = sadd.s32 %s9, 1
    %s17 = ssub.s32 %s9, %s16
    %p18 = scmp.eq.s32.totalorder %s17, 0
    %s20 = sadd.s32 %s19, 1
    %s21 = scalar_select %p18, %s19, %s20
    %p24 = pneg %p18
    %p25 = scmp.eq.s32.totalorder %s9, 1
    %p26 = por %p24, %p25
    %p27 = scmp.ne.s32.totalorder %s19, %s22
    %p28 = scmp.eq.s32.totalorder %s9, 0
    %p29 = por %p27, %p28
    %p30 = scmp.ne.s32.totalorder %s19, %s22
    %p31 = scmp.eq.s32.totalorder %s14, 1
    %p32 = por %p30, %p31
    %p33 = scmp.ne.s32.totalorder %s22, %s23
    %p34 = scmp.eq.s32.totalorder %s14, 0
    %p35 = por %p33, %p34
    %p36 = scmp.ne.s32.totalorder %s22, %s23
    %p37 = scmp.eq.s32.totalorder %s15, 1
    %p38 = por %p36, %p37
    %p40 = scmp.ne.s32.totalorder %s23, %s39
    %p41 = scmp.eq.s32.totalorder %s15, 0
    %p42 = por %p40, %p41
    %s44 = sadd.s32 %s43, 1
    %p47 = scmp.eq.s32.totalorder %s9, 1
    %p48 = scmp.ne.s32.totalorder %s43, %s45
    %p49 = scmp.eq.s32.totalorder %s9, 0
    %p50 = por %p48, %p49
    %p51 = scmp.ne.s32.totalorder %s43, %s45
    %p52 = scmp.eq.s32.totalorder %s14, 1
    %p53 = por %p51, %p52
    %p54 = scmp.ne.s32.totalorder %s45, %s46
    %p55 = scmp.eq.s32.totalorder %s14, 0
    %p56 = por %p54, %p55
    %p57 = scmp.ne.s32.totalorder %s45, %s46
    %p58 = scmp.eq.s32.totalorder %s15, 1
    %p59 = por %p57, %p58
    %p61 = scmp.ne.s32.totalorder %s46, %s60
    %p62 = scmp.eq.s32.totalorder %s15, 0
    %p63 = por %p61, %p62
    %s65 = sadd.s32 %s64, 1
    %p68 = scmp.eq.s32.totalorder %s9, 1
    %p69 = scmp.ne.s32.totalorder %s64, %s66
    %p70 = scmp.eq.s32.totalorder %s9, 0
    %p71 = por %p69, %p70
    %p72 = scmp.ne.s32.totalorder %s64, %s66
    %p73 = scmp.eq.s32.totalorder %s14, 1
    %p74 = por %p72, %p73
    %p75 = scmp.ne.s32.totalorder %s66, %s67
    %p76 = scmp.eq.s32.totalorder %s14, 0
    %p77 = por %p75, %p76
    %p78 = scmp.ne.s32.totalorder %s66, %s67
    %p79 = scmp.eq.s32.totalorder %s15, 1
    %p80 = por %p78, %p79
    %p82 = scmp.ne.s32.totalorder %s67, %s81
    %p83 = scmp.eq.s32.totalorder %s15, 0
    %p84 = por %p82, %p83
    %s85 = ssub.s32 %s9, %s16
    %p86 = scmp.eq.s32.totalorder %s85, 0
    %s88 = sadd.s32 %s87, 1
    %s89 = scalar_select %p86, %s87, %s88
    %p92 = pneg %p86
    %p93 = scmp.eq.s32.totalorder %s9, 1
    %p94 = por %p92, %p93
    %p95 = scmp.ne.s32.totalorder %s87, %s90
    %p96 = scmp.eq.s32.totalorder %s9, 0
    %p97 = por %p95, %p96
    %p98 = scmp.ne.s32.totalorder %s87, %s90
    %p99 = scmp.eq.s32.totalorder %s14, 1
    %p100 = por %p98, %p99
    %p101 = scmp.ne.s32.totalorder %s90, %s91
    %p102 = scmp.eq.s32.totalorder %s14, 0
    %p103 = por %p101, %p102
    %p104 = scmp.ne.s32.totalorder %s90, %s91
    %p105 = scmp.eq.s32.totalorder %s15, 1
    %p106 = por %p104, %p105
    %p108 = scmp.ne.s32.totalorder %s91, %s107
    %p109 = scmp.eq.s32.totalorder %s15, 0
    %p110 = por %p108, %p109
    %p111 = scmp.le.s32.totalorder 1, %s9
    %p112 = scmp.lt.s32.totalorder %s9, 3
    %p113 = pnand %p111, %p112
    %p114 = pneg %p113
    // Predicated region
    $region9: #{dblock_forward.1} parent=5 // pred_check
      _
    $region10: #{dblock_forward.1} parent=5 // pred_check_branch
      %116 = sbr.rel (%p113) target = $region12
    $region11: #{dblock_forward.1} parent=5 // pred_region
      %s117 = ssub.s32 %s9, 1
      // Predicated region
      $region13: #{dblock_forward.1} parent=11 // pred_check
        %p118 = pneg %p56
      $region14: #{dblock_forward.1} parent=11 // pred_check_branch
        %120 = sbr.rel (%p118) target = $region16
      $region15: #{dblock_forward.1} parent=11 // pred_region
        _
      $region16: #{dblock_forward.1} parent=11 // pred_fallthru
        _
      // Predicated region
      $region17: #{dblock_forward.1} parent=11 // pred_check
        %p121 = pneg %p77
      $region18: #{dblock_forward.1} parent=11 // pred_check_branch
        %123 = sbr.rel (%p121) target = $region20
      $region19: #{dblock_forward.1} parent=11 // pred_region
        _
      $region20: #{dblock_forward.1} parent=11 // pred_fallthru
        _
    $region12: #{dblock_forward.1} parent=5 // pred_fallthru
      _
    %p124 = scmp.lt.s32.totalorder %s9, 2
    // Predicated region
    $region21: #{dblock_forward.1} parent=5 // pred_check
      %p125 = pneg %p124
    $region22: #{dblock_forward.1} parent=5 // pred_check_branch
      %127 = sbr.rel (%p125) target = $region24
    $region23: #{dblock_forward.1} parent=5 // pred_region
      // Predicated region
      $region25: #{dblock_forward.1} parent=23 // pred_check
        %p128 = pneg %p29
      $region26: #{dblock_forward.1} parent=23 // pred_check_branch
        %130 = sbr.rel (%p128) target = $region28
      $region27: #{dblock_forward.1} parent=23 // pred_region
        %p131 = scmp.lt.s32.totalorder %s9, 1
        %s132 = scalar_select %p131, %s9, 1
        %s133 = smul.addr %s132, 32
        %s134 = smul.addr %s133, 8
        %s135 = scalar_lea.vmem %s0, %s134
      $region28: #{dblock_forward.1} parent=23 // pred_fallthru
        _
    $region24: #{dblock_forward.1} parent=5 // pred_fallthru
      _
    %p136 = scmp.le.s32.totalorder 1, %s9
    %p137 = scmp.lt.s32.totalorder %s9, 3
    %p138 = pnand %p136, %p137
    %p139 = pneg %p138
    // Predicated region
    $region29: #{dblock_forward.1} parent=5 // pred_check
      _
    $region30: #{dblock_forward.1} parent=5 // pred_check_branch
      %141 = sbr.rel (%p138) target = $region32
    $region31: #{dblock_forward.1} parent=5 // pred_region
      %s142 = ssub.s32 %s9, 1
      %p143 = scmp.lt.s32.totalorder %s14, 1
      %s144 = scalar_select %p143, %s14, 1
      %s145 = smul.addr %s144, 32
      %s146 = smul.addr %s145, 8
      %s147 = scalar_lea.vmem %s0, %s146
      %p148 = pneg %p35
      %p149 = pneg %p32
      %p150 = pneg %p56
      %p151 = pneg %p53
      %p152 = pneg %p77
      %p153 = pneg %p74
      %p154 = pneg %p103
      %p155 = pneg %p100
      %p156 = scmp.lt.s32.totalorder %s14, 1
      %s157 = scalar_select %p156, %s14, 1
      %s158 = smul.addr %s157, 24
      %s159 = smul.addr %s158, 8
      %s160 = scalar_lea.vmem %s3, %s159
      %p161 = scmp.lt.s32.totalorder %s14, 1
      %s162 = scalar_select %p161, %s14, 1
      %s163 = smul.addr %s162, 32
      %s164 = smul.addr %s163, 8
      %s165 = scalar_lea.vmem %s0, %s164
      %p166 = scmp.lt.s32.totalorder %s14, 1
      %s167 = scalar_select %p166, %s14, 1
      %s168 = smul.addr %s167, 24
      %s169 = smul.addr %s168, 8
      %s170 = scalar_lea.vmem %s3, %s169
      %v171 = vld [vmem:[%s165] sm:$0xff]
      %v172 = vld [vmem:[%s165 + $0x8] sm:$0xff]
      %v173 = vld [vmem:[%s165 + $0x10] sm:$0xff]
      %v174 = vld [vmem:[%s165 + $0x18] sm:$0xff]
      %v175 = vld [vmem:[%s165 + $0x20] sm:$0xff]
      %v176 = vld [vmem:[%s165 + $0x28] sm:$0xff]
      %v177 = vld [vmem:[%s165 + $0x30] sm:$0xff]
      %v178 = vld [vmem:[%s165 + $0x38] sm:$0xff]
      %v179 = vld [vmem:[%s165 + $0x40] sm:$0xff]
      %v180 = vld [vmem:[%s165 + $0x48] sm:$0xff]
      %v181 = vld [vmem:[%s165 + $0x50] sm:$0xff]
      %v182 = vld [vmem:[%s165 + $0x58] sm:$0xff]
      %v183 = vld [vmem:[%s165 + $0x60] sm:$0xff]
      %v184 = vld [vmem:[%s165 + $0x68] sm:$0xff]
      %v185 = vld [vmem:[%s165 + $0x70] sm:$0xff]
      %v186 = vld [vmem:[%s165 + $0x78] sm:$0xff]
      %v187 = vld [vmem:[%s165 + $0x80] sm:$0xff]
      %v188 = vld [vmem:[%s165 + $0x88] sm:$0xff]
      %v189 = vld [vmem:[%s165 + $0x90] sm:$0xff]
      %v190 = vld [vmem:[%s165 + $0x98] sm:$0xff]
      %v191 = vld [vmem:[%s165 + $0xa0] sm:$0xff]
      %v192 = vld [vmem:[%s165 + $0xa8] sm:$0xff]
      %v193 = vld [vmem:[%s165 + $0xb0] sm:$0xff]
      %v194 = vld [vmem:[%s165 + $0xb8] sm:$0xff]
      %v195 = vld [vmem:[%s165 + $0xc0] sm:$0xff]
      %v196 = vld [vmem:[%s165 + $0xc8] sm:$0xff]
      %v197 = vld [vmem:[%s165 + $0xd0] sm:$0xff]
      %v198 = vld [vmem:[%s165 + $0xd8] sm:$0xff]
      %v199 = vld [vmem:[%s165 + $0xe0] sm:$0xff]
      %v200 = vld [vmem:[%s165 + $0xe8] sm:$0xff]
      %v201 = vld [vmem:[%s165 + $0xf0] sm:$0xff]
      %v202 = vld [vmem:[%s165 + $0xf8] sm:$0xff]
      %v203 = vld [vmem:[%s1] sm:$0xf]
      %s204 = scalar_lea.vmem %s1, 4
      %v205 = vld [vmem:[%s204] sm:$0xf]
      %v234 = vrot.slane %v171, 2
      %v235 = vrot.slane %v171, 4
      %v236 = vrot.slane %v171, 6
      %v237 = vrot.slane %v172, 2
      %v238 = vrot.slane %v172, 4
      %v239 = vrot.slane %v172, 6
      %v240 = vrot.slane %v173, 2
      %v241 = vrot.slane %v173, 4
      %v242 = vrot.slane %v173, 6
      %v243 = vrot.slane %v174, 2
      %v244 = vrot.slane %v174, 4
      %v245 = vrot.slane %v174, 6
      %v246 = vrot.slane %v175, 2
      %v247 = vrot.slane %v175, 4
      %v248 = vrot.slane %v175, 6
      %v249 = vrot.slane %v176, 2
      %v250 = vrot.slane %v176, 4
      %v251 = vrot.slane %v176, 6
      %v252 = vrot.slane %v177, 2
      %v253 = vrot.slane %v177, 4
      %v254 = vrot.slane %v177, 6
      %v255 = vrot.slane %v178, 2
      %v256 = vrot.slane %v178, 4
      %v257 = vrot.slane %v178, 6
      %v258 = vrot.slane %v179, 2
      %v259 = vrot.slane %v179, 4
      %v260 = vrot.slane %v179, 6
      %v261 = vrot.slane %v180, 2
      %v262 = vrot.slane %v180, 4
      %v263 = vrot.slane %v180, 6
      %v264 = vrot.slane %v181, 2
      %v265 = vrot.slane %v181, 4
      %v266 = vrot.slane %v181, 6
      %v267 = vrot.slane %v182, 2
      %v268 = vrot.slane %v182, 4
      %v269 = vrot.slane %v182, 6
      %v270 = vrot.slane %v183, 2
      %v271 = vrot.slane %v183, 4
      %v272 = vrot.slane %v183, 6
      %v273 = vrot.slane %v184, 2
      %v274 = vrot.slane %v184, 4
      %v275 = vrot.slane %v184, 6
      %v276 = vrot.slane %v185, 2
      %v277 = vrot.slane %v185, 4
      %v278 = vrot.slane %v185, 6
      %v279 = vrot.slane %v186, 2
      %v280 = vrot.slane %v186, 4
      %v281 = vrot.slane %v186, 6
      %v282 = vrot.slane %v187, 2
      %v283 = vrot.slane %v187, 4
      %v284 = vrot.slane %v187, 6
      %v285 = vrot.slane %v188, 2
      %v286 = vrot.slane %v188, 4
      %v287 = vrot.slane %v188, 6
      %v288 = vrot.slane %v189, 2
      %v289 = vrot.slane %v189, 4
      %v290 = vrot.slane %v189, 6
      %v291 = vrot.slane %v190, 2
      %v292 = vrot.slane %v190, 4
      %v293 = vrot.slane %v190, 6
      %v294 = vrot.slane %v191, 2
      %v295 = vrot.slane %v191, 4
      %v296 = vrot.slane %v191, 6
      %v297 = vrot.slane %v192, 2
      %v298 = vrot.slane %v192, 4
      %v299 = vrot.slane %v192, 6
      %v300 = vrot.slane %v193, 2
      %v301 = vrot.slane %v193, 4
      %v302 = vrot.slane %v193, 6
      %v303 = vrot.slane %v194, 2
      %v304 = vrot.slane %v194, 4
      %v305 = vrot.slane %v194, 6
      %v306 = vrot.slane %v195, 2
      %v307 = vrot.slane %v195, 4
      %v308 = vrot.slane %v195, 6
      %v309 = vrot.slane %v196, 2
      %v310 = vrot.slane %v196, 4
      %v311 = vrot.slane %v196, 6
      %v312 = vrot.slane %v197, 2
      %v313 = vrot.slane %v197, 4
      %v314 = vrot.slane %v197, 6
      %v315 = vrot.slane %v198, 2
      %v316 = vrot.slane %v198, 4
      %v317 = vrot.slane %v198, 6
      %vm318 = vcmask 1040384
      %vm319 = vcmask 1042434
      %vm320 = vmor %vm318, %vm319
      %vm321 = vcmask 1044484
      %vm322 = vmor %vm320, %vm321
      %vm323 = vcmask 1046534
      %vm324 = vmor %vm322, %vm323
      %v325 = vrot.slane %v171, 7
      %v326 = vrot.slane %v325, 2
      %v327 = vrot.slane %v234, 7
      %v328 = vsel %vm324, %v326, %v327
      %v329 = vrot.slane %v327, 2
      %v330 = vrot.slane %v235, 7
      %v331 = vsel %vm324, %v329, %v330
      %v332 = vrot.slane %v330, 2
      %v333 = vrot.slane %v236, 7
      %v334 = vsel %vm324, %v332, %v333
      %v335 = vrot.slane %v333, 2
      %v336 = vrot.slane %v172, 7
      %v337 = vsel %vm324, %v335, %v336
      %v338 = vrot.slane %v336, 2
      %v339 = vrot.slane %v237, 7
      %v340 = vsel %vm324, %v338, %v339
      %v341 = vrot.slane %v339, 2
      %v342 = vrot.slane %v238, 7
      %v343 = vsel %vm324, %v341, %v342
      %v344 = vrot.slane %v342, 2
      %v345 = vrot.slane %v239, 7
      %v346 = vsel %vm324, %v344, %v345
      %v347 = vrot.slane %v173, 7
      %v348 = vrot.slane %v347, 2
      %v349 = vrot.slane %v240, 7
      %v350 = vsel %vm324, %v348, %v349
      %v351 = vrot.slane %v349, 2
      %v352 = vrot.slane %v241, 7
      %v353 = vsel %vm324, %v351, %v352
      %v354 = vrot.slane %v352, 2
      %v355 = vrot.slane %v242, 7
      %v356 = vsel %vm324, %v354, %v355
      %v357 = vrot.slane %v355, 2
      %v358 = vrot.slane %v174, 7
      %v359 = vsel %vm324, %v357, %v358
      %v360 = vrot.slane %v358, 2
      %v361 = vrot.slane %v243, 7
      %v362 = vsel %vm324, %v360, %v361
      %v363 = vrot.slane %v361, 2
      %v364 = vrot.slane %v244, 7
      %v365 = vsel %vm324, %v363, %v364
      %v366 = vrot.slane %v364, 2
      %v367 = vrot.slane %v245, 7
      %v368 = vsel %vm324, %v366, %v367
      %v369 = vrot.slane %v175, 7
      %v370 = vrot.slane %v369, 2
      %v371 = vrot.slane %v246, 7
      %v372 = vsel %vm324, %v370, %v371
      %v373 = vrot.slane %v371, 2
      %v374 = vrot.slane %v247, 7
      %v375 = vsel %vm324, %v373, %v374
      %v376 = vrot.slane %v374, 2
      %v377 = vrot.slane %v248, 7
      %v378 = vsel %vm324, %v376, %v377
      %v379 = vrot.slane %v377, 2
      %v380 = vrot.slane %v176, 7
      %v381 = vsel %vm324, %v379, %v380
      %v382 = vrot.slane %v380, 2
      %v383 = vrot.slane %v249, 7
      %v384 = vsel %vm324, %v382, %v383
      %v385 = vrot.slane %v383, 2
      %v386 = vrot.slane %v250, 7
      %v387 = vsel %vm324, %v385, %v386
      %v388 = vrot.slane %v386, 2
      %v389 = vrot.slane %v251, 7
      %v390 = vsel %vm324, %v388, %v389
      %v391 = vrot.slane %v177, 7
      %v392 = vrot.slane %v391, 2
      %v393 = vrot.slane %v252, 7
      %v394 = vsel %vm324, %v392, %v393
      %v395 = vrot.slane %v393, 2
      %v396 = vrot.slane %v253, 7
      %v397 = vsel %vm324, %v395, %v396
      %v398 = vrot.slane %v396, 2
      %v399 = vrot.slane %v254, 7
      %v400 = vsel %vm324, %v398, %v399
      %v401 = vrot.slane %v399, 2
      %v402 = vrot.slane %v178, 7
      %v403 = vsel %vm324, %v401, %v402
      %v404 = vrot.slane %v402, 2
      %v405 = vrot.slane %v255, 7
      %v406 = vsel %vm324, %v404, %v405
      %v407 = vrot.slane %v405, 2
      %v408 = vrot.slane %v256, 7
      %v409 = vsel %vm324, %v407, %v408
      %v410 = vrot.slane %v408, 2
      %v411 = vrot.slane %v257, 7
      %v412 = vsel %vm324, %v410, %v411
      %v413 = vrot.slane %v179, 7
      %v414 = vrot.slane %v413, 2
      %v415 = vrot.slane %v258, 7
      %v416 = vsel %vm324, %v414, %v415
      %v417 = vrot.slane %v415, 2
      %v418 = vrot.slane %v259, 7
      %v419 = vsel %vm324, %v417, %v418
      %v420 = vrot.slane %v418, 2
      %v421 = vrot.slane %v260, 7
      %v422 = vsel %vm324, %v420, %v421
      %v423 = vrot.slane %v421, 2
      %v424 = vrot.slane %v180, 7
      %v425 = vsel %vm324, %v423, %v424
      %v426 = vrot.slane %v424, 2
      %v427 = vrot.slane %v261, 7
      %v428 = vsel %vm324, %v426, %v427
      %v429 = vrot.slane %v427, 2
      %v430 = vrot.slane %v262, 7
      %v431 = vsel %vm324, %v429, %v430
      %v432 = vrot.slane %v430, 2
      %v433 = vrot.slane %v263, 7
      %v434 = vsel %vm324, %v432, %v433
      %v435 = vrot.slane %v181, 7
      %v436 = vrot.slane %v435, 2
      %v437 = vrot.slane %v264, 7
      %v438 = vsel %vm324, %v436, %v437
      %v439 = vrot.slane %v437, 2
      %v440 = vrot.slane %v265, 7
      %v441 = vsel %vm324, %v439, %v440
      %v442 = vrot.slane %v440, 2
      %v443 = vrot.slane %v266, 7
      %v444 = vsel %vm324, %v442, %v443
      %v445 = vrot.slane %v443, 2
      %v446 = vrot.slane %v182, 7
      %v447 = vsel %vm324, %v445, %v446
      %v448 = vrot.slane %v446, 2
      %v449 = vrot.slane %v267, 7
      %v450 = vsel %vm324, %v448, %v449
      %v451 = vrot.slane %v449, 2
      %v452 = vrot.slane %v268, 7
      %v453 = vsel %vm324, %v451, %v452
      %v454 = vrot.slane %v452, 2
      %v455 = vrot.slane %v269, 7
      %v456 = vsel %vm324, %v454, %v455
      %v457 = vrot.slane %v183, 7
      %v458 = vrot.slane %v457, 2
      %v459 = vrot.slane %v270, 7
      %v460 = vsel %vm324, %v458, %v459
      %v461 = vrot.slane %v459, 2
      %v462 = vrot.slane %v271, 7
      %v463 = vsel %vm324, %v461, %v462
      %v464 = vrot.slane %v462, 2
      %v465 = vrot.slane %v272, 7
      %v466 = vsel %vm324, %v464, %v465
      %v467 = vrot.slane %v465, 2
      %v468 = vrot.slane %v184, 7
      %v469 = vsel %vm324, %v467, %v468
      %v470 = vrot.slane %v468, 2
      %v471 = vrot.slane %v273, 7
      %v472 = vsel %vm324, %v470, %v471
      %v473 = vrot.slane %v471, 2
      %v474 = vrot.slane %v274, 7
      %v475 = vsel %vm324, %v473, %v474
      %v476 = vrot.slane %v474, 2
      %v477 = vrot.slane %v275, 7
      %v478 = vsel %vm324, %v476, %v477
      %v479 = vrot.slane %v185, 7
      %v480 = vrot.slane %v479, 2
      %v481 = vrot.slane %v276, 7
      %v482 = vsel %vm324, %v480, %v481
      %v483 = vrot.slane %v481, 2
      %v484 = vrot.slane %v277, 7
      %v485 = vsel %vm324, %v483, %v484
      %v486 = vrot.slane %v484, 2
      %v487 = vrot.slane %v278, 7
      %v488 = vsel %vm324, %v486, %v487
      %v489 = vrot.slane %v487, 2
      %v490 = vrot.slane %v186, 7
      %v491 = vsel %vm324, %v489, %v490
      %v492 = vrot.slane %v490, 2
      %v493 = vrot.slane %v279, 7
      %v494 = vsel %vm324, %v492, %v493
      %v495 = vrot.slane %v493, 2
      %v496 = vrot.slane %v280, 7
      %v497 = vsel %vm324, %v495, %v496
      %v498 = vrot.slane %v496, 2
      %v499 = vrot.slane %v281, 7
      %v500 = vsel %vm324, %v498, %v499
      %v501 = vrot.slane %v187, 7
      %v502 = vrot.slane %v501, 2
      %v503 = vrot.slane %v282, 7
      %v504 = vsel %vm324, %v502, %v503
      %v505 = vrot.slane %v503, 2
      %v506 = vrot.slane %v283, 7
      %v507 = vsel %vm324, %v505, %v506
      %v508 = vrot.slane %v506, 2
      %v509 = vrot.slane %v284, 7
      %v510 = vsel %vm324, %v508, %v509
      %v511 = vrot.slane %v509, 2
      %v512 = vrot.slane %v188, 7
      %v513 = vsel %vm324, %v511, %v512
      %v514 = vrot.slane %v512, 2
      %v515 = vrot.slane %v285, 7
      %v516 = vsel %vm324, %v514, %v515
      %v517 = vrot.slane %v515, 2
      %v518 = vrot.slane %v286, 7
      %v519 = vsel %vm324, %v517, %v518
      %v520 = vrot.slane %v518, 2
      %v521 = vrot.slane %v287, 7
      %v522 = vsel %vm324, %v520, %v521
      %v523 = vrot.slane %v189, 7
      %v524 = vrot.slane %v523, 2
      %v525 = vrot.slane %v288, 7
      %v526 = vsel %vm324, %v524, %v525
      %v527 = vrot.slane %v525, 2
      %v528 = vrot.slane %v289, 7
      %v529 = vsel %vm324, %v527, %v528
      %v530 = vrot.slane %v528, 2
      %v531 = vrot.slane %v290, 7
      %v532 = vsel %vm324, %v530, %v531
      %v533 = vrot.slane %v531, 2
      %v534 = vrot.slane %v190, 7
      %v535 = vsel %vm324, %v533, %v534
      %v536 = vrot.slane %v534, 2
      %v537 = vrot.slane %v291, 7
      %v538 = vsel %vm324, %v536, %v537
      %v539 = vrot.slane %v537, 2
      %v540 = vrot.slane %v292, 7
      %v541 = vsel %vm324, %v539, %v540
      %v542 = vrot.slane %v540, 2
      %v543 = vrot.slane %v293, 7
      %v544 = vsel %vm324, %v542, %v543
      %v545 = vrot.slane %v191, 7
      %v546 = vrot.slane %v545, 2
      %v547 = vrot.slane %v294, 7
      %v548 = vsel %vm324, %v546, %v547
      %v549 = vrot.slane %v547, 2
      %v550 = vrot.slane %v295, 7
      %v551 = vsel %vm324, %v549, %v550
      %v552 = vrot.slane %v550, 2
      %v553 = vrot.slane %v296, 7
      %v554 = vsel %vm324, %v552, %v553
      %v555 = vrot.slane %v553, 2
      %v556 = vrot.slane %v192, 7
      %v557 = vsel %vm324, %v555, %v556
      %v558 = vrot.slane %v556, 2
      %v559 = vrot.slane %v297, 7
      %v560 = vsel %vm324, %v558, %v559
      %v561 = vrot.slane %v559, 2
      %v562 = vrot.slane %v298, 7
      %v563 = vsel %vm324, %v561, %v562
      %v564 = vrot.slane %v562, 2
      %v565 = vrot.slane %v299, 7
      %v566 = vsel %vm324, %v564, %v565
      %v567 = vrot.slane %v193, 7
      %v568 = vrot.slane %v567, 2
      %v569 = vrot.slane %v300, 7
      %v570 = vsel %vm324, %v568, %v569
      %v571 = vrot.slane %v569, 2
      %v572 = vrot.slane %v301, 7
      %v573 = vsel %vm324, %v571, %v572
      %v574 = vrot.slane %v572, 2
      %v575 = vrot.slane %v302, 7
      %v576 = vsel %vm324, %v574, %v575
      %v577 = vrot.slane %v575, 2
      %v578 = vrot.slane %v194, 7
      %v579 = vsel %vm324, %v577, %v578
      %v580 = vrot.slane %v578, 2
      %v581 = vrot.slane %v303, 7
      %v582 = vsel %vm324, %v580, %v581
      %v583 = vrot.slane %v581, 2
      %v584 = vrot.slane %v304, 7
      %v585 = vsel %vm324, %v583, %v584
      %v586 = vrot.slane %v584, 2
      %v587 = vrot.slane %v305, 7
      %v588 = vsel %vm324, %v586, %v587
      %v589 = vrot.slane %v195, 7
      %v590 = vrot.slane %v589, 2
      %v591 = vrot.slane %v306, 7
      %v592 = vsel %vm324, %v590, %v591
      %v593 = vrot.slane %v591, 2
      %v594 = vrot.slane %v307, 7
      %v595 = vsel %vm324, %v593, %v594
      %v596 = vrot.slane %v594, 2
      %v597 = vrot.slane %v308, 7
      %v598 = vsel %vm324, %v596, %v597
      %v599 = vrot.slane %v597, 2
      %v600 = vrot.slane %v196, 7
      %v601 = vsel %vm324, %v599, %v600
      %v602 = vrot.slane %v600, 2
      %v603 = vrot.slane %v309, 7
      %v604 = vsel %vm324, %v602, %v603
      %v605 = vrot.slane %v603, 2
      %v606 = vrot.slane %v310, 7
      %v607 = vsel %vm324, %v605, %v606
      %v608 = vrot.slane %v606, 2
      %v609 = vrot.slane %v311, 7
      %v610 = vsel %vm324, %v608, %v609
      %v611 = vrot.slane %v197, 7
      %v612 = vrot.slane %v611, 2
      %v613 = vrot.slane %v312, 7
      %v614 = vsel %vm324, %v612, %v613
      %v615 = vrot.slane %v613, 2
      %v616 = vrot.slane %v313, 7
      %v617 = vsel %vm324, %v615, %v616
      %v618 = vrot.slane %v616, 2
      %v619 = vrot.slane %v314, 7
      %v620 = vsel %vm324, %v618, %v619
      %v621 = vrot.slane %v619, 2
      %v622 = vrot.slane %v198, 7
      %v623 = vsel %vm324, %v621, %v622
      %v624 = vrot.slane %v622, 2
      %v625 = vrot.slane %v315, 7
      %v626 = vsel %vm324, %v624, %v625
      %v627 = vrot.slane %v625, 2
      %v628 = vrot.slane %v316, 7
      %v629 = vsel %vm324, %v627, %v628
      %v630 = vrot.slane %v628, 2
      %v631 = vrot.slane %v317, 7
      %v632 = vsel %vm324, %v630, %v631
      %633 = vst [vmem:[#allocation1] ss:$4 sm:$0xff] %v328
      %s634 = scalar_lea.vmem [#allocation1], 1
      %635 = vst [vmem:[%s634] ss:$4 sm:$0xff] %v331
      %s636 = scalar_lea.vmem [#allocation1], 2
      %637 = vst [vmem:[%s636] ss:$4 sm:$0xff] %v334
      %s638 = scalar_lea.vmem [#allocation1], 3
      %639 = vst [vmem:[%s638] ss:$4 sm:$0xff] %v337
      %s640 = scalar_lea.vmem [#allocation1], 32
      %641 = vst [vmem:[%s640] ss:$4 sm:$0xff] %v340
      %s642 = scalar_lea.vmem [#allocation1], 33
      %643 = vst [vmem:[%s642] ss:$4 sm:$0xff] %v343
      %s644 = scalar_lea.vmem [#allocation1], 34
      %645 = vst [vmem:[%s644] ss:$4 sm:$0xff] %v346
      %s646 = scalar_lea.vmem [#allocation1], 35
      %647 = vst [vmem:[%s646] ss:$4 sm:$0xff] %v350
      %v648 = vld.sshfl [vmem:[#allocation1] sm:$0xff pattern:$0x73625140]
      %v649 = vld.sshfl [vmem:[#allocation1 + $0x20] sm:$0xff pattern:$0x73625140]
      %650 = vst [vmem:[#allocation1] ss:$4 sm:$0xff] %v353
      %651 = vst [vmem:[%s634] ss:$4 sm:$0xff] %v356
      %652 = vst [vmem:[%s636] ss:$4 sm:$0xff] %v359
      %653 = vst [vmem:[%s638] ss:$4 sm:$0xff] %v362
      %654 = vst [vmem:[%s640] ss:$4 sm:$0xff] %v365
      %655 = vst [vmem:[%s642] ss:$4 sm:$0xff] %v368
      %656 = vst [vmem:[%s644] ss:$4 sm:$0xff] %v372
      %657 = vst [vmem:[%s646] ss:$4 sm:$0xff] %v375
      %v658 = vld.sshfl [vmem:[#allocation1] sm:$0xff pattern:$0x73625140]
      %v659 = vld.sshfl [vmem:[#allocation1 + $0x20] sm:$0xff pattern:$0x73625140]
      %660 = vst [vmem:[#allocation1] ss:$4 sm:$0xff] %v378
      %661 = vst [vmem:[%s634] ss:$4 sm:$0xff] %v381
      %662 = vst [vmem:[%s636] ss:$4 sm:$0xff] %v384
      %663 = vst [vmem:[%s638] ss:$4 sm:$0xff] %v387
      %664 = vst [vmem:[%s640] ss:$4 sm:$0xff] %v390
      %665 = vst [vmem:[%s642] ss:$4 sm:$0xff] %v394
      %666 = vst [vmem:[%s644] ss:$4 sm:$0xff] %v397
      %667 = vst [vmem:[%s646] ss:$4 sm:$0xff] %v400
      %v668 = vld.sshfl [vmem:[#allocation1] sm:$0xff pattern:$0x73625140]
      %v669 = vld.sshfl [vmem:[#allocation1 + $0x20] sm:$0xff pattern:$0x73625140]
      %670 = vst [vmem:[#allocation1] ss:$4 sm:$0xff] %v403
      %671 = vst [vmem:[%s634] ss:$4 sm:$0xff] %v406
      %672 = vst [vmem:[%s636] ss:$4 sm:$0xff] %v409
      %673 = vst [vmem:[%s638] ss:$4 sm:$0xff] %v412
      %674 = vst [vmem:[%s640] ss:$4 sm:$0xff] %v416
      %675 = vst [vmem:[%s642] ss:$4 sm:$0xff] %v419
      %676 = vst [vmem:[%s644] ss:$4 sm:$0xff] %v422
      %677 = vst [vmem:[%s646] ss:$4 sm:$0xff] %v425
      %v678 = vld.sshfl [vmem:[#allocation1] sm:$0xff pattern:$0x73625140]
      %v679 = vld.sshfl [vmem:[#allocation1 + $0x20] sm:$0xff pattern:$0x73625140]
      %680 = vst [vmem:[#allocation1] ss:$4 sm:$0xff] %v428
      %681 = vst [vmem:[%s634] ss:$4 sm:$0xff] %v431
      %682 = vst [vmem:[%s636] ss:$4 sm:$0xff] %v434
      %683 = vst [vmem:[%s638] ss:$4 sm:$0xff] %v438
      %684 = vst [vmem:[%s640] ss:$4 sm:$0xff] %v441
      %685 = vst [vmem:[%s642] ss:$4 sm:$0xff] %v444
      %686 = vst [vmem:[%s644] ss:$4 sm:$0xff] %v447
      %687 = vst [vmem:[%s646] ss:$4 sm:$0xff] %v450
      %v688 = vld.sshfl [vmem:[#allocation1] sm:$0xff pattern:$0x73625140]
      %v689 = vld.sshfl [vmem:[#allocation1 + $0x20] sm:$0xff pattern:$0x73625140]
      %690 = vst [vmem:[#allocation1] ss:$4 sm:$0xff] %v453
      %691 = vst [vmem:[%s634] ss:$4 sm:$0xff] %v456
      %692 = vst [vmem:[%s636] ss:$4 sm:$0xff] %v460
      %693 = vst [vmem:[%s638] ss:$4 sm:$0xff] %v463
      %694 = vst [vmem:[%s640] ss:$4 sm:$0xff] %v466
      %695 = vst [vmem:[%s642] ss:$4 sm:$0xff] %v469
      %696 = vst [vmem:[%s644] ss:$4 sm:$0xff] %v472
      %697 = vst [vmem:[%s646] ss:$4 sm:$0xff] %v475
      %v698 = vld.sshfl [vmem:[#allocation1] sm:$0xff pattern:$0x73625140]
      %v699 = vld.sshfl [vmem:[#allocation1 + $0x20] sm:$0xff pattern:$0x73625140]
      %700 = vst [vmem:[#allocation1] ss:$4 sm:$0xff] %v478
      %701 = vst [vmem:[%s634] ss:$4 sm:$0xff] %v482
      %702 = vst [vmem:[%s636] ss:$4 sm:$0xff] %v485
      %703 = vst [vmem:[%s638] ss:$4 sm:$0xff] %v488
      %704 = vst [vmem:[%s640] ss:$4 sm:$0xff] %v491
      %705 = vst [vmem:[%s642] ss:$4 sm:$0xff] %v494
      %706 = vst [vmem:[%s644] ss:$4 sm:$0xff] %v497
      %707 = vst [vmem:[%s646] ss:$4 sm:$0xff] %v500
      %v708 = vld.sshfl [vmem:[#allocation1] sm:$0xff pattern:$0x73625140]
      %v709 = vld.sshfl [vmem:[#allocation1 + $0x20] sm:$0xff pattern:$0x73625140]
      %710 = vst [vmem:[#allocation1] ss:$4 sm:$0xff] %v504
      %711 = vst [vmem:[%s634] ss:$4 sm:$0xff] %v507
      %712 = vst [vmem:[%s636] ss:$4 sm:$0xff] %v510
      %713 = vst [vmem:[%s638] ss:$4 sm:$0xff] %v513
      %714 = vst [vmem:[%s640] ss:$4 sm:$0xff] %v516
      %715 = vst [vmem:[%s642] ss:$4 sm:$0xff] %v519
      %716 = vst [vmem:[%s644] ss:$4 sm:$0xff] %v522
      %717 = vst [vmem:[%s646] ss:$4 sm:$0xff] %v526
      %v718 = vld.sshfl [vmem:[#allocation1] sm:$0xff pattern:$0x73625140]
      %v719 = vld.sshfl [vmem:[#allocation1 + $0x20] sm:$0xff pattern:$0x73625140]
      %720 = vst [vmem:[#allocation1] ss:$4 sm:$0xff] %v529
      %721 = vst [vmem:[%s634] ss:$4 sm:$0xff] %v532
      %722 = vst [vmem:[%s636] ss:$4 sm:$0xff] %v535
      %723 = vst [vmem:[%s638] ss:$4 sm:$0xff] %v538
      %724 = vst [vmem:[%s640] ss:$4 sm:$0xff] %v541
      %725 = vst [vmem:[%s642] ss:$4 sm:$0xff] %v544
      %726 = vst [vmem:[%s644] ss:$4 sm:$0xff] %v548
      %727 = vst [vmem:[%s646] ss:$4 sm:$0xff] %v551
      %v728 = vld.sshfl [vmem:[#allocation1] sm:$0xff pattern:$0x73625140]
      %v729 = vld.sshfl [vmem:[#allocation1 + $0x20] sm:$0xff pattern:$0x73625140]
      %730 = vst [vmem:[#allocation1] ss:$4 sm:$0xff] %v554
      %731 = vst [vmem:[%s634] ss:$4 sm:$0xff] %v557
      %732 = vst [vmem:[%s636] ss:$4 sm:$0xff] %v560
      %733 = vst [vmem:[%s638] ss:$4 sm:$0xff] %v563
      %734 = vst [vmem:[%s640] ss:$4 sm:$0xff] %v566
      %735 = vst [vmem:[%s642] ss:$4 sm:$0xff] %v570
      %736 = vst [vmem:[%s644] ss:$4 sm:$0xff] %v573
      %737 = vst [vmem:[%s646] ss:$4 sm:$0xff] %v576
      %v738 = vld.sshfl [vmem:[#allocation1] sm:$0xff pattern:$0x73625140]
      %v739 = vld.sshfl [vmem:[#allocation1 + $0x20] sm:$0xff pattern:$0x73625140]
      %740 = vst [vmem:[#allocation1] ss:$4 sm:$0xff] %v579
      %741 = vst [vmem:[%s634] ss:$4 sm:$0xff] %v582
      %742 = vst [vmem:[%s636] ss:$4 sm:$0xff] %v585
      %743 = vst [vmem:[%s638] ss:$4 sm:$0xff] %v588
      %744 = vst [vmem:[%s640] ss:$4 sm:$0xff] %v592
      %745 = vst [vmem:[%s642] ss:$4 sm:$0xff] %v595
      %746 = vst [vmem:[%s644] ss:$4 sm:$0xff] %v598
      %747 = vst [vmem:[%s646] ss:$4 sm:$0xff] %v601
      %v748 = vld.sshfl [vmem:[#allocation1] sm:$0xff pattern:$0x73625140]
      %v749 = vld.sshfl [vmem:[#allocation1 + $0x20] sm:$0xff pattern:$0x73625140]
      %750 = vst [vmem:[#allocation1] ss:$4 sm:$0xff] %v604
      %751 = vst [vmem:[%s634] ss:$4 sm:$0xff] %v607
      %752 = vst [vmem:[%s636] ss:$4 sm:$0xff] %v610
      %753 = vst [vmem:[%s638] ss:$4 sm:$0xff] %v614
      %754 = vst [vmem:[%s640] ss:$4 sm:$0xff] %v617
      %755 = vst [vmem:[%s642] ss:$4 sm:$0xff] %v620
      %756 = vst [vmem:[%s644] ss:$4 sm:$0xff] %v623
      %757 = vst [vmem:[%s646] ss:$4 sm:$0xff] %v626
      %v758 = vld.sshfl [vmem:[#allocation1] sm:$0xff pattern:$0x73625140]
      %v759 = vld.sshfl [vmem:[#allocation1 + $0x20] sm:$0xff pattern:$0x73625140]
      %760 = vst [vmem:[#allocation1] ss:$4 sm:$0xff] %v629
      %761 = vst [vmem:[%s634] ss:$4 sm:$0xff] %v632
      %v762 = vld.sshfl [vmem:[#allocation1] sm:$0xff pattern:$0x73625140]
      %vm763 = vcmask 31744
      %v764 = vsel %vm763, %v648, 0
      %v766 = vsel %vm763, %v649, 0
      %v768 = vsel %vm763, %v658, 0
      %v770 = vsel %vm763, %v659, 0
      %v772 = vsel %vm763, %v668, 0
      %v774 = vsel %vm763, %v669, 0
      %v776 = vsel %vm763, %v678, 0
      %v778 = vsel %vm763, %v679, 0
      %v780 = vsel %vm763, %v688, 0
      %v782 = vsel %vm763, %v689, 0
      %v784 = vsel %vm763, %v698, 0
      %v786 = vsel %vm763, %v699, 0
      %v788 = vsel %vm763, %v708, 0
      %v790 = vsel %vm763, %v709, 0
      %v792 = vsel %vm763, %v718, 0
      %v794 = vsel %vm763, %v719, 0
      %v796 = vsel %vm763, %v728, 0
      %v798 = vsel %vm763, %v729, 0
      %v800 = vsel %vm763, %v738, 0
      %v802 = vsel %vm763, %v739, 0
      %v804 = vsel %vm763, %v748, 0
      %v806 = vsel %vm763, %v749, 0
      %v808 = vsel %vm763, %v758, 0
      %v810 = vsel %vm763, %v759, 0
      %v812 = vsel %vm763, %v762, 0
      %vm814 = vcmask 1043456
      %v816 = vsel %vm814, %v205, 0
      %818 = vmatpush.msra.mxu0 0.0
      %819 = vmatpush.msra.mxu0 0.0
      %820 = vmatpush.msra.mxu0 0.0
      %821 = vmatpush.msra.mxu0 0.0
      %822 = vmatpush.msra.mxu0 0.0
      %823 = vmatpush.msra.mxu0 0.0
      %824 = vmatpush.msra.mxu0 0.0
      %825 = vmatpush.msra.mxu0 0.0
      %826 = vmatpush.msra.mxu0 0.0
      %827 = vmatpush.msra.mxu0 0.0
      %828 = vmatpush.msra.mxu0 0.0
      %829 = vmatpush.msra.mxu0 0.0
      %830 = vmatpush.msra.mxu0 0.0
      %831 = vmatpush.msra.mxu0 0.0
      %832 = vmatpush.msra.mxu0 0.0
      %833 = vmatpush.msra.mxu0 %v816
      %834 = vmatmul.f32.gmra.mxu0 %v764
      %v835 = vpop.f32.mrf.mxu0
      %v836 = vadd.f32 0.0, %v835
      %837 = vmatmul.f32.gmra.mxu0 %v766
      %v838 = vpop.f32.mrf.mxu0
      %v839 = vadd.f32 0.0, %v838
      %840 = vmatmul.f32.gmra.mxu0 %v768
      %v841 = vpop.f32.mrf.mxu0
      %v842 = vadd.f32 0.0, %v841
      %843 = vmatmul.f32.gmra.mxu0 %v770
      %v844 = vpop.f32.mrf.mxu0
      %v845 = vadd.f32 0.0, %v844
      %846 = vmatmul.f32.gmra.mxu0 %v772
      %v847 = vpop.f32.mrf.mxu0
      %v848 = vadd.f32 0.0, %v847
      %849 = vmatmul.f32.gmra.mxu0 %v774
      %v850 = vpop.f32.mrf.mxu0
      %v851 = vadd.f32 0.0, %v850
      %852 = vmatmul.f32.gmra.mxu0 %v776
      %v853 = vpop.f32.mrf.mxu0
      %v854 = vadd.f32 0.0, %v853
      %855 = vmatmul.f32.gmra.mxu0 %v778
      %v856 = vpop.f32.mrf.mxu0
      %v857 = vadd.f32 0.0, %v856
      %858 = vmatmul.f32.gmra.mxu0 %v780
      %v859 = vpop.f32.mrf.mxu0
      %v860 = vadd.f32 0.0, %v859
      %861 = vmatmul.f32.gmra.mxu0 %v782
      %v862 = vpop.f32.mrf.mxu0
      %v863 = vadd.f32 0.0, %v862
      %864 = vmatmul.f32.gmra.mxu0 %v784
      %v865 = vpop.f32.mrf.mxu0
      %v866 = vadd.f32 0.0, %v865
      %867 = vmatmul.f32.gmra.mxu0 %v786
      %v868 = vpop.f32.mrf.mxu0
      %v869 = vadd.f32 0.0, %v868
      %870 = vmatmul.f32.gmra.mxu0 %v788
      %v871 = vpop.f32.mrf.mxu0
      %v872 = vadd.f32 0.0, %v871
      %873 = vmatmul.f32.gmra.mxu0 %v790
      %v874 = vpop.f32.mrf.mxu0
      %v875 = vadd.f32 0.0, %v874
      %876 = vmatmul.f32.gmra.mxu0 %v792
      %v877 = vpop.f32.mrf.mxu0
      %v878 = vadd.f32 0.0, %v877
      %879 = vmatmul.f32.gmra.mxu0 %v794
      %v880 = vpop.f32.mrf.mxu0
      %v881 = vadd.f32 0.0, %v880
      %882 = vmatmul.f32.gmra.mxu0 %v796
      %v883 = vpop.f32.mrf.mxu0
      %v884 = vadd.f32 0.0, %v883
      %885 = vmatmul.f32.gmra.mxu0 %v798
      %v886 = vpop.f32.mrf.mxu0
      %v887 = vadd.f32 0.0, %v886
      %888 = vmatmul.f32.gmra.mxu0 %v800
      %v889 = vpop.f32.mrf.mxu0
      %v890 = vadd.f32 0.0, %v889
      %891 = vmatmul.f32.gmra.mxu0 %v802
      %v892 = vpop.f32.mrf.mxu0
      %v893 = vadd.f32 0.0, %v892
      %894 = vmatmul.f32.gmra.mxu0 %v804
      %v895 = vpop.f32.mrf.mxu0
      %v896 = vadd.f32 0.0, %v895
      %897 = vmatmul.f32.gmra.mxu0 %v806
      %v898 = vpop.f32.mrf.mxu0
      %v899 = vadd.f32 0.0, %v898
      %900 = vmatmul.f32.gmra.mxu0 %v808
      %v901 = vpop.f32.mrf.mxu0
      %v902 = vadd.f32 0.0, %v901
      %903 = vmatmul.f32.gmra.mxu0 %v810
      %v904 = vpop.f32.mrf.mxu0
      %v905 = vadd.f32 0.0, %v904
      %906 = vmatmul.f32.gmra.mxu0 %v812
      %v907 = vpop.f32.mrf.mxu0
      %v908 = vadd.f32 0.0, %v907
      %909 = vdwg.mxu0
      %910 = vst [vmem:[#allocation1] ss:$4 sm:$0xff] %v171
      %s911 = scalar_lea.vmem [#allocation1], 1
      %912 = vst [vmem:[%s911] ss:$4 sm:$0xff] %v234
      %s913 = scalar_lea.vmem [#allocation1], 2
      %914 = vst [vmem:[%s913] ss:$4 sm:$0xff] %v235
      %s915 = scalar_lea.vmem [#allocation1], 3
      %916 = vst [vmem:[%s915] ss:$4 sm:$0xff] %v236
      %s917 = scalar_lea.vmem [#allocation1], 32
      %918 = vst [vmem:[%s917] ss:$4 sm:$0xff] %v172
      %s919 = scalar_lea.vmem [#allocation1], 33
      %920 = vst [vmem:[%s919] ss:$4 sm:$0xff] %v237
      %s921 = scalar_lea.vmem [#allocation1], 34
      %922 = vst [vmem:[%s921] ss:$4 sm:$0xff] %v238
      %s923 = scalar_lea.vmem [#allocation1], 35
      %924 = vst [vmem:[%s923] ss:$4 sm:$0xff] %v173
      %v925 = vld.sshfl [vmem:[#allocation1] sm:$0xff pattern:$0x73625140]
      %v926 = vld.sshfl [vmem:[#allocation1 + $0x20] sm:$0xff pattern:$0x73625140]
      %927 = vst [vmem:[#allocation1] ss:$4 sm:$0xff] %v240
      %928 = vst [vmem:[%s911] ss:$4 sm:$0xff] %v241
      %929 = vst [vmem:[%s913] ss:$4 sm:$0xff] %v242
      %930 = vst [vmem:[%s915] ss:$4 sm:$0xff] %v174
      %931 = vst [vmem:[%s917] ss:$4 sm:$0xff] %v243
      %932 = vst [vmem:[%s919] ss:$4 sm:$0xff] %v244
      %933 = vst [vmem:[%s921] ss:$4 sm:$0xff] %v175
      %934 = vst [vmem:[%s923] ss:$4 sm:$0xff] %v246
      %v935 = vld.sshfl [vmem:[#allocation1] sm:$0xff pattern:$0x73625140]
      %v936 = vld.sshfl [vmem:[#allocation1 + $0x20] sm:$0xff pattern:$0x73625140]
      %937 = vst [vmem:[#allocation1] ss:$4 sm:$0xff] %v247
      %938 = vst [vmem:[%s911] ss:$4 sm:$0xff] %v248
      %939 = vst [vmem:[%s913] ss:$4 sm:$0xff] %v176
      %940 = vst [vmem:[%s915] ss:$4 sm:$0xff] %v249
      %941 = vst [vmem:[%s917] ss:$4 sm:$0xff] %v250
      %942 = vst [vmem:[%s919] ss:$4 sm:$0xff] %v177
      %943 = vst [vmem:[%s921] ss:$4 sm:$0xff] %v252
      %944 = vst [vmem:[%s923] ss:$4 sm:$0xff] %v253
      %v945 = vld.sshfl [vmem:[#allocation1] sm:$0xff pattern:$0x73625140]
      %v946 = vld.sshfl [vmem:[#allocation1 + $0x20] sm:$0xff pattern:$0x73625140]
      %947 = vst [vmem:[#allocation1] ss:$4 sm:$0xff] %v254
      %948 = vst [vmem:[%s911] ss:$4 sm:$0xff] %v178
      %949 = vst [vmem:[%s913] ss:$4 sm:$0xff] %v255
      %950 = vst [vmem:[%s915] ss:$4 sm:$0xff] %v256
      %951 = vst [vmem:[%s917] ss:$4 sm:$0xff] %v179
      %952 = vst [vmem:[%s919] ss:$4 sm:$0xff] %v258
      %953 = vst [vmem:[%s921] ss:$4 sm:$0xff] %v259
      %954 = vst [vmem:[%s923] ss:$4 sm:$0xff] %v260
      %v955 = vld.sshfl [vmem:[#allocation1] sm:$0xff pattern:$0x73625140]
      %v956 = vld.sshfl [vmem:[#allocation1 + $0x20] sm:$0xff pattern:$0x73625140]
      %957 = vst [vmem:[#allocation1] ss:$4 sm:$0xff] %v180
      %958 = vst [vmem:[%s911] ss:$4 sm:$0xff] %v261
      %959 = vst [vmem:[%s913] ss:$4 sm:$0xff] %v262
      %960 = vst [vmem:[%s915] ss:$4 sm:$0xff] %v181
      %961 = vst [vmem:[%s917] ss:$4 sm:$0xff] %v264
      %962 = vst [vmem:[%s919] ss:$4 sm:$0xff] %v265
      %963 = vst [vmem:[%s921] ss:$4 sm:$0xff] %v266
      %964 = vst [vmem:[%s923] ss:$4 sm:$0xff] %v182
      %v965 = vld.sshfl [vmem:[#allocation1] sm:$0xff pattern:$0x73625140]
      %v966 = vld.sshfl [vmem:[#allocation1 + $0x20] sm:$0xff pattern:$0x73625140]
      %967 = vst [vmem:[#allocation1] ss:$4 sm:$0xff] %v267
      %968 = vst [vmem:[%s911] ss:$4 sm:$0xff] %v268
      %969 = vst [vmem:[%s913] ss:$4 sm:$0xff] %v183
      %970 = vst [vmem:[%s915] ss:$4 sm:$0xff] %v270
      %971 = vst [vmem:[%s917] ss:$4 sm:$0xff] %v271
      %972 = vst [vmem:[%s919] ss:$4 sm:$0xff] %v272
      %973 = vst [vmem:[%s921] ss:$4 sm:$0xff] %v184
      %974 = vst [vmem:[%s923] ss:$4 sm:$0xff] %v273
      %v975 = vld.sshfl [vmem:[#allocation1] sm:$0xff pattern:$0x73625140]
      %v976 = vld.sshfl [vmem:[#allocation1 + $0x20] sm:$0xff pattern:$0x73625140]
      %977 = vst [vmem:[#allocation1] ss:$4 sm:$0xff] %v274
      %978 = vst [vmem:[%s911] ss:$4 sm:$0xff] %v185
      %979 = vst [vmem:[%s913] ss:$4 sm:$0xff] %v276
      %980 = vst [vmem:[%s915] ss:$4 sm:$0xff] %v277
      %981 = vst [vmem:[%s917] ss:$4 sm:$0xff] %v278
      %982 = vst [vmem:[%s919] ss:$4 sm:$0xff] %v186
      %983 = vst [vmem:[%s921] ss:$4 sm:$0xff] %v279
      %984 = vst [vmem:[%s923] ss:$4 sm:$0xff] %v280
      %v985 = vld.sshfl [vmem:[#allocation1] sm:$0xff pattern:$0x73625140]
      %v986 = vld.sshfl [vmem:[#allocation1 + $0x20] sm:$0xff pattern:$0x73625140]
      %987 = vst [vmem:[#allocation1] ss:$4 sm:$0xff] %v187
      %988 = vst [vmem:[%s911] ss:$4 sm:$0xff] %v282
      %989 = vst [vmem:[%s913] ss:$4 sm:$0xff] %v283
      %990 = vst [vmem:[%s915] ss:$4 sm:$0xff] %v284
      %991 = vst [vmem:[%s917] ss:$4 sm:$0xff] %v188
      %992 = vst [vmem:[%s919] ss:$4 sm:$0xff] %v285
      %993 = vst [vmem:[%s921] ss:$4 sm:$0xff] %v286
      %994 = vst [vmem:[%s923] ss:$4 sm:$0xff] %v189
      %v995 = vld.sshfl [vmem:[#allocation1] sm:$0xff pattern:$0x73625140]
      %v996 = vld.sshfl [vmem:[#allocation1 + $0x20] sm:$0xff pattern:$0x73625140]
      %997 = vst [vmem:[#allocation1] ss:$4 sm:$0xff] %v288
      %998 = vst [vmem:[%s911] ss:$4 sm:$0xff] %v289
      %999 = vst [vmem:[%s913] ss:$4 sm:$0xff] %v290
      %1000 = vst [vmem:[%s915] ss:$4 sm:$0xff] %v190
      %1001 = vst [vmem:[%s917] ss:$4 sm:$0xff] %v291
      %1002 = vst [vmem:[%s919] ss:$4 sm:$0xff] %v292
      %1003 = vst [vmem:[%s921] ss:$4 sm:$0xff] %v191
      %1004 = vst [vmem:[%s923] ss:$4 sm:$0xff] %v294
      %v1005 = vld.sshfl [vmem:[#allocation1] sm:$0xff pattern:$0x73625140]
      %v1006 = vld.sshfl [vmem:[#allocation1 + $0x20] sm:$0xff pattern:$0x73625140]
      %1007 = vst [vmem:[#allocation1] ss:$4 sm:$0xff] %v295
      %1008 = vst [vmem:[%s911] ss:$4 sm:$0xff] %v296
      %1009 = vst [vmem:[%s913] ss:$4 sm:$0xff] %v192
      %1010 = vst [vmem:[%s915] ss:$4 sm:$0xff] %v297
      %1011 = vst [vmem:[%s917] ss:$4 sm:$0xff] %v298
      %1012 = vst [vmem:[%s919] ss:$4 sm:$0xff] %v193
      %1013 = vst [vmem:[%s921] ss:$4 sm:$0xff] %v300
      %1014 = vst [vmem:[%s923] ss:$4 sm:$0xff] %v301
      %v1015 = vld.sshfl [vmem:[#allocation1] sm:$0xff pattern:$0x73625140]
      %v1016 = vld.sshfl [vmem:[#allocation1 + $0x20] sm:$0xff pattern:$0x73625140]
      %1017 = vst [vmem:[#allocation1] ss:$4 sm:$0xff] %v302
      %1018 = vst [vmem:[%s911] ss:$4 sm:$0xff] %v194
      %1019 = vst [vmem:[%s913] ss:$4 sm:$0xff] %v303
      %1020 = vst [vmem:[%s915] ss:$4 sm:$0xff] %v304
      %1021 = vst [vmem:[%s917] ss:$4 sm:$0xff] %v195
      %1022 = vst [vmem:[%s919] ss:$4 sm:$0xff] %v306
      %1023 = vst [vmem:[%s921] ss:$4 sm:$0xff] %v307
      %1024 = vst [vmem:[%s923] ss:$4 sm:$0xff] %v308
      %v1025 = vld.sshfl [vmem:[#allocation1] sm:$0xff pattern:$0x73625140]
      %v1026 = vld.sshfl [vmem:[#allocation1 + $0x20] sm:$0xff pattern:$0x73625140]
      %1027 = vst [vmem:[#allocation1] ss:$4 sm:$0xff] %v196
      %1028 = vst [vmem:[%s911] ss:$4 sm:$0xff] %v309
      %1029 = vst [vmem:[%s913] ss:$4 sm:$0xff] %v310
      %1030 = vst [vmem:[%s915] ss:$4 sm:$0xff] %v197
      %1031 = vst [vmem:[%s917] ss:$4 sm:$0xff] %v312
      %1032 = vst [vmem:[%s919] ss:$4 sm:$0xff] %v313
      %1033 = vst [vmem:[%s921] ss:$4 sm:$0xff] %v314
      %1034 = vst [vmem:[%s923] ss:$4 sm:$0xff] %v198
      %v1035 = vld.sshfl [vmem:[#allocation1] sm:$0xff pattern:$0x73625140]
      %v1036 = vld.sshfl [vmem:[#allocation1 + $0x20] sm:$0xff pattern:$0x73625140]
      %1037 = vst [vmem:[#allocation1] ss:$4 sm:$0xff] %v315
      %1038 = vst [vmem:[%s911] ss:$4 sm:$0xff] %v316
      %v1039 = vld.sshfl [vmem:[#allocation1] sm:$0xff pattern:$0x73625140]
      %v1040 = vsel %vm763, %v925, 0
      %v1042 = vsel %vm763, %v926, 0
      %v1044 = vsel %vm763, %v935, 0
      %v1046 = vsel %vm763, %v936, 0
      %v1048 = vsel %vm763, %v945, 0
      %v1050 = vsel %vm763, %v946, 0
      %v1052 = vsel %vm763, %v955, 0
      %v1054 = vsel %vm763, %v956, 0
      %v1056 = vsel %vm763, %v965, 0
      %v1058 = vsel %vm763, %v966, 0
      %v1060 = vsel %vm763, %v975, 0
      %v1062 = vsel %vm763, %v976, 0
      %v1064 = vsel %vm763, %v985, 0
      %v1066 = vsel %vm763, %v986, 0
      %v1068 = vsel %vm763, %v995, 0
      %v1070 = vsel %vm763, %v996, 0
      %v1072 = vsel %vm763, %v1005, 0
      %v1074 = vsel %vm763, %v1006, 0
      %v1076 = vsel %vm763, %v1015, 0
      %v1078 = vsel %vm763, %v1016, 0
      %v1080 = vsel %vm763, %v1025, 0
      %v1082 = vsel %vm763, %v1026, 0
      %v1084 = vsel %vm763, %v1035, 0
      %v1086 = vsel %vm763, %v1036, 0
      %v1088 = vsel %vm763, %v1039, 0
      %v1091 = vsel %vm814, %v203, 0
      %1093 = vmatpush.msra.mxu0 0.0
      %1094 = vmatpush.msra.mxu0 0.0
      %1095 = vmatpush.msra.mxu0 0.0
      %1096 = vmatpush.msra.mxu0 0.0
      %1097 = vmatpush.msra.mxu0 0.0
      %1098 = vmatpush.msra.mxu0 0.0
      %1099 = vmatpush.msra.mxu0 0.0
      %1100 = vmatpush.msra.mxu0 0.0
      %1101 = vmatpush.msra.mxu0 0.0
      %1102 = vmatpush.msra.mxu0 0.0
      %1103 = vmatpush.msra.mxu0 0.0
      %1104 = vmatpush.msra.mxu0 0.0
      %1105 = vmatpush.msra.mxu0 0.0
      %1106 = vmatpush.msra.mxu0 0.0
      %1107 = vmatpush.msra.mxu0 0.0
      %1108 = vmatpush.msra.mxu0 %v1091
      %1109 = vmatmul.f32.gmra.mxu0 %v1040
      %v1110 = vpop.f32.mrf.mxu0
      %v1111 = vadd.f32 %v836, %v1110
      %1112 = vmatmul.f32.gmra.mxu0 %v1042
      %v1113 = vpop.f32.mrf.mxu0
      %v1114 = vadd.f32 %v839, %v1113
      %1115 = vmatmul.f32.gmra.mxu0 %v1044
      %v1116 = vpop.f32.mrf.mxu0
      %v1117 = vadd.f32 %v842, %v1116
      %1118 = vmatmul.f32.gmra.mxu0 %v1046
      %v1119 = vpop.f32.mrf.mxu0
      %v1120 = vadd.f32 %v845, %v1119
      %1121 = vmatmul.f32.gmra.mxu0 %v1048
      %v1122 = vpop.f32.mrf.mxu0
      %v1123 = vadd.f32 %v848, %v1122
      %1124 = vmatmul.f32.gmra.mxu0 %v1050
      %v1125 = vpop.f32.mrf.mxu0
      %v1126 = vadd.f32 %v851, %v1125
      %1127 = vmatmul.f32.gmra.mxu0 %v1052
      %v1128 = vpop.f32.mrf.mxu0
      %v1129 = vadd.f32 %v854, %v1128
      %1130 = vmatmul.f32.gmra.mxu0 %v1054
      %v1131 = vpop.f32.mrf.mxu0
      %v1132 = vadd.f32 %v857, %v1131
      %1133 = vmatmul.f32.gmra.mxu0 %v1056
      %v1134 = vpop.f32.mrf.mxu0
      %v1135 = vadd.f32 %v860, %v1134
      %1136 = vmatmul.f32.gmra.mxu0 %v1058
      %v1137 = vpop.f32.mrf.mxu0
      %v1138 = vadd.f32 %v863, %v1137
      %1139 = vmatmul.f32.gmra.mxu0 %v1060
      %v1140 = vpop.f32.mrf.mxu0
      %v1141 = vadd.f32 %v866, %v1140
      %1142 = vmatmul.f32.gmra.mxu0 %v1062
      %v1143 = vpop.f32.mrf.mxu0
      %v1144 = vadd.f32 %v869, %v1143
      %1145 = vmatmul.f32.gmra.mxu0 %v1064
      %v1146 = vpop.f32.mrf.mxu0
      %v1147 = vadd.f32 %v872, %v1146
      %1148 = vmatmul.f32.gmra.mxu0 %v1066
      %v1149 = vpop.f32.mrf.mxu0
      %v1150 = vadd.f32 %v875, %v1149
      %1151 = vmatmul.f32.gmra.mxu0 %v1068
      %v1152 = vpop.f32.mrf.mxu0
      %v1153 = vadd.f32 %v878, %v1152
      %1154 = vmatmul.f32.gmra.mxu0 %v1070
      %v1155 = vpop.f32.mrf.mxu0
      %v1156 = vadd.f32 %v881, %v1155
      %1157 = vmatmul.f32.gmra.mxu0 %v1072
      %v1158 = vpop.f32.mrf.mxu0
      %v1159 = vadd.f32 %v884, %v1158
      %1160 = vmatmul.f32.gmra.mxu0 %v1074
      %v1161 = vpop.f32.mrf.mxu0
      %v1162 = vadd.f32 %v887, %v1161
      %1163 = vmatmul.f32.gmra.mxu0 %v1076
      %v1164 = vpop.f32.mrf.mxu0
      %v1165 = vadd.f32 %v890, %v1164
      %1166 = vmatmul.f32.gmra.mxu0 %v1078
      %v1167 = vpop.f32.mrf.mxu0
      %v1168 = vadd.f32 %v893, %v1167
      %1169 = vmatmul.f32.gmra.mxu0 %v1080
      %v1170 = vpop.f32.mrf.mxu0
      %v1171 = vadd.f32 %v896, %v1170
      %1172 = vmatmul.f32.gmra.mxu0 %v1082
      %v1173 = vpop.f32.mrf.mxu0
      %v1174 = vadd.f32 %v899, %v1173
      %1175 = vmatmul.f32.gmra.mxu0 %v1084
      %v1176 = vpop.f32.mrf.mxu0
      %v1177 = vadd.f32 %v902, %v1176
      %1178 = vmatmul.f32.gmra.mxu0 %v1086
      %v1179 = vpop.f32.mrf.mxu0
      %v1180 = vadd.f32 %v905, %v1179
      %1181 = vmatmul.f32.gmra.mxu0 %v1088
      %v1182 = vpop.f32.mrf.mxu0
      %v1183 = vadd.f32 %v908, %v1182
      %1184 = vdwg.mxu0
      %v1210 = vrot.slane %v1111, 2
      %v1211 = vrot.slane %v1111, 4
      %v1212 = vrot.slane %v1111, 6
      %v1213 = vrot.slane %v1114, 2
      %v1214 = vrot.slane %v1114, 4
      %v1215 = vrot.slane %v1114, 6
      %v1216 = vrot.slane %v1117, 2
      %v1217 = vrot.slane %v1117, 4
      %v1218 = vrot.slane %v1117, 6
      %v1219 = vrot.slane %v1120, 2
      %v1220 = vrot.slane %v1120, 4
      %v1221 = vrot.slane %v1120, 6
      %v1222 = vrot.slane %v1123, 2
      %v1223 = vrot.slane %v1123, 4
      %v1224 = vrot.slane %v1123, 6
      %v1225 = vrot.slane %v1126, 2
      %v1226 = vrot.slane %v1126, 4
      %v1227 = vrot.slane %v1126, 6
      %v1228 = vrot.slane %v1129, 2
      %v1229 = vrot.slane %v1129, 4
      %v1230 = vrot.slane %v1129, 6
      %v1231 = vrot.slane %v1132, 2
      %v1232 = vrot.slane %v1132, 4
      %v1233 = vrot.slane %v1132, 6
      %v1234 = vrot.slane %v1135, 2
      %v1235 = vrot.slane %v1135, 4
      %v1236 = vrot.slane %v1135, 6
      %v1237 = vrot.slane %v1138, 2
      %v1238 = vrot.slane %v1138, 4
      %v1239 = vrot.slane %v1138, 6
      %v1240 = vrot.slane %v1141, 2
      %v1241 = vrot.slane %v1141, 4
      %v1242 = vrot.slane %v1141, 6
      %v1243 = vrot.slane %v1144, 2
      %v1244 = vrot.slane %v1144, 4
      %v1245 = vrot.slane %v1144, 6
      %v1246 = vrot.slane %v1147, 2
      %v1247 = vrot.slane %v1147, 4
      %v1248 = vrot.slane %v1147, 6
      %v1249 = vrot.slane %v1150, 2
      %v1250 = vrot.slane %v1150, 4
      %v1251 = vrot.slane %v1150, 6
      %v1252 = vrot.slane %v1153, 2
      %v1253 = vrot.slane %v1153, 4
      %v1254 = vrot.slane %v1153, 6
      %v1255 = vrot.slane %v1156, 2
      %v1256 = vrot.slane %v1156, 4
      %v1257 = vrot.slane %v1156, 6
      %v1258 = vrot.slane %v1159, 2
      %v1259 = vrot.slane %v1159, 4
      %v1260 = vrot.slane %v1159, 6
      %v1261 = vrot.slane %v1162, 2
      %v1262 = vrot.slane %v1162, 4
      %v1263 = vrot.slane %v1162, 6
      %v1264 = vrot.slane %v1165, 2
      %v1265 = vrot.slane %v1165, 4
      %v1266 = vrot.slane %v1165, 6
      %v1267 = vrot.slane %v1168, 2
      %v1268 = vrot.slane %v1168, 4
      %v1269 = vrot.slane %v1168, 6
      %v1270 = vrot.slane %v1171, 2
      %v1271 = vrot.slane %v1171, 4
      %v1272 = vrot.slane %v1171, 6
      %v1273 = vrot.slane %v1174, 2
      %v1274 = vrot.slane %v1174, 4
      %v1275 = vrot.slane %v1174, 6
      %v1276 = vrot.slane %v1177, 2
      %v1277 = vrot.slane %v1177, 4
      %v1278 = vrot.slane %v1177, 6
      %v1279 = vrot.slane %v1180, 2
      %v1280 = vrot.slane %v1180, 4
      %v1281 = vrot.slane %v1180, 6
      %v1282 = vrot.slane %v1183, 2
      %s1356 = scalar_lea.vmem %s1, 8
      %v1357 = vld [vmem:[%s1356] sm:$0xf]
      %1358 = vst.sshfl [vmem:[#allocation1] sm:$0xff pattern:$0x73625140] %v171
      %1359 = vst.sshfl [vmem:[#allocation1 + $0x20] sm:$0xff pattern:$0x73625140] %v172
      %s1360 = scalar_lea.vmem [#allocation1], 1
      %v1361 = vld [vmem:[%s1360] ss:$4 sm:$0xff]
      %s1362 = scalar_lea.vmem [#allocation1], 2
      %v1363 = vld [vmem:[%s1362] ss:$4 sm:$0xff]
      %s1364 = scalar_lea.vmem [#allocation1], 3
      %v1365 = vld [vmem:[%s1364] ss:$4 sm:$0xff]
      %s1366 = scalar_lea.vmem [#allocation1], 32
      %v1367 = vld [vmem:[%s1366] ss:$4 sm:$0xff]
      %s1368 = scalar_lea.vmem [#allocation1], 33
      %v1369 = vld [vmem:[%s1368] ss:$4 sm:$0xff]
      %s1370 = scalar_lea.vmem [#allocation1], 34
      %v1371 = vld [vmem:[%s1370] ss:$4 sm:$0xff]
      %s1372 = scalar_lea.vmem [#allocation1], 35
      %v1373 = vld [vmem:[%s1372] ss:$4 sm:$0xff]
      %1374 = vst.sshfl [vmem:[#allocation1] sm:$0xff pattern:$0x73625140] %v173
      %1375 = vst.sshfl [vmem:[#allocation1 + $0x20] sm:$0xff pattern:$0x73625140] %v174
      %v1376 = vld [vmem:[%s1360] ss:$4 sm:$0xff]
      %v1377 = vld [vmem:[%s1362] ss:$4 sm:$0xff]
      %v1378 = vld [vmem:[%s1364] ss:$4 sm:$0xff]
      %v1379 = vld [vmem:[%s1366] ss:$4 sm:$0xff]
      %v1380 = vld [vmem:[%s1368] ss:$4 sm:$0xff]
      %v1381 = vld [vmem:[%s1370] ss:$4 sm:$0xff]
      %v1382 = vld [vmem:[%s1372] ss:$4 sm:$0xff]
      %1383 = vst.sshfl [vmem:[#allocation1] sm:$0xff pattern:$0x73625140] %v175
      %1384 = vst.sshfl [vmem:[#allocation1 + $0x20] sm:$0xff pattern:$0x73625140] %v176
      %v1385 = vld [vmem:[%s1360] ss:$4 sm:$0xff]
      %v1386 = vld [vmem:[%s1362] ss:$4 sm:$0xff]
      %v1387 = vld [vmem:[%s1364] ss:$4 sm:$0xff]
      %v1388 = vld [vmem:[%s1366] ss:$4 sm:$0xff]
      %v1389 = vld [vmem:[%s1368] ss:$4 sm:$0xff]
      %v1390 = vld [vmem:[%s1370] ss:$4 sm:$0xff]
      %v1391 = vld [vmem:[%s1372] ss:$4 sm:$0xff]
      %1392 = vst.sshfl [vmem:[#allocation1] sm:$0xff pattern:$0x73625140] %v177
      %1393 = vst.sshfl [vmem:[#allocation1 + $0x20] sm:$0xff pattern:$0x73625140] %v178
      %v1394 = vld [vmem:[%s1360] ss:$4 sm:$0xff]
      %v1395 = vld [vmem:[%s1362] ss:$4 sm:$0xff]
      %v1396 = vld [vmem:[%s1364] ss:$4 sm:$0xff]
      %v1397 = vld [vmem:[%s1366] ss:$4 sm:$0xff]
      %v1398 = vld [vmem:[%s1368] ss:$4 sm:$0xff]
      %v1399 = vld [vmem:[%s1370] ss:$4 sm:$0xff]
      %v1400 = vld [vmem:[%s1372] ss:$4 sm:$0xff]
      %1401 = vst.sshfl [vmem:[#allocation1] sm:$0xff pattern:$0x73625140] %v179
      %1402 = vst.sshfl [vmem:[#allocation1 + $0x20] sm:$0xff pattern:$0x73625140] %v180
      %v1403 = vld [vmem:[%s1360] ss:$4 sm:$0xff]
      %v1404 = vld [vmem:[%s1362] ss:$4 sm:$0xff]
      %v1405 = vld [vmem:[%s1364] ss:$4 sm:$0xff]
      %v1406 = vld [vmem:[%s1366] ss:$4 sm:$0xff]
      %v1407 = vld [vmem:[%s1368] ss:$4 sm:$0xff]
      %v1408 = vld [vmem:[%s1370] ss:$4 sm:$0xff]
      %v1409 = vld [vmem:[%s1372] ss:$4 sm:$0xff]
      %1410 = vst.sshfl [vmem:[#allocation1] sm:$0xff pattern:$0x73625140] %v181
      %1411 = vst.sshfl [vmem:[#allocation1 + $0x20] sm:$0xff pattern:$0x73625140] %v182
      %v1412 = vld [vmem:[%s1360] ss:$4 sm:$0xff]
      %v1413 = vld [vmem:[%s1362] ss:$4 sm:$0xff]
      %v1414 = vld [vmem:[%s1364] ss:$4 sm:$0xff]
      %v1415 = vld [vmem:[%s1366] ss:$4 sm:$0xff]
      %v1416 = vld [vmem:[%s1368] ss:$4 sm:$0xff]
      %v1417 = vld [vmem:[%s1370] ss:$4 sm:$0xff]
      %v1418 = vld [vmem:[%s1372] ss:$4 sm:$0xff]
      %1419 = vst.sshfl [vmem:[#allocation1] sm:$0xff pattern:$0x73625140] %v183
      %1420 = vst.sshfl [vmem:[#allocation1 + $0x20] sm:$0xff pattern:$0x73625140] %v184
      %v1421 = vld [vmem:[%s1360] ss:$4 sm:$0xff]
      %v1422 = vld [vmem:[%s1362] ss:$4 sm:$0xff]
      %v1423 = vld [vmem:[%s1364] ss:$4 sm:$0xff]
      %v1424 = vld [vmem:[%s1366] ss:$4 sm:$0xff]
      %v1425 = vld [vmem:[%s1368] ss:$4 sm:$0xff]
      %v1426 = vld [vmem:[%s1370] ss:$4 sm:$0xff]
      %v1427 = vld [vmem:[%s1372] ss:$4 sm:$0xff]
      %1428 = vst.sshfl [vmem:[#allocation1] sm:$0xff pattern:$0x73625140] %v185
      %1429 = vst.sshfl [vmem:[#allocation1 + $0x20] sm:$0xff pattern:$0x73625140] %v186
      %v1430 = vld [vmem:[%s1360] ss:$4 sm:$0xff]
      %v1431 = vld [vmem:[%s1362] ss:$4 sm:$0xff]
      %v1432 = vld [vmem:[%s1364] ss:$4 sm:$0xff]
      %v1433 = vld [vmem:[%s1366] ss:$4 sm:$0xff]
      %v1434 = vld [vmem:[%s1368] ss:$4 sm:$0xff]
      %v1435 = vld [vmem:[%s1370] ss:$4 sm:$0xff]
      %v1436 = vld [vmem:[%s1372] ss:$4 sm:$0xff]
      %1437 = vst.sshfl [vmem:[#allocation1] sm:$0xff pattern:$0x73625140] %v187
      %1438 = vst.sshfl [vmem:[#allocation1 + $0x20] sm:$0xff pattern:$0x73625140] %v188
      %v1439 = vld [vmem:[%s1360] ss:$4 sm:$0xff]
      %v1440 = vld [vmem:[%s1362] ss:$4 sm:$0xff]
      %v1441 = vld [vmem:[%s1364] ss:$4 sm:$0xff]
      %v1442 = vld [vmem:[%s1366] ss:$4 sm:$0xff]
      %v1443 = vld [vmem:[%s1368] ss:$4 sm:$0xff]
      %v1444 = vld [vmem:[%s1370] ss:$4 sm:$0xff]
      %v1445 = vld [vmem:[%s1372] ss:$4 sm:$0xff]
      %1446 = vst.sshfl [vmem:[#allocation1] sm:$0xff pattern:$0x73625140] %v189
      %1447 = vst.sshfl [vmem:[#allocation1 + $0x20] sm:$0xff pattern:$0x73625140] %v190
      %v1448 = vld [vmem:[%s1360] ss:$4 sm:$0xff]
      %v1449 = vld [vmem:[%s1362] ss:$4 sm:$0xff]
      %v1450 = vld [vmem:[%s1364] ss:$4 sm:$0xff]
      %v1451 = vld [vmem:[%s1366] ss:$4 sm:$0xff]
      %v1452 = vld [vmem:[%s1368] ss:$4 sm:$0xff]
      %v1453 = vld [vmem:[%s1370] ss:$4 sm:$0xff]
      %v1454 = vld [vmem:[%s1372] ss:$4 sm:$0xff]
      %1455 = vst.sshfl [vmem:[#allocation1] sm:$0xff pattern:$0x73625140] %v191
      %1456 = vst.sshfl [vmem:[#allocation1 + $0x20] sm:$0xff pattern:$0x73625140] %v192
      %v1457 = vld [vmem:[%s1360] ss:$4 sm:$0xff]
      %v1458 = vld [vmem:[%s1362] ss:$4 sm:$0xff]
      %v1459 = vld [vmem:[%s1364] ss:$4 sm:$0xff]
      %v1460 = vld [vmem:[%s1366] ss:$4 sm:$0xff]
      %v1461 = vld [vmem:[%s1368] ss:$4 sm:$0xff]
      %v1462 = vld [vmem:[%s1370] ss:$4 sm:$0xff]
      %v1463 = vld [vmem:[%s1372] ss:$4 sm:$0xff]
      %1464 = vst.sshfl [vmem:[#allocation1] sm:$0xff pattern:$0x73625140] %v193
      %1465 = vst.sshfl [vmem:[#allocation1 + $0x20] sm:$0xff pattern:$0x73625140] %v194
      %v1466 = vld [vmem:[%s1360] ss:$4 sm:$0xff]
      %v1467 = vld [vmem:[%s1362] ss:$4 sm:$0xff]
      %v1468 = vld [vmem:[%s1364] ss:$4 sm:$0xff]
      %v1469 = vld [vmem:[%s1366] ss:$4 sm:$0xff]
      %v1470 = vld [vmem:[%s1368] ss:$4 sm:$0xff]
      %v1471 = vld [vmem:[%s1370] ss:$4 sm:$0xff]
      %v1472 = vld [vmem:[%s1372] ss:$4 sm:$0xff]
      %1473 = vst.sshfl [vmem:[#allocation1] sm:$0xff pattern:$0x73625140] %v195
      %1474 = vst.sshfl [vmem:[#allocation1 + $0x20] sm:$0xff pattern:$0x73625140] %v196
      %v1475 = vld [vmem:[%s1360] ss:$4 sm:$0xff]
      %v1476 = vld [vmem:[%s1362] ss:$4 sm:$0xff]
      %v1477 = vld [vmem:[%s1364] ss:$4 sm:$0xff]
      %v1478 = vld [vmem:[%s1366] ss:$4 sm:$0xff]
      %v1479 = vld [vmem:[%s1368] ss:$4 sm:$0xff]
      %v1480 = vld [vmem:[%s1370] ss:$4 sm:$0xff]
      %v1481 = vld [vmem:[%s1372] ss:$4 sm:$0xff]
      %1482 = vst.sshfl [vmem:[#allocation1] sm:$0xff pattern:$0x73625140] %v197
      %1483 = vst.sshfl [vmem:[#allocation1 + $0x20] sm:$0xff pattern:$0x73625140] %v198
      %v1484 = vld [vmem:[%s1360] ss:$4 sm:$0xff]
      %v1485 = vld [vmem:[%s1362] ss:$4 sm:$0xff]
      %v1486 = vld [vmem:[%s1364] ss:$4 sm:$0xff]
      %v1487 = vld [vmem:[%s1366] ss:$4 sm:$0xff]
      %v1488 = vld [vmem:[%s1368] ss:$4 sm:$0xff]
      %v1489 = vld [vmem:[%s1370] ss:$4 sm:$0xff]
      %v1490 = vld [vmem:[%s1372] ss:$4 sm:$0xff]
      %1491 = vst [vmem:[#allocation1] ss:$4 sm:$0xff] %v1361
      %s1492 = scalar_lea.vmem [#allocation1], 1
      %1493 = vst [vmem:[%s1492] ss:$4 sm:$0xff] %v1363
      %s1494 = scalar_lea.vmem [#allocation1], 2
      %1495 = vst [vmem:[%s1494] ss:$4 sm:$0xff] %v1365
      %s1496 = scalar_lea.vmem [#allocation1], 3
      %1497 = vst [vmem:[%s1496] ss:$4 sm:$0xff] %v1367
      %s1498 = scalar_lea.vmem [#allocation1], 32
      %1499 = vst [vmem:[%s1498] ss:$4 sm:$0xff] %v1369
      %s1500 = scalar_lea.vmem [#allocation1], 33
      %1501 = vst [vmem:[%s1500] ss:$4 sm:$0xff] %v1371
      %s1502 = scalar_lea.vmem [#allocation1], 34
      %1503 = vst [vmem:[%s1502] ss:$4 sm:$0xff] %v1373
      %s1504 = scalar_lea.vmem [#allocation1], 35
      %1505 = vst [vmem:[%s1504] ss:$4 sm:$0xff] %v1376
      %v1506 = vld.sshfl [vmem:[#allocation1] sm:$0xff pattern:$0x73625140]
      %v1507 = vld.sshfl [vmem:[#allocation1 + $0x20] sm:$0xff pattern:$0x73625140]
      %1508 = vst [vmem:[#allocation1] ss:$4 sm:$0xff] %v1377
      %1509 = vst [vmem:[%s1492] ss:$4 sm:$0xff] %v1378
      %1510 = vst [vmem:[%s1494] ss:$4 sm:$0xff] %v1379
      %1511 = vst [vmem:[%s1496] ss:$4 sm:$0xff] %v1380
      %1512 = vst [vmem:[%s1498] ss:$4 sm:$0xff] %v1381
      %1513 = vst [vmem:[%s1500] ss:$4 sm:$0xff] %v1382
      %1514 = vst [vmem:[%s1502] ss:$4 sm:$0xff] %v1385
      %1515 = vst [vmem:[%s1504] ss:$4 sm:$0xff] %v1386
      %v1516 = vld.sshfl [vmem:[#allocation1] sm:$0xff pattern:$0x73625140]
      %v1517 = vld.sshfl [vmem:[#allocation1 + $0x20] sm:$0xff pattern:$0x73625140]
      %1518 = vst [vmem:[#allocation1] ss:$4 sm:$0xff] %v1387
      %1519 = vst [vmem:[%s1492] ss:$4 sm:$0xff] %v1388
      %1520 = vst [vmem:[%s1494] ss:$4 sm:$0xff] %v1389
      %1521 = vst [vmem:[%s1496] ss:$4 sm:$0xff] %v1390
      %1522 = vst [vmem:[%s1498] ss:$4 sm:$0xff] %v1391
      %1523 = vst [vmem:[%s1500] ss:$4 sm:$0xff] %v1394
      %1524 = vst [vmem:[%s1502] ss:$4 sm:$0xff] %v1395
      %1525 = vst [vmem:[%s1504] ss:$4 sm:$0xff] %v1396
      %v1526 = vld.sshfl [vmem:[#allocation1] sm:$0xff pattern:$0x73625140]
      %v1527 = vld.sshfl [vmem:[#allocation1 + $0x20] sm:$0xff pattern:$0x73625140]
      %1528 = vst [vmem:[#allocation1] ss:$4 sm:$0xff] %v1397
      %1529 = vst [vmem:[%s1492] ss:$4 sm:$0xff] %v1398
      %1530 = vst [vmem:[%s1494] ss:$4 sm:$0xff] %v1399
      %1531 = vst [vmem:[%s1496] ss:$4 sm:$0xff] %v1400
      %1532 = vst [vmem:[%s1498] ss:$4 sm:$0xff] %v1403
      %1533 = vst [vmem:[%s1500] ss:$4 sm:$0xff] %v1404
      %1534 = vst [vmem:[%s1502] ss:$4 sm:$0xff] %v1405
      %1535 = vst [vmem:[%s1504] ss:$4 sm:$0xff] %v1406
      %v1536 = vld.sshfl [vmem:[#allocation1] sm:$0xff pattern:$0x73625140]
      %v1537 = vld.sshfl [vmem:[#allocation1 + $0x20] sm:$0xff pattern:$0x73625140]
      %1538 = vst [vmem:[#allocation1] ss:$4 sm:$0xff] %v1407
      %1539 = vst [vmem:[%s1492] ss:$4 sm:$0xff] %v1408
      %1540 = vst [vmem:[%s1494] ss:$4 sm:$0xff] %v1409
      %1541 = vst [vmem:[%s1496] ss:$4 sm:$0xff] %v1412
      %1542 = vst [vmem:[%s1498] ss:$4 sm:$0xff] %v1413
      %1543 = vst [vmem:[%s1500] ss:$4 sm:$0xff] %v1414
      %1544 = vst [vmem:[%s1502] ss:$4 sm:$0xff] %v1415
      %1545 = vst [vmem:[%s1504] ss:$4 sm:$0xff] %v1416
      %v1546 = vld.sshfl [vmem:[#allocation1] sm:$0xff pattern:$0x73625140]
      %v1547 = vld.sshfl [vmem:[#allocation1 + $0x20] sm:$0xff pattern:$0x73625140]
      %1548 = vst [vmem:[#allocation1] ss:$4 sm:$0xff] %v1417
      %1549 = vst [vmem:[%s1492] ss:$4 sm:$0xff] %v1418
      %1550 = vst [vmem:[%s1494] ss:$4 sm:$0xff] %v1421
      %1551 = vst [vmem:[%s1496] ss:$4 sm:$0xff] %v1422
      %1552 = vst [vmem:[%s1498] ss:$4 sm:$0xff] %v1423
      %1553 = vst [vmem:[%s1500] ss:$4 sm:$0xff] %v1424
      %1554 = vst [vmem:[%s1502] ss:$4 sm:$0xff] %v1425
      %1555 = vst [vmem:[%s1504] ss:$4 sm:$0xff] %v1426
      %v1556 = vld.sshfl [vmem:[#allocation1] sm:$0xff pattern:$0x73625140]
      %v1557 = vld.sshfl [vmem:[#allocation1 + $0x20] sm:$0xff pattern:$0x73625140]
      %1558 = vst [vmem:[#allocation1] ss:$4 sm:$0xff] %v1427
      %1559 = vst [vmem:[%s1492] ss:$4 sm:$0xff] %v1430
      %1560 = vst [vmem:[%s1494] ss:$4 sm:$0xff] %v1431
      %1561 = vst [vmem:[%s1496] ss:$4 sm:$0xff] %v1432
      %1562 = vst [vmem:[%s1498] ss:$4 sm:$0xff] %v1433
      %1563 = vst [vmem:[%s1500] ss:$4 sm:$0xff] %v1434
      %1564 = vst [vmem:[%s1502] ss:$4 sm:$0xff] %v1435
      %1565 = vst [vmem:[%s1504] ss:$4 sm:$0xff] %v1436
      %v1566 = vld.sshfl [vmem:[#allocation1] sm:$0xff pattern:$0x73625140]
      %v1567 = vld.sshfl [vmem:[#allocation1 + $0x20] sm:$0xff pattern:$0x73625140]
      %1568 = vst [vmem:[#allocation1] ss:$4 sm:$0xff] %v1439
      %1569 = vst [vmem:[%s1492] ss:$4 sm:$0xff] %v1440
      %1570 = vst [vmem:[%s1494] ss:$4 sm:$0xff] %v1441
      %1571 = vst [vmem:[%s1496] ss:$4 sm:$0xff] %v1442
      %1572 = vst [vmem:[%s1498] ss:$4 sm:$0xff] %v1443
      %1573 = vst [vmem:[%s1500] ss:$4 sm:$0xff] %v1444
      %1574 = vst [vmem:[%s1502] ss:$4 sm:$0xff] %v1445
      %1575 = vst [vmem:[%s1504] ss:$4 sm:$0xff] %v1448
      %v1576 = vld.sshfl [vmem:[#allocation1] sm:$0xff pattern:$0x73625140]
      %v1577 = vld.sshfl [vmem:[#allocation1 + $0x20] sm:$0xff pattern:$0x73625140]
      %1578 = vst [vmem:[#allocation1] ss:$4 sm:$0xff] %v1449
      %1579 = vst [vmem:[%s1492] ss:$4 sm:$0xff] %v1450
      %1580 = vst [vmem:[%s1494] ss:$4 sm:$0xff] %v1451
      %1581 = vst [vmem:[%s1496] ss:$4 sm:$0xff] %v1452
      %1582 = vst [vmem:[%s1498] ss:$4 sm:$0xff] %v1453
      %1583 = vst [vmem:[%s1500] ss:$4 sm:$0xff] %v1454
      %1584 = vst [vmem:[%s1502] ss:$4 sm:$0xff] %v1457
      %1585 = vst [vmem:[%s1504] ss:$4 sm:$0xff] %v1458
      %v1586 = vld.sshfl [vmem:[#allocation1] sm:$0xff pattern:$0x73625140]
      %v1587 = vld.sshfl [vmem:[#allocation1 + $0x20] sm:$0xff pattern:$0x73625140]
      %1588 = vst [vmem:[#allocation1] ss:$4 sm:$0xff] %v1459
      %1589 = vst [vmem:[%s1492] ss:$4 sm:$0xff] %v1460
      %1590 = vst [vmem:[%s1494] ss:$4 sm:$0xff] %v1461
      %1591 = vst [vmem:[%s1496] ss:$4 sm:$0xff] %v1462
      %1592 = vst [vmem:[%s1498] ss:$4 sm:$0xff] %v1463
      %1593 = vst [vmem:[%s1500] ss:$4 sm:$0xff] %v1466
      %1594 = vst [vmem:[%s1502] ss:$4 sm:$0xff] %v1467
      %1595 = vst [vmem:[%s1504] ss:$4 sm:$0xff] %v1468
      %v1596 = vld.sshfl [vmem:[#allocation1] sm:$0xff pattern:$0x73625140]
      %v1597 = vld.sshfl [vmem:[#allocation1 + $0x20] sm:$0xff pattern:$0x73625140]
      %1598 = vst [vmem:[#allocation1] ss:$4 sm:$0xff] %v1469
      %1599 = vst [vmem:[%s1492] ss:$4 sm:$0xff] %v1470
      %1600 = vst [vmem:[%s1494] ss:$4 sm:$0xff] %v1471
      %1601 = vst [vmem:[%s1496] ss:$4 sm:$0xff] %v1472
      %1602 = vst [vmem:[%s1498] ss:$4 sm:$0xff] %v1475
      %1603 = vst [vmem:[%s1500] ss:$4 sm:$0xff] %v1476
      %1604 = vst [vmem:[%s1502] ss:$4 sm:$0xff] %v1477
      %1605 = vst [vmem:[%s1504] ss:$4 sm:$0xff] %v1478
      %v1606 = vld.sshfl [vmem:[#allocation1] sm:$0xff pattern:$0x73625140]
      %v1607 = vld.sshfl [vmem:[#allocation1 + $0x20] sm:$0xff pattern:$0x73625140]
      %1608 = vst [vmem:[#allocation1] ss:$4 sm:$0xff] %v1479
      %1609 = vst [vmem:[%s1492] ss:$4 sm:$0xff] %v1480
      %1610 = vst [vmem:[%s1494] ss:$4 sm:$0xff] %v1481
      %1611 = vst [vmem:[%s1496] ss:$4 sm:$0xff] %v1484
      %1612 = vst [vmem:[%s1498] ss:$4 sm:$0xff] %v1485
      %1613 = vst [vmem:[%s1500] ss:$4 sm:$0xff] %v1486
      %1614 = vst [vmem:[%s1502] ss:$4 sm:$0xff] %v1487
      %1615 = vst [vmem:[%s1504] ss:$4 sm:$0xff] %v1488
      %v1616 = vld.sshfl [vmem:[#allocation1] sm:$0xff pattern:$0x73625140]
      %v1617 = vld.sshfl [vmem:[#allocation1 + $0x20] sm:$0xff pattern:$0x73625140]
      %1618 = vst [vmem:[#allocation1] ss:$4 sm:$0xff] %v1489
      %1619 = vst [vmem:[%s1492] ss:$4 sm:$0xff] %v1490
      %v1620 = vld.sshfl [vmem:[#allocation1] sm:$0xff pattern:$0x73625140]
      %v1621 = vsel %vm763, %v1506, 0
      %v1623 = vsel %vm763, %v1507, 0
      %v1625 = vsel %vm763, %v1516, 0
      %v1627 = vsel %vm763, %v1517, 0
      %v1629 = vsel %vm763, %v1526, 0
      %v1631 = vsel %vm763, %v1527, 0
      %v1633 = vsel %vm763, %v1536, 0
      %v1635 = vsel %vm763, %v1537, 0
      %v1637 = vsel %vm763, %v1546, 0
      %v1639 = vsel %vm763, %v1547, 0
      %v1641 = vsel %vm763, %v1556, 0
      %v1643 = vsel %vm763, %v1557, 0
      %v1645 = vsel %vm763, %v1566, 0
      %v1647 = vsel %vm763, %v1567, 0
      %v1649 = vsel %vm763, %v1576, 0
      %v1651 = vsel %vm763, %v1577, 0
      %v1653 = vsel %vm763, %v1586, 0
      %v1655 = vsel %vm763, %v1587, 0
      %v1657 = vsel %vm763, %v1596, 0
      %v1659 = vsel %vm763, %v1597, 0
      %v1661 = vsel %vm763, %v1606, 0
      %v1663 = vsel %vm763, %v1607, 0
      %v1665 = vsel %vm763, %v1616, 0
      %v1667 = vsel %vm763, %v1617, 0
      %v1669 = vsel %vm763, %v1620, 0
      %v1672 = vsel %vm814, %v1357, 0
      %1674 = vmatpush.msra.mxu0 0.0
      %1675 = vmatpush.msra.mxu0 0.0
      %1676 = vmatpush.msra.mxu0 0.0
      %1677 = vmatpush.msra.mxu0 0.0
      %1678 = vmatpush.msra.mxu0 0.0
      %1679 = vmatpush.msra.mxu0 0.0
      %1680 = vmatpush.msra.mxu0 0.0
      %1681 = vmatpush.msra.mxu0 0.0
      %1682 = vmatpush.msra.mxu0 0.0
      %1683 = vmatpush.msra.mxu0 0.0
      %1684 = vmatpush.msra.mxu0 0.0
      %1685 = vmatpush.msra.mxu0 0.0
      %1686 = vmatpush.msra.mxu0 0.0
      %1687 = vmatpush.msra.mxu0 0.0
      %1688 = vmatpush.msra.mxu0 0.0
      %1689 = vmatpush.msra.mxu0 %v1672
      %1690 = vmatmul.f32.gmra.mxu0 %v1621
      %v1691 = vpop.f32.mrf.mxu0
      %v1692 = vadd.f32 0.0, %v1691
      %1693 = vmatmul.f32.gmra.mxu0 %v1623
      %v1694 = vpop.f32.mrf.mxu0
      %v1695 = vadd.f32 0.0, %v1694
      %1696 = vmatmul.f32.gmra.mxu0 %v1625
      %v1697 = vpop.f32.mrf.mxu0
      %v1698 = vadd.f32 0.0, %v1697
      %1699 = vmatmul.f32.gmra.mxu0 %v1627
      %v1700 = vpop.f32.mrf.mxu0
      %v1701 = vadd.f32 0.0, %v1700
      %1702 = vmatmul.f32.gmra.mxu0 %v1629
      %v1703 = vpop.f32.mrf.mxu0
      %v1704 = vadd.f32 0.0, %v1703
      %1705 = vmatmul.f32.gmra.mxu0 %v1631
      %v1706 = vpop.f32.mrf.mxu0
      %v1707 = vadd.f32 0.0, %v1706
      %1708 = vmatmul.f32.gmra.mxu0 %v1633
      %v1709 = vpop.f32.mrf.mxu0
      %v1710 = vadd.f32 0.0, %v1709
      %1711 = vmatmul.f32.gmra.mxu0 %v1635
      %v1712 = vpop.f32.mrf.mxu0
      %v1713 = vadd.f32 0.0, %v1712
      %1714 = vmatmul.f32.gmra.mxu0 %v1637
      %v1715 = vpop.f32.mrf.mxu0
      %v1716 = vadd.f32 0.0, %v1715
      %1717 = vmatmul.f32.gmra.mxu0 %v1639
      %v1718 = vpop.f32.mrf.mxu0
      %v1719 = vadd.f32 0.0, %v1718
      %1720 = vmatmul.f32.gmra.mxu0 %v1641
      %v1721 = vpop.f32.mrf.mxu0
      %v1722 = vadd.f32 0.0, %v1721
      %1723 = vmatmul.f32.gmra.mxu0 %v1643
      %v1724 = vpop.f32.mrf.mxu0
      %v1725 = vadd.f32 0.0, %v1724
      %1726 = vmatmul.f32.gmra.mxu0 %v1645
      %v1727 = vpop.f32.mrf.mxu0
      %v1728 = vadd.f32 0.0, %v1727
      %1729 = vmatmul.f32.gmra.mxu0 %v1647
      %v1730 = vpop.f32.mrf.mxu0
      %v1731 = vadd.f32 0.0, %v1730
      %1732 = vmatmul.f32.gmra.mxu0 %v1649
      %v1733 = vpop.f32.mrf.mxu0
      %v1734 = vadd.f32 0.0, %v1733
      %1735 = vmatmul.f32.gmra.mxu0 %v1651
      %v1736 = vpop.f32.mrf.mxu0
      %v1737 = vadd.f32 0.0, %v1736
      %1738 = vmatmul.f32.gmra.mxu0 %v1653
      %v1739 = vpop.f32.mrf.mxu0
      %v1740 = vadd.f32 0.0, %v1739
      %1741 = vmatmul.f32.gmra.mxu0 %v1655
      %v1742 = vpop.f32.mrf.mxu0
      %v1743 = vadd.f32 0.0, %v1742
      %1744 = vmatmul.f32.gmra.mxu0 %v1657
      %v1745 = vpop.f32.mrf.mxu0
      %v1746 = vadd.f32 0.0, %v1745
      %1747 = vmatmul.f32.gmra.mxu0 %v1659
      %v1748 = vpop.f32.mrf.mxu0
      %v1749 = vadd.f32 0.0, %v1748
      %1750 = vmatmul.f32.gmra.mxu0 %v1661
      %v1751 = vpop.f32.mrf.mxu0
      %v1752 = vadd.f32 0.0, %v1751
      %1753 = vmatmul.f32.gmra.mxu0 %v1663
      %v1754 = vpop.f32.mrf.mxu0
      %v1755 = vadd.f32 0.0, %v1754
      %1756 = vmatmul.f32.gmra.mxu0 %v1665
      %v1757 = vpop.f32.mrf.mxu0
      %v1758 = vadd.f32 0.0, %v1757
      %1759 = vmatmul.f32.gmra.mxu0 %v1667
      %v1760 = vpop.f32.mrf.mxu0
      %v1761 = vadd.f32 0.0, %v1760
      %1762 = vmatmul.f32.gmra.mxu0 %v1669
      %v1763 = vpop.f32.mrf.mxu0
      %v1764 = vadd.f32 0.0, %v1763
      %1765 = vdwg.mxu0
      %v1791 = vrot.slane %v1692, 2
      %v1792 = vrot.slane %v1692, 4
      %v1793 = vrot.slane %v1692, 6
      %v1794 = vrot.slane %v1695, 2
      %v1795 = vrot.slane %v1695, 4
      %v1796 = vrot.slane %v1695, 6
      %v1797 = vrot.slane %v1698, 2
      %v1798 = vrot.slane %v1698, 4
      %v1799 = vrot.slane %v1698, 6
      %v1800 = vrot.slane %v1701, 2
      %v1801 = vrot.slane %v1701, 4
      %v1802 = vrot.slane %v1701, 6
      %v1803 = vrot.slane %v1704, 2
      %v1804 = vrot.slane %v1704, 4
      %v1805 = vrot.slane %v1704, 6
      %v1806 = vrot.slane %v1707, 2
      %v1807 = vrot.slane %v1707, 4
      %v1808 = vrot.slane %v1707, 6
      %v1809 = vrot.slane %v1710, 2
      %v1810 = vrot.slane %v1710, 4
      %v1811 = vrot.slane %v1710, 6
      %v1812 = vrot.slane %v1713, 2
      %v1813 = vrot.slane %v1713, 4
      %v1814 = vrot.slane %v1713, 6
      %v1815 = vrot.slane %v1716, 2
      %v1816 = vrot.slane %v1716, 4
      %v1817 = vrot.slane %v1716, 6
      %v1818 = vrot.slane %v1719, 2
      %v1819 = vrot.slane %v1719, 4
      %v1820 = vrot.slane %v1719, 6
      %v1821 = vrot.slane %v1722, 2
      %v1822 = vrot.slane %v1722, 4
      %v1823 = vrot.slane %v1722, 6
      %v1824 = vrot.slane %v1725, 2
      %v1825 = vrot.slane %v1725, 4
      %v1826 = vrot.slane %v1725, 6
      %v1827 = vrot.slane %v1728, 2
      %v1828 = vrot.slane %v1728, 4
      %v1829 = vrot.slane %v1728, 6
      %v1830 = vrot.slane %v1731, 2
      %v1831 = vrot.slane %v1731, 4
      %v1832 = vrot.slane %v1731, 6
      %v1833 = vrot.slane %v1734, 2
      %v1834 = vrot.slane %v1734, 4
      %v1835 = vrot.slane %v1734, 6
      %v1836 = vrot.slane %v1737, 2
      %v1837 = vrot.slane %v1737, 4
      %v1838 = vrot.slane %v1737, 6
      %v1839 = vrot.slane %v1740, 2
      %v1840 = vrot.slane %v1740, 4
      %v1841 = vrot.slane %v1740, 6
      %v1842 = vrot.slane %v1743, 2
      %v1843 = vrot.slane %v1743, 4
      %v1844 = vrot.slane %v1743, 6
      %v1845 = vrot.slane %v1746, 2
      %v1846 = vrot.slane %v1746, 4
      %v1847 = vrot.slane %v1746, 6
      %v1848 = vrot.slane %v1749, 2
      %v1849 = vrot.slane %v1749, 4
      %v1850 = vrot.slane %v1749, 6
      %v1851 = vrot.slane %v1752, 2
      %v1852 = vrot.slane %v1752, 4
      %v1853 = vrot.slane %v1752, 6
      %v1854 = vrot.slane %v1755, 2
      %v1855 = vrot.slane %v1755, 4
      %v1856 = vrot.slane %v1755, 6
      %v1857 = vrot.slane %v1758, 2
      %v1858 = vrot.slane %v1758, 4
      %v1859 = vrot.slane %v1758, 6
      %v1860 = vrot.slane %v1761, 2
      %v1861 = vrot.slane %v1761, 4
      %v1862 = vrot.slane %v1761, 6
      %v1863 = vrot.slane %v1764, 2
      %v1937 = vadd.f32 %v1111, %v1692
      %v1938 = vadd.f32 %v1210, %v1791
      %v1939 = vadd.f32 %v1211, %v1792
      %v1940 = vadd.f32 %v1212, %v1793
      %v1941 = vadd.f32 %v1114, %v1695
      %v1942 = vadd.f32 %v1213, %v1794
      %v1943 = vadd.f32 %v1214, %v1795
      %v1944 = vadd.f32 %v1215, %v1796
      %v1945 = vadd.f32 %v1117, %v1698
      %v1946 = vadd.f32 %v1216, %v1797
      %v1947 = vadd.f32 %v1217, %v1798
      %v1948 = vadd.f32 %v1218, %v1799
      %v1949 = vadd.f32 %v1120, %v1701
      %v1950 = vadd.f32 %v1219, %v1800
      %v1951 = vadd.f32 %v1220, %v1801
      %v1952 = vadd.f32 %v1221, %v1802
      %v1953 = vadd.f32 %v1123, %v1704
      %v1954 = vadd.f32 %v1222, %v1803
      %v1955 = vadd.f32 %v1223, %v1804
      %v1956 = vadd.f32 %v1224, %v1805
      %v1957 = vadd.f32 %v1126, %v1707
      %v1958 = vadd.f32 %v1225, %v1806
      %v1959 = vadd.f32 %v1226, %v1807
      %v1960 = vadd.f32 %v1227, %v1808
      %v1961 = vadd.f32 %v1129, %v1710
      %v1962 = vadd.f32 %v1228, %v1809
      %v1963 = vadd.f32 %v1229, %v1810
      %v1964 = vadd.f32 %v1230, %v1811
      %v1965 = vadd.f32 %v1132, %v1713
      %v1966 = vadd.f32 %v1231, %v1812
      %v1967 = vadd.f32 %v1232, %v1813
      %v1968 = vadd.f32 %v1233, %v1814
      %v1969 = vadd.f32 %v1135, %v1716
      %v1970 = vadd.f32 %v1234, %v1815
      %v1971 = vadd.f32 %v1235, %v1816
      %v1972 = vadd.f32 %v1236, %v1817
      %v1973 = vadd.f32 %v1138, %v1719
      %v1974 = vadd.f32 %v1237, %v1818
      %v1975 = vadd.f32 %v1238, %v1819
      %v1976 = vadd.f32 %v1239, %v1820
      %v1977 = vadd.f32 %v1141, %v1722
      %v1978 = vadd.f32 %v1240, %v1821
      %v1979 = vadd.f32 %v1241, %v1822
      %v1980 = vadd.f32 %v1242, %v1823
      %v1981 = vadd.f32 %v1144, %v1725
      %v1982 = vadd.f32 %v1243, %v1824
      %v1983 = vadd.f32 %v1244, %v1825
      %v1984 = vadd.f32 %v1245, %v1826
      %v1985 = vadd.f32 %v1147, %v1728
      %v1986 = vadd.f32 %v1246, %v1827
      %v1987 = vadd.f32 %v1247, %v1828
      %v1988 = vadd.f32 %v1248, %v1829
      %v1989 = vadd.f32 %v1150, %v1731
      %v1990 = vadd.f32 %v1249, %v1830
      %v1991 = vadd.f32 %v1250, %v1831
      %v1992 = vadd.f32 %v1251, %v1832
      %v1993 = vadd.f32 %v1153, %v1734
      %v1994 = vadd.f32 %v1252, %v1833
      %v1995 = vadd.f32 %v1253, %v1834
      %v1996 = vadd.f32 %v1254, %v1835
      %v1997 = vadd.f32 %v1156, %v1737
      %v1998 = vadd.f32 %v1255, %v1836
      %v1999 = vadd.f32 %v1256, %v1837
      %v2000 = vadd.f32 %v1257, %v1838
      %v2001 = vadd.f32 %v1159, %v1740
      %v2002 = vadd.f32 %v1258, %v1839
      %v2003 = vadd.f32 %v1259, %v1840
      %v2004 = vadd.f32 %v1260, %v1841
      %v2005 = vadd.f32 %v1162, %v1743
      %v2006 = vadd.f32 %v1261, %v1842
      %v2007 = vadd.f32 %v1262, %v1843
      %v2008 = vadd.f32 %v1263, %v1844
      %v2009 = vadd.f32 %v1165, %v1746
      %v2010 = vadd.f32 %v1264, %v1845
      %v2011 = vadd.f32 %v1265, %v1846
      %v2012 = vadd.f32 %v1266, %v1847
      %v2013 = vadd.f32 %v1168, %v1749
      %v2014 = vadd.f32 %v1267, %v1848
      %v2015 = vadd.f32 %v1268, %v1849
      %v2016 = vadd.f32 %v1269, %v1850
      %v2017 = vadd.f32 %v1171, %v1752
      %v2018 = vadd.f32 %v1270, %v1851
      %v2019 = vadd.f32 %v1271, %v1852
      %v2020 = vadd.f32 %v1272, %v1853
      %v2021 = vadd.f32 %v1174, %v1755
      %v2022 = vadd.f32 %v1273, %v1854
      %v2023 = vadd.f32 %v1274, %v1855
      %v2024 = vadd.f32 %v1275, %v1856
      %v2025 = vadd.f32 %v1177, %v1758
      %v2026 = vadd.f32 %v1276, %v1857
      %v2027 = vadd.f32 %v1277, %v1858
      %v2028 = vadd.f32 %v1278, %v1859
      %v2029 = vadd.f32 %v1180, %v1761
      %v2030 = vadd.f32 %v1279, %v1860
      %v2031 = vadd.f32 %v1280, %v1861
      %v2032 = vadd.f32 %v1281, %v1862
      %v2033 = vadd.f32 %v1183, %v1764
      %v2034 = vadd.f32 %v1282, %v1863
      %s2035 = scalar_lea.vmem %s1, 12
      %v2036 = vld [vmem:[%s2035] sm:$0xf]
      %v2039 = vrot.slane %v199, 2
      %v2040 = vrot.slane %v199, 4
      %v2041 = vrot.slane %v199, 6
      %v2042 = vrot.slane %v200, 2
      %v2043 = vrot.slane %v200, 4
      %2044 = vst [vmem:[#allocation1] ss:$4 sm:$0xff] %v173
      %s2045 = scalar_lea.vmem [#allocation1], 1
      %2046 = vst [vmem:[%s2045] ss:$4 sm:$0xff] %v240
      %s2047 = scalar_lea.vmem [#allocation1], 2
      %2048 = vst [vmem:[%s2047] ss:$4 sm:$0xff] %v241
      %s2049 = scalar_lea.vmem [#allocation1], 3
      %2050 = vst [vmem:[%s2049] ss:$4 sm:$0xff] %v242
      %s2051 = scalar_lea.vmem [#allocation1], 32
      %2052 = vst [vmem:[%s2051] ss:$4 sm:$0xff] %v174
      %s2053 = scalar_lea.vmem [#allocation1], 33
      %2054 = vst [vmem:[%s2053] ss:$4 sm:$0xff] %v243
      %s2055 = scalar_lea.vmem [#allocation1], 34
      %2056 = vst [vmem:[%s2055] ss:$4 sm:$0xff] %v244
      %s2057 = scalar_lea.vmem [#allocation1], 35
      %2058 = vst [vmem:[%s2057] ss:$4 sm:$0xff] %v175
      %v2059 = vld.sshfl [vmem:[#allocation1] sm:$0xff pattern:$0x73625140]
      %v2060 = vld.sshfl [vmem:[#allocation1 + $0x20] sm:$0xff pattern:$0x73625140]
      %2061 = vst [vmem:[#allocation1] ss:$4 sm:$0xff] %v246
      %2062 = vst [vmem:[%s2045] ss:$4 sm:$0xff] %v247
      %2063 = vst [vmem:[%s2047] ss:$4 sm:$0xff] %v248
      %2064 = vst [vmem:[%s2049] ss:$4 sm:$0xff] %v176
      %2065 = vst [vmem:[%s2051] ss:$4 sm:$0xff] %v249
      %2066 = vst [vmem:[%s2053] ss:$4 sm:$0xff] %v250
      %2067 = vst [vmem:[%s2055] ss:$4 sm:$0xff] %v177
      %2068 = vst [vmem:[%s2057] ss:$4 sm:$0xff] %v252
      %v2069 = vld.sshfl [vmem:[#allocation1] sm:$0xff pattern:$0x73625140]
      %v2070 = vld.sshfl [vmem:[#allocation1 + $0x20] sm:$0xff pattern:$0x73625140]
      %2071 = vst [vmem:[#allocation1] ss:$4 sm:$0xff] %v253
      %2072 = vst [vmem:[%s2045] ss:$4 sm:$0xff] %v254
      %2073 = vst [vmem:[%s2047] ss:$4 sm:$0xff] %v178
      %2074 = vst [vmem:[%s2049] ss:$4 sm:$0xff] %v255
      %2075 = vst [vmem:[%s2051] ss:$4 sm:$0xff] %v256
      %2076 = vst [vmem:[%s2053] ss:$4 sm:$0xff] %v179
      %2077 = vst [vmem:[%s2055] ss:$4 sm:$0xff] %v258
      %2078 = vst [vmem:[%s2057] ss:$4 sm:$0xff] %v259
      %v2079 = vld.sshfl [vmem:[#allocation1] sm:$0xff pattern:$0x73625140]
      %v2080 = vld.sshfl [vmem:[#allocation1 + $0x20] sm:$0xff pattern:$0x73625140]
      %2081 = vst [vmem:[#allocation1] ss:$4 sm:$0xff] %v260
      %2082 = vst [vmem:[%s2045] ss:$4 sm:$0xff] %v180
      %2083 = vst [vmem:[%s2047] ss:$4 sm:$0xff] %v261
      %2084 = vst [vmem:[%s2049] ss:$4 sm:$0xff] %v262
      %2085 = vst [vmem:[%s2051] ss:$4 sm:$0xff] %v181
      %2086 = vst [vmem:[%s2053] ss:$4 sm:$0xff] %v264
      %2087 = vst [vmem:[%s2055] ss:$4 sm:$0xff] %v265
      %2088 = vst [vmem:[%s2057] ss:$4 sm:$0xff] %v266
      %v2089 = vld.sshfl [vmem:[#allocation1] sm:$0xff pattern:$0x73625140]
      %v2090 = vld.sshfl [vmem:[#allocation1 + $0x20] sm:$0xff pattern:$0x73625140]
      %2091 = vst [vmem:[#allocation1] ss:$4 sm:$0xff] %v182
      %2092 = vst [vmem:[%s2045] ss:$4 sm:$0xff] %v267
      %2093 = vst [vmem:[%s2047] ss:$4 sm:$0xff] %v268
      %2094 = vst [vmem:[%s2049] ss:$4 sm:$0xff] %v183
      %2095 = vst [vmem:[%s2051] ss:$4 sm:$0xff] %v270
      %2096 = vst [vmem:[%s2053] ss:$4 sm:$0xff] %v271
      %2097 = vst [vmem:[%s2055] ss:$4 sm:$0xff] %v272
      %2098 = vst [vmem:[%s2057] ss:$4 sm:$0xff] %v184
      %v2099 = vld.sshfl [vmem:[#allocation1] sm:$0xff pattern:$0x73625140]
      %v2100 = vld.sshfl [vmem:[#allocation1 + $0x20] sm:$0xff pattern:$0x73625140]
      %2101 = vst [vmem:[#allocation1] ss:$4 sm:$0xff] %v273
      %2102 = vst [vmem:[%s2045] ss:$4 sm:$0xff] %v274
      %2103 = vst [vmem:[%s2047] ss:$4 sm:$0xff] %v185
      %2104 = vst [vmem:[%s2049] ss:$4 sm:$0xff] %v276
      %2105 = vst [vmem:[%s2051] ss:$4 sm:$0xff] %v277
      %2106 = vst [vmem:[%s2053] ss:$4 sm:$0xff] %v278
      %2107 = vst [vmem:[%s2055] ss:$4 sm:$0xff] %v186
      %2108 = vst [vmem:[%s2057] ss:$4 sm:$0xff] %v279
      %v2109 = vld.sshfl [vmem:[#allocation1] sm:$0xff pattern:$0x73625140]
      %v2110 = vld.sshfl [vmem:[#allocation1 + $0x20] sm:$0xff pattern:$0x73625140]
      %2111 = vst [vmem:[#allocation1] ss:$4 sm:$0xff] %v280
      %2112 = vst [vmem:[%s2045] ss:$4 sm:$0xff] %v187
      %2113 = vst [vmem:[%s2047] ss:$4 sm:$0xff] %v282
      %2114 = vst [vmem:[%s2049] ss:$4 sm:$0xff] %v283
      %2115 = vst [vmem:[%s2051] ss:$4 sm:$0xff] %v284
      %2116 = vst [vmem:[%s2053] ss:$4 sm:$0xff] %v188
      %2117 = vst [vmem:[%s2055] ss:$4 sm:$0xff] %v285
      %2118 = vst [vmem:[%s2057] ss:$4 sm:$0xff] %v286
      %v2119 = vld.sshfl [vmem:[#allocation1] sm:$0xff pattern:$0x73625140]
      %v2120 = vld.sshfl [vmem:[#allocation1 + $0x20] sm:$0xff pattern:$0x73625140]
      %2121 = vst [vmem:[#allocation1] ss:$4 sm:$0xff] %v189
      %2122 = vst [vmem:[%s2045] ss:$4 sm:$0xff] %v288
      %2123 = vst [vmem:[%s2047] ss:$4 sm:$0xff] %v289
      %2124 = vst [vmem:[%s2049] ss:$4 sm:$0xff] %v290
      %2125 = vst [vmem:[%s2051] ss:$4 sm:$0xff] %v190
      %2126 = vst [vmem:[%s2053] ss:$4 sm:$0xff] %v291
      %2127 = vst [vmem:[%s2055] ss:$4 sm:$0xff] %v292
      %2128 = vst [vmem:[%s2057] ss:$4 sm:$0xff] %v191
      %v2129 = vld.sshfl [vmem:[#allocation1] sm:$0xff pattern:$0x73625140]
      %v2130 = vld.sshfl [vmem:[#allocation1 + $0x20] sm:$0xff pattern:$0x73625140]
      %2131 = vst [vmem:[#allocation1] ss:$4 sm:$0xff] %v294
      %2132 = vst [vmem:[%s2045] ss:$4 sm:$0xff] %v295
      %2133 = vst [vmem:[%s2047] ss:$4 sm:$0xff] %v296
      %2134 = vst [vmem:[%s2049] ss:$4 sm:$0xff] %v192
      %2135 = vst [vmem:[%s2051] ss:$4 sm:$0xff] %v297
      %2136 = vst [vmem:[%s2053] ss:$4 sm:$0xff] %v298
      %2137 = vst [vmem:[%s2055] ss:$4 sm:$0xff] %v193
      %2138 = vst [vmem:[%s2057] ss:$4 sm:$0xff] %v300
      %v2139 = vld.sshfl [vmem:[#allocation1] sm:$0xff pattern:$0x73625140]
      %v2140 = vld.sshfl [vmem:[#allocation1 + $0x20] sm:$0xff pattern:$0x73625140]
      %2141 = vst [vmem:[#allocation1] ss:$4 sm:$0xff] %v301
      %2142 = vst [vmem:[%s2045] ss:$4 sm:$0xff] %v302
      %2143 = vst [vmem:[%s2047] ss:$4 sm:$0xff] %v194
      %2144 = vst [vmem:[%s2049] ss:$4 sm:$0xff] %v303
      %2145 = vst [vmem:[%s2051] ss:$4 sm:$0xff] %v304
      %2146 = vst [vmem:[%s2053] ss:$4 sm:$0xff] %v195
      %2147 = vst [vmem:[%s2055] ss:$4 sm:$0xff] %v306
      %2148 = vst [vmem:[%s2057] ss:$4 sm:$0xff] %v307
      %v2149 = vld.sshfl [vmem:[#allocation1] sm:$0xff pattern:$0x73625140]
      %v2150 = vld.sshfl [vmem:[#allocation1 + $0x20] sm:$0xff pattern:$0x73625140]
      %2151 = vst [vmem:[#allocation1] ss:$4 sm:$0xff] %v308
      %2152 = vst [vmem:[%s2045] ss:$4 sm:$0xff] %v196
      %2153 = vst [vmem:[%s2047] ss:$4 sm:$0xff] %v309
      %2154 = vst [vmem:[%s2049] ss:$4 sm:$0xff] %v310
      %2155 = vst [vmem:[%s2051] ss:$4 sm:$0xff] %v197
      %2156 = vst [vmem:[%s2053] ss:$4 sm:$0xff] %v312
      %2157 = vst [vmem:[%s2055] ss:$4 sm:$0xff] %v313
      %2158 = vst [vmem:[%s2057] ss:$4 sm:$0xff] %v314
      %v2159 = vld.sshfl [vmem:[#allocation1] sm:$0xff pattern:$0x73625140]
      %v2160 = vld.sshfl [vmem:[#allocation1 + $0x20] sm:$0xff pattern:$0x73625140]
      %2161 = vst [vmem:[#allocation1] ss:$4 sm:$0xff] %v198
      %2162 = vst [vmem:[%s2045] ss:$4 sm:$0xff] %v315
      %2163 = vst [vmem:[%s2047] ss:$4 sm:$0xff] %v316
      %2164 = vst [vmem:[%s2049] ss:$4 sm:$0xff] %v199
      %2165 = vst [vmem:[%s2051] ss:$4 sm:$0xff] %v2039
      %2166 = vst [vmem:[%s2053] ss:$4 sm:$0xff] %v2040
      %2167 = vst [vmem:[%s2055] ss:$4 sm:$0xff] %v2041
      %2168 = vst [vmem:[%s2057] ss:$4 sm:$0xff] %v200
      %v2169 = vld.sshfl [vmem:[#allocation1] sm:$0xff pattern:$0x73625140]
      %v2170 = vld.sshfl [vmem:[#allocation1 + $0x20] sm:$0xff pattern:$0x73625140]
      %2171 = vst [vmem:[#allocation1] ss:$4 sm:$0xff] %v2042
      %2172 = vst [vmem:[%s2045] ss:$4 sm:$0xff] %v2043
      %v2173 = vld.sshfl [vmem:[#allocation1] sm:$0xff pattern:$0x73625140]
      %v2174 = vsel %vm763, %v2059, 0
      %v2176 = vsel %vm763, %v2060, 0
      %v2178 = vsel %vm763, %v2069, 0
      %v2180 = vsel %vm763, %v2070, 0
      %v2182 = vsel %vm763, %v2079, 0
      %v2184 = vsel %vm763, %v2080, 0
      %v2186 = vsel %vm763, %v2089, 0
      %v2188 = vsel %vm763, %v2090, 0
      %v2190 = vsel %vm763, %v2099, 0
      %v2192 = vsel %vm763, %v2100, 0
      %v2194 = vsel %vm763, %v2109, 0
      %v2196 = vsel %vm763, %v2110, 0
      %v2198 = vsel %vm763, %v2119, 0
      %v2200 = vsel %vm763, %v2120, 0
      %v2202 = vsel %vm763, %v2129, 0
      %v2204 = vsel %vm763, %v2130, 0
      %v2206 = vsel %vm763, %v2139, 0
      %v2208 = vsel %vm763, %v2140, 0
      %v2210 = vsel %vm763, %v2149, 0
      %v2212 = vsel %vm763, %v2150, 0
      %v2214 = vsel %vm763, %v2159, 0
      %v2216 = vsel %vm763, %v2160, 0
      %v2218 = vsel %vm763, %v2169, 0
      %v2220 = vsel %vm763, %v2170, 0
      %v2222 = vsel %vm763, %v2173, 0
      %v2225 = vsel %vm814, %v2036, 0
      %2227 = vmatpush.msra.mxu0 0.0
      %2228 = vmatpush.msra.mxu0 0.0
      %2229 = vmatpush.msra.mxu0 0.0
      %2230 = vmatpush.msra.mxu0 0.0
      %2231 = vmatpush.msra.mxu0 0.0
      %2232 = vmatpush.msra.mxu0 0.0
      %2233 = vmatpush.msra.mxu0 0.0
      %2234 = vmatpush.msra.mxu0 0.0
      %2235 = vmatpush.msra.mxu0 0.0
      %2236 = vmatpush.msra.mxu0 0.0
      %2237 = vmatpush.msra.mxu0 0.0
      %2238 = vmatpush.msra.mxu0 0.0
      %2239 = vmatpush.msra.mxu0 0.0
      %2240 = vmatpush.msra.mxu0 0.0
      %2241 = vmatpush.msra.mxu0 0.0
      %2242 = vmatpush.msra.mxu0 %v2225
      %2243 = vmatmul.f32.gmra.mxu0 %v2174
      %v2244 = vpop.f32.mrf.mxu0
      %v2245 = vadd.f32 0.0, %v2244
      %2246 = vmatmul.f32.gmra.mxu0 %v2176
      %v2247 = vpop.f32.mrf.mxu0
      %v2248 = vadd.f32 0.0, %v2247
      %2249 = vmatmul.f32.gmra.mxu0 %v2178
      %v2250 = vpop.f32.mrf.mxu0
      %v2251 = vadd.f32 0.0, %v2250
      %2252 = vmatmul.f32.gmra.mxu0 %v2180
      %v2253 = vpop.f32.mrf.mxu0
      %v2254 = vadd.f32 0.0, %v2253
      %2255 = vmatmul.f32.gmra.mxu0 %v2182
      %v2256 = vpop.f32.mrf.mxu0
      %v2257 = vadd.f32 0.0, %v2256
      %2258 = vmatmul.f32.gmra.mxu0 %v2184
      %v2259 = vpop.f32.mrf.mxu0
      %v2260 = vadd.f32 0.0, %v2259
      %2261 = vmatmul.f32.gmra.mxu0 %v2186
      %v2262 = vpop.f32.mrf.mxu0
      %v2263 = vadd.f32 0.0, %v2262
      %2264 = vmatmul.f32.gmra.mxu0 %v2188
      %v2265 = vpop.f32.mrf.mxu0
      %v2266 = vadd.f32 0.0, %v2265
      %2267 = vmatmul.f32.gmra.mxu0 %v2190
      %v2268 = vpop.f32.mrf.mxu0
      %v2269 = vadd.f32 0.0, %v2268
      %2270 = vmatmul.f32.gmra.mxu0 %v2192
      %v2271 = vpop.f32.mrf.mxu0
      %v2272 = vadd.f32 0.0, %v2271
      %2273 = vmatmul.f32.gmra.mxu0 %v2194
      %v2274 = vpop.f32.mrf.mxu0
      %v2275 = vadd.f32 0.0, %v2274
      %2276 = vmatmul.f32.gmra.mxu0 %v2196
      %v2277 = vpop.f32.mrf.mxu0
      %v2278 = vadd.f32 0.0, %v2277
      %2279 = vmatmul.f32.gmra.mxu0 %v2198
      %v2280 = vpop.f32.mrf.mxu0
      %v2281 = vadd.f32 0.0, %v2280
      %2282 = vmatmul.f32.gmra.mxu0 %v2200
      %v2283 = vpop.f32.mrf.mxu0
      %v2284 = vadd.f32 0.0, %v2283
      %2285 = vmatmul.f32.gmra.mxu0 %v2202
      %v2286 = vpop.f32.mrf.mxu0
      %v2287 = vadd.f32 0.0, %v2286
      %2288 = vmatmul.f32.gmra.mxu0 %v2204
      %v2289 = vpop.f32.mrf.mxu0
      %v2290 = vadd.f32 0.0, %v2289
      %2291 = vmatmul.f32.gmra.mxu0 %v2206
      %v2292 = vpop.f32.mrf.mxu0
      %v2293 = vadd.f32 0.0, %v2292
      %2294 = vmatmul.f32.gmra.mxu0 %v2208
      %v2295 = vpop.f32.mrf.mxu0
      %v2296 = vadd.f32 0.0, %v2295
      %2297 = vmatmul.f32.gmra.mxu0 %v2210
      %v2298 = vpop.f32.mrf.mxu0
      %v2299 = vadd.f32 0.0, %v2298
      %2300 = vmatmul.f32.gmra.mxu0 %v2212
      %v2301 = vpop.f32.mrf.mxu0
      %v2302 = vadd.f32 0.0, %v2301
      %2303 = vmatmul.f32.gmra.mxu0 %v2214
      %v2304 = vpop.f32.mrf.mxu0
      %v2305 = vadd.f32 0.0, %v2304
      %2306 = vmatmul.f32.gmra.mxu0 %v2216
      %v2307 = vpop.f32.mrf.mxu0
      %v2308 = vadd.f32 0.0, %v2307
      %2309 = vmatmul.f32.gmra.mxu0 %v2218
      %v2310 = vpop.f32.mrf.mxu0
      %v2311 = vadd.f32 0.0, %v2310
      %2312 = vmatmul.f32.gmra.mxu0 %v2220
      %v2313 = vpop.f32.mrf.mxu0
      %v2314 = vadd.f32 0.0, %v2313
      %2315 = vmatmul.f32.gmra.mxu0 %v2222
      %v2316 = vpop.f32.mrf.mxu0
      %v2317 = vadd.f32 0.0, %v2316
      %2318 = vdwg.mxu0
      %v2344 = vrot.slane %v2245, 2
      %v2345 = vrot.slane %v2245, 4
      %v2346 = vrot.slane %v2245, 6
      %v2347 = vrot.slane %v2248, 2
      %v2348 = vrot.slane %v2248, 4
      %v2349 = vrot.slane %v2248, 6
      %v2350 = vrot.slane %v2251, 2
      %v2351 = vrot.slane %v2251, 4
      %v2352 = vrot.slane %v2251, 6
      %v2353 = vrot.slane %v2254, 2
      %v2354 = vrot.slane %v2254, 4
      %v2355 = vrot.slane %v2254, 6
      %v2356 = vrot.slane %v2257, 2
      %v2357 = vrot.slane %v2257, 4
      %v2358 = vrot.slane %v2257, 6
      %v2359 = vrot.slane %v2260, 2
      %v2360 = vrot.slane %v2260, 4
      %v2361 = vrot.slane %v2260, 6
      %v2362 = vrot.slane %v2263, 2
      %v2363 = vrot.slane %v2263, 4
      %v2364 = vrot.slane %v2263, 6
      %v2365 = vrot.slane %v2266, 2
      %v2366 = vrot.slane %v2266, 4
      %v2367 = vrot.slane %v2266, 6
      %v2368 = vrot.slane %v2269, 2
      %v2369 = vrot.slane %v2269, 4
      %v2370 = vrot.slane %v2269, 6
      %v2371 = vrot.slane %v2272, 2
      %v2372 = vrot.slane %v2272, 4
      %v2373 = vrot.slane %v2272, 6
      %v2374 = vrot.slane %v2275, 2
      %v2375 = vrot.slane %v2275, 4
      %v2376 = vrot.slane %v2275, 6
      %v2377 = vrot.slane %v2278, 2
      %v2378 = vrot.slane %v2278, 4
      %v2379 = vrot.slane %v2278, 6
      %v2380 = vrot.slane %v2281, 2
      %v2381 = vrot.slane %v2281, 4
      %v2382 = vrot.slane %v2281, 6
      %v2383 = vrot.slane %v2284, 2
      %v2384 = vrot.slane %v2284, 4
      %v2385 = vrot.slane %v2284, 6
      %v2386 = vrot.slane %v2287, 2
      %v2387 = vrot.slane %v2287, 4
      %v2388 = vrot.slane %v2287, 6
      %v2389 = vrot.slane %v2290, 2
      %v2390 = vrot.slane %v2290, 4
      %v2391 = vrot.slane %v2290, 6
      %v2392 = vrot.slane %v2293, 2
      %v2393 = vrot.slane %v2293, 4
      %v2394 = vrot.slane %v2293, 6
      %v2395 = vrot.slane %v2296, 2
      %v2396 = vrot.slane %v2296, 4
      %v2397 = vrot.slane %v2296, 6
      %v2398 = vrot.slane %v2299, 2
      %v2399 = vrot.slane %v2299, 4
      %v2400 = vrot.slane %v2299, 6
      %v2401 = vrot.slane %v2302, 2
      %v2402 = vrot.slane %v2302, 4
      %v2403 = vrot.slane %v2302, 6
      %v2404 = vrot.slane %v2305, 2
      %v2405 = vrot.slane %v2305, 4
      %v2406 = vrot.slane %v2305, 6
      %v2407 = vrot.slane %v2308, 2
      %v2408 = vrot.slane %v2308, 4
      %v2409 = vrot.slane %v2308, 6
      %v2410 = vrot.slane %v2311, 2
      %v2411 = vrot.slane %v2311, 4
      %v2412 = vrot.slane %v2311, 6
      %v2413 = vrot.slane %v2314, 2
      %v2414 = vrot.slane %v2314, 4
      %v2415 = vrot.slane %v2314, 6
      %v2416 = vrot.slane %v2317, 2
      %v2490 = vadd.f32 %v1937, %v2245
      %v2491 = vadd.f32 %v1938, %v2344
      %v2492 = vadd.f32 %v1939, %v2345
      %v2493 = vadd.f32 %v1940, %v2346
      %v2494 = vadd.f32 %v1941, %v2248
      %v2495 = vadd.f32 %v1942, %v2347
      %v2496 = vadd.f32 %v1943, %v2348
      %v2497 = vadd.f32 %v1944, %v2349
      %v2498 = vadd.f32 %v1945, %v2251
      %v2499 = vadd.f32 %v1946, %v2350
      %v2500 = vadd.f32 %v1947, %v2351
      %v2501 = vadd.f32 %v1948, %v2352
      %v2502 = vadd.f32 %v1949, %v2254
      %v2503 = vadd.f32 %v1950, %v2353
      %v2504 = vadd.f32 %v1951, %v2354
      %v2505 = vadd.f32 %v1952, %v2355
      %v2506 = vadd.f32 %v1953, %v2257
      %v2507 = vadd.f32 %v1954, %v2356
      %v2508 = vadd.f32 %v1955, %v2357
      %v2509 = vadd.f32 %v1956, %v2358
      %v2510 = vadd.f32 %v1957, %v2260
      %v2511 = vadd.f32 %v1958, %v2359
      %v2512 = vadd.f32 %v1959, %v2360
      %v2513 = vadd.f32 %v1960, %v2361
      %v2514 = vadd.f32 %v1961, %v2263
      %v2515 = vadd.f32 %v1962, %v2362
      %v2516 = vadd.f32 %v1963, %v2363
      %v2517 = vadd.f32 %v1964, %v2364
      %v2518 = vadd.f32 %v1965, %v2266
      %v2519 = vadd.f32 %v1966, %v2365
      %v2520 = vadd.f32 %v1967, %v2366
      %v2521 = vadd.f32 %v1968, %v2367
      %v2522 = vadd.f32 %v1969, %v2269
      %v2523 = vadd.f32 %v1970, %v2368
      %v2524 = vadd.f32 %v1971, %v2369
      %v2525 = vadd.f32 %v1972, %v2370
      %v2526 = vadd.f32 %v1973, %v2272
      %v2527 = vadd.f32 %v1974, %v2371
      %v2528 = vadd.f32 %v1975, %v2372
      %v2529 = vadd.f32 %v1976, %v2373
      %v2530 = vadd.f32 %v1977, %v2275
      %v2531 = vadd.f32 %v1978, %v2374
      %v2532 = vadd.f32 %v1979, %v2375
      %v2533 = vadd.f32 %v1980, %v2376
      %v2534 = vadd.f32 %v1981, %v2278
      %v2535 = vadd.f32 %v1982, %v2377
      %v2536 = vadd.f32 %v1983, %v2378
      %v2537 = vadd.f32 %v1984, %v2379
      %v2538 = vadd.f32 %v1985, %v2281
      %v2539 = vadd.f32 %v1986, %v2380
      %v2540 = vadd.f32 %v1987, %v2381
      %v2541 = vadd.f32 %v1988, %v2382
      %v2542 = vadd.f32 %v1989, %v2284
      %v2543 = vadd.f32 %v1990, %v2383
      %v2544 = vadd.f32 %v1991, %v2384
      %v2545 = vadd.f32 %v1992, %v2385
      %v2546 = vadd.f32 %v1993, %v2287
      %v2547 = vadd.f32 %v1994, %v2386
      %v2548 = vadd.f32 %v1995, %v2387
      %v2549 = vadd.f32 %v1996, %v2388
      %v2550 = vadd.f32 %v1997, %v2290
      %v2551 = vadd.f32 %v1998, %v2389
      %v2552 = vadd.f32 %v1999, %v2390
      %v2553 = vadd.f32 %v2000, %v2391
      %v2554 = vadd.f32 %v2001, %v2293
      %v2555 = vadd.f32 %v2002, %v2392
      %v2556 = vadd.f32 %v2003, %v2393
      %v2557 = vadd.f32 %v2004, %v2394
      %v2558 = vadd.f32 %v2005, %v2296
      %v2559 = vadd.f32 %v2006, %v2395
      %v2560 = vadd.f32 %v2007, %v2396
      %v2561 = vadd.f32 %v2008, %v2397
      %v2562 = vadd.f32 %v2009, %v2299
      %v2563 = vadd.f32 %v2010, %v2398
      %v2564 = vadd.f32 %v2011, %v2399
      %v2565 = vadd.f32 %v2012, %v2400
      %v2566 = vadd.f32 %v2013, %v2302
      %v2567 = vadd.f32 %v2014, %v2401
      %v2568 = vadd.f32 %v2015, %v2402
      %v2569 = vadd.f32 %v2016, %v2403
      %v2570 = vadd.f32 %v2017, %v2305
      %v2571 = vadd.f32 %v2018, %v2404
      %v2572 = vadd.f32 %v2019, %v2405
      %v2573 = vadd.f32 %v2020, %v2406
      %v2574 = vadd.f32 %v2021, %v2308
      %v2575 = vadd.f32 %v2022, %v2407
      %v2576 = vadd.f32 %v2023, %v2408
      %v2577 = vadd.f32 %v2024, %v2409
      %v2578 = vadd.f32 %v2025, %v2311
      %v2579 = vadd.f32 %v2026, %v2410
      %v2580 = vadd.f32 %v2027, %v2411
      %v2581 = vadd.f32 %v2028, %v2412
      %v2582 = vadd.f32 %v2029, %v2314
      %v2583 = vadd.f32 %v2030, %v2413
      %v2584 = vadd.f32 %v2031, %v2414
      %v2585 = vadd.f32 %v2032, %v2415
      %v2586 = vadd.f32 %v2033, %v2317
      %v2587 = vadd.f32 %v2034, %v2416
      %s2588 = scalar_lea.vmem %s1, 16
      %v2589 = vld [vmem:[%s2588] sm:$0xf]
      %v2590 = vrot.slane %v200, 6
      %v2591 = vrot.slane %v199, 7
      %v2592 = vrot.slane %v2591, 2
      %v2593 = vrot.slane %v2039, 7
      %v2594 = vsel %vm324, %v2592, %v2593
      %v2595 = vrot.slane %v2593, 2
      %v2596 = vrot.slane %v2040, 7
      %v2597 = vsel %vm324, %v2595, %v2596
      %v2598 = vrot.slane %v2596, 2
      %v2599 = vrot.slane %v2041, 7
      %v2600 = vsel %vm324, %v2598, %v2599
      %v2601 = vrot.slane %v2599, 2
      %v2602 = vrot.slane %v200, 7
      %v2603 = vsel %vm324, %v2601, %v2602
      %v2604 = vrot.slane %v2602, 2
      %v2605 = vrot.slane %v2042, 7
      %v2606 = vsel %vm324, %v2604, %v2605
      %v2607 = vrot.slane %v2605, 2
      %v2608 = vrot.slane %v2043, 7
      %v2609 = vsel %vm324, %v2607, %v2608
      %v2610 = vrot.slane %v2608, 2
      %v2611 = vrot.slane %v2590, 7
      %v2612 = vsel %vm324, %v2610, %v2611
      %2613 = vst [vmem:[#allocation1] ss:$4 sm:$0xff] %v350
      %s2614 = scalar_lea.vmem [#allocation1], 1
      %2615 = vst [vmem:[%s2614] ss:$4 sm:$0xff] %v353
      %s2616 = scalar_lea.vmem [#allocation1], 2
      %2617 = vst [vmem:[%s2616] ss:$4 sm:$0xff] %v356
      %s2618 = scalar_lea.vmem [#allocation1], 3
      %2619 = vst [vmem:[%s2618] ss:$4 sm:$0xff] %v359
      %s2620 = scalar_lea.vmem [#allocation1], 32
      %2621 = vst [vmem:[%s2620] ss:$4 sm:$0xff] %v362
      %s2622 = scalar_lea.vmem [#allocation1], 33
      %2623 = vst [vmem:[%s2622] ss:$4 sm:$0xff] %v365
      %s2624 = scalar_lea.vmem [#allocation1], 34
      %2625 = vst [vmem:[%s2624] ss:$4 sm:$0xff] %v368
      %s2626 = scalar_lea.vmem [#allocation1], 35
      %2627 = vst [vmem:[%s2626] ss:$4 sm:$0xff] %v372
      %v2628 = vld.sshfl [vmem:[#allocation1] sm:$0xff pattern:$0x73625140]
      %v2629 = vld.sshfl [vmem:[#allocation1 + $0x20] sm:$0xff pattern:$0x73625140]
      %2630 = vst [vmem:[#allocation1] ss:$4 sm:$0xff] %v375
      %2631 = vst [vmem:[%s2614] ss:$4 sm:$0xff] %v378
      %2632 = vst [vmem:[%s2616] ss:$4 sm:$0xff] %v381
      %2633 = vst [vmem:[%s2618] ss:$4 sm:$0xff] %v384
      %2634 = vst [vmem:[%s2620] ss:$4 sm:$0xff] %v387
      %2635 = vst [vmem:[%s2622] ss:$4 sm:$0xff] %v390
      %2636 = vst [vmem:[%s2624] ss:$4 sm:$0xff] %v394
      %2637 = vst [vmem:[%s2626] ss:$4 sm:$0xff] %v397
      %v2638 = vld.sshfl [vmem:[#allocation1] sm:$0xff pattern:$0x73625140]
      %v2639 = vld.sshfl [vmem:[#allocation1 + $0x20] sm:$0xff pattern:$0x73625140]
      %2640 = vst [vmem:[#allocation1] ss:$4 sm:$0xff] %v400
      %2641 = vst [vmem:[%s2614] ss:$4 sm:$0xff] %v403
      %2642 = vst [vmem:[%s2616] ss:$4 sm:$0xff] %v406
      %2643 = vst [vmem:[%s2618] ss:$4 sm:$0xff] %v409
      %2644 = vst [vmem:[%s2620] ss:$4 sm:$0xff] %v412
      %2645 = vst [vmem:[%s2622] ss:$4 sm:$0xff] %v416
      %2646 = vst [vmem:[%s2624] ss:$4 sm:$0xff] %v419
      %2647 = vst [vmem:[%s2626] ss:$4 sm:$0xff] %v422
      %v2648 = vld.sshfl [vmem:[#allocation1] sm:$0xff pattern:$0x73625140]
      %v2649 = vld.sshfl [vmem:[#allocation1 + $0x20] sm:$0xff pattern:$0x73625140]
      %2650 = vst [vmem:[#allocation1] ss:$4 sm:$0xff] %v425
      %2651 = vst [vmem:[%s2614] ss:$4 sm:$0xff] %v428
      %2652 = vst [vmem:[%s2616] ss:$4 sm:$0xff] %v431
      %2653 = vst [vmem:[%s2618] ss:$4 sm:$0xff] %v434
      %2654 = vst [vmem:[%s2620] ss:$4 sm:$0xff] %v438
      %2655 = vst [vmem:[%s2622] ss:$4 sm:$0xff] %v441
      %2656 = vst [vmem:[%s2624] ss:$4 sm:$0xff] %v444
      %2657 = vst [vmem:[%s2626] ss:$4 sm:$0xff] %v447
      %v2658 = vld.sshfl [vmem:[#allocation1] sm:$0xff pattern:$0x73625140]
      %v2659 = vld.sshfl [vmem:[#allocation1 + $0x20] sm:$0xff pattern:$0x73625140]
      %2660 = vst [vmem:[#allocation1] ss:$4 sm:$0xff] %v450
      %2661 = vst [vmem:[%s2614] ss:$4 sm:$0xff] %v453
      %2662 = vst [vmem:[%s2616] ss:$4 sm:$0xff] %v456
      %2663 = vst [vmem:[%s2618] ss:$4 sm:$0xff] %v460
      %2664 = vst [vmem:[%s2620] ss:$4 sm:$0xff] %v463
      %2665 = vst [vmem:[%s2622] ss:$4 sm:$0xff] %v466
      %2666 = vst [vmem:[%s2624] ss:$4 sm:$0xff] %v469
      %2667 = vst [vmem:[%s2626] ss:$4 sm:$0xff] %v472
      %v2668 = vld.sshfl [vmem:[#allocation1] sm:$0xff pattern:$0x73625140]
      %v2669 = vld.sshfl [vmem:[#allocation1 + $0x20] sm:$0xff pattern:$0x73625140]
      %2670 = vst [vmem:[#allocation1] ss:$4 sm:$0xff] %v475
      %2671 = vst [vmem:[%s2614] ss:$4 sm:$0xff] %v478
      %2672 = vst [vmem:[%s2616] ss:$4 sm:$0xff] %v482
      %2673 = vst [vmem:[%s2618] ss:$4 sm:$0xff] %v485
      %2674 = vst [vmem:[%s2620] ss:$4 sm:$0xff] %v488
      %2675 = vst [vmem:[%s2622] ss:$4 sm:$0xff] %v491
      %2676 = vst [vmem:[%s2624] ss:$4 sm:$0xff] %v494
      %2677 = vst [vmem:[%s2626] ss:$4 sm:$0xff] %v497
      %v2678 = vld.sshfl [vmem:[#allocation1] sm:$0xff pattern:$0x73625140]
      %v2679 = vld.sshfl [vmem:[#allocation1 + $0x20] sm:$0xff pattern:$0x73625140]
      %2680 = vst [vmem:[#allocation1] ss:$4 sm:$0xff] %v500
      %2681 = vst [vmem:[%s2614] ss:$4 sm:$0xff] %v504
      %2682 = vst [vmem:[%s2616] ss:$4 sm:$0xff] %v507
      %2683 = vst [vmem:[%s2618] ss:$4 sm:$0xff] %v510
      %2684 = vst [vmem:[%s2620] ss:$4 sm:$0xff] %v513
      %2685 = vst [vmem:[%s2622] ss:$4 sm:$0xff] %v516
      %2686 = vst [vmem:[%s2624] ss:$4 sm:$0xff] %v519
      %2687 = vst [vmem:[%s2626] ss:$4 sm:$0xff] %v522
      %v2688 = vld.sshfl [vmem:[#allocation1] sm:$0xff pattern:$0x73625140]
      %v2689 = vld.sshfl [vmem:[#allocation1 + $0x20] sm:$0xff pattern:$0x73625140]
      %2690 = vst [vmem:[#allocation1] ss:$4 sm:$0xff] %v526
      %2691 = vst [vmem:[%s2614] ss:$4 sm:$0xff] %v529
      %2692 = vst [vmem:[%s2616] ss:$4 sm:$0xff] %v532
      %2693 = vst [vmem:[%s2618] ss:$4 sm:$0xff] %v535
      %2694 = vst [vmem:[%s2620] ss:$4 sm:$0xff] %v538
      %2695 = vst [vmem:[%s2622] ss:$4 sm:$0xff] %v541
      %2696 = vst [vmem:[%s2624] ss:$4 sm:$0xff] %v544
      %2697 = vst [vmem:[%s2626] ss:$4 sm:$0xff] %v548
      %v2698 = vld.sshfl [vmem:[#allocation1] sm:$0xff pattern:$0x73625140]
      %v2699 = vld.sshfl [vmem:[#allocation1 + $0x20] sm:$0xff pattern:$0x73625140]
      %2700 = vst [vmem:[#allocation1] ss:$4 sm:$0xff] %v551
      %2701 = vst [vmem:[%s2614] ss:$4 sm:$0xff] %v554
      %2702 = vst [vmem:[%s2616] ss:$4 sm:$0xff] %v557
      %2703 = vst [vmem:[%s2618] ss:$4 sm:$0xff] %v560
      %2704 = vst [vmem:[%s2620] ss:$4 sm:$0xff] %v563
      %2705 = vst [vmem:[%s2622] ss:$4 sm:$0xff] %v566
      %2706 = vst [vmem:[%s2624] ss:$4 sm:$0xff] %v570
      %2707 = vst [vmem:[%s2626] ss:$4 sm:$0xff] %v573
      %v2708 = vld.sshfl [vmem:[#allocation1] sm:$0xff pattern:$0x73625140]
      %v2709 = vld.sshfl [vmem:[#allocation1 + $0x20] sm:$0xff pattern:$0x73625140]
      %2710 = vst [vmem:[#allocation1] ss:$4 sm:$0xff] %v576
      %2711 = vst [vmem:[%s2614] ss:$4 sm:$0xff] %v579
      %2712 = vst [vmem:[%s2616] ss:$4 sm:$0xff] %v582
      %2713 = vst [vmem:[%s2618] ss:$4 sm:$0xff] %v585
      %2714 = vst [vmem:[%s2620] ss:$4 sm:$0xff] %v588
      %2715 = vst [vmem:[%s2622] ss:$4 sm:$0xff] %v592
      %2716 = vst [vmem:[%s2624] ss:$4 sm:$0xff] %v595
      %2717 = vst [vmem:[%s2626] ss:$4 sm:$0xff] %v598
      %v2718 = vld.sshfl [vmem:[#allocation1] sm:$0xff pattern:$0x73625140]
      %v2719 = vld.sshfl [vmem:[#allocation1 + $0x20] sm:$0xff pattern:$0x73625140]
      %2720 = vst [vmem:[#allocation1] ss:$4 sm:$0xff] %v601
      %2721 = vst [vmem:[%s2614] ss:$4 sm:$0xff] %v604
      %2722 = vst [vmem:[%s2616] ss:$4 sm:$0xff] %v607
      %2723 = vst [vmem:[%s2618] ss:$4 sm:$0xff] %v610
      %2724 = vst [vmem:[%s2620] ss:$4 sm:$0xff] %v614
      %2725 = vst [vmem:[%s2622] ss:$4 sm:$0xff] %v617
      %2726 = vst [vmem:[%s2624] ss:$4 sm:$0xff] %v620
      %2727 = vst [vmem:[%s2626] ss:$4 sm:$0xff] %v623
      %v2728 = vld.sshfl [vmem:[#allocation1] sm:$0xff pattern:$0x73625140]
      %v2729 = vld.sshfl [vmem:[#allocation1 + $0x20] sm:$0xff pattern:$0x73625140]
      %2730 = vst [vmem:[#allocation1] ss:$4 sm:$0xff] %v626
      %2731 = vst [vmem:[%s2614] ss:$4 sm:$0xff] %v629
      %2732 = vst [vmem:[%s2616] ss:$4 sm:$0xff] %v632
      %2733 = vst [vmem:[%s2618] ss:$4 sm:$0xff] %v2594
      %2734 = vst [vmem:[%s2620] ss:$4 sm:$0xff] %v2597
      %2735 = vst [vmem:[%s2622] ss:$4 sm:$0xff] %v2600
      %2736 = vst [vmem:[%s2624] ss:$4 sm:$0xff] %v2603
      %2737 = vst [vmem:[%s2626] ss:$4 sm:$0xff] %v2606
      %v2738 = vld.sshfl [vmem:[#allocation1] sm:$0xff pattern:$0x73625140]
      %v2739 = vld.sshfl [vmem:[#allocation1 + $0x20] sm:$0xff pattern:$0x73625140]
      %2740 = vst [vmem:[#allocation1] ss:$4 sm:$0xff] %v2609
      %2741 = vst [vmem:[%s2614] ss:$4 sm:$0xff] %v2612
      %v2742 = vld.sshfl [vmem:[#allocation1] sm:$0xff pattern:$0x73625140]
      %v2743 = vsel %vm763, %v2628, 0
      %v2745 = vsel %vm763, %v2629, 0
      %v2747 = vsel %vm763, %v2638, 0
      %v2749 = vsel %vm763, %v2639, 0
      %v2751 = vsel %vm763, %v2648, 0
      %v2753 = vsel %vm763, %v2649, 0
      %v2755 = vsel %vm763, %v2658, 0
      %v2757 = vsel %vm763, %v2659, 0
      %v2759 = vsel %vm763, %v2668, 0
      %v2761 = vsel %vm763, %v2669, 0
      %v2763 = vsel %vm763, %v2678, 0
      %v2765 = vsel %vm763, %v2679, 0
      %v2767 = vsel %vm763, %v2688, 0
      %v2769 = vsel %vm763, %v2689, 0
      %v2771 = vsel %vm763, %v2698, 0
      %v2773 = vsel %vm763, %v2699, 0
      %v2775 = vsel %vm763, %v2708, 0
      %v2777 = vsel %vm763, %v2709, 0
      %v2779 = vsel %vm763, %v2718, 0
      %v2781 = vsel %vm763, %v2719, 0
      %v2783 = vsel %vm763, %v2728, 0
      %v2785 = vsel %vm763, %v2729, 0
      %v2787 = vsel %vm763, %v2738, 0
      %v2789 = vsel %vm763, %v2739, 0
      %v2791 = vsel %vm763, %v2742, 0
      %v2794 = vsel %vm814, %v2589, 0
      %2796 = vmatpush.msra.mxu0 0.0
      %2797 = vmatpush.msra.mxu0 0.0
      %2798 = vmatpush.msra.mxu0 0.0
      %2799 = vmatpush.msra.mxu0 0.0
      %2800 = vmatpush.msra.mxu0 0.0
      %2801 = vmatpush.msra.mxu0 0.0
      %2802 = vmatpush.msra.mxu0 0.0
      %2803 = vmatpush.msra.mxu0 0.0
      %2804 = vmatpush.msra.mxu0 0.0
      %2805 = vmatpush.msra.mxu0 0.0
      %2806 = vmatpush.msra.mxu0 0.0
      %2807 = vmatpush.msra.mxu0 0.0
      %2808 = vmatpush.msra.mxu0 0.0
      %2809 = vmatpush.msra.mxu0 0.0
      %2810 = vmatpush.msra.mxu0 0.0
      %2811 = vmatpush.msra.mxu0 %v2794
      %2812 = vmatmul.f32.gmra.mxu0 %v2743
      %v2813 = vpop.f32.mrf.mxu0
      %v2814 = vadd.f32 0.0, %v2813
      %2815 = vmatmul.f32.gmra.mxu0 %v2745
      %v2816 = vpop.f32.mrf.mxu0
      %v2817 = vadd.f32 0.0, %v2816
      %2818 = vmatmul.f32.gmra.mxu0 %v2747
      %v2819 = vpop.f32.mrf.mxu0
      %v2820 = vadd.f32 0.0, %v2819
      %2821 = vmatmul.f32.gmra.mxu0 %v2749
      %v2822 = vpop.f32.mrf.mxu0
      %v2823 = vadd.f32 0.0, %v2822
      %2824 = vmatmul.f32.gmra.mxu0 %v2751
      %v2825 = vpop.f32.mrf.mxu0
      %v2826 = vadd.f32 0.0, %v2825
      %2827 = vmatmul.f32.gmra.mxu0 %v2753
      %v2828 = vpop.f32.mrf.mxu0
      %v2829 = vadd.f32 0.0, %v2828
      %2830 = vmatmul.f32.gmra.mxu0 %v2755
      %v2831 = vpop.f32.mrf.mxu0
      %v2832 = vadd.f32 0.0, %v2831
      %2833 = vmatmul.f32.gmra.mxu0 %v2757
      %v2834 = vpop.f32.mrf.mxu0
      %v2835 = vadd.f32 0.0, %v2834
      %2836 = vmatmul.f32.gmra.mxu0 %v2759
      %v2837 = vpop.f32.mrf.mxu0
      %v2838 = vadd.f32 0.0, %v2837
      %2839 = vmatmul.f32.gmra.mxu0 %v2761
      %v2840 = vpop.f32.mrf.mxu0
      %v2841 = vadd.f32 0.0, %v2840
      %2842 = vmatmul.f32.gmra.mxu0 %v2763
      %v2843 = vpop.f32.mrf.mxu0
      %v2844 = vadd.f32 0.0, %v2843
      %2845 = vmatmul.f32.gmra.mxu0 %v2765
      %v2846 = vpop.f32.mrf.mxu0
      %v2847 = vadd.f32 0.0, %v2846
      %2848 = vmatmul.f32.gmra.mxu0 %v2767
      %v2849 = vpop.f32.mrf.mxu0
      %v2850 = vadd.f32 0.0, %v2849
      %2851 = vmatmul.f32.gmra.mxu0 %v2769
      %v2852 = vpop.f32.mrf.mxu0
      %v2853 = vadd.f32 0.0, %v2852
      %2854 = vmatmul.f32.gmra.mxu0 %v2771
      %v2855 = vpop.f32.mrf.mxu0
      %v2856 = vadd.f32 0.0, %v2855
      %2857 = vmatmul.f32.gmra.mxu0 %v2773
      %v2858 = vpop.f32.mrf.mxu0
      %v2859 = vadd.f32 0.0, %v2858
      %2860 = vmatmul.f32.gmra.mxu0 %v2775
      %v2861 = vpop.f32.mrf.mxu0
      %v2862 = vadd.f32 0.0, %v2861
      %2863 = vmatmul.f32.gmra.mxu0 %v2777
      %v2864 = vpop.f32.mrf.mxu0
      %v2865 = vadd.f32 0.0, %v2864
      %2866 = vmatmul.f32.gmra.mxu0 %v2779
      %v2867 = vpop.f32.mrf.mxu0
      %v2868 = vadd.f32 0.0, %v2867
      %2869 = vmatmul.f32.gmra.mxu0 %v2781
      %v2870 = vpop.f32.mrf.mxu0
      %v2871 = vadd.f32 0.0, %v2870
      %2872 = vmatmul.f32.gmra.mxu0 %v2783
      %v2873 = vpop.f32.mrf.mxu0
      %v2874 = vadd.f32 0.0, %v2873
      %2875 = vmatmul.f32.gmra.mxu0 %v2785
      %v2876 = vpop.f32.mrf.mxu0
      %v2877 = vadd.f32 0.0, %v2876
      %2878 = vmatmul.f32.gmra.mxu0 %v2787
      %v2879 = vpop.f32.mrf.mxu0
      %v2880 = vadd.f32 0.0, %v2879
      %2881 = vmatmul.f32.gmra.mxu0 %v2789
      %v2882 = vpop.f32.mrf.mxu0
      %v2883 = vadd.f32 0.0, %v2882
      %2884 = vmatmul.f32.gmra.mxu0 %v2791
      %v2885 = vpop.f32.mrf.mxu0
      %v2886 = vadd.f32 0.0, %v2885
      %2887 = vdwg.mxu0
      %v2913 = vrot.slane %v2814, 2
      %v2914 = vrot.slane %v2814, 4
      %v2915 = vrot.slane %v2814, 6
      %v2916 = vrot.slane %v2817, 2
      %v2917 = vrot.slane %v2817, 4
      %v2918 = vrot.slane %v2817, 6
      %v2919 = vrot.slane %v2820, 2
      %v2920 = vrot.slane %v2820, 4
      %v2921 = vrot.slane %v2820, 6
      %v2922 = vrot.slane %v2823, 2
      %v2923 = vrot.slane %v2823, 4
      %v2924 = vrot.slane %v2823, 6
      %v2925 = vrot.slane %v2826, 2
      %v2926 = vrot.slane %v2826, 4
      %v2927 = vrot.slane %v2826, 6
      %v2928 = vrot.slane %v2829, 2
      %v2929 = vrot.slane %v2829, 4
      %v2930 = vrot.slane %v2829, 6
      %v2931 = vrot.slane %v2832, 2
      %v2932 = vrot.slane %v2832, 4
      %v2933 = vrot.slane %v2832, 6
      %v2934 = vrot.slane %v2835, 2
      %v2935 = vrot.slane %v2835, 4
      %v2936 = vrot.slane %v2835, 6
      %v2937 = vrot.slane %v2838, 2
      %v2938 = vrot.slane %v2838, 4
      %v2939 = vrot.slane %v2838, 6
      %v2940 = vrot.slane %v2841, 2
      %v2941 = vrot.slane %v2841, 4
      %v2942 = vrot.slane %v2841, 6
      %v2943 = vrot.slane %v2844, 2
      %v2944 = vrot.slane %v2844, 4
      %v2945 = vrot.slane %v2844, 6
      %v2946 = vrot.slane %v2847, 2
      %v2947 = vrot.slane %v2847, 4
      %v2948 = vrot.slane %v2847, 6
      %v2949 = vrot.slane %v2850, 2
      %v2950 = vrot.slane %v2850, 4
      %v2951 = vrot.slane %v2850, 6
      %v2952 = vrot.slane %v2853, 2
      %v2953 = vrot.slane %v2853, 4
      %v2954 = vrot.slane %v2853, 6
      %v2955 = vrot.slane %v2856, 2
      %v2956 = vrot.slane %v2856, 4
      %v2957 = vrot.slane %v2856, 6
      %v2958 = vrot.slane %v2859, 2
      %v2959 = vrot.slane %v2859, 4
      %v2960 = vrot.slane %v2859, 6
      %v2961 = vrot.slane %v2862, 2
      %v2962 = vrot.slane %v2862, 4
      %v2963 = vrot.slane %v2862, 6
      %v2964 = vrot.slane %v2865, 2
      %v2965 = vrot.slane %v2865, 4
      %v2966 = vrot.slane %v2865, 6
      %v2967 = vrot.slane %v2868, 2
      %v2968 = vrot.slane %v2868, 4
      %v2969 = vrot.slane %v2868, 6
      %v2970 = vrot.slane %v2871, 2
      %v2971 = vrot.slane %v2871, 4
      %v2972 = vrot.slane %v2871, 6
      %v2973 = vrot.slane %v2874, 2
      %v2974 = vrot.slane %v2874, 4
      %v2975 = vrot.slane %v2874, 6
      %v2976 = vrot.slane %v2877, 2
      %v2977 = vrot.slane %v2877, 4
      %v2978 = vrot.slane %v2877, 6
      %v2979 = vrot.slane %v2880, 2
      %v2980 = vrot.slane %v2880, 4
      %v2981 = vrot.slane %v2880, 6
      %v2982 = vrot.slane %v2883, 2
      %v2983 = vrot.slane %v2883, 4
      %v2984 = vrot.slane %v2883, 6
      %v2985 = vrot.slane %v2886, 2
      %v3059 = vadd.f32 %v2490, %v2814
      %v3060 = vadd.f32 %v2491, %v2913
      %v3061 = vadd.f32 %v2492, %v2914
      %v3062 = vadd.f32 %v2493, %v2915
      %v3063 = vadd.f32 %v2494, %v2817
      %v3064 = vadd.f32 %v2495, %v2916
      %v3065 = vadd.f32 %v2496, %v2917
      %v3066 = vadd.f32 %v2497, %v2918
      %v3067 = vadd.f32 %v2498, %v2820
      %v3068 = vadd.f32 %v2499, %v2919
      %v3069 = vadd.f32 %v2500, %v2920
      %v3070 = vadd.f32 %v2501, %v2921
      %v3071 = vadd.f32 %v2502, %v2823
      %v3072 = vadd.f32 %v2503, %v2922
      %v3073 = vadd.f32 %v2504, %v2923
      %v3074 = vadd.f32 %v2505, %v2924
      %v3075 = vadd.f32 %v2506, %v2826
      %v3076 = vadd.f32 %v2507, %v2925
      %v3077 = vadd.f32 %v2508, %v2926
      %v3078 = vadd.f32 %v2509, %v2927
      %v3079 = vadd.f32 %v2510, %v2829
      %v3080 = vadd.f32 %v2511, %v2928
      %v3081 = vadd.f32 %v2512, %v2929
      %v3082 = vadd.f32 %v2513, %v2930
      %v3083 = vadd.f32 %v2514, %v2832
      %v3084 = vadd.f32 %v2515, %v2931
      %v3085 = vadd.f32 %v2516, %v2932
      %v3086 = vadd.f32 %v2517, %v2933
      %v3087 = vadd.f32 %v2518, %v2835
      %v3088 = vadd.f32 %v2519, %v2934
      %v3089 = vadd.f32 %v2520, %v2935
      %v3090 = vadd.f32 %v2521, %v2936
      %v3091 = vadd.f32 %v2522, %v2838
      %v3092 = vadd.f32 %v2523, %v2937
      %v3093 = vadd.f32 %v2524, %v2938
      %v3094 = vadd.f32 %v2525, %v2939
      %v3095 = vadd.f32 %v2526, %v2841
      %v3096 = vadd.f32 %v2527, %v2940
      %v3097 = vadd.f32 %v2528, %v2941
      %v3098 = vadd.f32 %v2529, %v2942
      %v3099 = vadd.f32 %v2530, %v2844
      %v3100 = vadd.f32 %v2531, %v2943
      %v3101 = vadd.f32 %v2532, %v2944
      %v3102 = vadd.f32 %v2533, %v2945
      %v3103 = vadd.f32 %v2534, %v2847
      %v3104 = vadd.f32 %v2535, %v2946
      %v3105 = vadd.f32 %v2536, %v2947
      %v3106 = vadd.f32 %v2537, %v2948
      %v3107 = vadd.f32 %v2538, %v2850
      %v3108 = vadd.f32 %v2539, %v2949
      %v3109 = vadd.f32 %v2540, %v2950
      %v3110 = vadd.f32 %v2541, %v2951
      %v3111 = vadd.f32 %v2542, %v2853
      %v3112 = vadd.f32 %v2543, %v2952
      %v3113 = vadd.f32 %v2544, %v2953
      %v3114 = vadd.f32 %v2545, %v2954
      %v3115 = vadd.f32 %v2546, %v2856
      %v3116 = vadd.f32 %v2547, %v2955
      %v3117 = vadd.f32 %v2548, %v2956
      %v3118 = vadd.f32 %v2549, %v2957
      %v3119 = vadd.f32 %v2550, %v2859
      %v3120 = vadd.f32 %v2551, %v2958
      %v3121 = vadd.f32 %v2552, %v2959
      %v3122 = vadd.f32 %v2553, %v2960
      %v3123 = vadd.f32 %v2554, %v2862
      %v3124 = vadd.f32 %v2555, %v2961
      %v3125 = vadd.f32 %v2556, %v2962
      %v3126 = vadd.f32 %v2557, %v2963
      %v3127 = vadd.f32 %v2558, %v2865
      %v3128 = vadd.f32 %v2559, %v2964
      %v3129 = vadd.f32 %v2560, %v2965
      %v3130 = vadd.f32 %v2561, %v2966
      %v3131 = vadd.f32 %v2562, %v2868
      %v3132 = vadd.f32 %v2563, %v2967
      %v3133 = vadd.f32 %v2564, %v2968
      %v3134 = vadd.f32 %v2565, %v2969
      %v3135 = vadd.f32 %v2566, %v2871
      %v3136 = vadd.f32 %v2567, %v2970
      %v3137 = vadd.f32 %v2568, %v2971
      %v3138 = vadd.f32 %v2569, %v2972
      %v3139 = vadd.f32 %v2570, %v2874
      %v3140 = vadd.f32 %v2571, %v2973
      %v3141 = vadd.f32 %v2572, %v2974
      %v3142 = vadd.f32 %v2573, %v2975
      %v3143 = vadd.f32 %v2574, %v2877
      %v3144 = vadd.f32 %v2575, %v2976
      %v3145 = vadd.f32 %v2576, %v2977
      %v3146 = vadd.f32 %v2577, %v2978
      %v3147 = vadd.f32 %v2578, %v2880
      %v3148 = vadd.f32 %v2579, %v2979
      %v3149 = vadd.f32 %v2580, %v2980
      %v3150 = vadd.f32 %v2581, %v2981
      %v3151 = vadd.f32 %v2582, %v2883
      %v3152 = vadd.f32 %v2583, %v2982
      %v3153 = vadd.f32 %v2584, %v2983
      %v3154 = vadd.f32 %v2585, %v2984
      %v3155 = vadd.f32 %v2586, %v2886
      %v3156 = vadd.f32 %v2587, %v2985
      %s3157 = scalar_lea.vmem %s1, 20
      %v3158 = vld [vmem:[%s3157] sm:$0xf]
      %3159 = vst.sshfl [vmem:[#allocation1] sm:$0xff pattern:$0x73625140] %v173
      %3160 = vst.sshfl [vmem:[#allocation1 + $0x20] sm:$0xff pattern:$0x73625140] %v174
      %s3161 = scalar_lea.vmem [#allocation1], 1
      %v3162 = vld [vmem:[%s3161] ss:$4 sm:$0xff]
      %s3163 = scalar_lea.vmem [#allocation1], 2
      %v3164 = vld [vmem:[%s3163] ss:$4 sm:$0xff]
      %s3165 = scalar_lea.vmem [#allocation1], 3
      %v3166 = vld [vmem:[%s3165] ss:$4 sm:$0xff]
      %s3167 = scalar_lea.vmem [#allocation1], 32
      %v3168 = vld [vmem:[%s3167] ss:$4 sm:$0xff]
      %s3169 = scalar_lea.vmem [#allocation1], 33
      %v3170 = vld [vmem:[%s3169] ss:$4 sm:$0xff]
      %s3171 = scalar_lea.vmem [#allocation1], 34
      %v3172 = vld [vmem:[%s3171] ss:$4 sm:$0xff]
      %s3173 = scalar_lea.vmem [#allocation1], 35
      %v3174 = vld [vmem:[%s3173] ss:$4 sm:$0xff]
      %3175 = vst.sshfl [vmem:[#allocation1] sm:$0xff pattern:$0x73625140] %v175
      %3176 = vst.sshfl [vmem:[#allocation1 + $0x20] sm:$0xff pattern:$0x73625140] %v176
      %v3177 = vld [vmem:[%s3161] ss:$4 sm:$0xff]
      %v3178 = vld [vmem:[%s3163] ss:$4 sm:$0xff]
      %v3179 = vld [vmem:[%s3165] ss:$4 sm:$0xff]
      %v3180 = vld [vmem:[%s3167] ss:$4 sm:$0xff]
      %v3181 = vld [vmem:[%s3169] ss:$4 sm:$0xff]
      %v3182 = vld [vmem:[%s3171] ss:$4 sm:$0xff]
      %v3183 = vld [vmem:[%s3173] ss:$4 sm:$0xff]
      %3184 = vst.sshfl [vmem:[#allocation1] sm:$0xff pattern:$0x73625140] %v177
      %3185 = vst.sshfl [vmem:[#allocation1 + $0x20] sm:$0xff pattern:$0x73625140] %v178
      %v3186 = vld [vmem:[%s3161] ss:$4 sm:$0xff]
      %v3187 = vld [vmem:[%s3163] ss:$4 sm:$0xff]
      %v3188 = vld [vmem:[%s3165] ss:$4 sm:$0xff]
      %v3189 = vld [vmem:[%s3167] ss:$4 sm:$0xff]
      %v3190 = vld [vmem:[%s3169] ss:$4 sm:$0xff]
      %v3191 = vld [vmem:[%s3171] ss:$4 sm:$0xff]
      %v3192 = vld [vmem:[%s3173] ss:$4 sm:$0xff]
      %3193 = vst.sshfl [vmem:[#allocation1] sm:$0xff pattern:$0x73625140] %v179
      %3194 = vst.sshfl [vmem:[#allocation1 + $0x20] sm:$0xff pattern:$0x73625140] %v180
      %v3195 = vld [vmem:[%s3161] ss:$4 sm:$0xff]
      %v3196 = vld [vmem:[%s3163] ss:$4 sm:$0xff]
      %v3197 = vld [vmem:[%s3165] ss:$4 sm:$0xff]
      %v3198 = vld [vmem:[%s3167] ss:$4 sm:$0xff]
      %v3199 = vld [vmem:[%s3169] ss:$4 sm:$0xff]
      %v3200 = vld [vmem:[%s3171] ss:$4 sm:$0xff]
      %v3201 = vld [vmem:[%s3173] ss:$4 sm:$0xff]
      %3202 = vst.sshfl [vmem:[#allocation1] sm:$0xff pattern:$0x73625140] %v181
      %3203 = vst.sshfl [vmem:[#allocation1 + $0x20] sm:$0xff pattern:$0x73625140] %v182
      %v3204 = vld [vmem:[%s3161] ss:$4 sm:$0xff]
      %v3205 = vld [vmem:[%s3163] ss:$4 sm:$0xff]
      %v3206 = vld [vmem:[%s3165] ss:$4 sm:$0xff]
      %v3207 = vld [vmem:[%s3167] ss:$4 sm:$0xff]
      %v3208 = vld [vmem:[%s3169] ss:$4 sm:$0xff]
      %v3209 = vld [vmem:[%s3171] ss:$4 sm:$0xff]
      %v3210 = vld [vmem:[%s3173] ss:$4 sm:$0xff]
      %3211 = vst.sshfl [vmem:[#allocation1] sm:$0xff pattern:$0x73625140] %v183
      %3212 = vst.sshfl [vmem:[#allocation1 + $0x20] sm:$0xff pattern:$0x73625140] %v184
      %v3213 = vld [vmem:[%s3161] ss:$4 sm:$0xff]
      %v3214 = vld [vmem:[%s3163] ss:$4 sm:$0xff]
      %v3215 = vld [vmem:[%s3165] ss:$4 sm:$0xff]
      %v3216 = vld [vmem:[%s3167] ss:$4 sm:$0xff]
      %v3217 = vld [vmem:[%s3169] ss:$4 sm:$0xff]
      %v3218 = vld [vmem:[%s3171] ss:$4 sm:$0xff]
      %v3219 = vld [vmem:[%s3173] ss:$4 sm:$0xff]
      %3220 = vst.sshfl [vmem:[#allocation1] sm:$0xff pattern:$0x73625140] %v185
      %3221 = vst.sshfl [vmem:[#allocation1 + $0x20] sm:$0xff pattern:$0x73625140] %v186
      %v3222 = vld [vmem:[%s3161] ss:$4 sm:$0xff]
      %v3223 = vld [vmem:[%s3163] ss:$4 sm:$0xff]
      %v3224 = vld [vmem:[%s3165] ss:$4 sm:$0xff]
      %v3225 = vld [vmem:[%s3167] ss:$4 sm:$0xff]
      %v3226 = vld [vmem:[%s3169] ss:$4 sm:$0xff]
      %v3227 = vld [vmem:[%s3171] ss:$4 sm:$0xff]
      %v3228 = vld [vmem:[%s3173] ss:$4 sm:$0xff]
      %3229 = vst.sshfl [vmem:[#allocation1] sm:$0xff pattern:$0x73625140] %v187
      %3230 = vst.sshfl [vmem:[#allocation1 + $0x20] sm:$0xff pattern:$0x73625140] %v188
      %v3231 = vld [vmem:[%s3161] ss:$4 sm:$0xff]
      %v3232 = vld [vmem:[%s3163] ss:$4 sm:$0xff]
      %v3233 = vld [vmem:[%s3165] ss:$4 sm:$0xff]
      %v3234 = vld [vmem:[%s3167] ss:$4 sm:$0xff]
      %v3235 = vld [vmem:[%s3169] ss:$4 sm:$0xff]
      %v3236 = vld [vmem:[%s3171] ss:$4 sm:$0xff]
      %v3237 = vld [vmem:[%s3173] ss:$4 sm:$0xff]
      %3238 = vst.sshfl [vmem:[#allocation1] sm:$0xff pattern:$0x73625140] %v189
      %3239 = vst.sshfl [vmem:[#allocation1 + $0x20] sm:$0xff pattern:$0x73625140] %v190
      %v3240 = vld [vmem:[%s3161] ss:$4 sm:$0xff]
      %v3241 = vld [vmem:[%s3163] ss:$4 sm:$0xff]
      %v3242 = vld [vmem:[%s3165] ss:$4 sm:$0xff]
      %v3243 = vld [vmem:[%s3167] ss:$4 sm:$0xff]
      %v3244 = vld [vmem:[%s3169] ss:$4 sm:$0xff]
      %v3245 = vld [vmem:[%s3171] ss:$4 sm:$0xff]
      %v3246 = vld [vmem:[%s3173] ss:$4 sm:$0xff]
      %3247 = vst.sshfl [vmem:[#allocation1] sm:$0xff pattern:$0x73625140] %v191
      %3248 = vst.sshfl [vmem:[#allocation1 + $0x20] sm:$0xff pattern:$0x73625140] %v192
      %v3249 = vld [vmem:[%s3161] ss:$4 sm:$0xff]
      %v3250 = vld [vmem:[%s3163] ss:$4 sm:$0xff]
      %v3251 = vld [vmem:[%s3165] ss:$4 sm:$0xff]
      %v3252 = vld [vmem:[%s3167] ss:$4 sm:$0xff]
      %v3253 = vld [vmem:[%s3169] ss:$4 sm:$0xff]
      %v3254 = vld [vmem:[%s3171] ss:$4 sm:$0xff]
      %v3255 = vld [vmem:[%s3173] ss:$4 sm:$0xff]
      %3256 = vst.sshfl [vmem:[#allocation1] sm:$0xff pattern:$0x73625140] %v193
      %3257 = vst.sshfl [vmem:[#allocation1 + $0x20] sm:$0xff pattern:$0x73625140] %v194
      %v3258 = vld [vmem:[%s3161] ss:$4 sm:$0xff]
      %v3259 = vld [vmem:[%s3163] ss:$4 sm:$0xff]
      %v3260 = vld [vmem:[%s3165] ss:$4 sm:$0xff]
      %v3261 = vld [vmem:[%s3167] ss:$4 sm:$0xff]
      %v3262 = vld [vmem:[%s3169] ss:$4 sm:$0xff]
      %v3263 = vld [vmem:[%s3171] ss:$4 sm:$0xff]
      %v3264 = vld [vmem:[%s3173] ss:$4 sm:$0xff]
      %3265 = vst.sshfl [vmem:[#allocation1] sm:$0xff pattern:$0x73625140] %v195
      %3266 = vst.sshfl [vmem:[#allocation1 + $0x20] sm:$0xff pattern:$0x73625140] %v196
      %v3267 = vld [vmem:[%s3161] ss:$4 sm:$0xff]
      %v3268 = vld [vmem:[%s3163] ss:$4 sm:$0xff]
      %v3269 = vld [vmem:[%s3165] ss:$4 sm:$0xff]
      %v3270 = vld [vmem:[%s3167] ss:$4 sm:$0xff]
      %v3271 = vld [vmem:[%s3169] ss:$4 sm:$0xff]
      %v3272 = vld [vmem:[%s3171] ss:$4 sm:$0xff]
      %v3273 = vld [vmem:[%s3173] ss:$4 sm:$0xff]
      %3274 = vst.sshfl [vmem:[#allocation1] sm:$0xff pattern:$0x73625140] %v197
      %3275 = vst.sshfl [vmem:[#allocation1 + $0x20] sm:$0xff pattern:$0x73625140] %v198
      %v3276 = vld [vmem:[%s3161] ss:$4 sm:$0xff]
      %v3277 = vld [vmem:[%s3163] ss:$4 sm:$0xff]
      %v3278 = vld [vmem:[%s3165] ss:$4 sm:$0xff]
      %v3279 = vld [vmem:[%s3167] ss:$4 sm:$0xff]
      %v3280 = vld [vmem:[%s3169] ss:$4 sm:$0xff]
      %v3281 = vld [vmem:[%s3171] ss:$4 sm:$0xff]
      %v3282 = vld [vmem:[%s3173] ss:$4 sm:$0xff]
      %3283 = vst.sshfl [vmem:[#allocation1] sm:$0xff pattern:$0x73625140] %v199
      %3284 = vst.sshfl [vmem:[#allocation1 + $0x20] sm:$0xff pattern:$0x73625140] %v200
      %v3285 = vld [vmem:[%s3161] ss:$4 sm:$0xff]
      %v3286 = vld [vmem:[%s3163] ss:$4 sm:$0xff]
      %v3287 = vld [vmem:[%s3165] ss:$4 sm:$0xff]
      %v3288 = vld [vmem:[%s3167] ss:$4 sm:$0xff]
      %v3289 = vld [vmem:[%s3169] ss:$4 sm:$0xff]
      %v3290 = vld [vmem:[%s3171] ss:$4 sm:$0xff]
      %v3291 = vld [vmem:[%s3173] ss:$4 sm:$0xff]
      %3292 = vst [vmem:[#allocation1] ss:$4 sm:$0xff] %v3162
      %s3293 = scalar_lea.vmem [#allocation1], 1
      %3294 = vst [vmem:[%s3293] ss:$4 sm:$0xff] %v3164
      %s3295 = scalar_lea.vmem [#allocation1], 2
      %3296 = vst [vmem:[%s3295] ss:$4 sm:$0xff] %v3166
      %s3297 = scalar_lea.vmem [#allocation1], 3
      %3298 = vst [vmem:[%s3297] ss:$4 sm:$0xff] %v3168
      %s3299 = scalar_lea.vmem [#allocation1], 32
      %3300 = vst [vmem:[%s3299] ss:$4 sm:$0xff] %v3170
      %s3301 = scalar_lea.vmem [#allocation1], 33
      %3302 = vst [vmem:[%s3301] ss:$4 sm:$0xff] %v3172
      %s3303 = scalar_lea.vmem [#allocation1], 34
      %3304 = vst [vmem:[%s3303] ss:$4 sm:$0xff] %v3174
      %s3305 = scalar_lea.vmem [#allocation1], 35
      %3306 = vst [vmem:[%s3305] ss:$4 sm:$0xff] %v3177
      %v3307 = vld.sshfl [vmem:[#allocation1] sm:$0xff pattern:$0x73625140]
      %v3308 = vld.sshfl [vmem:[#allocation1 + $0x20] sm:$0xff pattern:$0x73625140]
      %3309 = vst [vmem:[#allocation1] ss:$4 sm:$0xff] %v3178
      %3310 = vst [vmem:[%s3293] ss:$4 sm:$0xff] %v3179
      %3311 = vst [vmem:[%s3295] ss:$4 sm:$0xff] %v3180
      %3312 = vst [vmem:[%s3297] ss:$4 sm:$0xff] %v3181
      %3313 = vst [vmem:[%s3299] ss:$4 sm:$0xff] %v3182
      %3314 = vst [vmem:[%s3301] ss:$4 sm:$0xff] %v3183
      %3315 = vst [vmem:[%s3303] ss:$4 sm:$0xff] %v3186
      %3316 = vst [vmem:[%s3305] ss:$4 sm:$0xff] %v3187
      %v3317 = vld.sshfl [vmem:[#allocation1] sm:$0xff pattern:$0x73625140]
      %v3318 = vld.sshfl [vmem:[#allocation1 + $0x20] sm:$0xff pattern:$0x73625140]
      %3319 = vst [vmem:[#allocation1] ss:$4 sm:$0xff] %v3188
      %3320 = vst [vmem:[%s3293] ss:$4 sm:$0xff] %v3189
      %3321 = vst [vmem:[%s3295] ss:$4 sm:$0xff] %v3190
      %3322 = vst [vmem:[%s3297] ss:$4 sm:$0xff] %v3191
      %3323 = vst [vmem:[%s3299] ss:$4 sm:$0xff] %v3192
      %3324 = vst [vmem:[%s3301] ss:$4 sm:$0xff] %v3195
      %3325 = vst [vmem:[%s3303] ss:$4 sm:$0xff] %v3196
      %3326 = vst [vmem:[%s3305] ss:$4 sm:$0xff] %v3197
      %v3327 = vld.sshfl [vmem:[#allocation1] sm:$0xff pattern:$0x73625140]
      %v3328 = vld.sshfl [vmem:[#allocation1 + $0x20] sm:$0xff pattern:$0x73625140]
      %3329 = vst [vmem:[#allocation1] ss:$4 sm:$0xff] %v3198
      %3330 = vst [vmem:[%s3293] ss:$4 sm:$0xff] %v3199
      %3331 = vst [vmem:[%s3295] ss:$4 sm:$0xff] %v3200
      %3332 = vst [vmem:[%s3297] ss:$4 sm:$0xff] %v3201
      %3333 = vst [vmem:[%s3299] ss:$4 sm:$0xff] %v3204
      %3334 = vst [vmem:[%s3301] ss:$4 sm:$0xff] %v3205
      %3335 = vst [vmem:[%s3303] ss:$4 sm:$0xff] %v3206
      %3336 = vst [vmem:[%s3305] ss:$4 sm:$0xff] %v3207
      %v3337 = vld.sshfl [vmem:[#allocation1] sm:$0xff pattern:$0x73625140]
      %v3338 = vld.sshfl [vmem:[#allocation1 + $0x20] sm:$0xff pattern:$0x73625140]
      %3339 = vst [vmem:[#allocation1] ss:$4 sm:$0xff] %v3208
      %3340 = vst [vmem:[%s3293] ss:$4 sm:$0xff] %v3209
      %3341 = vst [vmem:[%s3295] ss:$4 sm:$0xff] %v3210
      %3342 = vst [vmem:[%s3297] ss:$4 sm:$0xff] %v3213
      %3343 = vst [vmem:[%s3299] ss:$4 sm:$0xff] %v3214
      %3344 = vst [vmem:[%s3301] ss:$4 sm:$0xff] %v3215
      %3345 = vst [vmem:[%s3303] ss:$4 sm:$0xff] %v3216
      %3346 = vst [vmem:[%s3305] ss:$4 sm:$0xff] %v3217
      %v3347 = vld.sshfl [vmem:[#allocation1] sm:$0xff pattern:$0x73625140]
      %v3348 = vld.sshfl [vmem:[#allocation1 + $0x20] sm:$0xff pattern:$0x73625140]
      %3349 = vst [vmem:[#allocation1] ss:$4 sm:$0xff] %v3218
      %3350 = vst [vmem:[%s3293] ss:$4 sm:$0xff] %v3219
      %3351 = vst [vmem:[%s3295] ss:$4 sm:$0xff] %v3222
      %3352 = vst [vmem:[%s3297] ss:$4 sm:$0xff] %v3223
      %3353 = vst [vmem:[%s3299] ss:$4 sm:$0xff] %v3224
      %3354 = vst [vmem:[%s3301] ss:$4 sm:$0xff] %v3225
      %3355 = vst [vmem:[%s3303] ss:$4 sm:$0xff] %v3226
      %3356 = vst [vmem:[%s3305] ss:$4 sm:$0xff] %v3227
      %v3357 = vld.sshfl [vmem:[#allocation1] sm:$0xff pattern:$0x73625140]
      %v3358 = vld.sshfl [vmem:[#allocation1 + $0x20] sm:$0xff pattern:$0x73625140]
      %3359 = vst [vmem:[#allocation1] ss:$4 sm:$0xff] %v3228
      %3360 = vst [vmem:[%s3293] ss:$4 sm:$0xff] %v3231
      %3361 = vst [vmem:[%s3295] ss:$4 sm:$0xff] %v3232
      %3362 = vst [vmem:[%s3297] ss:$4 sm:$0xff] %v3233
      %3363 = vst [vmem:[%s3299] ss:$4 sm:$0xff] %v3234
      %3364 = vst [vmem:[%s3301] ss:$4 sm:$0xff] %v3235
      %3365 = vst [vmem:[%s3303] ss:$4 sm:$0xff] %v3236
      %3366 = vst [vmem:[%s3305] ss:$4 sm:$0xff] %v3237
      %v3367 = vld.sshfl [vmem:[#allocation1] sm:$0xff pattern:$0x73625140]
      %v3368 = vld.sshfl [vmem:[#allocation1 + $0x20] sm:$0xff pattern:$0x73625140]
      %3369 = vst [vmem:[#allocation1] ss:$4 sm:$0xff] %v3240
      %3370 = vst [vmem:[%s3293] ss:$4 sm:$0xff] %v3241
      %3371 = vst [vmem:[%s3295] ss:$4 sm:$0xff] %v3242
      %3372 = vst [vmem:[%s3297] ss:$4 sm:$0xff] %v3243
      %3373 = vst [vmem:[%s3299] ss:$4 sm:$0xff] %v3244
      %3374 = vst [vmem:[%s3301] ss:$4 sm:$0xff] %v3245
      %3375 = vst [vmem:[%s3303] ss:$4 sm:$0xff] %v3246
      %3376 = vst [vmem:[%s3305] ss:$4 sm:$0xff] %v3249
      %v3377 = vld.sshfl [vmem:[#allocation1] sm:$0xff pattern:$0x73625140]
      %v3378 = vld.sshfl [vmem:[#allocation1 + $0x20] sm:$0xff pattern:$0x73625140]
      %3379 = vst [vmem:[#allocation1] ss:$4 sm:$0xff] %v3250
      %3380 = vst [vmem:[%s3293] ss:$4 sm:$0xff] %v3251
      %3381 = vst [vmem:[%s3295] ss:$4 sm:$0xff] %v3252
      %3382 = vst [vmem:[%s3297] ss:$4 sm:$0xff] %v3253
      %3383 = vst [vmem:[%s3299] ss:$4 sm:$0xff] %v3254
      %3384 = vst [vmem:[%s3301] ss:$4 sm:$0xff] %v3255
      %3385 = vst [vmem:[%s3303] ss:$4 sm:$0xff] %v3258
      %3386 = vst [vmem:[%s3305] ss:$4 sm:$0xff] %v3259
      %v3387 = vld.sshfl [vmem:[#allocation1] sm:$0xff pattern:$0x73625140]
      %v3388 = vld.sshfl [vmem:[#allocation1 + $0x20] sm:$0xff pattern:$0x73625140]
      %3389 = vst [vmem:[#allocation1] ss:$4 sm:$0xff] %v3260
      %3390 = vst [vmem:[%s3293] ss:$4 sm:$0xff] %v3261
      %3391 = vst [vmem:[%s3295] ss:$4 sm:$0xff] %v3262
      %3392 = vst [vmem:[%s3297] ss:$4 sm:$0xff] %v3263
      %3393 = vst [vmem:[%s3299] ss:$4 sm:$0xff] %v3264
      %3394 = vst [vmem:[%s3301] ss:$4 sm:$0xff] %v3267
      %3395 = vst [vmem:[%s3303] ss:$4 sm:$0xff] %v3268
      %3396 = vst [vmem:[%s3305] ss:$4 sm:$0xff] %v3269
      %v3397 = vld.sshfl [vmem:[#allocation1] sm:$0xff pattern:$0x73625140]
      %v3398 = vld.sshfl [vmem:[#allocation1 + $0x20] sm:$0xff pattern:$0x73625140]
      %3399 = vst [vmem:[#allocation1] ss:$4 sm:$0xff] %v3270
      %3400 = vst [vmem:[%s3293] ss:$4 sm:$0xff] %v3271
      %3401 = vst [vmem:[%s3295] ss:$4 sm:$0xff] %v3272
      %3402 = vst [vmem:[%s3297] ss:$4 sm:$0xff] %v3273
      %3403 = vst [vmem:[%s3299] ss:$4 sm:$0xff] %v3276
      %3404 = vst [vmem:[%s3301] ss:$4 sm:$0xff] %v3277
      %3405 = vst [vmem:[%s3303] ss:$4 sm:$0xff] %v3278
      %3406 = vst [vmem:[%s3305] ss:$4 sm:$0xff] %v3279
      %v3407 = vld.sshfl [vmem:[#allocation1] sm:$0xff pattern:$0x73625140]
      %v3408 = vld.sshfl [vmem:[#allocation1 + $0x20] sm:$0xff pattern:$0x73625140]
      %3409 = vst [vmem:[#allocation1] ss:$4 sm:$0xff] %v3280
      %3410 = vst [vmem:[%s3293] ss:$4 sm:$0xff] %v3281
      %3411 = vst [vmem:[%s3295] ss:$4 sm:$0xff] %v3282
      %3412 = vst [vmem:[%s3297] ss:$4 sm:$0xff] %v3285
      %3413 = vst [vmem:[%s3299] ss:$4 sm:$0xff] %v3286
      %3414 = vst [vmem:[%s3301] ss:$4 sm:$0xff] %v3287
      %3415 = vst [vmem:[%s3303] ss:$4 sm:$0xff] %v3288
      %3416 = vst [vmem:[%s3305] ss:$4 sm:$0xff] %v3289
      %v3417 = vld.sshfl [vmem:[#allocation1] sm:$0xff pattern:$0x73625140]
      %v3418 = vld.sshfl [vmem:[#allocation1 + $0x20] sm:$0xff pattern:$0x73625140]
      %3419 = vst [vmem:[#allocation1] ss:$4 sm:$0xff] %v3290
      %3420 = vst [vmem:[%s3293] ss:$4 sm:$0xff] %v3291
      %v3421 = vld.sshfl [vmem:[#allocation1] sm:$0xff pattern:$0x73625140]
      %v3422 = vsel %vm763, %v3307, 0
      %v3424 = vsel %vm763, %v3308, 0
      %v3426 = vsel %vm763, %v3317, 0
      %v3428 = vsel %vm763, %v3318, 0
      %v3430 = vsel %vm763, %v3327, 0
      %v3432 = vsel %vm763, %v3328, 0
      %v3434 = vsel %vm763, %v3337, 0
      %v3436 = vsel %vm763, %v3338, 0
      %v3438 = vsel %vm763, %v3347, 0
      %v3440 = vsel %vm763, %v3348, 0
      %v3442 = vsel %vm763, %v3357, 0
      %v3444 = vsel %vm763, %v3358, 0
      %v3446 = vsel %vm763, %v3367, 0
      %v3448 = vsel %vm763, %v3368, 0
      %v3450 = vsel %vm763, %v3377, 0
      %v3452 = vsel %vm763, %v3378, 0
      %v3454 = vsel %vm763, %v3387, 0
      %v3456 = vsel %vm763, %v3388, 0
      %v3458 = vsel %vm763, %v3397, 0
      %v3460 = vsel %vm763, %v3398, 0
      %v3462 = vsel %vm763, %v3407, 0
      %v3464 = vsel %vm763, %v3408, 0
      %v3466 = vsel %vm763, %v3417, 0
      %v3468 = vsel %vm763, %v3418, 0
      %v3470 = vsel %vm763, %v3421, 0
      %v3473 = vsel %vm814, %v3158, 0
      %3475 = vmatpush.msra.mxu0 0.0
      %3476 = vmatpush.msra.mxu0 0.0
      %3477 = vmatpush.msra.mxu0 0.0
      %3478 = vmatpush.msra.mxu0 0.0
      %3479 = vmatpush.msra.mxu0 0.0
      %3480 = vmatpush.msra.mxu0 0.0
      %3481 = vmatpush.msra.mxu0 0.0
      %3482 = vmatpush.msra.mxu0 0.0
      %3483 = vmatpush.msra.mxu0 0.0
      %3484 = vmatpush.msra.mxu0 0.0
      %3485 = vmatpush.msra.mxu0 0.0
      %3486 = vmatpush.msra.mxu0 0.0
      %3487 = vmatpush.msra.mxu0 0.0
      %3488 = vmatpush.msra.mxu0 0.0
      %3489 = vmatpush.msra.mxu0 0.0
      %3490 = vmatpush.msra.mxu0 %v3473
      %3491 = vmatmul.f32.gmra.mxu0 %v3422
      %v3492 = vpop.f32.mrf.mxu0
      %v3493 = vadd.f32 0.0, %v3492
      %3494 = vmatmul.f32.gmra.mxu0 %v3424
      %v3495 = vpop.f32.mrf.mxu0
      %v3496 = vadd.f32 0.0, %v3495
      %3497 = vmatmul.f32.gmra.mxu0 %v3426
      %v3498 = vpop.f32.mrf.mxu0
      %v3499 = vadd.f32 0.0, %v3498
      %3500 = vmatmul.f32.gmra.mxu0 %v3428
      %v3501 = vpop.f32.mrf.mxu0
      %v3502 = vadd.f32 0.0, %v3501
      %3503 = vmatmul.f32.gmra.mxu0 %v3430
      %v3504 = vpop.f32.mrf.mxu0
      %v3505 = vadd.f32 0.0, %v3504
      %3506 = vmatmul.f32.gmra.mxu0 %v3432
      %v3507 = vpop.f32.mrf.mxu0
      %v3508 = vadd.f32 0.0, %v3507
      %3509 = vmatmul.f32.gmra.mxu0 %v3434
      %v3510 = vpop.f32.mrf.mxu0
      %v3511 = vadd.f32 0.0, %v3510
      %3512 = vmatmul.f32.gmra.mxu0 %v3436
      %v3513 = vpop.f32.mrf.mxu0
      %v3514 = vadd.f32 0.0, %v3513
      %3515 = vmatmul.f32.gmra.mxu0 %v3438
      %v3516 = vpop.f32.mrf.mxu0
      %v3517 = vadd.f32 0.0, %v3516
      %3518 = vmatmul.f32.gmra.mxu0 %v3440
      %v3519 = vpop.f32.mrf.mxu0
      %v3520 = vadd.f32 0.0, %v3519
      %3521 = vmatmul.f32.gmra.mxu0 %v3442
      %v3522 = vpop.f32.mrf.mxu0
      %v3523 = vadd.f32 0.0, %v3522
      %3524 = vmatmul.f32.gmra.mxu0 %v3444
      %v3525 = vpop.f32.mrf.mxu0
      %v3526 = vadd.f32 0.0, %v3525
      %3527 = vmatmul.f32.gmra.mxu0 %v3446
      %v3528 = vpop.f32.mrf.mxu0
      %v3529 = vadd.f32 0.0, %v3528
      %3530 = vmatmul.f32.gmra.mxu0 %v3448
      %v3531 = vpop.f32.mrf.mxu0
      %v3532 = vadd.f32 0.0, %v3531
      %3533 = vmatmul.f32.gmra.mxu0 %v3450
      %v3534 = vpop.f32.mrf.mxu0
      %v3535 = vadd.f32 0.0, %v3534
      %3536 = vmatmul.f32.gmra.mxu0 %v3452
      %v3537 = vpop.f32.mrf.mxu0
      %v3538 = vadd.f32 0.0, %v3537
      %3539 = vmatmul.f32.gmra.mxu0 %v3454
      %v3540 = vpop.f32.mrf.mxu0
      %v3541 = vadd.f32 0.0, %v3540
      %3542 = vmatmul.f32.gmra.mxu0 %v3456
      %v3543 = vpop.f32.mrf.mxu0
      %v3544 = vadd.f32 0.0, %v3543
      %3545 = vmatmul.f32.gmra.mxu0 %v3458
      %v3546 = vpop.f32.mrf.mxu0
      %v3547 = vadd.f32 0.0, %v3546
      %3548 = vmatmul.f32.gmra.mxu0 %v3460
      %v3549 = vpop.f32.mrf.mxu0
      %v3550 = vadd.f32 0.0, %v3549
      %3551 = vmatmul.f32.gmra.mxu0 %v3462
      %v3552 = vpop.f32.mrf.mxu0
      %v3553 = vadd.f32 0.0, %v3552
      %3554 = vmatmul.f32.gmra.mxu0 %v3464
      %v3555 = vpop.f32.mrf.mxu0
      %v3556 = vadd.f32 0.0, %v3555
      %3557 = vmatmul.f32.gmra.mxu0 %v3466
      %v3558 = vpop.f32.mrf.mxu0
      %v3559 = vadd.f32 0.0, %v3558
      %3560 = vmatmul.f32.gmra.mxu0 %v3468
      %v3561 = vpop.f32.mrf.mxu0
      %v3562 = vadd.f32 0.0, %v3561
      %3563 = vmatmul.f32.gmra.mxu0 %v3470
      %v3564 = vpop.f32.mrf.mxu0
      %v3565 = vadd.f32 0.0, %v3564
      %3566 = vdwg.mxu0
      %v3592 = vrot.slane %v3493, 2
      %v3593 = vrot.slane %v3493, 4
      %v3594 = vrot.slane %v3493, 6
      %v3595 = vrot.slane %v3496, 2
      %v3596 = vrot.slane %v3496, 4
      %v3597 = vrot.slane %v3496, 6
      %v3598 = vrot.slane %v3499, 2
      %v3599 = vrot.slane %v3499, 4
      %v3600 = vrot.slane %v3499, 6
      %v3601 = vrot.slane %v3502, 2
      %v3602 = vrot.slane %v3502, 4
      %v3603 = vrot.slane %v3502, 6
      %v3604 = vrot.slane %v3505, 2
      %v3605 = vrot.slane %v3505, 4
      %v3606 = vrot.slane %v3505, 6
      %v3607 = vrot.slane %v3508, 2
      %v3608 = vrot.slane %v3508, 4
      %v3609 = vrot.slane %v3508, 6
      %v3610 = vrot.slane %v3511, 2
      %v3611 = vrot.slane %v3511, 4
      %v3612 = vrot.slane %v3511, 6
      %v3613 = vrot.slane %v3514, 2
      %v3614 = vrot.slane %v3514, 4
      %v3615 = vrot.slane %v3514, 6
      %v3616 = vrot.slane %v3517, 2
      %v3617 = vrot.slane %v3517, 4
      %v3618 = vrot.slane %v3517, 6
      %v3619 = vrot.slane %v3520, 2
      %v3620 = vrot.slane %v3520, 4
      %v3621 = vrot.slane %v3520, 6
      %v3622 = vrot.slane %v3523, 2
      %v3623 = vrot.slane %v3523, 4
      %v3624 = vrot.slane %v3523, 6
      %v3625 = vrot.slane %v3526, 2
      %v3626 = vrot.slane %v3526, 4
      %v3627 = vrot.slane %v3526, 6
      %v3628 = vrot.slane %v3529, 2
      %v3629 = vrot.slane %v3529, 4
      %v3630 = vrot.slane %v3529, 6
      %v3631 = vrot.slane %v3532, 2
      %v3632 = vrot.slane %v3532, 4
      %v3633 = vrot.slane %v3532, 6
      %v3634 = vrot.slane %v3535, 2
      %v3635 = vrot.slane %v3535, 4
      %v3636 = vrot.slane %v3535, 6
      %v3637 = vrot.slane %v3538, 2
      %v3638 = vrot.slane %v3538, 4
      %v3639 = vrot.slane %v3538, 6
      %v3640 = vrot.slane %v3541, 2
      %v3641 = vrot.slane %v3541, 4
      %v3642 = vrot.slane %v3541, 6
      %v3643 = vrot.slane %v3544, 2
      %v3644 = vrot.slane %v3544, 4
      %v3645 = vrot.slane %v3544, 6
      %v3646 = vrot.slane %v3547, 2
      %v3647 = vrot.slane %v3547, 4
      %v3648 = vrot.slane %v3547, 6
      %v3649 = vrot.slane %v3550, 2
      %v3650 = vrot.slane %v3550, 4
      %v3651 = vrot.slane %v3550, 6
      %v3652 = vrot.slane %v3553, 2
      %v3653 = vrot.slane %v3553, 4
      %v3654 = vrot.slane %v3553, 6
      %v3655 = vrot.slane %v3556, 2
      %v3656 = vrot.slane %v3556, 4
      %v3657 = vrot.slane %v3556, 6
      %v3658 = vrot.slane %v3559, 2
      %v3659 = vrot.slane %v3559, 4
      %v3660 = vrot.slane %v3559, 6
      %v3661 = vrot.slane %v3562, 2
      %v3662 = vrot.slane %v3562, 4
      %v3663 = vrot.slane %v3562, 6
      %v3664 = vrot.slane %v3565, 2
      %v3738 = vadd.f32 %v3059, %v3493
      %v3739 = vadd.f32 %v3060, %v3592
      %v3740 = vadd.f32 %v3061, %v3593
      %v3741 = vadd.f32 %v3062, %v3594
      %v3742 = vadd.f32 %v3063, %v3496
      %v3743 = vadd.f32 %v3064, %v3595
      %v3744 = vadd.f32 %v3065, %v3596
      %v3745 = vadd.f32 %v3066, %v3597
      %v3746 = vadd.f32 %v3067, %v3499
      %v3747 = vadd.f32 %v3068, %v3598
      %v3748 = vadd.f32 %v3069, %v3599
      %v3749 = vadd.f32 %v3070, %v3600
      %v3750 = vadd.f32 %v3071, %v3502
      %v3751 = vadd.f32 %v3072, %v3601
      %v3752 = vadd.f32 %v3073, %v3602
      %v3753 = vadd.f32 %v3074, %v3603
      %v3754 = vadd.f32 %v3075, %v3505
      %v3755 = vadd.f32 %v3076, %v3604
      %v3756 = vadd.f32 %v3077, %v3605
      %v3757 = vadd.f32 %v3078, %v3606
      %v3758 = vadd.f32 %v3079, %v3508
      %v3759 = vadd.f32 %v3080, %v3607
      %v3760 = vadd.f32 %v3081, %v3608
      %v3761 = vadd.f32 %v3082, %v3609
      %v3762 = vadd.f32 %v3083, %v3511
      %v3763 = vadd.f32 %v3084, %v3610
      %v3764 = vadd.f32 %v3085, %v3611
      %v3765 = vadd.f32 %v3086, %v3612
      %v3766 = vadd.f32 %v3087, %v3514
      %v3767 = vadd.f32 %v3088, %v3613
      %v3768 = vadd.f32 %v3089, %v3614
      %v3769 = vadd.f32 %v3090, %v3615
      %v3770 = vadd.f32 %v3091, %v3517
      %v3771 = vadd.f32 %v3092, %v3616
      %v3772 = vadd.f32 %v3093, %v3617
      %v3773 = vadd.f32 %v3094, %v3618
      %v3774 = vadd.f32 %v3095, %v3520
      %v3775 = vadd.f32 %v3096, %v3619
      %v3776 = vadd.f32 %v3097, %v3620
      %v3777 = vadd.f32 %v3098, %v3621
      %v3778 = vadd.f32 %v3099, %v3523
      %v3779 = vadd.f32 %v3100, %v3622
      %v3780 = vadd.f32 %v3101, %v3623
      %v3781 = vadd.f32 %v3102, %v3624
      %v3782 = vadd.f32 %v3103, %v3526
      %v3783 = vadd.f32 %v3104, %v3625
      %v3784 = vadd.f32 %v3105, %v3626
      %v3785 = vadd.f32 %v3106, %v3627
      %v3786 = vadd.f32 %v3107, %v3529
      %v3787 = vadd.f32 %v3108, %v3628
      %v3788 = vadd.f32 %v3109, %v3629
      %v3789 = vadd.f32 %v3110, %v3630
      %v3790 = vadd.f32 %v3111, %v3532
      %v3791 = vadd.f32 %v3112, %v3631
      %v3792 = vadd.f32 %v3113, %v3632
      %v3793 = vadd.f32 %v3114, %v3633
      %v3794 = vadd.f32 %v3115, %v3535
      %v3795 = vadd.f32 %v3116, %v3634
      %v3796 = vadd.f32 %v3117, %v3635
      %v3797 = vadd.f32 %v3118, %v3636
      %v3798 = vadd.f32 %v3119, %v3538
      %v3799 = vadd.f32 %v3120, %v3637
      %v3800 = vadd.f32 %v3121, %v3638
      %v3801 = vadd.f32 %v3122, %v3639
      %v3802 = vadd.f32 %v3123, %v3541
      %v3803 = vadd.f32 %v3124, %v3640
      %v3804 = vadd.f32 %v3125, %v3641
      %v3805 = vadd.f32 %v3126, %v3642
      %v3806 = vadd.f32 %v3127, %v3544
      %v3807 = vadd.f32 %v3128, %v3643
      %v3808 = vadd.f32 %v3129, %v3644
      %v3809 = vadd.f32 %v3130, %v3645
      %v3810 = vadd.f32 %v3131, %v3547
      %v3811 = vadd.f32 %v3132, %v3646
      %v3812 = vadd.f32 %v3133, %v3647
      %v3813 = vadd.f32 %v3134, %v3648
      %v3814 = vadd.f32 %v3135, %v3550
      %v3815 = vadd.f32 %v3136, %v3649
      %v3816 = vadd.f32 %v3137, %v3650
      %v3817 = vadd.f32 %v3138, %v3651
      %v3818 = vadd.f32 %v3139, %v3553
      %v3819 = vadd.f32 %v3140, %v3652
      %v3820 = vadd.f32 %v3141, %v3653
      %v3821 = vadd.f32 %v3142, %v3654
      %v3822 = vadd.f32 %v3143, %v3556
      %v3823 = vadd.f32 %v3144, %v3655
      %v3824 = vadd.f32 %v3145, %v3656
      %v3825 = vadd.f32 %v3146, %v3657
      %v3826 = vadd.f32 %v3147, %v3559
      %v3827 = vadd.f32 %v3148, %v3658
      %v3828 = vadd.f32 %v3149, %v3659
      %v3829 = vadd.f32 %v3150, %v3660
      %v3830 = vadd.f32 %v3151, %v3562
      %v3831 = vadd.f32 %v3152, %v3661
      %v3832 = vadd.f32 %v3153, %v3662
      %v3833 = vadd.f32 %v3154, %v3663
      %v3834 = vadd.f32 %v3155, %v3565
      %v3835 = vadd.f32 %v3156, %v3664
      %s3836 = scalar_lea.vmem %s1, 24
      %v3837 = vld [vmem:[%s3836] sm:$0xf]
      %v3840 = vrot.slane %v201, 2
      %v3841 = vrot.slane %v201, 4
      %v3842 = vrot.slane %v201, 6
      %v3843 = vrot.slane %v202, 2
      %v3844 = vrot.slane %v202, 4
      %3845 = vst [vmem:[#allocation1] ss:$4 sm:$0xff] %v175
      %s3846 = scalar_lea.vmem [#allocation1], 1
      %3847 = vst [vmem:[%s3846] ss:$4 sm:$0xff] %v246
      %s3848 = scalar_lea.vmem [#allocation1], 2
      %3849 = vst [vmem:[%s3848] ss:$4 sm:$0xff] %v247
      %s3850 = scalar_lea.vmem [#allocation1], 3
      %3851 = vst [vmem:[%s3850] ss:$4 sm:$0xff] %v248
      %s3852 = scalar_lea.vmem [#allocation1], 32
      %3853 = vst [vmem:[%s3852] ss:$4 sm:$0xff] %v176
      %s3854 = scalar_lea.vmem [#allocation1], 33
      %3855 = vst [vmem:[%s3854] ss:$4 sm:$0xff] %v249
      %s3856 = scalar_lea.vmem [#allocation1], 34
      %3857 = vst [vmem:[%s3856] ss:$4 sm:$0xff] %v250
      %s3858 = scalar_lea.vmem [#allocation1], 35
      %3859 = vst [vmem:[%s3858] ss:$4 sm:$0xff] %v177
      %v3860 = vld.sshfl [vmem:[#allocation1] sm:$0xff pattern:$0x73625140]
      %v3861 = vld.sshfl [vmem:[#allocation1 + $0x20] sm:$0xff pattern:$0x73625140]
      %3862 = vst [vmem:[#allocation1] ss:$4 sm:$0xff] %v252
      %3863 = vst [vmem:[%s3846] ss:$4 sm:$0xff] %v253
      %3864 = vst [vmem:[%s3848] ss:$4 sm:$0xff] %v254
      %3865 = vst [vmem:[%s3850] ss:$4 sm:$0xff] %v178
      %3866 = vst [vmem:[%s3852] ss:$4 sm:$0xff] %v255
      %3867 = vst [vmem:[%s3854] ss:$4 sm:$0xff] %v256
      %3868 = vst [vmem:[%s3856] ss:$4 sm:$0xff] %v179
      %3869 = vst [vmem:[%s3858] ss:$4 sm:$0xff] %v258
      %v3870 = vld.sshfl [vmem:[#allocation1] sm:$0xff pattern:$0x73625140]
      %v3871 = vld.sshfl [vmem:[#allocation1 + $0x20] sm:$0xff pattern:$0x73625140]
      %3872 = vst [vmem:[#allocation1] ss:$4 sm:$0xff] %v259
      %3873 = vst [vmem:[%s3846] ss:$4 sm:$0xff] %v260
      %3874 = vst [vmem:[%s3848] ss:$4 sm:$0xff] %v180
      %3875 = vst [vmem:[%s3850] ss:$4 sm:$0xff] %v261
      %3876 = vst [vmem:[%s3852] ss:$4 sm:$0xff] %v262
      %3877 = vst [vmem:[%s3854] ss:$4 sm:$0xff] %v181
      %3878 = vst [vmem:[%s3856] ss:$4 sm:$0xff] %v264
      %3879 = vst [vmem:[%s3858] ss:$4 sm:$0xff] %v265
      %v3880 = vld.sshfl [vmem:[#allocation1] sm:$0xff pattern:$0x73625140]
      %v3881 = vld.sshfl [vmem:[#allocation1 + $0x20] sm:$0xff pattern:$0x73625140]
      %3882 = vst [vmem:[#allocation1] ss:$4 sm:$0xff] %v266
      %3883 = vst [vmem:[%s3846] ss:$4 sm:$0xff] %v182
      %3884 = vst [vmem:[%s3848] ss:$4 sm:$0xff] %v267
      %3885 = vst [vmem:[%s3850] ss:$4 sm:$0xff] %v268
      %3886 = vst [vmem:[%s3852] ss:$4 sm:$0xff] %v183
      %3887 = vst [vmem:[%s3854] ss:$4 sm:$0xff] %v270
      %3888 = vst [vmem:[%s3856] ss:$4 sm:$0xff] %v271
      %3889 = vst [vmem:[%s3858] ss:$4 sm:$0xff] %v272
      %v3890 = vld.sshfl [vmem:[#allocation1] sm:$0xff pattern:$0x73625140]
      %v3891 = vld.sshfl [vmem:[#allocation1 + $0x20] sm:$0xff pattern:$0x73625140]
      %3892 = vst [vmem:[#allocation1] ss:$4 sm:$0xff] %v184
      %3893 = vst [vmem:[%s3846] ss:$4 sm:$0xff] %v273
      %3894 = vst [vmem:[%s3848] ss:$4 sm:$0xff] %v274
      %3895 = vst [vmem:[%s3850] ss:$4 sm:$0xff] %v185
      %3896 = vst [vmem:[%s3852] ss:$4 sm:$0xff] %v276
      %3897 = vst [vmem:[%s3854] ss:$4 sm:$0xff] %v277
      %3898 = vst [vmem:[%s3856] ss:$4 sm:$0xff] %v278
      %3899 = vst [vmem:[%s3858] ss:$4 sm:$0xff] %v186
      %v3900 = vld.sshfl [vmem:[#allocation1] sm:$0xff pattern:$0x73625140]
      %v3901 = vld.sshfl [vmem:[#allocation1 + $0x20] sm:$0xff pattern:$0x73625140]
      %3902 = vst [vmem:[#allocation1] ss:$4 sm:$0xff] %v279
      %3903 = vst [vmem:[%s3846] ss:$4 sm:$0xff] %v280
      %3904 = vst [vmem:[%s3848] ss:$4 sm:$0xff] %v187
      %3905 = vst [vmem:[%s3850] ss:$4 sm:$0xff] %v282
      %3906 = vst [vmem:[%s3852] ss:$4 sm:$0xff] %v283
      %3907 = vst [vmem:[%s3854] ss:$4 sm:$0xff] %v284
      %3908 = vst [vmem:[%s3856] ss:$4 sm:$0xff] %v188
      %3909 = vst [vmem:[%s3858] ss:$4 sm:$0xff] %v285
      %v3910 = vld.sshfl [vmem:[#allocation1] sm:$0xff pattern:$0x73625140]
      %v3911 = vld.sshfl [vmem:[#allocation1 + $0x20] sm:$0xff pattern:$0x73625140]
      %3912 = vst [vmem:[#allocation1] ss:$4 sm:$0xff] %v286
      %3913 = vst [vmem:[%s3846] ss:$4 sm:$0xff] %v189
      %3914 = vst [vmem:[%s3848] ss:$4 sm:$0xff] %v288
      %3915 = vst [vmem:[%s3850] ss:$4 sm:$0xff] %v289
      %3916 = vst [vmem:[%s3852] ss:$4 sm:$0xff] %v290
      %3917 = vst [vmem:[%s3854] ss:$4 sm:$0xff] %v190
      %3918 = vst [vmem:[%s3856] ss:$4 sm:$0xff] %v291
      %3919 = vst [vmem:[%s3858] ss:$4 sm:$0xff] %v292
      %v3920 = vld.sshfl [vmem:[#allocation1] sm:$0xff pattern:$0x73625140]
      %v3921 = vld.sshfl [vmem:[#allocation1 + $0x20] sm:$0xff pattern:$0x73625140]
      %3922 = vst [vmem:[#allocation1] ss:$4 sm:$0xff] %v191
      %3923 = vst [vmem:[%s3846] ss:$4 sm:$0xff] %v294
      %3924 = vst [vmem:[%s3848] ss:$4 sm:$0xff] %v295
      %3925 = vst [vmem:[%s3850] ss:$4 sm:$0xff] %v296
      %3926 = vst [vmem:[%s3852] ss:$4 sm:$0xff] %v192
      %3927 = vst [vmem:[%s3854] ss:$4 sm:$0xff] %v297
      %3928 = vst [vmem:[%s3856] ss:$4 sm:$0xff] %v298
      %3929 = vst [vmem:[%s3858] ss:$4 sm:$0xff] %v193
      %v3930 = vld.sshfl [vmem:[#allocation1] sm:$0xff pattern:$0x73625140]
      %v3931 = vld.sshfl [vmem:[#allocation1 + $0x20] sm:$0xff pattern:$0x73625140]
      %3932 = vst [vmem:[#allocation1] ss:$4 sm:$0xff] %v300
      %3933 = vst [vmem:[%s3846] ss:$4 sm:$0xff] %v301
      %3934 = vst [vmem:[%s3848] ss:$4 sm:$0xff] %v302
      %3935 = vst [vmem:[%s3850] ss:$4 sm:$0xff] %v194
      %3936 = vst [vmem:[%s3852] ss:$4 sm:$0xff] %v303
      %3937 = vst [vmem:[%s3854] ss:$4 sm:$0xff] %v304
      %3938 = vst [vmem:[%s3856] ss:$4 sm:$0xff] %v195
      %3939 = vst [vmem:[%s3858] ss:$4 sm:$0xff] %v306
      %v3940 = vld.sshfl [vmem:[#allocation1] sm:$0xff pattern:$0x73625140]
      %v3941 = vld.sshfl [vmem:[#allocation1 + $0x20] sm:$0xff pattern:$0x73625140]
      %3942 = vst [vmem:[#allocation1] ss:$4 sm:$0xff] %v307
      %3943 = vst [vmem:[%s3846] ss:$4 sm:$0xff] %v308
      %3944 = vst [vmem:[%s3848] ss:$4 sm:$0xff] %v196
      %3945 = vst [vmem:[%s3850] ss:$4 sm:$0xff] %v309
      %3946 = vst [vmem:[%s3852] ss:$4 sm:$0xff] %v310
      %3947 = vst [vmem:[%s3854] ss:$4 sm:$0xff] %v197
      %3948 = vst [vmem:[%s3856] ss:$4 sm:$0xff] %v312
      %3949 = vst [vmem:[%s3858] ss:$4 sm:$0xff] %v313
      %v3950 = vld.sshfl [vmem:[#allocation1] sm:$0xff pattern:$0x73625140]
      %v3951 = vld.sshfl [vmem:[#allocation1 + $0x20] sm:$0xff pattern:$0x73625140]
      %3952 = vst [vmem:[#allocation1] ss:$4 sm:$0xff] %v314
      %3953 = vst [vmem:[%s3846] ss:$4 sm:$0xff] %v198
      %3954 = vst [vmem:[%s3848] ss:$4 sm:$0xff] %v315
      %3955 = vst [vmem:[%s3850] ss:$4 sm:$0xff] %v316
      %3956 = vst [vmem:[%s3852] ss:$4 sm:$0xff] %v199
      %3957 = vst [vmem:[%s3854] ss:$4 sm:$0xff] %v2039
      %3958 = vst [vmem:[%s3856] ss:$4 sm:$0xff] %v2040
      %3959 = vst [vmem:[%s3858] ss:$4 sm:$0xff] %v2041
      %v3960 = vld.sshfl [vmem:[#allocation1] sm:$0xff pattern:$0x73625140]
      %v3961 = vld.sshfl [vmem:[#allocation1 + $0x20] sm:$0xff pattern:$0x73625140]
      %3962 = vst [vmem:[#allocation1] ss:$4 sm:$0xff] %v200
      %3963 = vst [vmem:[%s3846] ss:$4 sm:$0xff] %v2042
      %3964 = vst [vmem:[%s3848] ss:$4 sm:$0xff] %v2043
      %3965 = vst [vmem:[%s3850] ss:$4 sm:$0xff] %v201
      %3966 = vst [vmem:[%s3852] ss:$4 sm:$0xff] %v3840
      %3967 = vst [vmem:[%s3854] ss:$4 sm:$0xff] %v3841
      %3968 = vst [vmem:[%s3856] ss:$4 sm:$0xff] %v3842
      %3969 = vst [vmem:[%s3858] ss:$4 sm:$0xff] %v202
      %v3970 = vld.sshfl [vmem:[#allocation1] sm:$0xff pattern:$0x73625140]
      %v3971 = vld.sshfl [vmem:[#allocation1 + $0x20] sm:$0xff pattern:$0x73625140]
      %3972 = vst [vmem:[#allocation1] ss:$4 sm:$0xff] %v3843
      %3973 = vst [vmem:[%s3846] ss:$4 sm:$0xff] %v3844
      %v3974 = vld.sshfl [vmem:[#allocation1] sm:$0xff pattern:$0x73625140]
      %v3975 = vsel %vm763, %v3860, 0
      %v3977 = vsel %vm763, %v3861, 0
      %v3979 = vsel %vm763, %v3870, 0
      %v3981 = vsel %vm763, %v3871, 0
      %v3983 = vsel %vm763, %v3880, 0
      %v3985 = vsel %vm763, %v3881, 0
      %v3987 = vsel %vm763, %v3890, 0
      %v3989 = vsel %vm763, %v3891, 0
      %v3991 = vsel %vm763, %v3900, 0
      %v3993 = vsel %vm763, %v3901, 0
      %v3995 = vsel %vm763, %v3910, 0
      %v3997 = vsel %vm763, %v3911, 0
      %v3999 = vsel %vm763, %v3920, 0
      %v4001 = vsel %vm763, %v3921, 0
      %v4003 = vsel %vm763, %v3930, 0
      %v4005 = vsel %vm763, %v3931, 0
      %v4007 = vsel %vm763, %v3940, 0
      %v4009 = vsel %vm763, %v3941, 0
      %v4011 = vsel %vm763, %v3950, 0
      %v4013 = vsel %vm763, %v3951, 0
      %v4015 = vsel %vm763, %v3960, 0
      %v4017 = vsel %vm763, %v3961, 0
      %v4019 = vsel %vm763, %v3970, 0
      %v4021 = vsel %vm763, %v3971, 0
      %v4023 = vsel %vm763, %v3974, 0
      %v4026 = vsel %vm814, %v3837, 0
      %4028 = vmatpush.msra.mxu0 0.0
      %4029 = vmatpush.msra.mxu0 0.0
      %4030 = vmatpush.msra.mxu0 0.0
      %4031 = vmatpush.msra.mxu0 0.0
      %4032 = vmatpush.msra.mxu0 0.0
      %4033 = vmatpush.msra.mxu0 0.0
      %4034 = vmatpush.msra.mxu0 0.0
      %4035 = vmatpush.msra.mxu0 0.0
      %4036 = vmatpush.msra.mxu0 0.0
      %4037 = vmatpush.msra.mxu0 0.0
      %4038 = vmatpush.msra.mxu0 0.0
      %4039 = vmatpush.msra.mxu0 0.0
      %4040 = vmatpush.msra.mxu0 0.0
      %4041 = vmatpush.msra.mxu0 0.0
      %4042 = vmatpush.msra.mxu0 0.0
      %4043 = vmatpush.msra.mxu0 %v4026
      %4044 = vmatmul.f32.gmra.mxu0 %v3975
      %v4045 = vpop.f32.mrf.mxu0
      %v4046 = vadd.f32 0.0, %v4045
      %4047 = vmatmul.f32.gmra.mxu0 %v3977
      %v4048 = vpop.f32.mrf.mxu0
      %v4049 = vadd.f32 0.0, %v4048
      %4050 = vmatmul.f32.gmra.mxu0 %v3979
      %v4051 = vpop.f32.mrf.mxu0
      %v4052 = vadd.f32 0.0, %v4051
      %4053 = vmatmul.f32.gmra.mxu0 %v3981
      %v4054 = vpop.f32.mrf.mxu0
      %v4055 = vadd.f32 0.0, %v4054
      %4056 = vmatmul.f32.gmra.mxu0 %v3983
      %v4057 = vpop.f32.mrf.mxu0
      %v4058 = vadd.f32 0.0, %v4057
      %4059 = vmatmul.f32.gmra.mxu0 %v3985
      %v4060 = vpop.f32.mrf.mxu0
      %v4061 = vadd.f32 0.0, %v4060
      %4062 = vmatmul.f32.gmra.mxu0 %v3987
      %v4063 = vpop.f32.mrf.mxu0
      %v4064 = vadd.f32 0.0, %v4063
      %4065 = vmatmul.f32.gmra.mxu0 %v3989
      %v4066 = vpop.f32.mrf.mxu0
      %v4067 = vadd.f32 0.0, %v4066
      %4068 = vmatmul.f32.gmra.mxu0 %v3991
      %v4069 = vpop.f32.mrf.mxu0
      %v4070 = vadd.f32 0.0, %v4069
      %4071 = vmatmul.f32.gmra.mxu0 %v3993
      %v4072 = vpop.f32.mrf.mxu0
      %v4073 = vadd.f32 0.0, %v4072
      %4074 = vmatmul.f32.gmra.mxu0 %v3995
      %v4075 = vpop.f32.mrf.mxu0
      %v4076 = vadd.f32 0.0, %v4075
      %4077 = vmatmul.f32.gmra.mxu0 %v3997
      %v4078 = vpop.f32.mrf.mxu0
      %v4079 = vadd.f32 0.0, %v4078
      %4080 = vmatmul.f32.gmra.mxu0 %v3999
      %v4081 = vpop.f32.mrf.mxu0
      %v4082 = vadd.f32 0.0, %v4081
      %4083 = vmatmul.f32.gmra.mxu0 %v4001
      %v4084 = vpop.f32.mrf.mxu0
      %v4085 = vadd.f32 0.0, %v4084
      %4086 = vmatmul.f32.gmra.mxu0 %v4003
      %v4087 = vpop.f32.mrf.mxu0
      %v4088 = vadd.f32 0.0, %v4087
      %4089 = vmatmul.f32.gmra.mxu0 %v4005
      %v4090 = vpop.f32.mrf.mxu0
      %v4091 = vadd.f32 0.0, %v4090
      %4092 = vmatmul.f32.gmra.mxu0 %v4007
      %v4093 = vpop.f32.mrf.mxu0
      %v4094 = vadd.f32 0.0, %v4093
      %4095 = vmatmul.f32.gmra.mxu0 %v4009
      %v4096 = vpop.f32.mrf.mxu0
      %v4097 = vadd.f32 0.0, %v4096
      %4098 = vmatmul.f32.gmra.mxu0 %v4011
      %v4099 = vpop.f32.mrf.mxu0
      %v4100 = vadd.f32 0.0, %v4099
      %4101 = vmatmul.f32.gmra.mxu0 %v4013
      %v4102 = vpop.f32.mrf.mxu0
      %v4103 = vadd.f32 0.0, %v4102
      %4104 = vmatmul.f32.gmra.mxu0 %v4015
      %v4105 = vpop.f32.mrf.mxu0
      %v4106 = vadd.f32 0.0, %v4105
      %4107 = vmatmul.f32.gmra.mxu0 %v4017
      %v4108 = vpop.f32.mrf.mxu0
      %v4109 = vadd.f32 0.0, %v4108
      %4110 = vmatmul.f32.gmra.mxu0 %v4019
      %v4111 = vpop.f32.mrf.mxu0
      %v4112 = vadd.f32 0.0, %v4111
      %4113 = vmatmul.f32.gmra.mxu0 %v4021
      %v4114 = vpop.f32.mrf.mxu0
      %v4115 = vadd.f32 0.0, %v4114
      %4116 = vmatmul.f32.gmra.mxu0 %v4023
      %v4117 = vpop.f32.mrf.mxu0
      %v4118 = vadd.f32 0.0, %v4117
      %4119 = vdwg.mxu0
      %v4145 = vrot.slane %v4046, 2
      %v4146 = vrot.slane %v4046, 4
      %v4147 = vrot.slane %v4046, 6
      %v4148 = vrot.slane %v4049, 2
      %v4149 = vrot.slane %v4049, 4
      %v4150 = vrot.slane %v4049, 6
      %v4151 = vrot.slane %v4052, 2
      %v4152 = vrot.slane %v4052, 4
      %v4153 = vrot.slane %v4052, 6
      %v4154 = vrot.slane %v4055, 2
      %v4155 = vrot.slane %v4055, 4
      %v4156 = vrot.slane %v4055, 6
      %v4157 = vrot.slane %v4058, 2
      %v4158 = vrot.slane %v4058, 4
      %v4159 = vrot.slane %v4058, 6
      %v4160 = vrot.slane %v4061, 2
      %v4161 = vrot.slane %v4061, 4
      %v4162 = vrot.slane %v4061, 6
      %v4163 = vrot.slane %v4064, 2
      %v4164 = vrot.slane %v4064, 4
      %v4165 = vrot.slane %v4064, 6
      %v4166 = vrot.slane %v4067, 2
      %v4167 = vrot.slane %v4067, 4
      %v4168 = vrot.slane %v4067, 6
      %v4169 = vrot.slane %v4070, 2
      %v4170 = vrot.slane %v4070, 4
      %v4171 = vrot.slane %v4070, 6
      %v4172 = vrot.slane %v4073, 2
      %v4173 = vrot.slane %v4073, 4
      %v4174 = vrot.slane %v4073, 6
      %v4175 = vrot.slane %v4076, 2
      %v4176 = vrot.slane %v4076, 4
      %v4177 = vrot.slane %v4076, 6
      %v4178 = vrot.slane %v4079, 2
      %v4179 = vrot.slane %v4079, 4
      %v4180 = vrot.slane %v4079, 6
      %v4181 = vrot.slane %v4082, 2
      %v4182 = vrot.slane %v4082, 4
      %v4183 = vrot.slane %v4082, 6
      %v4184 = vrot.slane %v4085, 2
      %v4185 = vrot.slane %v4085, 4
      %v4186 = vrot.slane %v4085, 6
      %v4187 = vrot.slane %v4088, 2
      %v4188 = vrot.slane %v4088, 4
      %v4189 = vrot.slane %v4088, 6
      %v4190 = vrot.slane %v4091, 2
      %v4191 = vrot.slane %v4091, 4
      %v4192 = vrot.slane %v4091, 6
      %v4193 = vrot.slane %v4094, 2
      %v4194 = vrot.slane %v4094, 4
      %v4195 = vrot.slane %v4094, 6
      %v4196 = vrot.slane %v4097, 2
      %v4197 = vrot.slane %v4097, 4
      %v4198 = vrot.slane %v4097, 6
      %v4199 = vrot.slane %v4100, 2
      %v4200 = vrot.slane %v4100, 4
      %v4201 = vrot.slane %v4100, 6
      %v4202 = vrot.slane %v4103, 2
      %v4203 = vrot.slane %v4103, 4
      %v4204 = vrot.slane %v4103, 6
      %v4205 = vrot.slane %v4106, 2
      %v4206 = vrot.slane %v4106, 4
      %v4207 = vrot.slane %v4106, 6
      %v4208 = vrot.slane %v4109, 2
      %v4209 = vrot.slane %v4109, 4
      %v4210 = vrot.slane %v4109, 6
      %v4211 = vrot.slane %v4112, 2
      %v4212 = vrot.slane %v4112, 4
      %v4213 = vrot.slane %v4112, 6
      %v4214 = vrot.slane %v4115, 2
      %v4215 = vrot.slane %v4115, 4
      %v4216 = vrot.slane %v4115, 6
      %v4217 = vrot.slane %v4118, 2
      %v4291 = vadd.f32 %v3738, %v4046
      %v4292 = vadd.f32 %v3739, %v4145
      %v4293 = vadd.f32 %v3740, %v4146
      %v4294 = vadd.f32 %v3741, %v4147
      %v4295 = vadd.f32 %v3742, %v4049
      %v4296 = vadd.f32 %v3743, %v4148
      %v4297 = vadd.f32 %v3744, %v4149
      %v4298 = vadd.f32 %v3745, %v4150
      %v4299 = vadd.f32 %v3746, %v4052
      %v4300 = vadd.f32 %v3747, %v4151
      %v4301 = vadd.f32 %v3748, %v4152
      %v4302 = vadd.f32 %v3749, %v4153
      %v4303 = vadd.f32 %v3750, %v4055
      %v4304 = vadd.f32 %v3751, %v4154
      %v4305 = vadd.f32 %v3752, %v4155
      %v4306 = vadd.f32 %v3753, %v4156
      %v4307 = vadd.f32 %v3754, %v4058
      %v4308 = vadd.f32 %v3755, %v4157
      %v4309 = vadd.f32 %v3756, %v4158
      %v4310 = vadd.f32 %v3757, %v4159
      %v4311 = vadd.f32 %v3758, %v4061
      %v4312 = vadd.f32 %v3759, %v4160
      %v4313 = vadd.f32 %v3760, %v4161
      %v4314 = vadd.f32 %v3761, %v4162
      %v4315 = vadd.f32 %v3762, %v4064
      %v4316 = vadd.f32 %v3763, %v4163
      %v4317 = vadd.f32 %v3764, %v4164
      %v4318 = vadd.f32 %v3765, %v4165
      %v4319 = vadd.f32 %v3766, %v4067
      %v4320 = vadd.f32 %v3767, %v4166
      %v4321 = vadd.f32 %v3768, %v4167
      %v4322 = vadd.f32 %v3769, %v4168
      %v4323 = vadd.f32 %v3770, %v4070
      %v4324 = vadd.f32 %v3771, %v4169
      %v4325 = vadd.f32 %v3772, %v4170
      %v4326 = vadd.f32 %v3773, %v4171
      %v4327 = vadd.f32 %v3774, %v4073
      %v4328 = vadd.f32 %v3775, %v4172
      %v4329 = vadd.f32 %v3776, %v4173
      %v4330 = vadd.f32 %v3777, %v4174
      %v4331 = vadd.f32 %v3778, %v4076
      %v4332 = vadd.f32 %v3779, %v4175
      %v4333 = vadd.f32 %v3780, %v4176
      %v4334 = vadd.f32 %v3781, %v4177
      %v4335 = vadd.f32 %v3782, %v4079
      %v4336 = vadd.f32 %v3783, %v4178
      %v4337 = vadd.f32 %v3784, %v4179
      %v4338 = vadd.f32 %v3785, %v4180
      %v4339 = vadd.f32 %v3786, %v4082
      %v4340 = vadd.f32 %v3787, %v4181
      %v4341 = vadd.f32 %v3788, %v4182
      %v4342 = vadd.f32 %v3789, %v4183
      %v4343 = vadd.f32 %v3790, %v4085
      %v4344 = vadd.f32 %v3791, %v4184
      %v4345 = vadd.f32 %v3792, %v4185
      %v4346 = vadd.f32 %v3793, %v4186
      %v4347 = vadd.f32 %v3794, %v4088
      %v4348 = vadd.f32 %v3795, %v4187
      %v4349 = vadd.f32 %v3796, %v4188
      %v4350 = vadd.f32 %v3797, %v4189
      %v4351 = vadd.f32 %v3798, %v4091
      %v4352 = vadd.f32 %v3799, %v4190
      %v4353 = vadd.f32 %v3800, %v4191
      %v4354 = vadd.f32 %v3801, %v4192
      %v4355 = vadd.f32 %v3802, %v4094
      %v4356 = vadd.f32 %v3803, %v4193
      %v4357 = vadd.f32 %v3804, %v4194
      %v4358 = vadd.f32 %v3805, %v4195
      %v4359 = vadd.f32 %v3806, %v4097
      %v4360 = vadd.f32 %v3807, %v4196
      %v4361 = vadd.f32 %v3808, %v4197
      %v4362 = vadd.f32 %v3809, %v4198
      %v4363 = vadd.f32 %v3810, %v4100
      %v4364 = vadd.f32 %v3811, %v4199
      %v4365 = vadd.f32 %v3812, %v4200
      %v4366 = vadd.f32 %v3813, %v4201
      %v4367 = vadd.f32 %v3814, %v4103
      %v4368 = vadd.f32 %v3815, %v4202
      %v4369 = vadd.f32 %v3816, %v4203
      %v4370 = vadd.f32 %v3817, %v4204
      %v4371 = vadd.f32 %v3818, %v4106
      %v4372 = vadd.f32 %v3819, %v4205
      %v4373 = vadd.f32 %v3820, %v4206
      %v4374 = vadd.f32 %v3821, %v4207
      %v4375 = vadd.f32 %v3822, %v4109
      %v4376 = vadd.f32 %v3823, %v4208
      %v4377 = vadd.f32 %v3824, %v4209
      %v4378 = vadd.f32 %v3825, %v4210
      %v4379 = vadd.f32 %v3826, %v4112
      %v4380 = vadd.f32 %v3827, %v4211
      %v4381 = vadd.f32 %v3828, %v4212
      %v4382 = vadd.f32 %v3829, %v4213
      %v4383 = vadd.f32 %v3830, %v4115
      %v4384 = vadd.f32 %v3831, %v4214
      %v4385 = vadd.f32 %v3832, %v4215
      %v4386 = vadd.f32 %v3833, %v4216
      %v4387 = vadd.f32 %v3834, %v4118
      %v4388 = vadd.f32 %v3835, %v4217
      %s4389 = scalar_lea.vmem %s1, 28
      %v4390 = vld [vmem:[%s4389] sm:$0xf]
      %v4391 = vrot.slane %v202, 6
      %v4392 = vrot.slane %v201, 7
      %v4393 = vrot.slane %v4392, 2
      %v4394 = vrot.slane %v3840, 7
      %v4395 = vsel %vm324, %v4393, %v4394
      %v4396 = vrot.slane %v4394, 2
      %v4397 = vrot.slane %v3841, 7
      %v4398 = vsel %vm324, %v4396, %v4397
      %v4399 = vrot.slane %v4397, 2
      %v4400 = vrot.slane %v3842, 7
      %v4401 = vsel %vm324, %v4399, %v4400
      %v4402 = vrot.slane %v4400, 2
      %v4403 = vrot.slane %v202, 7
      %v4404 = vsel %vm324, %v4402, %v4403
      %v4405 = vrot.slane %v4403, 2
      %v4406 = vrot.slane %v3843, 7
      %v4407 = vsel %vm324, %v4405, %v4406
      %v4408 = vrot.slane %v4406, 2
      %v4409 = vrot.slane %v3844, 7
      %v4410 = vsel %vm324, %v4408, %v4409
      %v4411 = vrot.slane %v4409, 2
      %v4412 = vrot.slane %v4391, 7
      %v4413 = vsel %vm324, %v4411, %v4412
      %4414 = vst [vmem:[#allocation1] ss:$4 sm:$0xff] %v372
      %s4415 = scalar_lea.vmem [#allocation1], 1
      %4416 = vst [vmem:[%s4415] ss:$4 sm:$0xff] %v375
      %s4417 = scalar_lea.vmem [#allocation1], 2
      %4418 = vst [vmem:[%s4417] ss:$4 sm:$0xff] %v378
      %s4419 = scalar_lea.vmem [#allocation1], 3
      %4420 = vst [vmem:[%s4419] ss:$4 sm:$0xff] %v381
      %s4421 = scalar_lea.vmem [#allocation1], 32
      %4422 = vst [vmem:[%s4421] ss:$4 sm:$0xff] %v384
      %s4423 = scalar_lea.vmem [#allocation1], 33
      %4424 = vst [vmem:[%s4423] ss:$4 sm:$0xff] %v387
      %s4425 = scalar_lea.vmem [#allocation1], 34
      %4426 = vst [vmem:[%s4425] ss:$4 sm:$0xff] %v390
      %s4427 = scalar_lea.vmem [#allocation1], 35
      %4428 = vst [vmem:[%s4427] ss:$4 sm:$0xff] %v394
      %v4429 = vld.sshfl [vmem:[#allocation1] sm:$0xff pattern:$0x73625140]
      %v4430 = vld.sshfl [vmem:[#allocation1 + $0x20] sm:$0xff pattern:$0x73625140]
      %4431 = vst [vmem:[#allocation1] ss:$4 sm:$0xff] %v397
      %4432 = vst [vmem:[%s4415] ss:$4 sm:$0xff] %v400
      %4433 = vst [vmem:[%s4417] ss:$4 sm:$0xff] %v403
      %4434 = vst [vmem:[%s4419] ss:$4 sm:$0xff] %v406
      %4435 = vst [vmem:[%s4421] ss:$4 sm:$0xff] %v409
      %4436 = vst [vmem:[%s4423] ss:$4 sm:$0xff] %v412
      %4437 = vst [vmem:[%s4425] ss:$4 sm:$0xff] %v416
      %4438 = vst [vmem:[%s4427] ss:$4 sm:$0xff] %v419
      %v4439 = vld.sshfl [vmem:[#allocation1] sm:$0xff pattern:$0x73625140]
      %v4440 = vld.sshfl [vmem:[#allocation1 + $0x20] sm:$0xff pattern:$0x73625140]
      %4441 = vst [vmem:[#allocation1] ss:$4 sm:$0xff] %v422
      %4442 = vst [vmem:[%s4415] ss:$4 sm:$0xff] %v425
      %4443 = vst [vmem:[%s4417] ss:$4 sm:$0xff] %v428
      %4444 = vst [vmem:[%s4419] ss:$4 sm:$0xff] %v431
      %4445 = vst [vmem:[%s4421] ss:$4 sm:$0xff] %v434
      %4446 = vst [vmem:[%s4423] ss:$4 sm:$0xff] %v438
      %4447 = vst [vmem:[%s4425] ss:$4 sm:$0xff] %v441
      %4448 = vst [vmem:[%s4427] ss:$4 sm:$0xff] %v444
      %v4449 = vld.sshfl [vmem:[#allocation1] sm:$0xff pattern:$0x73625140]
      %v4450 = vld.sshfl [vmem:[#allocation1 + $0x20] sm:$0xff pattern:$0x73625140]
      %4451 = vst [vmem:[#allocation1] ss:$4 sm:$0xff] %v447
      %4452 = vst [vmem:[%s4415] ss:$4 sm:$0xff] %v450
      %4453 = vst [vmem:[%s4417] ss:$4 sm:$0xff] %v453
      %4454 = vst [vmem:[%s4419] ss:$4 sm:$0xff] %v456
      %4455 = vst [vmem:[%s4421] ss:$4 sm:$0xff] %v460
      %4456 = vst [vmem:[%s4423] ss:$4 sm:$0xff] %v463
      %4457 = vst [vmem:[%s4425] ss:$4 sm:$0xff] %v466
      %4458 = vst [vmem:[%s4427] ss:$4 sm:$0xff] %v469
      %v4459 = vld.sshfl [vmem:[#allocation1] sm:$0xff pattern:$0x73625140]
      %v4460 = vld.sshfl [vmem:[#allocation1 + $0x20] sm:$0xff pattern:$0x73625140]
      %4461 = vst [vmem:[#allocation1] ss:$4 sm:$0xff] %v472
      %4462 = vst [vmem:[%s4415] ss:$4 sm:$0xff] %v475
      %4463 = vst [vmem:[%s4417] ss:$4 sm:$0xff] %v478
      %4464 = vst [vmem:[%s4419] ss:$4 sm:$0xff] %v482
      %4465 = vst [vmem:[%s4421] ss:$4 sm:$0xff] %v485
      %4466 = vst [vmem:[%s4423] ss:$4 sm:$0xff] %v488
      %4467 = vst [vmem:[%s4425] ss:$4 sm:$0xff] %v491
      %4468 = vst [vmem:[%s4427] ss:$4 sm:$0xff] %v494
      %v4469 = vld.sshfl [vmem:[#allocation1] sm:$0xff pattern:$0x73625140]
      %v4470 = vld.sshfl [vmem:[#allocation1 + $0x20] sm:$0xff pattern:$0x73625140]
      %4471 = vst [vmem:[#allocation1] ss:$4 sm:$0xff] %v497
      %4472 = vst [vmem:[%s4415] ss:$4 sm:$0xff] %v500
      %4473 = vst [vmem:[%s4417] ss:$4 sm:$0xff] %v504
      %4474 = vst [vmem:[%s4419] ss:$4 sm:$0xff] %v507
      %4475 = vst [vmem:[%s4421] ss:$4 sm:$0xff] %v510
      %4476 = vst [vmem:[%s4423] ss:$4 sm:$0xff] %v513
      %4477 = vst [vmem:[%s4425] ss:$4 sm:$0xff] %v516
      %4478 = vst [vmem:[%s4427] ss:$4 sm:$0xff] %v519
      %v4479 = vld.sshfl [vmem:[#allocation1] sm:$0xff pattern:$0x73625140]
      %v4480 = vld.sshfl [vmem:[#allocation1 + $0x20] sm:$0xff pattern:$0x73625140]
      %4481 = vst [vmem:[#allocation1] ss:$4 sm:$0xff] %v522
      %4482 = vst [vmem:[%s4415] ss:$4 sm:$0xff] %v526
      %4483 = vst [vmem:[%s4417] ss:$4 sm:$0xff] %v529
      %4484 = vst [vmem:[%s4419] ss:$4 sm:$0xff] %v532
      %4485 = vst [vmem:[%s4421] ss:$4 sm:$0xff] %v535
      %4486 = vst [vmem:[%s4423] ss:$4 sm:$0xff] %v538
      %4487 = vst [vmem:[%s4425] ss:$4 sm:$0xff] %v541
      %4488 = vst [vmem:[%s4427] ss:$4 sm:$0xff] %v544
      %v4489 = vld.sshfl [vmem:[#allocation1] sm:$0xff pattern:$0x73625140]
      %v4490 = vld.sshfl [vmem:[#allocation1 + $0x20] sm:$0xff pattern:$0x73625140]
      %4491 = vst [vmem:[#allocation1] ss:$4 sm:$0xff] %v548
      %4492 = vst [vmem:[%s4415] ss:$4 sm:$0xff] %v551
      %4493 = vst [vmem:[%s4417] ss:$4 sm:$0xff] %v554
      %4494 = vst [vmem:[%s4419] ss:$4 sm:$0xff] %v557
      %4495 = vst [vmem:[%s4421] ss:$4 sm:$0xff] %v560
      %4496 = vst [vmem:[%s4423] ss:$4 sm:$0xff] %v563
      %4497 = vst [vmem:[%s4425] ss:$4 sm:$0xff] %v566
      %4498 = vst [vmem:[%s4427] ss:$4 sm:$0xff] %v570
      %v4499 = vld.sshfl [vmem:[#allocation1] sm:$0xff pattern:$0x73625140]
      %v4500 = vld.sshfl [vmem:[#allocation1 + $0x20] sm:$0xff pattern:$0x73625140]
      %4501 = vst [vmem:[#allocation1] ss:$4 sm:$0xff] %v573
      %4502 = vst [vmem:[%s4415] ss:$4 sm:$0xff] %v576
      %4503 = vst [vmem:[%s4417] ss:$4 sm:$0xff] %v579
      %4504 = vst [vmem:[%s4419] ss:$4 sm:$0xff] %v582
      %4505 = vst [vmem:[%s4421] ss:$4 sm:$0xff] %v585
      %4506 = vst [vmem:[%s4423] ss:$4 sm:$0xff] %v588
      %4507 = vst [vmem:[%s4425] ss:$4 sm:$0xff] %v592
      %4508 = vst [vmem:[%s4427] ss:$4 sm:$0xff] %v595
      %v4509 = vld.sshfl [vmem:[#allocation1] sm:$0xff pattern:$0x73625140]
      %v4510 = vld.sshfl [vmem:[#allocation1 + $0x20] sm:$0xff pattern:$0x73625140]
      %4511 = vst [vmem:[#allocation1] ss:$4 sm:$0xff] %v598
      %4512 = vst [vmem:[%s4415] ss:$4 sm:$0xff] %v601
      %4513 = vst [vmem:[%s4417] ss:$4 sm:$0xff] %v604
      %4514 = vst [vmem:[%s4419] ss:$4 sm:$0xff] %v607
      %4515 = vst [vmem:[%s4421] ss:$4 sm:$0xff] %v610
      %4516 = vst [vmem:[%s4423] ss:$4 sm:$0xff] %v614
      %4517 = vst [vmem:[%s4425] ss:$4 sm:$0xff] %v617
      %4518 = vst [vmem:[%s4427] ss:$4 sm:$0xff] %v620
      %v4519 = vld.sshfl [vmem:[#allocation1] sm:$0xff pattern:$0x73625140]
      %v4520 = vld.sshfl [vmem:[#allocation1 + $0x20] sm:$0xff pattern:$0x73625140]
      %4521 = vst [vmem:[#allocation1] ss:$4 sm:$0xff] %v623
      %4522 = vst [vmem:[%s4415] ss:$4 sm:$0xff] %v626
      %4523 = vst [vmem:[%s4417] ss:$4 sm:$0xff] %v629
      %4524 = vst [vmem:[%s4419] ss:$4 sm:$0xff] %v632
      %4525 = vst [vmem:[%s4421] ss:$4 sm:$0xff] %v2594
      %4526 = vst [vmem:[%s4423] ss:$4 sm:$0xff] %v2597
      %4527 = vst [vmem:[%s4425] ss:$4 sm:$0xff] %v2600
      %4528 = vst [vmem:[%s4427] ss:$4 sm:$0xff] %v2603
      %v4529 = vld.sshfl [vmem:[#allocation1] sm:$0xff pattern:$0x73625140]
      %v4530 = vld.sshfl [vmem:[#allocation1 + $0x20] sm:$0xff pattern:$0x73625140]
      %4531 = vst [vmem:[#allocation1] ss:$4 sm:$0xff] %v2606
      %4532 = vst [vmem:[%s4415] ss:$4 sm:$0xff] %v2609
      %4533 = vst [vmem:[%s4417] ss:$4 sm:$0xff] %v2612
      %4534 = vst [vmem:[%s4419] ss:$4 sm:$0xff] %v4395
      %4535 = vst [vmem:[%s4421] ss:$4 sm:$0xff] %v4398
      %4536 = vst [vmem:[%s4423] ss:$4 sm:$0xff] %v4401
      %4537 = vst [vmem:[%s4425] ss:$4 sm:$0xff] %v4404
      %4538 = vst [vmem:[%s4427] ss:$4 sm:$0xff] %v4407
      %v4539 = vld.sshfl [vmem:[#allocation1] sm:$0xff pattern:$0x73625140]
      %v4540 = vld.sshfl [vmem:[#allocation1 + $0x20] sm:$0xff pattern:$0x73625140]
      %4541 = vst [vmem:[#allocation1] ss:$4 sm:$0xff] %v4410
      %4542 = vst [vmem:[%s4415] ss:$4 sm:$0xff] %v4413
      %v4543 = vld.sshfl [vmem:[#allocation1] sm:$0xff pattern:$0x73625140]
      %v4544 = vsel %vm763, %v4429, 0
      %v4546 = vsel %vm763, %v4430, 0
      %v4548 = vsel %vm763, %v4439, 0
      %v4550 = vsel %vm763, %v4440, 0
      %v4552 = vsel %vm763, %v4449, 0
      %v4554 = vsel %vm763, %v4450, 0
      %v4556 = vsel %vm763, %v4459, 0
      %v4558 = vsel %vm763, %v4460, 0
      %v4560 = vsel %vm763, %v4469, 0
      %v4562 = vsel %vm763, %v4470, 0
      %v4564 = vsel %vm763, %v4479, 0
      %v4566 = vsel %vm763, %v4480, 0
      %v4568 = vsel %vm763, %v4489, 0
      %v4570 = vsel %vm763, %v4490, 0
      %v4572 = vsel %vm763, %v4499, 0
      %v4574 = vsel %vm763, %v4500, 0
      %v4576 = vsel %vm763, %v4509, 0
      %v4578 = vsel %vm763, %v4510, 0
      %v4580 = vsel %vm763, %v4519, 0
      %v4582 = vsel %vm763, %v4520, 0
      %v4584 = vsel %vm763, %v4529, 0
      %v4586 = vsel %vm763, %v4530, 0
      %v4588 = vsel %vm763, %v4539, 0
      %v4590 = vsel %vm763, %v4540, 0
      %v4592 = vsel %vm763, %v4543, 0
      %v4595 = vsel %vm814, %v4390, 0
      %4597 = vmatpush.msra.mxu0 0.0
      %4598 = vmatpush.msra.mxu0 0.0
      %4599 = vmatpush.msra.mxu0 0.0
      %4600 = vmatpush.msra.mxu0 0.0
      %4601 = vmatpush.msra.mxu0 0.0
      %4602 = vmatpush.msra.mxu0 0.0
      %4603 = vmatpush.msra.mxu0 0.0
      %4604 = vmatpush.msra.mxu0 0.0
      %4605 = vmatpush.msra.mxu0 0.0
      %4606 = vmatpush.msra.mxu0 0.0
      %4607 = vmatpush.msra.mxu0 0.0
      %4608 = vmatpush.msra.mxu0 0.0
      %4609 = vmatpush.msra.mxu0 0.0
      %4610 = vmatpush.msra.mxu0 0.0
      %4611 = vmatpush.msra.mxu0 0.0
      %4612 = vmatpush.msra.mxu0 %v4595
      %4613 = vmatmul.f32.gmra.mxu0 %v4544
      %v4614 = vpop.f32.mrf.mxu0
      %v4615 = vadd.f32 0.0, %v4614
      %4616 = vmatmul.f32.gmra.mxu0 %v4546
      %v4617 = vpop.f32.mrf.mxu0
      %v4618 = vadd.f32 0.0, %v4617
      %4619 = vmatmul.f32.gmra.mxu0 %v4548
      %v4620 = vpop.f32.mrf.mxu0
      %v4621 = vadd.f32 0.0, %v4620
      %4622 = vmatmul.f32.gmra.mxu0 %v4550
      %v4623 = vpop.f32.mrf.mxu0
      %v4624 = vadd.f32 0.0, %v4623
      %4625 = vmatmul.f32.gmra.mxu0 %v4552
      %v4626 = vpop.f32.mrf.mxu0
      %v4627 = vadd.f32 0.0, %v4626
      %4628 = vmatmul.f32.gmra.mxu0 %v4554
      %v4629 = vpop.f32.mrf.mxu0
      %v4630 = vadd.f32 0.0, %v4629
      %4631 = vmatmul.f32.gmra.mxu0 %v4556
      %v4632 = vpop.f32.mrf.mxu0
      %v4633 = vadd.f32 0.0, %v4632
      %4634 = vmatmul.f32.gmra.mxu0 %v4558
      %v4635 = vpop.f32.mrf.mxu0
      %v4636 = vadd.f32 0.0, %v4635
      %4637 = vmatmul.f32.gmra.mxu0 %v4560
      %v4638 = vpop.f32.mrf.mxu0
      %v4639 = vadd.f32 0.0, %v4638
      %4640 = vmatmul.f32.gmra.mxu0 %v4562
      %v4641 = vpop.f32.mrf.mxu0
      %v4642 = vadd.f32 0.0, %v4641
      %4643 = vmatmul.f32.gmra.mxu0 %v4564
      %v4644 = vpop.f32.mrf.mxu0
      %v4645 = vadd.f32 0.0, %v4644
      %4646 = vmatmul.f32.gmra.mxu0 %v4566
      %v4647 = vpop.f32.mrf.mxu0
      %v4648 = vadd.f32 0.0, %v4647
      %4649 = vmatmul.f32.gmra.mxu0 %v4568
      %v4650 = vpop.f32.mrf.mxu0
      %v4651 = vadd.f32 0.0, %v4650
      %4652 = vmatmul.f32.gmra.mxu0 %v4570
      %v4653 = vpop.f32.mrf.mxu0
      %v4654 = vadd.f32 0.0, %v4653
      %4655 = vmatmul.f32.gmra.mxu0 %v4572
      %v4656 = vpop.f32.mrf.mxu0
      %v4657 = vadd.f32 0.0, %v4656
      %4658 = vmatmul.f32.gmra.mxu0 %v4574
      %v4659 = vpop.f32.mrf.mxu0
      %v4660 = vadd.f32 0.0, %v4659
      %4661 = vmatmul.f32.gmra.mxu0 %v4576
      %v4662 = vpop.f32.mrf.mxu0
      %v4663 = vadd.f32 0.0, %v4662
      %4664 = vmatmul.f32.gmra.mxu0 %v4578
      %v4665 = vpop.f32.mrf.mxu0
      %v4666 = vadd.f32 0.0, %v4665
      %4667 = vmatmul.f32.gmra.mxu0 %v4580
      %v4668 = vpop.f32.mrf.mxu0
      %v4669 = vadd.f32 0.0, %v4668
      %4670 = vmatmul.f32.gmra.mxu0 %v4582
      %v4671 = vpop.f32.mrf.mxu0
      %v4672 = vadd.f32 0.0, %v4671
      %4673 = vmatmul.f32.gmra.mxu0 %v4584
      %v4674 = vpop.f32.mrf.mxu0
      %v4675 = vadd.f32 0.0, %v4674
      %4676 = vmatmul.f32.gmra.mxu0 %v4586
      %v4677 = vpop.f32.mrf.mxu0
      %v4678 = vadd.f32 0.0, %v4677
      %4679 = vmatmul.f32.gmra.mxu0 %v4588
      %v4680 = vpop.f32.mrf.mxu0
      %v4681 = vadd.f32 0.0, %v4680
      %4682 = vmatmul.f32.gmra.mxu0 %v4590
      %v4683 = vpop.f32.mrf.mxu0
      %v4684 = vadd.f32 0.0, %v4683
      %4685 = vmatmul.f32.gmra.mxu0 %v4592
      %v4686 = vpop.f32.mrf.mxu0
      %v4687 = vadd.f32 0.0, %v4686
      %4688 = vdwg.mxu0
      %v4714 = vrot.slane %v4615, 2
      %v4715 = vrot.slane %v4615, 4
      %v4716 = vrot.slane %v4615, 6
      %v4717 = vrot.slane %v4618, 2
      %v4718 = vrot.slane %v4618, 4
      %v4719 = vrot.slane %v4618, 6
      %v4720 = vrot.slane %v4621, 2
      %v4721 = vrot.slane %v4621, 4
      %v4722 = vrot.slane %v4621, 6
      %v4723 = vrot.slane %v4624, 2
      %v4724 = vrot.slane %v4624, 4
      %v4725 = vrot.slane %v4624, 6
      %v4726 = vrot.slane %v4627, 2
      %v4727 = vrot.slane %v4627, 4
      %v4728 = vrot.slane %v4627, 6
      %v4729 = vrot.slane %v4630, 2
      %v4730 = vrot.slane %v4630, 4
      %v4731 = vrot.slane %v4630, 6
      %v4732 = vrot.slane %v4633, 2
      %v4733 = vrot.slane %v4633, 4
      %v4734 = vrot.slane %v4633, 6
      %v4735 = vrot.slane %v4636, 2
      %v4736 = vrot.slane %v4636, 4
      %v4737 = vrot.slane %v4636, 6
      %v4738 = vrot.slane %v4639, 2
      %v4739 = vrot.slane %v4639, 4
      %v4740 = vrot.slane %v4639, 6
      %v4741 = vrot.slane %v4642, 2
      %v4742 = vrot.slane %v4642, 4
      %v4743 = vrot.slane %v4642, 6
      %v4744 = vrot.slane %v4645, 2
      %v4745 = vrot.slane %v4645, 4
      %v4746 = vrot.slane %v4645, 6
      %v4747 = vrot.slane %v4648, 2
      %v4748 = vrot.slane %v4648, 4
      %v4749 = vrot.slane %v4648, 6
      %v4750 = vrot.slane %v4651, 2
      %v4751 = vrot.slane %v4651, 4
      %v4752 = vrot.slane %v4651, 6
      %v4753 = vrot.slane %v4654, 2
      %v4754 = vrot.slane %v4654, 4
      %v4755 = vrot.slane %v4654, 6
      %v4756 = vrot.slane %v4657, 2
      %v4757 = vrot.slane %v4657, 4
      %v4758 = vrot.slane %v4657, 6
      %v4759 = vrot.slane %v4660, 2
      %v4760 = vrot.slane %v4660, 4
      %v4761 = vrot.slane %v4660, 6
      %v4762 = vrot.slane %v4663, 2
      %v4763 = vrot.slane %v4663, 4
      %v4764 = vrot.slane %v4663, 6
      %v4765 = vrot.slane %v4666, 2
      %v4766 = vrot.slane %v4666, 4
      %v4767 = vrot.slane %v4666, 6
      %v4768 = vrot.slane %v4669, 2
      %v4769 = vrot.slane %v4669, 4
      %v4770 = vrot.slane %v4669, 6
      %v4771 = vrot.slane %v4672, 2
      %v4772 = vrot.slane %v4672, 4
      %v4773 = vrot.slane %v4672, 6
      %v4774 = vrot.slane %v4675, 2
      %v4775 = vrot.slane %v4675, 4
      %v4776 = vrot.slane %v4675, 6
      %v4777 = vrot.slane %v4678, 2
      %v4778 = vrot.slane %v4678, 4
      %v4779 = vrot.slane %v4678, 6
      %v4780 = vrot.slane %v4681, 2
      %v4781 = vrot.slane %v4681, 4
      %v4782 = vrot.slane %v4681, 6
      %v4783 = vrot.slane %v4684, 2
      %v4784 = vrot.slane %v4684, 4
      %v4785 = vrot.slane %v4684, 6
      %v4786 = vrot.slane %v4687, 2
      %v4860 = vadd.f32 %v4291, %v4615
      %v4861 = vadd.f32 %v4292, %v4714
      %v4862 = vadd.f32 %v4293, %v4715
      %v4863 = vadd.f32 %v4294, %v4716
      %v4864 = vadd.f32 %v4295, %v4618
      %v4865 = vadd.f32 %v4296, %v4717
      %v4866 = vadd.f32 %v4297, %v4718
      %v4867 = vadd.f32 %v4298, %v4719
      %v4868 = vadd.f32 %v4299, %v4621
      %v4869 = vadd.f32 %v4300, %v4720
      %v4870 = vadd.f32 %v4301, %v4721
      %v4871 = vadd.f32 %v4302, %v4722
      %v4872 = vadd.f32 %v4303, %v4624
      %v4873 = vadd.f32 %v4304, %v4723
      %v4874 = vadd.f32 %v4305, %v4724
      %v4875 = vadd.f32 %v4306, %v4725
      %v4876 = vadd.f32 %v4307, %v4627
      %v4877 = vadd.f32 %v4308, %v4726
      %v4878 = vadd.f32 %v4309, %v4727
      %v4879 = vadd.f32 %v4310, %v4728
      %v4880 = vadd.f32 %v4311, %v4630
      %v4881 = vadd.f32 %v4312, %v4729
      %v4882 = vadd.f32 %v4313, %v4730
      %v4883 = vadd.f32 %v4314, %v4731
      %v4884 = vadd.f32 %v4315, %v4633
      %v4885 = vadd.f32 %v4316, %v4732
      %v4886 = vadd.f32 %v4317, %v4733
      %v4887 = vadd.f32 %v4318, %v4734
      %v4888 = vadd.f32 %v4319, %v4636
      %v4889 = vadd.f32 %v4320, %v4735
      %v4890 = vadd.f32 %v4321, %v4736
      %v4891 = vadd.f32 %v4322, %v4737
      %v4892 = vadd.f32 %v4323, %v4639
      %v4893 = vadd.f32 %v4324, %v4738
      %v4894 = vadd.f32 %v4325, %v4739
      %v4895 = vadd.f32 %v4326, %v4740
      %v4896 = vadd.f32 %v4327, %v4642
      %v4897 = vadd.f32 %v4328, %v4741
      %v4898 = vadd.f32 %v4329, %v4742
      %v4899 = vadd.f32 %v4330, %v4743
      %v4900 = vadd.f32 %v4331, %v4645
      %v4901 = vadd.f32 %v4332, %v4744
      %v4902 = vadd.f32 %v4333, %v4745
      %v4903 = vadd.f32 %v4334, %v4746
      %v4904 = vadd.f32 %v4335, %v4648
      %v4905 = vadd.f32 %v4336, %v4747
      %v4906 = vadd.f32 %v4337, %v4748
      %v4907 = vadd.f32 %v4338, %v4749
      %v4908 = vadd.f32 %v4339, %v4651
      %v4909 = vadd.f32 %v4340, %v4750
      %v4910 = vadd.f32 %v4341, %v4751
      %v4911 = vadd.f32 %v4342, %v4752
      %v4912 = vadd.f32 %v4343, %v4654
      %v4913 = vadd.f32 %v4344, %v4753
      %v4914 = vadd.f32 %v4345, %v4754
      %v4915 = vadd.f32 %v4346, %v4755
      %v4916 = vadd.f32 %v4347, %v4657
      %v4917 = vadd.f32 %v4348, %v4756
      %v4918 = vadd.f32 %v4349, %v4757
      %v4919 = vadd.f32 %v4350, %v4758
      %v4920 = vadd.f32 %v4351, %v4660
      %v4921 = vadd.f32 %v4352, %v4759
      %v4922 = vadd.f32 %v4353, %v4760
      %v4923 = vadd.f32 %v4354, %v4761
      %v4924 = vadd.f32 %v4355, %v4663
      %v4925 = vadd.f32 %v4356, %v4762
      %v4926 = vadd.f32 %v4357, %v4763
      %v4927 = vadd.f32 %v4358, %v4764
      %v4928 = vadd.f32 %v4359, %v4666
      %v4929 = vadd.f32 %v4360, %v4765
      %v4930 = vadd.f32 %v4361, %v4766
      %v4931 = vadd.f32 %v4362, %v4767
      %v4932 = vadd.f32 %v4363, %v4669
      %v4933 = vadd.f32 %v4364, %v4768
      %v4934 = vadd.f32 %v4365, %v4769
      %v4935 = vadd.f32 %v4366, %v4770
      %v4936 = vadd.f32 %v4367, %v4672
      %v4937 = vadd.f32 %v4368, %v4771
      %v4938 = vadd.f32 %v4369, %v4772
      %v4939 = vadd.f32 %v4370, %v4773
      %v4940 = vadd.f32 %v4371, %v4675
      %v4941 = vadd.f32 %v4372, %v4774
      %v4942 = vadd.f32 %v4373, %v4775
      %v4943 = vadd.f32 %v4374, %v4776
      %v4944 = vadd.f32 %v4375, %v4678
      %v4945 = vadd.f32 %v4376, %v4777
      %v4946 = vadd.f32 %v4377, %v4778
      %v4947 = vadd.f32 %v4378, %v4779
      %v4948 = vadd.f32 %v4379, %v4681
      %v4949 = vadd.f32 %v4380, %v4780
      %v4950 = vadd.f32 %v4381, %v4781
      %v4951 = vadd.f32 %v4382, %v4782
      %v4952 = vadd.f32 %v4383, %v4684
      %v4953 = vadd.f32 %v4384, %v4783
      %v4954 = vadd.f32 %v4385, %v4784
      %v4955 = vadd.f32 %v4386, %v4785
      %v4956 = vadd.f32 %v4387, %v4687
      %v4957 = vadd.f32 %v4388, %v4786
      %s4958 = scalar_lea.vmem %s1, 32
      %v4959 = vld [vmem:[%s4958] sm:$0xf]
      %4960 = vst.sshfl [vmem:[#allocation1] sm:$0xff pattern:$0x73625140] %v175
      %4961 = vst.sshfl [vmem:[#allocation1 + $0x20] sm:$0xff pattern:$0x73625140] %v176
      %s4962 = scalar_lea.vmem [#allocation1], 1
      %v4963 = vld [vmem:[%s4962] ss:$4 sm:$0xff]
      %s4964 = scalar_lea.vmem [#allocation1], 2
      %v4965 = vld [vmem:[%s4964] ss:$4 sm:$0xff]
      %s4966 = scalar_lea.vmem [#allocation1], 3
      %v4967 = vld [vmem:[%s4966] ss:$4 sm:$0xff]
      %s4968 = scalar_lea.vmem [#allocation1], 32
      %v4969 = vld [vmem:[%s4968] ss:$4 sm:$0xff]
      %s4970 = scalar_lea.vmem [#allocation1], 33
      %v4971 = vld [vmem:[%s4970] ss:$4 sm:$0xff]
      %s4972 = scalar_lea.vmem [#allocation1], 34
      %v4973 = vld [vmem:[%s4972] ss:$4 sm:$0xff]
      %s4974 = scalar_lea.vmem [#allocation1], 35
      %v4975 = vld [vmem:[%s4974] ss:$4 sm:$0xff]
      %4976 = vst.sshfl [vmem:[#allocation1] sm:$0xff pattern:$0x73625140] %v177
      %4977 = vst.sshfl [vmem:[#allocation1 + $0x20] sm:$0xff pattern:$0x73625140] %v178
      %v4978 = vld [vmem:[%s4962] ss:$4 sm:$0xff]
      %v4979 = vld [vmem:[%s4964] ss:$4 sm:$0xff]
      %v4980 = vld [vmem:[%s4966] ss:$4 sm:$0xff]
      %v4981 = vld [vmem:[%s4968] ss:$4 sm:$0xff]
      %v4982 = vld [vmem:[%s4970] ss:$4 sm:$0xff]
      %v4983 = vld [vmem:[%s4972] ss:$4 sm:$0xff]
      %v4984 = vld [vmem:[%s4974] ss:$4 sm:$0xff]
      %4985 = vst.sshfl [vmem:[#allocation1] sm:$0xff pattern:$0x73625140] %v179
      %4986 = vst.sshfl [vmem:[#allocation1 + $0x20] sm:$0xff pattern:$0x73625140] %v180
      %v4987 = vld [vmem:[%s4962] ss:$4 sm:$0xff]
      %v4988 = vld [vmem:[%s4964] ss:$4 sm:$0xff]
      %v4989 = vld [vmem:[%s4966] ss:$4 sm:$0xff]
      %v4990 = vld [vmem:[%s4968] ss:$4 sm:$0xff]
      %v4991 = vld [vmem:[%s4970] ss:$4 sm:$0xff]
      %v4992 = vld [vmem:[%s4972] ss:$4 sm:$0xff]
      %v4993 = vld [vmem:[%s4974] ss:$4 sm:$0xff]
      %4994 = vst.sshfl [vmem:[#allocation1] sm:$0xff pattern:$0x73625140] %v181
      %4995 = vst.sshfl [vmem:[#allocation1 + $0x20] sm:$0xff pattern:$0x73625140] %v182
      %v4996 = vld [vmem:[%s4962] ss:$4 sm:$0xff]
      %v4997 = vld [vmem:[%s4964] ss:$4 sm:$0xff]
      %v4998 = vld [vmem:[%s4966] ss:$4 sm:$0xff]
      %v4999 = vld [vmem:[%s4968] ss:$4 sm:$0xff]
      %v5000 = vld [vmem:[%s4970] ss:$4 sm:$0xff]
      %v5001 = vld [vmem:[%s4972] ss:$4 sm:$0xff]
      %v5002 = vld [vmem:[%s4974] ss:$4 sm:$0xff]
      %5003 = vst.sshfl [vmem:[#allocation1] sm:$0xff pattern:$0x73625140] %v183
      %5004 = vst.sshfl [vmem:[#allocation1 + $0x20] sm:$0xff pattern:$0x73625140] %v184
      %v5005 = vld [vmem:[%s4962] ss:$4 sm:$0xff]
      %v5006 = vld [vmem:[%s4964] ss:$4 sm:$0xff]
      %v5007 = vld [vmem:[%s4966] ss:$4 sm:$0xff]
      %v5008 = vld [vmem:[%s4968] ss:$4 sm:$0xff]
      %v5009 = vld [vmem:[%s4970] ss:$4 sm:$0xff]
      %v5010 = vld [vmem:[%s4972] ss:$4 sm:$0xff]
      %v5011 = vld [vmem:[%s4974] ss:$4 sm:$0xff]
      %5012 = vst.sshfl [vmem:[#allocation1] sm:$0xff pattern:$0x73625140] %v185
      %5013 = vst.sshfl [vmem:[#allocation1 + $0x20] sm:$0xff pattern:$0x73625140] %v186
      %v5014 = vld [vmem:[%s4962] ss:$4 sm:$0xff]
      %v5015 = vld [vmem:[%s4964] ss:$4 sm:$0xff]
      %v5016 = vld [vmem:[%s4966] ss:$4 sm:$0xff]
      %v5017 = vld [vmem:[%s4968] ss:$4 sm:$0xff]
      %v5018 = vld [vmem:[%s4970] ss:$4 sm:$0xff]
      %v5019 = vld [vmem:[%s4972] ss:$4 sm:$0xff]
      %v5020 = vld [vmem:[%s4974] ss:$4 sm:$0xff]
      %5021 = vst.sshfl [vmem:[#allocation1] sm:$0xff pattern:$0x73625140] %v187
      %5022 = vst.sshfl [vmem:[#allocation1 + $0x20] sm:$0xff pattern:$0x73625140] %v188
      %v5023 = vld [vmem:[%s4962] ss:$4 sm:$0xff]
      %v5024 = vld [vmem:[%s4964] ss:$4 sm:$0xff]
      %v5025 = vld [vmem:[%s4966] ss:$4 sm:$0xff]
      %v5026 = vld [vmem:[%s4968] ss:$4 sm:$0xff]
      %v5027 = vld [vmem:[%s4970] ss:$4 sm:$0xff]
      %v5028 = vld [vmem:[%s4972] ss:$4 sm:$0xff]
      %v5029 = vld [vmem:[%s4974] ss:$4 sm:$0xff]
      %5030 = vst.sshfl [vmem:[#allocation1] sm:$0xff pattern:$0x73625140] %v189
      %5031 = vst.sshfl [vmem:[#allocation1 + $0x20] sm:$0xff pattern:$0x73625140] %v190
      %v5032 = vld [vmem:[%s4962] ss:$4 sm:$0xff]
      %v5033 = vld [vmem:[%s4964] ss:$4 sm:$0xff]
      %v5034 = vld [vmem:[%s4966] ss:$4 sm:$0xff]
      %v5035 = vld [vmem:[%s4968] ss:$4 sm:$0xff]
      %v5036 = vld [vmem:[%s4970] ss:$4 sm:$0xff]
      %v5037 = vld [vmem:[%s4972] ss:$4 sm:$0xff]
      %v5038 = vld [vmem:[%s4974] ss:$4 sm:$0xff]
      %5039 = vst.sshfl [vmem:[#allocation1] sm:$0xff pattern:$0x73625140] %v191
      %5040 = vst.sshfl [vmem:[#allocation1 + $0x20] sm:$0xff pattern:$0x73625140] %v192
      %v5041 = vld [vmem:[%s4962] ss:$4 sm:$0xff]
      %v5042 = vld [vmem:[%s4964] ss:$4 sm:$0xff]
      %v5043 = vld [vmem:[%s4966] ss:$4 sm:$0xff]
      %v5044 = vld [vmem:[%s4968] ss:$4 sm:$0xff]
      %v5045 = vld [vmem:[%s4970] ss:$4 sm:$0xff]
      %v5046 = vld [vmem:[%s4972] ss:$4 sm:$0xff]
      %v5047 = vld [vmem:[%s4974] ss:$4 sm:$0xff]
      %5048 = vst.sshfl [vmem:[#allocation1] sm:$0xff pattern:$0x73625140] %v193
      %5049 = vst.sshfl [vmem:[#allocation1 + $0x20] sm:$0xff pattern:$0x73625140] %v194
      %v5050 = vld [vmem:[%s4962] ss:$4 sm:$0xff]
      %v5051 = vld [vmem:[%s4964] ss:$4 sm:$0xff]
      %v5052 = vld [vmem:[%s4966] ss:$4 sm:$0xff]
      %v5053 = vld [vmem:[%s4968] ss:$4 sm:$0xff]
      %v5054 = vld [vmem:[%s4970] ss:$4 sm:$0xff]
      %v5055 = vld [vmem:[%s4972] ss:$4 sm:$0xff]
      %v5056 = vld [vmem:[%s4974] ss:$4 sm:$0xff]
      %5057 = vst.sshfl [vmem:[#allocation1] sm:$0xff pattern:$0x73625140] %v195
      %5058 = vst.sshfl [vmem:[#allocation1 + $0x20] sm:$0xff pattern:$0x73625140] %v196
      %v5059 = vld [vmem:[%s4962] ss:$4 sm:$0xff]
      %v5060 = vld [vmem:[%s4964] ss:$4 sm:$0xff]
      %v5061 = vld [vmem:[%s4966] ss:$4 sm:$0xff]
      %v5062 = vld [vmem:[%s4968] ss:$4 sm:$0xff]
      %v5063 = vld [vmem:[%s4970] ss:$4 sm:$0xff]
      %v5064 = vld [vmem:[%s4972] ss:$4 sm:$0xff]
      %v5065 = vld [vmem:[%s4974] ss:$4 sm:$0xff]
      %5066 = vst.sshfl [vmem:[#allocation1] sm:$0xff pattern:$0x73625140] %v197
      %5067 = vst.sshfl [vmem:[#allocation1 + $0x20] sm:$0xff pattern:$0x73625140] %v198
      %v5068 = vld [vmem:[%s4962] ss:$4 sm:$0xff]
      %v5069 = vld [vmem:[%s4964] ss:$4 sm:$0xff]
      %v5070 = vld [vmem:[%s4966] ss:$4 sm:$0xff]
      %v5071 = vld [vmem:[%s4968] ss:$4 sm:$0xff]
      %v5072 = vld [vmem:[%s4970] ss:$4 sm:$0xff]
      %v5073 = vld [vmem:[%s4972] ss:$4 sm:$0xff]
      %v5074 = vld [vmem:[%s4974] ss:$4 sm:$0xff]
      %5075 = vst.sshfl [vmem:[#allocation1] sm:$0xff pattern:$0x73625140] %v199
      %5076 = vst.sshfl [vmem:[#allocation1 + $0x20] sm:$0xff pattern:$0x73625140] %v200
      %v5077 = vld [vmem:[%s4962] ss:$4 sm:$0xff]
      %v5078 = vld [vmem:[%s4964] ss:$4 sm:$0xff]
      %v5079 = vld [vmem:[%s4966] ss:$4 sm:$0xff]
      %v5080 = vld [vmem:[%s4968] ss:$4 sm:$0xff]
      %v5081 = vld [vmem:[%s4970] ss:$4 sm:$0xff]
      %v5082 = vld [vmem:[%s4972] ss:$4 sm:$0xff]
      %v5083 = vld [vmem:[%s4974] ss:$4 sm:$0xff]
      %5084 = vst.sshfl [vmem:[#allocation1] sm:$0xff pattern:$0x73625140] %v201
      %5085 = vst.sshfl [vmem:[#allocation1 + $0x20] sm:$0xff pattern:$0x73625140] %v202
      %v5086 = vld [vmem:[%s4962] ss:$4 sm:$0xff]
      %v5087 = vld [vmem:[%s4964] ss:$4 sm:$0xff]
      %v5088 = vld [vmem:[%s4966] ss:$4 sm:$0xff]
      %v5089 = vld [vmem:[%s4968] ss:$4 sm:$0xff]
      %v5090 = vld [vmem:[%s4970] ss:$4 sm:$0xff]
      %v5091 = vld [vmem:[%s4972] ss:$4 sm:$0xff]
      %v5092 = vld [vmem:[%s4974] ss:$4 sm:$0xff]
      %5093 = vst [vmem:[#allocation1] ss:$4 sm:$0xff] %v4963
      %s5094 = scalar_lea.vmem [#allocation1], 1
      %5095 = vst [vmem:[%s5094] ss:$4 sm:$0xff] %v4965
      %s5096 = scalar_lea.vmem [#allocation1], 2
      %5097 = vst [vmem:[%s5096] ss:$4 sm:$0xff] %v4967
      %s5098 = scalar_lea.vmem [#allocation1], 3
      %5099 = vst [vmem:[%s5098] ss:$4 sm:$0xff] %v4969
      %s5100 = scalar_lea.vmem [#allocation1], 32
      %5101 = vst [vmem:[%s5100] ss:$4 sm:$0xff] %v4971
      %s5102 = scalar_lea.vmem [#allocation1], 33
      %5103 = vst [vmem:[%s5102] ss:$4 sm:$0xff] %v4973
      %s5104 = scalar_lea.vmem [#allocation1], 34
      %5105 = vst [vmem:[%s5104] ss:$4 sm:$0xff] %v4975
      %s5106 = scalar_lea.vmem [#allocation1], 35
      %5107 = vst [vmem:[%s5106] ss:$4 sm:$0xff] %v4978
      %v5108 = vld.sshfl [vmem:[#allocation1] sm:$0xff pattern:$0x73625140]
      %v5109 = vld.sshfl [vmem:[#allocation1 + $0x20] sm:$0xff pattern:$0x73625140]
      %5110 = vst [vmem:[#allocation1] ss:$4 sm:$0xff] %v4979
      %5111 = vst [vmem:[%s5094] ss:$4 sm:$0xff] %v4980
      %5112 = vst [vmem:[%s5096] ss:$4 sm:$0xff] %v4981
      %5113 = vst [vmem:[%s5098] ss:$4 sm:$0xff] %v4982
      %5114 = vst [vmem:[%s5100] ss:$4 sm:$0xff] %v4983
      %5115 = vst [vmem:[%s5102] ss:$4 sm:$0xff] %v4984
      %5116 = vst [vmem:[%s5104] ss:$4 sm:$0xff] %v4987
      %5117 = vst [vmem:[%s5106] ss:$4 sm:$0xff] %v4988
      %v5118 = vld.sshfl [vmem:[#allocation1] sm:$0xff pattern:$0x73625140]
      %v5119 = vld.sshfl [vmem:[#allocation1 + $0x20] sm:$0xff pattern:$0x73625140]
      %5120 = vst [vmem:[#allocation1] ss:$4 sm:$0xff] %v4989
      %5121 = vst [vmem:[%s5094] ss:$4 sm:$0xff] %v4990
      %5122 = vst [vmem:[%s5096] ss:$4 sm:$0xff] %v4991
      %5123 = vst [vmem:[%s5098] ss:$4 sm:$0xff] %v4992
      %5124 = vst [vmem:[%s5100] ss:$4 sm:$0xff] %v4993
      %5125 = vst [vmem:[%s5102] ss:$4 sm:$0xff] %v4996
      %5126 = vst [vmem:[%s5104] ss:$4 sm:$0xff] %v4997
      %5127 = vst [vmem:[%s5106] ss:$4 sm:$0xff] %v4998
      %v5128 = vld.sshfl [vmem:[#allocation1] sm:$0xff pattern:$0x73625140]
      %v5129 = vld.sshfl [vmem:[#allocation1 + $0x20] sm:$0xff pattern:$0x73625140]
      %5130 = vst [vmem:[#allocation1] ss:$4 sm:$0xff] %v4999
      %5131 = vst [vmem:[%s5094] ss:$4 sm:$0xff] %v5000
      %5132 = vst [vmem:[%s5096] ss:$4 sm:$0xff] %v5001
      %5133 = vst [vmem:[%s5098] ss:$4 sm:$0xff] %v5002
      %5134 = vst [vmem:[%s5100] ss:$4 sm:$0xff] %v5005
      %5135 = vst [vmem:[%s5102] ss:$4 sm:$0xff] %v5006
      %5136 = vst [vmem:[%s5104] ss:$4 sm:$0xff] %v5007
      %5137 = vst [vmem:[%s5106] ss:$4 sm:$0xff] %v5008
      %v5138 = vld.sshfl [vmem:[#allocation1] sm:$0xff pattern:$0x73625140]
      %v5139 = vld.sshfl [vmem:[#allocation1 + $0x20] sm:$0xff pattern:$0x73625140]
      %5140 = vst [vmem:[#allocation1] ss:$4 sm:$0xff] %v5009
      %5141 = vst [vmem:[%s5094] ss:$4 sm:$0xff] %v5010
      %5142 = vst [vmem:[%s5096] ss:$4 sm:$0xff] %v5011
      %5143 = vst [vmem:[%s5098] ss:$4 sm:$0xff] %v5014
      %5144 = vst [vmem:[%s5100] ss:$4 sm:$0xff] %v5015
      %5145 = vst [vmem:[%s5102] ss:$4 sm:$0xff] %v5016
      %5146 = vst [vmem:[%s5104] ss:$4 sm:$0xff] %v5017
      %5147 = vst [vmem:[%s5106] ss:$4 sm:$0xff] %v5018
      %v5148 = vld.sshfl [vmem:[#allocation1] sm:$0xff pattern:$0x73625140]
      %v5149 = vld.sshfl [vmem:[#allocation1 + $0x20] sm:$0xff pattern:$0x73625140]
      %5150 = vst [vmem:[#allocation1] ss:$4 sm:$0xff] %v5019
      %5151 = vst [vmem:[%s5094] ss:$4 sm:$0xff] %v5020
      %5152 = vst [vmem:[%s5096] ss:$4 sm:$0xff] %v5023
      %5153 = vst [vmem:[%s5098] ss:$4 sm:$0xff] %v5024
      %5154 = vst [vmem:[%s5100] ss:$4 sm:$0xff] %v5025
      %5155 = vst [vmem:[%s5102] ss:$4 sm:$0xff] %v5026
      %5156 = vst [vmem:[%s5104] ss:$4 sm:$0xff] %v5027
      %5157 = vst [vmem:[%s5106] ss:$4 sm:$0xff] %v5028
      %v5158 = vld.sshfl [vmem:[#allocation1] sm:$0xff pattern:$0x73625140]
      %v5159 = vld.sshfl [vmem:[#allocation1 + $0x20] sm:$0xff pattern:$0x73625140]
      %5160 = vst [vmem:[#allocation1] ss:$4 sm:$0xff] %v5029
      %5161 = vst [vmem:[%s5094] ss:$4 sm:$0xff] %v5032
      %5162 = vst [vmem:[%s5096] ss:$4 sm:$0xff] %v5033
      %5163 = vst [vmem:[%s5098] ss:$4 sm:$0xff] %v5034
      %5164 = vst [vmem:[%s5100] ss:$4 sm:$0xff] %v5035
      %5165 = vst [vmem:[%s5102] ss:$4 sm:$0xff] %v5036
      %5166 = vst [vmem:[%s5104] ss:$4 sm:$0xff] %v5037
      %5167 = vst [vmem:[%s5106] ss:$4 sm:$0xff] %v5038
      %v5168 = vld.sshfl [vmem:[#allocation1] sm:$0xff pattern:$0x73625140]
      %v5169 = vld.sshfl [vmem:[#allocation1 + $0x20] sm:$0xff pattern:$0x73625140]
      %5170 = vst [vmem:[#allocation1] ss:$4 sm:$0xff] %v5041
      %5171 = vst [vmem:[%s5094] ss:$4 sm:$0xff] %v5042
      %5172 = vst [vmem:[%s5096] ss:$4 sm:$0xff] %v5043
      %5173 = vst [vmem:[%s5098] ss:$4 sm:$0xff] %v5044
      %5174 = vst [vmem:[%s5100] ss:$4 sm:$0xff] %v5045
      %5175 = vst [vmem:[%s5102] ss:$4 sm:$0xff] %v5046
      %5176 = vst [vmem:[%s5104] ss:$4 sm:$0xff] %v5047
      %5177 = vst [vmem:[%s5106] ss:$4 sm:$0xff] %v5050
      %v5178 = vld.sshfl [vmem:[#allocation1] sm:$0xff pattern:$0x73625140]
      %v5179 = vld.sshfl [vmem:[#allocation1 + $0x20] sm:$0xff pattern:$0x73625140]
      %5180 = vst [vmem:[#allocation1] ss:$4 sm:$0xff] %v5051
      %5181 = vst [vmem:[%s5094] ss:$4 sm:$0xff] %v5052
      %5182 = vst [vmem:[%s5096] ss:$4 sm:$0xff] %v5053
      %5183 = vst [vmem:[%s5098] ss:$4 sm:$0xff] %v5054
      %5184 = vst [vmem:[%s5100] ss:$4 sm:$0xff] %v5055
      %5185 = vst [vmem:[%s5102] ss:$4 sm:$0xff] %v5056
      %5186 = vst [vmem:[%s5104] ss:$4 sm:$0xff] %v5059
      %5187 = vst [vmem:[%s5106] ss:$4 sm:$0xff] %v5060
      %v5188 = vld.sshfl [vmem:[#allocation1] sm:$0xff pattern:$0x73625140]
      %v5189 = vld.sshfl [vmem:[#allocation1 + $0x20] sm:$0xff pattern:$0x73625140]
      %5190 = vst [vmem:[#allocation1] ss:$4 sm:$0xff] %v5061
      %5191 = vst [vmem:[%s5094] ss:$4 sm:$0xff] %v5062
      %5192 = vst [vmem:[%s5096] ss:$4 sm:$0xff] %v5063
      %5193 = vst [vmem:[%s5098] ss:$4 sm:$0xff] %v5064
      %5194 = vst [vmem:[%s5100] ss:$4 sm:$0xff] %v5065
      %5195 = vst [vmem:[%s5102] ss:$4 sm:$0xff] %v5068
      %5196 = vst [vmem:[%s5104] ss:$4 sm:$0xff] %v5069
      %5197 = vst [vmem:[%s5106] ss:$4 sm:$0xff] %v5070
      %v5198 = vld.sshfl [vmem:[#allocation1] sm:$0xff pattern:$0x73625140]
      %v5199 = vld.sshfl [vmem:[#allocation1 + $0x20] sm:$0xff pattern:$0x73625140]
      %5200 = vst [vmem:[#allocation1] ss:$4 sm:$0xff] %v5071
      %5201 = vst [vmem:[%s5094] ss:$4 sm:$0xff] %v5072
      %5202 = vst [vmem:[%s5096] ss:$4 sm:$0xff] %v5073
      %5203 = vst [vmem:[%s5098] ss:$4 sm:$0xff] %v5074
      %5204 = vst [vmem:[%s5100] ss:$4 sm:$0xff] %v5077
      %5205 = vst [vmem:[%s5102] ss:$4 sm:$0xff] %v5078
      %5206 = vst [vmem:[%s5104] ss:$4 sm:$0xff] %v5079
      %5207 = vst [vmem:[%s5106] ss:$4 sm:$0xff] %v5080
      %v5208 = vld.sshfl [vmem:[#allocation1] sm:$0xff pattern:$0x73625140]
      %v5209 = vld.sshfl [vmem:[#allocation1 + $0x20] sm:$0xff pattern:$0x73625140]
      %5210 = vst [vmem:[#allocation1] ss:$4 sm:$0xff] %v5081
      %5211 = vst [vmem:[%s5094] ss:$4 sm:$0xff] %v5082
      %5212 = vst [vmem:[%s5096] ss:$4 sm:$0xff] %v5083
      %5213 = vst [vmem:[%s5098] ss:$4 sm:$0xff] %v5086
      %5214 = vst [vmem:[%s5100] ss:$4 sm:$0xff] %v5087
      %5215 = vst [vmem:[%s5102] ss:$4 sm:$0xff] %v5088
      %5216 = vst [vmem:[%s5104] ss:$4 sm:$0xff] %v5089
      %5217 = vst [vmem:[%s5106] ss:$4 sm:$0xff] %v5090
      %v5218 = vld.sshfl [vmem:[#allocation1] sm:$0xff pattern:$0x73625140]
      %v5219 = vld.sshfl [vmem:[#allocation1 + $0x20] sm:$0xff pattern:$0x73625140]
      %5220 = vst [vmem:[#allocation1] ss:$4 sm:$0xff] %v5091
      %5221 = vst [vmem:[%s5094] ss:$4 sm:$0xff] %v5092
      %v5222 = vld.sshfl [vmem:[#allocation1] sm:$0xff pattern:$0x73625140]
      %v5223 = vsel %vm763, %v5108, 0
      %v5225 = vsel %vm763, %v5109, 0
      %v5227 = vsel %vm763, %v5118, 0
      %v5229 = vsel %vm763, %v5119, 0
      %v5231 = vsel %vm763, %v5128, 0
      %v5233 = vsel %vm763, %v5129, 0
      %v5235 = vsel %vm763, %v5138, 0
      %v5237 = vsel %vm763, %v5139, 0
      %v5239 = vsel %vm763, %v5148, 0
      %v5241 = vsel %vm763, %v5149, 0
      %v5243 = vsel %vm763, %v5158, 0
      %v5245 = vsel %vm763, %v5159, 0
      %v5247 = vsel %vm763, %v5168, 0
      %v5249 = vsel %vm763, %v5169, 0
      %v5251 = vsel %vm763, %v5178, 0
      %v5253 = vsel %vm763, %v5179, 0
      %v5255 = vsel %vm763, %v5188, 0
      %v5257 = vsel %vm763, %v5189, 0
      %v5259 = vsel %vm763, %v5198, 0
      %v5261 = vsel %vm763, %v5199, 0
      %v5263 = vsel %vm763, %v5208, 0
      %v5265 = vsel %vm763, %v5209, 0
      %v5267 = vsel %vm763, %v5218, 0
      %v5269 = vsel %vm763, %v5219, 0
      %v5271 = vsel %vm763, %v5222, 0
      %v5274 = vsel %vm814, %v4959, 0
      %5276 = vmatpush.msra.mxu0 0.0
      %5277 = vmatpush.msra.mxu0 0.0
      %5278 = vmatpush.msra.mxu0 0.0
      %5279 = vmatpush.msra.mxu0 0.0
      %5280 = vmatpush.msra.mxu0 0.0
      %5281 = vmatpush.msra.mxu0 0.0
      %5282 = vmatpush.msra.mxu0 0.0
      %5283 = vmatpush.msra.mxu0 0.0
      %5284 = vmatpush.msra.mxu0 0.0
      %5285 = vmatpush.msra.mxu0 0.0
      %5286 = vmatpush.msra.mxu0 0.0
      %5287 = vmatpush.msra.mxu0 0.0
      %5288 = vmatpush.msra.mxu0 0.0
      %5289 = vmatpush.msra.mxu0 0.0
      %5290 = vmatpush.msra.mxu0 0.0
      %5291 = vmatpush.msra.mxu0 %v5274
      %5292 = vmatmul.f32.gmra.mxu0 %v5223
      %v5293 = vpop.f32.mrf.mxu0
      %v5294 = vadd.f32 0.0, %v5293
      %5295 = vmatmul.f32.gmra.mxu0 %v5225
      %v5296 = vpop.f32.mrf.mxu0
      %v5297 = vadd.f32 0.0, %v5296
      %5298 = vmatmul.f32.gmra.mxu0 %v5227
      %v5299 = vpop.f32.mrf.mxu0
      %v5300 = vadd.f32 0.0, %v5299
      %5301 = vmatmul.f32.gmra.mxu0 %v5229
      %v5302 = vpop.f32.mrf.mxu0
      %v5303 = vadd.f32 0.0, %v5302
      %5304 = vmatmul.f32.gmra.mxu0 %v5231
      %v5305 = vpop.f32.mrf.mxu0
      %v5306 = vadd.f32 0.0, %v5305
      %5307 = vmatmul.f32.gmra.mxu0 %v5233
      %v5308 = vpop.f32.mrf.mxu0
      %v5309 = vadd.f32 0.0, %v5308
      %5310 = vmatmul.f32.gmra.mxu0 %v5235
      %v5311 = vpop.f32.mrf.mxu0
      %v5312 = vadd.f32 0.0, %v5311
      %5313 = vmatmul.f32.gmra.mxu0 %v5237
      %v5314 = vpop.f32.mrf.mxu0
      %v5315 = vadd.f32 0.0, %v5314
      %5316 = vmatmul.f32.gmra.mxu0 %v5239
      %v5317 = vpop.f32.mrf.mxu0
      %v5318 = vadd.f32 0.0, %v5317
      %5319 = vmatmul.f32.gmra.mxu0 %v5241
      %v5320 = vpop.f32.mrf.mxu0
      %v5321 = vadd.f32 0.0, %v5320
      %5322 = vmatmul.f32.gmra.mxu0 %v5243
      %v5323 = vpop.f32.mrf.mxu0
      %v5324 = vadd.f32 0.0, %v5323
      %5325 = vmatmul.f32.gmra.mxu0 %v5245
      %v5326 = vpop.f32.mrf.mxu0
      %v5327 = vadd.f32 0.0, %v5326
      %5328 = vmatmul.f32.gmra.mxu0 %v5247
      %v5329 = vpop.f32.mrf.mxu0
      %v5330 = vadd.f32 0.0, %v5329
      %5331 = vmatmul.f32.gmra.mxu0 %v5249
      %v5332 = vpop.f32.mrf.mxu0
      %v5333 = vadd.f32 0.0, %v5332
      %5334 = vmatmul.f32.gmra.mxu0 %v5251
      %v5335 = vpop.f32.mrf.mxu0
      %v5336 = vadd.f32 0.0, %v5335
      %5337 = vmatmul.f32.gmra.mxu0 %v5253
      %v5338 = vpop.f32.mrf.mxu0
      %v5339 = vadd.f32 0.0, %v5338
      %5340 = vmatmul.f32.gmra.mxu0 %v5255
      %v5341 = vpop.f32.mrf.mxu0
      %v5342 = vadd.f32 0.0, %v5341
      %5343 = vmatmul.f32.gmra.mxu0 %v5257
      %v5344 = vpop.f32.mrf.mxu0
      %v5345 = vadd.f32 0.0, %v5344
      %5346 = vmatmul.f32.gmra.mxu0 %v5259
      %v5347 = vpop.f32.mrf.mxu0
      %v5348 = vadd.f32 0.0, %v5347
      %5349 = vmatmul.f32.gmra.mxu0 %v5261
      %v5350 = vpop.f32.mrf.mxu0
      %v5351 = vadd.f32 0.0, %v5350
      %5352 = vmatmul.f32.gmra.mxu0 %v5263
      %v5353 = vpop.f32.mrf.mxu0
      %v5354 = vadd.f32 0.0, %v5353
      %5355 = vmatmul.f32.gmra.mxu0 %v5265
      %v5356 = vpop.f32.mrf.mxu0
      %v5357 = vadd.f32 0.0, %v5356
      %5358 = vmatmul.f32.gmra.mxu0 %v5267
      %v5359 = vpop.f32.mrf.mxu0
      %v5360 = vadd.f32 0.0, %v5359
      %5361 = vmatmul.f32.gmra.mxu0 %v5269
      %v5362 = vpop.f32.mrf.mxu0
      %v5363 = vadd.f32 0.0, %v5362
      %5364 = vmatmul.f32.gmra.mxu0 %v5271
      %v5365 = vpop.f32.mrf.mxu0
      %v5366 = vadd.f32 0.0, %v5365
      %5367 = vdwg.mxu0
      %v5393 = vrot.slane %v5294, 2
      %v5394 = vrot.slane %v5294, 4
      %v5395 = vrot.slane %v5294, 6
      %v5396 = vrot.slane %v5297, 2
      %v5397 = vrot.slane %v5297, 4
      %v5398 = vrot.slane %v5297, 6
      %v5399 = vrot.slane %v5300, 2
      %v5400 = vrot.slane %v5300, 4
      %v5401 = vrot.slane %v5300, 6
      %v5402 = vrot.slane %v5303, 2
      %v5403 = vrot.slane %v5303, 4
      %v5404 = vrot.slane %v5303, 6
      %v5405 = vrot.slane %v5306, 2
      %v5406 = vrot.slane %v5306, 4
      %v5407 = vrot.slane %v5306, 6
      %v5408 = vrot.slane %v5309, 2
      %v5409 = vrot.slane %v5309, 4
      %v5410 = vrot.slane %v5309, 6
      %v5411 = vrot.slane %v5312, 2
      %v5412 = vrot.slane %v5312, 4
      %v5413 = vrot.slane %v5312, 6
      %v5414 = vrot.slane %v5315, 2
      %v5415 = vrot.slane %v5315, 4
      %v5416 = vrot.slane %v5315, 6
      %v5417 = vrot.slane %v5318, 2
      %v5418 = vrot.slane %v5318, 4
      %v5419 = vrot.slane %v5318, 6
      %v5420 = vrot.slane %v5321, 2
      %v5421 = vrot.slane %v5321, 4
      %v5422 = vrot.slane %v5321, 6
      %v5423 = vrot.slane %v5324, 2
      %v5424 = vrot.slane %v5324, 4
      %v5425 = vrot.slane %v5324, 6
      %v5426 = vrot.slane %v5327, 2
      %v5427 = vrot.slane %v5327, 4
      %v5428 = vrot.slane %v5327, 6
      %v5429 = vrot.slane %v5330, 2
      %v5430 = vrot.slane %v5330, 4
      %v5431 = vrot.slane %v5330, 6
      %v5432 = vrot.slane %v5333, 2
      %v5433 = vrot.slane %v5333, 4
      %v5434 = vrot.slane %v5333, 6
      %v5435 = vrot.slane %v5336, 2
      %v5436 = vrot.slane %v5336, 4
      %v5437 = vrot.slane %v5336, 6
      %v5438 = vrot.slane %v5339, 2
      %v5439 = vrot.slane %v5339, 4
      %v5440 = vrot.slane %v5339, 6
      %v5441 = vrot.slane %v5342, 2
      %v5442 = vrot.slane %v5342, 4
      %v5443 = vrot.slane %v5342, 6
      %v5444 = vrot.slane %v5345, 2
      %v5445 = vrot.slane %v5345, 4
      %v5446 = vrot.slane %v5345, 6
      %v5447 = vrot.slane %v5348, 2
      %v5448 = vrot.slane %v5348, 4
      %v5449 = vrot.slane %v5348, 6
      %v5450 = vrot.slane %v5351, 2
      %v5451 = vrot.slane %v5351, 4
      %v5452 = vrot.slane %v5351, 6
      %v5453 = vrot.slane %v5354, 2
      %v5454 = vrot.slane %v5354, 4
      %v5455 = vrot.slane %v5354, 6
      %v5456 = vrot.slane %v5357, 2
      %v5457 = vrot.slane %v5357, 4
      %v5458 = vrot.slane %v5357, 6
      %v5459 = vrot.slane %v5360, 2
      %v5460 = vrot.slane %v5360, 4
      %v5461 = vrot.slane %v5360, 6
      %v5462 = vrot.slane %v5363, 2
      %v5463 = vrot.slane %v5363, 4
      %v5464 = vrot.slane %v5363, 6
      %v5465 = vrot.slane %v5366, 2
      %v5539 = vadd.f32 %v4860, %v5294
      %v5540 = vadd.f32 %v4861, %v5393
      %v5541 = vadd.f32 %v4862, %v5394
      %v5542 = vadd.f32 %v4863, %v5395
      %v5543 = vadd.f32 %v4864, %v5297
      %v5544 = vadd.f32 %v4865, %v5396
      %v5545 = vadd.f32 %v4866, %v5397
      %v5546 = vadd.f32 %v4867, %v5398
      %v5547 = vadd.f32 %v4868, %v5300
      %v5548 = vadd.f32 %v4869, %v5399
      %v5549 = vadd.f32 %v4870, %v5400
      %v5550 = vadd.f32 %v4871, %v5401
      %v5551 = vadd.f32 %v4872, %v5303
      %v5552 = vadd.f32 %v4873, %v5402
      %v5553 = vadd.f32 %v4874, %v5403
      %v5554 = vadd.f32 %v4875, %v5404
      %v5555 = vadd.f32 %v4876, %v5306
      %v5556 = vadd.f32 %v4877, %v5405
      %v5557 = vadd.f32 %v4878, %v5406
      %v5558 = vadd.f32 %v4879, %v5407
      %v5559 = vadd.f32 %v4880, %v5309
      %v5560 = vadd.f32 %v4881, %v5408
      %v5561 = vadd.f32 %v4882, %v5409
      %v5562 = vadd.f32 %v4883, %v5410
      %v5563 = vadd.f32 %v4884, %v5312
      %v5564 = vadd.f32 %v4885, %v5411
      %v5565 = vadd.f32 %v4886, %v5412
      %v5566 = vadd.f32 %v4887, %v5413
      %v5567 = vadd.f32 %v4888, %v5315
      %v5568 = vadd.f32 %v4889, %v5414
      %v5569 = vadd.f32 %v4890, %v5415
      %v5570 = vadd.f32 %v4891, %v5416
      %v5571 = vadd.f32 %v4892, %v5318
      %v5572 = vadd.f32 %v4893, %v5417
      %v5573 = vadd.f32 %v4894, %v5418
      %v5574 = vadd.f32 %v4895, %v5419
      %v5575 = vadd.f32 %v4896, %v5321
      %v5576 = vadd.f32 %v4897, %v5420
      %v5577 = vadd.f32 %v4898, %v5421
      %v5578 = vadd.f32 %v4899, %v5422
      %v5579 = vadd.f32 %v4900, %v5324
      %v5580 = vadd.f32 %v4901, %v5423
      %v5581 = vadd.f32 %v4902, %v5424
      %v5582 = vadd.f32 %v4903, %v5425
      %v5583 = vadd.f32 %v4904, %v5327
      %v5584 = vadd.f32 %v4905, %v5426
      %v5585 = vadd.f32 %v4906, %v5427
      %v5586 = vadd.f32 %v4907, %v5428
      %v5587 = vadd.f32 %v4908, %v5330
      %v5588 = vadd.f32 %v4909, %v5429
      %v5589 = vadd.f32 %v4910, %v5430
      %v5590 = vadd.f32 %v4911, %v5431
      %v5591 = vadd.f32 %v4912, %v5333
      %v5592 = vadd.f32 %v4913, %v5432
      %v5593 = vadd.f32 %v4914, %v5433
      %v5594 = vadd.f32 %v4915, %v5434
      %v5595 = vadd.f32 %v4916, %v5336
      %v5596 = vadd.f32 %v4917, %v5435
      %v5597 = vadd.f32 %v4918, %v5436
      %v5598 = vadd.f32 %v4919, %v5437
      %v5599 = vadd.f32 %v4920, %v5339
      %v5600 = vadd.f32 %v4921, %v5438
      %v5601 = vadd.f32 %v4922, %v5439
      %v5602 = vadd.f32 %v4923, %v5440
      %v5603 = vadd.f32 %v4924, %v5342
      %v5604 = vadd.f32 %v4925, %v5441
      %v5605 = vadd.f32 %v4926, %v5442
      %v5606 = vadd.f32 %v4927, %v5443
      %v5607 = vadd.f32 %v4928, %v5345
      %v5608 = vadd.f32 %v4929, %v5444
      %v5609 = vadd.f32 %v4930, %v5445
      %v5610 = vadd.f32 %v4931, %v5446
      %v5611 = vadd.f32 %v4932, %v5348
      %v5612 = vadd.f32 %v4933, %v5447
      %v5613 = vadd.f32 %v4934, %v5448
      %v5614 = vadd.f32 %v4935, %v5449
      %v5615 = vadd.f32 %v4936, %v5351
      %v5616 = vadd.f32 %v4937, %v5450
      %v5617 = vadd.f32 %v4938, %v5451
      %v5618 = vadd.f32 %v4939, %v5452
      %v5619 = vadd.f32 %v4940, %v5354
      %v5620 = vadd.f32 %v4941, %v5453
      %v5621 = vadd.f32 %v4942, %v5454
      %v5622 = vadd.f32 %v4943, %v5455
      %v5623 = vadd.f32 %v4944, %v5357
      %v5624 = vadd.f32 %v4945, %v5456
      %v5625 = vadd.f32 %v4946, %v5457
      %v5626 = vadd.f32 %v4947, %v5458
      %v5627 = vadd.f32 %v4948, %v5360
      %v5628 = vadd.f32 %v4949, %v5459
      %v5629 = vadd.f32 %v4950, %v5460
      %v5630 = vadd.f32 %v4951, %v5461
      %v5631 = vadd.f32 %v4952, %v5363
      %v5632 = vadd.f32 %v4953, %v5462
      %v5633 = vadd.f32 %v4954, %v5463
      %v5634 = vadd.f32 %v4955, %v5464
      %v5635 = vadd.f32 %v4956, %v5366
      %v5636 = vadd.f32 %v4957, %v5465
      %v5637 = vmul.f32 %v5539, 0.01
      %v5638 = vmul.f32 %v5540, 0.01
      %v5639 = vmul.f32 %v5541, 0.01
      %v5640 = vmul.f32 %v5542, 0.01
      %v5641 = vmul.f32 %v5543, 0.01
      %v5642 = vmul.f32 %v5544, 0.01
      %v5643 = vmul.f32 %v5545, 0.01
      %v5644 = vmul.f32 %v5546, 0.01
      %v5645 = vmul.f32 %v5547, 0.01
      %v5646 = vmul.f32 %v5548, 0.01
      %v5647 = vmul.f32 %v5549, 0.01
      %v5648 = vmul.f32 %v5550, 0.01
      %v5649 = vmul.f32 %v5551, 0.01
      %v5650 = vmul.f32 %v5552, 0.01
      %v5651 = vmul.f32 %v5553, 0.01
      %v5652 = vmul.f32 %v5554, 0.01
      %v5653 = vmul.f32 %v5555, 0.01
      %v5654 = vmul.f32 %v5556, 0.01
      %v5655 = vmul.f32 %v5557, 0.01
      %v5656 = vmul.f32 %v5558, 0.01
      %v5657 = vmul.f32 %v5559, 0.01
      %v5658 = vmul.f32 %v5560, 0.01
      %v5659 = vmul.f32 %v5561, 0.01
      %v5660 = vmul.f32 %v5562, 0.01
      %v5661 = vmul.f32 %v5563, 0.01
      %v5662 = vmul.f32 %v5564, 0.01
      %v5663 = vmul.f32 %v5565, 0.01
      %v5664 = vmul.f32 %v5566, 0.01
      %v5665 = vmul.f32 %v5567, 0.01
      %v5666 = vmul.f32 %v5568, 0.01
      %v5667 = vmul.f32 %v5569, 0.01
      %v5668 = vmul.f32 %v5570, 0.01
      %v5669 = vmul.f32 %v5571, 0.01
      %v5670 = vmul.f32 %v5572, 0.01
      %v5671 = vmul.f32 %v5573, 0.01
      %v5672 = vmul.f32 %v5574, 0.01
      %v5673 = vmul.f32 %v5575, 0.01
      %v5674 = vmul.f32 %v5576, 0.01
      %v5675 = vmul.f32 %v5577, 0.01
      %v5676 = vmul.f32 %v5578, 0.01
      %v5677 = vmul.f32 %v5579, 0.01
      %v5678 = vmul.f32 %v5580, 0.01
      %v5679 = vmul.f32 %v5581, 0.01
      %v5680 = vmul.f32 %v5582, 0.01
      %v5681 = vmul.f32 %v5583, 0.01
      %v5682 = vmul.f32 %v5584, 0.01
      %v5683 = vmul.f32 %v5585, 0.01
      %v5684 = vmul.f32 %v5586, 0.01
      %v5685 = vmul.f32 %v5587, 0.01
      %v5686 = vmul.f32 %v5588, 0.01
      %v5687 = vmul.f32 %v5589, 0.01
      %v5688 = vmul.f32 %v5590, 0.01
      %v5689 = vmul.f32 %v5591, 0.01
      %v5690 = vmul.f32 %v5592, 0.01
      %v5691 = vmul.f32 %v5593, 0.01
      %v5692 = vmul.f32 %v5594, 0.01
      %v5693 = vmul.f32 %v5595, 0.01
      %v5694 = vmul.f32 %v5596, 0.01
      %v5695 = vmul.f32 %v5597, 0.01
      %v5696 = vmul.f32 %v5598, 0.01
      %v5697 = vmul.f32 %v5599, 0.01
      %v5698 = vmul.f32 %v5600, 0.01
      %v5699 = vmul.f32 %v5601, 0.01
      %v5700 = vmul.f32 %v5602, 0.01
      %v5701 = vmul.f32 %v5603, 0.01
      %v5702 = vmul.f32 %v5604, 0.01
      %v5703 = vmul.f32 %v5605, 0.01
      %v5704 = vmul.f32 %v5606, 0.01
      %v5705 = vmul.f32 %v5607, 0.01
      %v5706 = vmul.f32 %v5608, 0.01
      %v5707 = vmul.f32 %v5609, 0.01
      %v5708 = vmul.f32 %v5610, 0.01
      %v5709 = vmul.f32 %v5611, 0.01
      %v5710 = vmul.f32 %v5612, 0.01
      %v5711 = vmul.f32 %v5613, 0.01
      %v5712 = vmul.f32 %v5614, 0.01
      %v5713 = vmul.f32 %v5615, 0.01
      %v5714 = vmul.f32 %v5616, 0.01
      %v5715 = vmul.f32 %v5617, 0.01
      %v5716 = vmul.f32 %v5618, 0.01
      %v5717 = vmul.f32 %v5619, 0.01
      %v5718 = vmul.f32 %v5620, 0.01
      %v5719 = vmul.f32 %v5621, 0.01
      %v5720 = vmul.f32 %v5622, 0.01
      %v5721 = vmul.f32 %v5623, 0.01
      %v5722 = vmul.f32 %v5624, 0.01
      %v5723 = vmul.f32 %v5625, 0.01
      %v5724 = vmul.f32 %v5626, 0.01
      %v5725 = vmul.f32 %v5627, 0.01
      %v5726 = vmul.f32 %v5628, 0.01
      %v5727 = vmul.f32 %v5629, 0.01
      %v5728 = vmul.f32 %v5630, 0.01
      %v5729 = vmul.f32 %v5631, 0.01
      %v5730 = vmul.f32 %v5632, 0.01
      %v5731 = vmul.f32 %v5633, 0.01
      %v5732 = vmul.f32 %v5634, 0.01
      %v5733 = vmul.f32 %v5635, 0.01
      %v5734 = vmul.f32 %v5636, 0.01
      %v5735 = vmax.f32 %v5539, %v5637
      %v5736 = vmax.f32 %v5540, %v5638
      %v5737 = vmax.f32 %v5541, %v5639
      %v5738 = vmax.f32 %v5542, %v5640
      %v5739 = vmax.f32 %v5543, %v5641
      %v5740 = vmax.f32 %v5544, %v5642
      %v5741 = vmax.f32 %v5545, %v5643
      %v5742 = vmax.f32 %v5546, %v5644
      %v5743 = vmax.f32 %v5547, %v5645
      %v5744 = vmax.f32 %v5548, %v5646
      %v5745 = vmax.f32 %v5549, %v5647
      %v5746 = vmax.f32 %v5550, %v5648
      %v5747 = vmax.f32 %v5551, %v5649
      %v5748 = vmax.f32 %v5552, %v5650
      %v5749 = vmax.f32 %v5553, %v5651
      %v5750 = vmax.f32 %v5554, %v5652
      %v5751 = vmax.f32 %v5555, %v5653
      %v5752 = vmax.f32 %v5556, %v5654
      %v5753 = vmax.f32 %v5557, %v5655
      %v5754 = vmax.f32 %v5558, %v5656
      %v5755 = vmax.f32 %v5559, %v5657
      %v5756 = vmax.f32 %v5560, %v5658
      %v5757 = vmax.f32 %v5561, %v5659
      %v5758 = vmax.f32 %v5562, %v5660
      %v5759 = vmax.f32 %v5563, %v5661
      %v5760 = vmax.f32 %v5564, %v5662
      %v5761 = vmax.f32 %v5565, %v5663
      %v5762 = vmax.f32 %v5566, %v5664
      %v5763 = vmax.f32 %v5567, %v5665
      %v5764 = vmax.f32 %v5568, %v5666
      %v5765 = vmax.f32 %v5569, %v5667
      %v5766 = vmax.f32 %v5570, %v5668
      %v5767 = vmax.f32 %v5571, %v5669
      %v5768 = vmax.f32 %v5572, %v5670
      %v5769 = vmax.f32 %v5573, %v5671
      %v5770 = vmax.f32 %v5574, %v5672
      %v5771 = vmax.f32 %v5575, %v5673
      %v5772 = vmax.f32 %v5576, %v5674
      %v5773 = vmax.f32 %v5577, %v5675
      %v5774 = vmax.f32 %v5578, %v5676
      %v5775 = vmax.f32 %v5579, %v5677
      %v5776 = vmax.f32 %v5580, %v5678
      %v5777 = vmax.f32 %v5581, %v5679
      %v5778 = vmax.f32 %v5582, %v5680
      %v5779 = vmax.f32 %v5583, %v5681
      %v5780 = vmax.f32 %v5584, %v5682
      %v5781 = vmax.f32 %v5585, %v5683
      %v5782 = vmax.f32 %v5586, %v5684
      %v5783 = vmax.f32 %v5587, %v5685
      %v5784 = vmax.f32 %v5588, %v5686
      %v5785 = vmax.f32 %v5589, %v5687
      %v5786 = vmax.f32 %v5590, %v5688
      %v5787 = vmax.f32 %v5591, %v5689
      %v5788 = vmax.f32 %v5592, %v5690
      %v5789 = vmax.f32 %v5593, %v5691
      %v5790 = vmax.f32 %v5594, %v5692
      %v5791 = vmax.f32 %v5595, %v5693
      %v5792 = vmax.f32 %v5596, %v5694
      %v5793 = vmax.f32 %v5597, %v5695
      %v5794 = vmax.f32 %v5598, %v5696
      %v5795 = vmax.f32 %v5599, %v5697
      %v5796 = vmax.f32 %v5600, %v5698
      %v5797 = vmax.f32 %v5601, %v5699
      %v5798 = vmax.f32 %v5602, %v5700
      %v5799 = vmax.f32 %v5603, %v5701
      %v5800 = vmax.f32 %v5604, %v5702
      %v5801 = vmax.f32 %v5605, %v5703
      %v5802 = vmax.f32 %v5606, %v5704
      %v5803 = vmax.f32 %v5607, %v5705
      %v5804 = vmax.f32 %v5608, %v5706
      %v5805 = vmax.f32 %v5609, %v5707
      %v5806 = vmax.f32 %v5610, %v5708
      %v5807 = vmax.f32 %v5611, %v5709
      %v5808 = vmax.f32 %v5612, %v5710
      %v5809 = vmax.f32 %v5613, %v5711
      %v5810 = vmax.f32 %v5614, %v5712
      %v5811 = vmax.f32 %v5615, %v5713
      %v5812 = vmax.f32 %v5616, %v5714
      %v5813 = vmax.f32 %v5617, %v5715
      %v5814 = vmax.f32 %v5618, %v5716
      %v5815 = vmax.f32 %v5619, %v5717
      %v5816 = vmax.f32 %v5620, %v5718
      %v5817 = vmax.f32 %v5621, %v5719
      %v5818 = vmax.f32 %v5622, %v5720
      %v5819 = vmax.f32 %v5623, %v5721
      %v5820 = vmax.f32 %v5624, %v5722
      %v5821 = vmax.f32 %v5625, %v5723
      %v5822 = vmax.f32 %v5626, %v5724
      %v5823 = vmax.f32 %v5627, %v5725
      %v5824 = vmax.f32 %v5628, %v5726
      %v5825 = vmax.f32 %v5629, %v5727
      %v5826 = vmax.f32 %v5630, %v5728
      %v5827 = vmax.f32 %v5631, %v5729
      %v5828 = vmax.f32 %v5632, %v5730
      %v5829 = vmax.f32 %v5633, %v5731
      %v5830 = vmax.f32 %v5634, %v5732
      %v5831 = vmax.f32 %v5635, %v5733
      %v5832 = vmax.f32 %v5636, %v5734
      %v5833 = vld [vmem:[%s2] sm:$0xff]
      %s5834 = scalar_lea.vmem %s2, 8
      %v5835 = vld [vmem:[%s5834] sm:$0xff]
      %v5920 = vrot.slane %v5735, 7
      %v5921 = vrot.slane %v5920, 2
      %v5922 = vrot.slane %v5736, 7
      %v5923 = vsel %vm324, %v5921, %v5922
      %v5924 = vrot.slane %v5922, 2
      %v5925 = vrot.slane %v5737, 7
      %v5926 = vsel %vm324, %v5924, %v5925
      %v5927 = vrot.slane %v5925, 2
      %v5928 = vrot.slane %v5738, 7
      %v5929 = vsel %vm324, %v5927, %v5928
      %v5930 = vrot.slane %v5928, 2
      %v5931 = vrot.slane %v5739, 7
      %v5932 = vsel %vm324, %v5930, %v5931
      %v5933 = vrot.slane %v5931, 2
      %v5934 = vrot.slane %v5740, 7
      %v5935 = vsel %vm324, %v5933, %v5934
      %v5936 = vrot.slane %v5934, 2
      %v5937 = vrot.slane %v5741, 7
      %v5938 = vsel %vm324, %v5936, %v5937
      %v5939 = vrot.slane %v5742, 7
      %v5940 = vrot.slane %v5939, 2
      %v5941 = vrot.slane %v5743, 7
      %v5942 = vsel %vm324, %v5940, %v5941
      %v5943 = vrot.slane %v5941, 2
      %v5944 = vrot.slane %v5744, 7
      %v5945 = vsel %vm324, %v5943, %v5944
      %v5946 = vrot.slane %v5944, 2
      %v5947 = vrot.slane %v5745, 7
      %v5948 = vsel %vm324, %v5946, %v5947
      %v5949 = vrot.slane %v5947, 2
      %v5950 = vrot.slane %v5746, 7
      %v5951 = vsel %vm324, %v5949, %v5950
      %v5952 = vrot.slane %v5950, 2
      %v5953 = vrot.slane %v5747, 7
      %v5954 = vsel %vm324, %v5952, %v5953
      %v5955 = vrot.slane %v5953, 2
      %v5956 = vrot.slane %v5748, 7
      %v5957 = vsel %vm324, %v5955, %v5956
      %v5958 = vrot.slane %v5749, 7
      %v5959 = vrot.slane %v5958, 2
      %v5960 = vrot.slane %v5750, 7
      %v5961 = vsel %vm324, %v5959, %v5960
      %v5962 = vrot.slane %v5960, 2
      %v5963 = vrot.slane %v5751, 7
      %v5964 = vsel %vm324, %v5962, %v5963
      %v5965 = vrot.slane %v5963, 2
      %v5966 = vrot.slane %v5752, 7
      %v5967 = vsel %vm324, %v5965, %v5966
      %v5968 = vrot.slane %v5966, 2
      %v5969 = vrot.slane %v5753, 7
      %v5970 = vsel %vm324, %v5968, %v5969
      %v5971 = vrot.slane %v5969, 2
      %v5972 = vrot.slane %v5754, 7
      %v5973 = vsel %vm324, %v5971, %v5972
      %v5974 = vrot.slane %v5972, 2
      %v5975 = vrot.slane %v5755, 7
      %v5976 = vsel %vm324, %v5974, %v5975
      %v5977 = vrot.slane %v5756, 7
      %v5978 = vrot.slane %v5977, 2
      %v5979 = vrot.slane %v5757, 7
      %v5980 = vsel %vm324, %v5978, %v5979
      %v5981 = vrot.slane %v5979, 2
      %v5982 = vrot.slane %v5758, 7
      %v5983 = vsel %vm324, %v5981, %v5982
      %v5984 = vrot.slane %v5982, 2
      %v5985 = vrot.slane %v5759, 7
      %v5986 = vsel %vm324, %v5984, %v5985
      %v5987 = vrot.slane %v5985, 2
      %v5988 = vrot.slane %v5760, 7
      %v5989 = vsel %vm324, %v5987, %v5988
      %v5990 = vrot.slane %v5988, 2
      %v5991 = vrot.slane %v5761, 7
      %v5992 = vsel %vm324, %v5990, %v5991
      %v5993 = vrot.slane %v5991, 2
      %v5994 = vrot.slane %v5762, 7
      %v5995 = vsel %vm324, %v5993, %v5994
      %v5996 = vrot.slane %v5763, 7
      %v5997 = vrot.slane %v5996, 2
      %v5998 = vrot.slane %v5764, 7
      %v5999 = vsel %vm324, %v5997, %v5998
      %v6000 = vrot.slane %v5998, 2
      %v6001 = vrot.slane %v5765, 7
      %v6002 = vsel %vm324, %v6000, %v6001
      %v6003 = vrot.slane %v6001, 2
      %v6004 = vrot.slane %v5766, 7
      %v6005 = vsel %vm324, %v6003, %v6004
      %v6006 = vrot.slane %v6004, 2
      %v6007 = vrot.slane %v5767, 7
      %v6008 = vsel %vm324, %v6006, %v6007
      %v6009 = vrot.slane %v6007, 2
      %v6010 = vrot.slane %v5768, 7
      %v6011 = vsel %vm324, %v6009, %v6010
      %v6012 = vrot.slane %v6010, 2
      %v6013 = vrot.slane %v5769, 7
      %v6014 = vsel %vm324, %v6012, %v6013
      %v6015 = vrot.slane %v5770, 7
      %v6016 = vrot.slane %v6015, 2
      %v6017 = vrot.slane %v5771, 7
      %v6018 = vsel %vm324, %v6016, %v6017
      %v6019 = vrot.slane %v6017, 2
      %v6020 = vrot.slane %v5772, 7
      %v6021 = vsel %vm324, %v6019, %v6020
      %v6022 = vrot.slane %v6020, 2
      %v6023 = vrot.slane %v5773, 7
      %v6024 = vsel %vm324, %v6022, %v6023
      %v6025 = vrot.slane %v6023, 2
      %v6026 = vrot.slane %v5774, 7
      %v6027 = vsel %vm324, %v6025, %v6026
      %v6028 = vrot.slane %v6026, 2
      %v6029 = vrot.slane %v5775, 7
      %v6030 = vsel %vm324, %v6028, %v6029
      %v6031 = vrot.slane %v6029, 2
      %v6032 = vrot.slane %v5776, 7
      %v6033 = vsel %vm324, %v6031, %v6032
      %v6034 = vrot.slane %v5777, 7
      %v6035 = vrot.slane %v6034, 2
      %v6036 = vrot.slane %v5778, 7
      %v6037 = vsel %vm324, %v6035, %v6036
      %v6038 = vrot.slane %v6036, 2
      %v6039 = vrot.slane %v5779, 7
      %v6040 = vsel %vm324, %v6038, %v6039
      %v6041 = vrot.slane %v6039, 2
      %v6042 = vrot.slane %v5780, 7
      %v6043 = vsel %vm324, %v6041, %v6042
      %v6044 = vrot.slane %v6042, 2
      %v6045 = vrot.slane %v5781, 7
      %v6046 = vsel %vm324, %v6044, %v6045
      %v6047 = vrot.slane %v6045, 2
      %v6048 = vrot.slane %v5782, 7
      %v6049 = vsel %vm324, %v6047, %v6048
      %v6050 = vrot.slane %v6048, 2
      %v6051 = vrot.slane %v5783, 7
      %v6052 = vsel %vm324, %v6050, %v6051
      %v6053 = vrot.slane %v5784, 7
      %v6054 = vrot.slane %v6053, 2
      %v6055 = vrot.slane %v5785, 7
      %v6056 = vsel %vm324, %v6054, %v6055
      %v6057 = vrot.slane %v6055, 2
      %v6058 = vrot.slane %v5786, 7
      %v6059 = vsel %vm324, %v6057, %v6058
      %v6060 = vrot.slane %v6058, 2
      %v6061 = vrot.slane %v5787, 7
      %v6062 = vsel %vm324, %v6060, %v6061
      %v6063 = vrot.slane %v6061, 2
      %v6064 = vrot.slane %v5788, 7
      %v6065 = vsel %vm324, %v6063, %v6064
      %v6066 = vrot.slane %v6064, 2
      %v6067 = vrot.slane %v5789, 7
      %v6068 = vsel %vm324, %v6066, %v6067
      %v6069 = vrot.slane %v6067, 2
      %v6070 = vrot.slane %v5790, 7
      %v6071 = vsel %vm324, %v6069, %v6070
      %v6072 = vrot.slane %v5791, 7
      %v6073 = vrot.slane %v6072, 2
      %v6074 = vrot.slane %v5792, 7
      %v6075 = vsel %vm324, %v6073, %v6074
      %v6076 = vrot.slane %v6074, 2
      %v6077 = vrot.slane %v5793, 7
      %v6078 = vsel %vm324, %v6076, %v6077
      %v6079 = vrot.slane %v6077, 2
      %v6080 = vrot.slane %v5794, 7
      %v6081 = vsel %vm324, %v6079, %v6080
      %v6082 = vrot.slane %v6080, 2
      %v6083 = vrot.slane %v5795, 7
      %v6084 = vsel %vm324, %v6082, %v6083
      %v6085 = vrot.slane %v6083, 2
      %v6086 = vrot.slane %v5796, 7
      %v6087 = vsel %vm324, %v6085, %v6086
      %v6088 = vrot.slane %v6086, 2
      %v6089 = vrot.slane %v5797, 7
      %v6090 = vsel %vm324, %v6088, %v6089
      %v6091 = vrot.slane %v5798, 7
      %v6092 = vrot.slane %v6091, 2
      %v6093 = vrot.slane %v5799, 7
      %v6094 = vsel %vm324, %v6092, %v6093
      %v6095 = vrot.slane %v6093, 2
      %v6096 = vrot.slane %v5800, 7
      %v6097 = vsel %vm324, %v6095, %v6096
      %v6098 = vrot.slane %v6096, 2
      %v6099 = vrot.slane %v5801, 7
      %v6100 = vsel %vm324, %v6098, %v6099
      %v6101 = vrot.slane %v6099, 2
      %v6102 = vrot.slane %v5802, 7
      %v6103 = vsel %vm324, %v6101, %v6102
      %v6104 = vrot.slane %v6102, 2
      %v6105 = vrot.slane %v5803, 7
      %v6106 = vsel %vm324, %v6104, %v6105
      %v6107 = vrot.slane %v6105, 2
      %v6108 = vrot.slane %v5804, 7
      %v6109 = vsel %vm324, %v6107, %v6108
      %v6110 = vrot.slane %v5805, 7
      %v6111 = vrot.slane %v6110, 2
      %v6112 = vrot.slane %v5806, 7
      %v6113 = vsel %vm324, %v6111, %v6112
      %v6114 = vrot.slane %v6112, 2
      %v6115 = vrot.slane %v5807, 7
      %v6116 = vsel %vm324, %v6114, %v6115
      %v6117 = vrot.slane %v6115, 2
      %v6118 = vrot.slane %v5808, 7
      %v6119 = vsel %vm324, %v6117, %v6118
      %v6120 = vrot.slane %v6118, 2
      %v6121 = vrot.slane %v5809, 7
      %v6122 = vsel %vm324, %v6120, %v6121
      %v6123 = vrot.slane %v6121, 2
      %v6124 = vrot.slane %v5810, 7
      %v6125 = vsel %vm324, %v6123, %v6124
      %v6126 = vrot.slane %v6124, 2
      %v6127 = vrot.slane %v5811, 7
      %v6128 = vsel %vm324, %v6126, %v6127
      %v6129 = vrot.slane %v5812, 7
      %v6130 = vrot.slane %v6129, 2
      %v6131 = vrot.slane %v5813, 7
      %v6132 = vsel %vm324, %v6130, %v6131
      %v6133 = vrot.slane %v6131, 2
      %v6134 = vrot.slane %v5814, 7
      %v6135 = vsel %vm324, %v6133, %v6134
      %v6136 = vrot.slane %v6134, 2
      %v6137 = vrot.slane %v5815, 7
      %v6138 = vsel %vm324, %v6136, %v6137
      %v6139 = vrot.slane %v6137, 2
      %v6140 = vrot.slane %v5816, 7
      %v6141 = vsel %vm324, %v6139, %v6140
      %v6142 = vrot.slane %v6140, 2
      %v6143 = vrot.slane %v5817, 7
      %v6144 = vsel %vm324, %v6142, %v6143
      %v6145 = vrot.slane %v6143, 2
      %v6146 = vrot.slane %v5818, 7
      %v6147 = vsel %vm324, %v6145, %v6146
      %6148 = vst [vmem:[#allocation1] ss:$4 sm:$0xff] %v5923
      %s6149 = scalar_lea.vmem [#allocation1], 1
      %6150 = vst [vmem:[%s6149] ss:$4 sm:$0xff] %v5926
      %s6151 = scalar_lea.vmem [#allocation1], 2
      %6152 = vst [vmem:[%s6151] ss:$4 sm:$0xff] %v5929
      %s6153 = scalar_lea.vmem [#allocation1], 3
      %6154 = vst [vmem:[%s6153] ss:$4 sm:$0xff] %v5932
      %s6155 = scalar_lea.vmem [#allocation1], 32
      %6156 = vst [vmem:[%s6155] ss:$4 sm:$0xff] %v5935
      %s6157 = scalar_lea.vmem [#allocation1], 33
      %6158 = vst [vmem:[%s6157] ss:$4 sm:$0xff] %v5938
      %s6159 = scalar_lea.vmem [#allocation1], 34
      %6160 = vst [vmem:[%s6159] ss:$4 sm:$0xff] %v5942
      %s6161 = scalar_lea.vmem [#allocation1], 35
      %6162 = vst [vmem:[%s6161] ss:$4 sm:$0xff] %v5945
      %v6163 = vld.sshfl [vmem:[#allocation1] sm:$0xff pattern:$0x73625140]
      %v6164 = vld.sshfl [vmem:[#allocation1 + $0x20] sm:$0xff pattern:$0x73625140]
      %6165 = vst [vmem:[#allocation1] ss:$4 sm:$0xff] %v5948
      %6166 = vst [vmem:[%s6149] ss:$4 sm:$0xff] %v5951
      %6167 = vst [vmem:[%s6151] ss:$4 sm:$0xff] %v5954
      %6168 = vst [vmem:[%s6153] ss:$4 sm:$0xff] %v5957
      %6169 = vst [vmem:[%s6155] ss:$4 sm:$0xff] %v5961
      %6170 = vst [vmem:[%s6157] ss:$4 sm:$0xff] %v5964
      %6171 = vst [vmem:[%s6159] ss:$4 sm:$0xff] %v5967
      %6172 = vst [vmem:[%s6161] ss:$4 sm:$0xff] %v5970
      %v6173 = vld.sshfl [vmem:[#allocation1] sm:$0xff pattern:$0x73625140]
      %v6174 = vld.sshfl [vmem:[#allocation1 + $0x20] sm:$0xff pattern:$0x73625140]
      %6175 = vst [vmem:[#allocation1] ss:$4 sm:$0xff] %v5973
      %6176 = vst [vmem:[%s6149] ss:$4 sm:$0xff] %v5976
      %6177 = vst [vmem:[%s6151] ss:$4 sm:$0xff] %v5980
      %6178 = vst [vmem:[%s6153] ss:$4 sm:$0xff] %v5983
      %6179 = vst [vmem:[%s6155] ss:$4 sm:$0xff] %v5986
      %6180 = vst [vmem:[%s6157] ss:$4 sm:$0xff] %v5989
      %6181 = vst [vmem:[%s6159] ss:$4 sm:$0xff] %v5992
      %6182 = vst [vmem:[%s6161] ss:$4 sm:$0xff] %v5995
      %v6183 = vld.sshfl [vmem:[#allocation1] sm:$0xff pattern:$0x73625140]
      %v6184 = vld.sshfl [vmem:[#allocation1 + $0x20] sm:$0xff pattern:$0x73625140]
      %6185 = vst [vmem:[#allocation1] ss:$4 sm:$0xff] %v5999
      %6186 = vst [vmem:[%s6149] ss:$4 sm:$0xff] %v6002
      %6187 = vst [vmem:[%s6151] ss:$4 sm:$0xff] %v6005
      %6188 = vst [vmem:[%s6153] ss:$4 sm:$0xff] %v6008
      %6189 = vst [vmem:[%s6155] ss:$4 sm:$0xff] %v6011
      %6190 = vst [vmem:[%s6157] ss:$4 sm:$0xff] %v6014
      %6191 = vst [vmem:[%s6159] ss:$4 sm:$0xff] %v6018
      %6192 = vst [vmem:[%s6161] ss:$4 sm:$0xff] %v6021
      %v6193 = vld.sshfl [vmem:[#allocation1] sm:$0xff pattern:$0x73625140]
      %v6194 = vld.sshfl [vmem:[#allocation1 + $0x20] sm:$0xff pattern:$0x73625140]
      %6195 = vst [vmem:[#allocation1] ss:$4 sm:$0xff] %v6024
      %6196 = vst [vmem:[%s6149] ss:$4 sm:$0xff] %v6027
      %6197 = vst [vmem:[%s6151] ss:$4 sm:$0xff] %v6030
      %6198 = vst [vmem:[%s6153] ss:$4 sm:$0xff] %v6033
      %6199 = vst [vmem:[%s6155] ss:$4 sm:$0xff] %v6037
      %6200 = vst [vmem:[%s6157] ss:$4 sm:$0xff] %v6040
      %6201 = vst [vmem:[%s6159] ss:$4 sm:$0xff] %v6043
      %6202 = vst [vmem:[%s6161] ss:$4 sm:$0xff] %v6046
      %v6203 = vld.sshfl [vmem:[#allocation1] sm:$0xff pattern:$0x73625140]
      %v6204 = vld.sshfl [vmem:[#allocation1 + $0x20] sm:$0xff pattern:$0x73625140]
      %6205 = vst [vmem:[#allocation1] ss:$4 sm:$0xff] %v6049
      %6206 = vst [vmem:[%s6149] ss:$4 sm:$0xff] %v6052
      %6207 = vst [vmem:[%s6151] ss:$4 sm:$0xff] %v6056
      %6208 = vst [vmem:[%s6153] ss:$4 sm:$0xff] %v6059
      %6209 = vst [vmem:[%s6155] ss:$4 sm:$0xff] %v6062
      %6210 = vst [vmem:[%s6157] ss:$4 sm:$0xff] %v6065
      %6211 = vst [vmem:[%s6159] ss:$4 sm:$0xff] %v6068
      %6212 = vst [vmem:[%s6161] ss:$4 sm:$0xff] %v6071
      %v6213 = vld.sshfl [vmem:[#allocation1] sm:$0xff pattern:$0x73625140]
      %v6214 = vld.sshfl [vmem:[#allocation1 + $0x20] sm:$0xff pattern:$0x73625140]
      %6215 = vst [vmem:[#allocation1] ss:$4 sm:$0xff] %v6075
      %6216 = vst [vmem:[%s6149] ss:$4 sm:$0xff] %v6078
      %6217 = vst [vmem:[%s6151] ss:$4 sm:$0xff] %v6081
      %6218 = vst [vmem:[%s6153] ss:$4 sm:$0xff] %v6084
      %6219 = vst [vmem:[%s6155] ss:$4 sm:$0xff] %v6087
      %6220 = vst [vmem:[%s6157] ss:$4 sm:$0xff] %v6090
      %6221 = vst [vmem:[%s6159] ss:$4 sm:$0xff] %v6094
      %6222 = vst [vmem:[%s6161] ss:$4 sm:$0xff] %v6097
      %v6223 = vld.sshfl [vmem:[#allocation1] sm:$0xff pattern:$0x73625140]
      %v6224 = vld.sshfl [vmem:[#allocation1 + $0x20] sm:$0xff pattern:$0x73625140]
      %6225 = vst [vmem:[#allocation1] ss:$4 sm:$0xff] %v6100
      %6226 = vst [vmem:[%s6149] ss:$4 sm:$0xff] %v6103
      %6227 = vst [vmem:[%s6151] ss:$4 sm:$0xff] %v6106
      %6228 = vst [vmem:[%s6153] ss:$4 sm:$0xff] %v6109
      %6229 = vst [vmem:[%s6155] ss:$4 sm:$0xff] %v6113
      %6230 = vst [vmem:[%s6157] ss:$4 sm:$0xff] %v6116
      %6231 = vst [vmem:[%s6159] ss:$4 sm:$0xff] %v6119
      %6232 = vst [vmem:[%s6161] ss:$4 sm:$0xff] %v6122
      %v6233 = vld.sshfl [vmem:[#allocation1] sm:$0xff pattern:$0x73625140]
      %v6234 = vld.sshfl [vmem:[#allocation1 + $0x20] sm:$0xff pattern:$0x73625140]
      %6235 = vst [vmem:[#allocation1] ss:$4 sm:$0xff] %v6125
      %6236 = vst [vmem:[%s6149] ss:$4 sm:$0xff] %v6128
      %6237 = vst [vmem:[%s6151] ss:$4 sm:$0xff] %v6132
      %6238 = vst [vmem:[%s6153] ss:$4 sm:$0xff] %v6135
      %6239 = vst [vmem:[%s6155] ss:$4 sm:$0xff] %v6138
      %6240 = vst [vmem:[%s6157] ss:$4 sm:$0xff] %v6141
      %6241 = vst [vmem:[%s6159] ss:$4 sm:$0xff] %v6144
      %6242 = vst [vmem:[%s6161] ss:$4 sm:$0xff] %v6147
      %v6243 = vld.sshfl [vmem:[#allocation1] sm:$0xff pattern:$0x73625140]
      %v6244 = vld.sshfl [vmem:[#allocation1 + $0x20] sm:$0xff pattern:$0x73625140]
      %vm6245 = vcmask 64512
      %v6246 = vsel %vm6245, %v6163, 0
      %v6248 = vsel %vm6245, %v6164, 0
      %v6250 = vsel %vm6245, %v6173, 0
      %v6252 = vsel %vm6245, %v6174, 0
      %v6254 = vsel %vm6245, %v6183, 0
      %v6256 = vsel %vm6245, %v6184, 0
      %v6258 = vsel %vm6245, %v6193, 0
      %v6260 = vsel %vm6245, %v6194, 0
      %v6262 = vsel %vm6245, %v6203, 0
      %v6264 = vsel %vm6245, %v6204, 0
      %v6266 = vsel %vm6245, %v6213, 0
      %v6268 = vsel %vm6245, %v6214, 0
      %v6270 = vsel %vm6245, %v6223, 0
      %v6272 = vsel %vm6245, %v6224, 0
      %v6274 = vsel %vm6245, %v6233, 0
      %v6276 = vsel %vm6245, %v6234, 0
      %v6278 = vsel %vm6245, %v6243, 0
      %v6280 = vsel %vm6245, %v6244, 0
      %6282 = vmatpush.msra.mxu0 0.0
      %6283 = vmatpush.msra.mxu0 0.0
      %6284 = vmatpush.msra.mxu0 0.0
      %6285 = vmatpush.msra.mxu0 0.0
      %6286 = vmatpush.msra.mxu0 0.0
      %6287 = vmatpush.msra.mxu0 0.0
      %6288 = vmatpush.msra.mxu0 0.0
      %6289 = vmatpush.msra.mxu0 0.0
      %6290 = vmatpush.msra.mxu0 0.0
      %6291 = vmatpush.msra.mxu0 0.0
      %6292 = vmatpush.msra.mxu0 0.0
      %6293 = vmatpush.msra.mxu0 0.0
      %6294 = vmatpush.msra.mxu0 0.0
      %6295 = vmatpush.msra.mxu0 0.0
      %6296 = vmatpush.msra.mxu0 0.0
      %6297 = vmatpush.msra.mxu0 %v5835
      %6298 = vmatmul.f32.gmra.mxu0 %v6246
      %v6299 = vpop.f32.mrf.mxu0
      %v6300 = vadd.f32 0.0, %v6299
      %6301 = vmatmul.f32.gmra.mxu0 %v6248
      %v6302 = vpop.f32.mrf.mxu0
      %v6303 = vadd.f32 0.0, %v6302
      %6304 = vmatmul.f32.gmra.mxu0 %v6250
      %v6305 = vpop.f32.mrf.mxu0
      %v6306 = vadd.f32 0.0, %v6305
      %6307 = vmatmul.f32.gmra.mxu0 %v6252
      %v6308 = vpop.f32.mrf.mxu0
      %v6309 = vadd.f32 0.0, %v6308
      %6310 = vmatmul.f32.gmra.mxu0 %v6254
      %v6311 = vpop.f32.mrf.mxu0
      %v6312 = vadd.f32 0.0, %v6311
      %6313 = vmatmul.f32.gmra.mxu0 %v6256
      %v6314 = vpop.f32.mrf.mxu0
      %v6315 = vadd.f32 0.0, %v6314
      %6316 = vmatmul.f32.gmra.mxu0 %v6258
      %v6317 = vpop.f32.mrf.mxu0
      %v6318 = vadd.f32 0.0, %v6317
      %6319 = vmatmul.f32.gmra.mxu0 %v6260
      %v6320 = vpop.f32.mrf.mxu0
      %v6321 = vadd.f32 0.0, %v6320
      %6322 = vmatmul.f32.gmra.mxu0 %v6262
      %v6323 = vpop.f32.mrf.mxu0
      %v6324 = vadd.f32 0.0, %v6323
      %6325 = vmatmul.f32.gmra.mxu0 %v6264
      %v6326 = vpop.f32.mrf.mxu0
      %v6327 = vadd.f32 0.0, %v6326
      %6328 = vmatmul.f32.gmra.mxu0 %v6266
      %v6329 = vpop.f32.mrf.mxu0
      %v6330 = vadd.f32 0.0, %v6329
      %6331 = vmatmul.f32.gmra.mxu0 %v6268
      %v6332 = vpop.f32.mrf.mxu0
      %v6333 = vadd.f32 0.0, %v6332
      %6334 = vmatmul.f32.gmra.mxu0 %v6270
      %v6335 = vpop.f32.mrf.mxu0
      %v6336 = vadd.f32 0.0, %v6335
      %6337 = vmatmul.f32.gmra.mxu0 %v6272
      %v6338 = vpop.f32.mrf.mxu0
      %v6339 = vadd.f32 0.0, %v6338
      %6340 = vmatmul.f32.gmra.mxu0 %v6274
      %v6341 = vpop.f32.mrf.mxu0
      %v6342 = vadd.f32 0.0, %v6341
      %6343 = vmatmul.f32.gmra.mxu0 %v6276
      %v6344 = vpop.f32.mrf.mxu0
      %v6345 = vadd.f32 0.0, %v6344
      %6346 = vmatmul.f32.gmra.mxu0 %v6278
      %v6347 = vpop.f32.mrf.mxu0
      %v6348 = vadd.f32 0.0, %v6347
      %6349 = vmatmul.f32.gmra.mxu0 %v6280
      %v6350 = vpop.f32.mrf.mxu0
      %v6351 = vadd.f32 0.0, %v6350
      %6352 = vdwg.mxu0
      %6353 = vst [vmem:[#allocation1] ss:$4 sm:$0xff] %v5735
      %s6354 = scalar_lea.vmem [#allocation1], 1
      %6355 = vst [vmem:[%s6354] ss:$4 sm:$0xff] %v5736
      %s6356 = scalar_lea.vmem [#allocation1], 2
      %6357 = vst [vmem:[%s6356] ss:$4 sm:$0xff] %v5737
      %s6358 = scalar_lea.vmem [#allocation1], 3
      %6359 = vst [vmem:[%s6358] ss:$4 sm:$0xff] %v5738
      %s6360 = scalar_lea.vmem [#allocation1], 32
      %6361 = vst [vmem:[%s6360] ss:$4 sm:$0xff] %v5739
      %s6362 = scalar_lea.vmem [#allocation1], 33
      %6363 = vst [vmem:[%s6362] ss:$4 sm:$0xff] %v5740
      %s6364 = scalar_lea.vmem [#allocation1], 34
      %6365 = vst [vmem:[%s6364] ss:$4 sm:$0xff] %v5742
      %s6366 = scalar_lea.vmem [#allocation1], 35
      %6367 = vst [vmem:[%s6366] ss:$4 sm:$0xff] %v5743
      %v6368 = vld.sshfl [vmem:[#allocation1] sm:$0xff pattern:$0x73625140]
      %v6369 = vld.sshfl [vmem:[#allocation1 + $0x20] sm:$0xff pattern:$0x73625140]
      %6370 = vst [vmem:[#allocation1] ss:$4 sm:$0xff] %v5744
      %6371 = vst [vmem:[%s6354] ss:$4 sm:$0xff] %v5745
      %6372 = vst [vmem:[%s6356] ss:$4 sm:$0xff] %v5746
      %6373 = vst [vmem:[%s6358] ss:$4 sm:$0xff] %v5747
      %6374 = vst [vmem:[%s6360] ss:$4 sm:$0xff] %v5749
      %6375 = vst [vmem:[%s6362] ss:$4 sm:$0xff] %v5750
      %6376 = vst [vmem:[%s6364] ss:$4 sm:$0xff] %v5751
      %6377 = vst [vmem:[%s6366] ss:$4 sm:$0xff] %v5752
      %v6378 = vld.sshfl [vmem:[#allocation1] sm:$0xff pattern:$0x73625140]
      %v6379 = vld.sshfl [vmem:[#allocation1 + $0x20] sm:$0xff pattern:$0x73625140]
      %6380 = vst [vmem:[#allocation1] ss:$4 sm:$0xff] %v5753
      %6381 = vst [vmem:[%s6354] ss:$4 sm:$0xff] %v5754
      %6382 = vst [vmem:[%s6356] ss:$4 sm:$0xff] %v5756
      %6383 = vst [vmem:[%s6358] ss:$4 sm:$0xff] %v5757
      %6384 = vst [vmem:[%s6360] ss:$4 sm:$0xff] %v5758
      %6385 = vst [vmem:[%s6362] ss:$4 sm:$0xff] %v5759
      %6386 = vst [vmem:[%s6364] ss:$4 sm:$0xff] %v5760
      %6387 = vst [vmem:[%s6366] ss:$4 sm:$0xff] %v5761
      %v6388 = vld.sshfl [vmem:[#allocation1] sm:$0xff pattern:$0x73625140]
      %v6389 = vld.sshfl [vmem:[#allocation1 + $0x20] sm:$0xff pattern:$0x73625140]
      %6390 = vst [vmem:[#allocation1] ss:$4 sm:$0xff] %v5763
      %6391 = vst [vmem:[%s6354] ss:$4 sm:$0xff] %v5764
      %6392 = vst [vmem:[%s6356] ss:$4 sm:$0xff] %v5765
      %6393 = vst [vmem:[%s6358] ss:$4 sm:$0xff] %v5766
      %6394 = vst [vmem:[%s6360] ss:$4 sm:$0xff] %v5767
      %6395 = vst [vmem:[%s6362] ss:$4 sm:$0xff] %v5768
      %6396 = vst [vmem:[%s6364] ss:$4 sm:$0xff] %v5770
      %6397 = vst [vmem:[%s6366] ss:$4 sm:$0xff] %v5771
      %v6398 = vld.sshfl [vmem:[#allocation1] sm:$0xff pattern:$0x73625140]
      %v6399 = vld.sshfl [vmem:[#allocation1 + $0x20] sm:$0xff pattern:$0x73625140]
      %6400 = vst [vmem:[#allocation1] ss:$4 sm:$0xff] %v5772
      %6401 = vst [vmem:[%s6354] ss:$4 sm:$0xff] %v5773
      %6402 = vst [vmem:[%s6356] ss:$4 sm:$0xff] %v5774
      %6403 = vst [vmem:[%s6358] ss:$4 sm:$0xff] %v5775
      %6404 = vst [vmem:[%s6360] ss:$4 sm:$0xff] %v5777
      %6405 = vst [vmem:[%s6362] ss:$4 sm:$0xff] %v5778
      %6406 = vst [vmem:[%s6364] ss:$4 sm:$0xff] %v5779
      %6407 = vst [vmem:[%s6366] ss:$4 sm:$0xff] %v5780
      %v6408 = vld.sshfl [vmem:[#allocation1] sm:$0xff pattern:$0x73625140]
      %v6409 = vld.sshfl [vmem:[#allocation1 + $0x20] sm:$0xff pattern:$0x73625140]
      %6410 = vst [vmem:[#allocation1] ss:$4 sm:$0xff] %v5781
      %6411 = vst [vmem:[%s6354] ss:$4 sm:$0xff] %v5782
      %6412 = vst [vmem:[%s6356] ss:$4 sm:$0xff] %v5784
      %6413 = vst [vmem:[%s6358] ss:$4 sm:$0xff] %v5785
      %6414 = vst [vmem:[%s6360] ss:$4 sm:$0xff] %v5786
      %6415 = vst [vmem:[%s6362] ss:$4 sm:$0xff] %v5787
      %6416 = vst [vmem:[%s6364] ss:$4 sm:$0xff] %v5788
      %6417 = vst [vmem:[%s6366] ss:$4 sm:$0xff] %v5789
      %v6418 = vld.sshfl [vmem:[#allocation1] sm:$0xff pattern:$0x73625140]
      %v6419 = vld.sshfl [vmem:[#allocation1 + $0x20] sm:$0xff pattern:$0x73625140]
      %6420 = vst [vmem:[#allocation1] ss:$4 sm:$0xff] %v5791
      %6421 = vst [vmem:[%s6354] ss:$4 sm:$0xff] %v5792
      %6422 = vst [vmem:[%s6356] ss:$4 sm:$0xff] %v5793
      %6423 = vst [vmem:[%s6358] ss:$4 sm:$0xff] %v5794
      %6424 = vst [vmem:[%s6360] ss:$4 sm:$0xff] %v5795
      %6425 = vst [vmem:[%s6362] ss:$4 sm:$0xff] %v5796
      %6426 = vst [vmem:[%s6364] ss:$4 sm:$0xff] %v5798
      %6427 = vst [vmem:[%s6366] ss:$4 sm:$0xff] %v5799
      %v6428 = vld.sshfl [vmem:[#allocation1] sm:$0xff pattern:$0x73625140]
      %v6429 = vld.sshfl [vmem:[#allocation1 + $0x20] sm:$0xff pattern:$0x73625140]
      %6430 = vst [vmem:[#allocation1] ss:$4 sm:$0xff] %v5800
      %6431 = vst [vmem:[%s6354] ss:$4 sm:$0xff] %v5801
      %6432 = vst [vmem:[%s6356] ss:$4 sm:$0xff] %v5802
      %6433 = vst [vmem:[%s6358] ss:$4 sm:$0xff] %v5803
      %6434 = vst [vmem:[%s6360] ss:$4 sm:$0xff] %v5805
      %6435 = vst [vmem:[%s6362] ss:$4 sm:$0xff] %v5806
      %6436 = vst [vmem:[%s6364] ss:$4 sm:$0xff] %v5807
      %6437 = vst [vmem:[%s6366] ss:$4 sm:$0xff] %v5808
      %v6438 = vld.sshfl [vmem:[#allocation1] sm:$0xff pattern:$0x73625140]
      %v6439 = vld.sshfl [vmem:[#allocation1 + $0x20] sm:$0xff pattern:$0x73625140]
      %6440 = vst [vmem:[#allocation1] ss:$4 sm:$0xff] %v5809
      %6441 = vst [vmem:[%s6354] ss:$4 sm:$0xff] %v5810
      %6442 = vst [vmem:[%s6356] ss:$4 sm:$0xff] %v5812
      %6443 = vst [vmem:[%s6358] ss:$4 sm:$0xff] %v5813
      %6444 = vst [vmem:[%s6360] ss:$4 sm:$0xff] %v5814
      %6445 = vst [vmem:[%s6362] ss:$4 sm:$0xff] %v5815
      %6446 = vst [vmem:[%s6364] ss:$4 sm:$0xff] %v5816
      %6447 = vst [vmem:[%s6366] ss:$4 sm:$0xff] %v5817
      %v6448 = vld.sshfl [vmem:[#allocation1] sm:$0xff pattern:$0x73625140]
      %v6449 = vld.sshfl [vmem:[#allocation1 + $0x20] sm:$0xff pattern:$0x73625140]
      %v6450 = vsel %vm6245, %v6368, 0
      %v6452 = vsel %vm6245, %v6369, 0
      %v6454 = vsel %vm6245, %v6378, 0
      %v6456 = vsel %vm6245, %v6379, 0
      %v6458 = vsel %vm6245, %v6388, 0
      %v6460 = vsel %vm6245, %v6389, 0
      %v6462 = vsel %vm6245, %v6398, 0
      %v6464 = vsel %vm6245, %v6399, 0
      %v6466 = vsel %vm6245, %v6408, 0
      %v6468 = vsel %vm6245, %v6409, 0
      %v6470 = vsel %vm6245, %v6418, 0
      %v6472 = vsel %vm6245, %v6419, 0
      %v6474 = vsel %vm6245, %v6428, 0
      %v6476 = vsel %vm6245, %v6429, 0
      %v6478 = vsel %vm6245, %v6438, 0
      %v6480 = vsel %vm6245, %v6439, 0
      %v6482 = vsel %vm6245, %v6448, 0
      %v6484 = vsel %vm6245, %v6449, 0
      %6486 = vmatpush.msra.mxu0 0.0
      %6487 = vmatpush.msra.mxu0 0.0
      %6488 = vmatpush.msra.mxu0 0.0
      %6489 = vmatpush.msra.mxu0 0.0
      %6490 = vmatpush.msra.mxu0 0.0
      %6491 = vmatpush.msra.mxu0 0.0
      %6492 = vmatpush.msra.mxu0 0.0
      %6493 = vmatpush.msra.mxu0 0.0
      %6494 = vmatpush.msra.mxu0 0.0
      %6495 = vmatpush.msra.mxu0 0.0
      %6496 = vmatpush.msra.mxu0 0.0
      %6497 = vmatpush.msra.mxu0 0.0
      %6498 = vmatpush.msra.mxu0 0.0
      %6499 = vmatpush.msra.mxu0 0.0
      %6500 = vmatpush.msra.mxu0 0.0
      %6501 = vmatpush.msra.mxu0 %v5833
      %6502 = vmatmul.f32.gmra.mxu0 %v6450
      %v6503 = vpop.f32.mrf.mxu0
      %v6504 = vadd.f32 %v6300, %v6503
      %6505 = vmatmul.f32.gmra.mxu0 %v6452
      %v6506 = vpop.f32.mrf.mxu0
      %v6507 = vadd.f32 %v6303, %v6506
      %6508 = vmatmul.f32.gmra.mxu0 %v6454
      %v6509 = vpop.f32.mrf.mxu0
      %v6510 = vadd.f32 %v6306, %v6509
      %6511 = vmatmul.f32.gmra.mxu0 %v6456
      %v6512 = vpop.f32.mrf.mxu0
      %v6513 = vadd.f32 %v6309, %v6512
      %6514 = vmatmul.f32.gmra.mxu0 %v6458
      %v6515 = vpop.f32.mrf.mxu0
      %v6516 = vadd.f32 %v6312, %v6515
      %6517 = vmatmul.f32.gmra.mxu0 %v6460
      %v6518 = vpop.f32.mrf.mxu0
      %v6519 = vadd.f32 %v6315, %v6518
      %6520 = vmatmul.f32.gmra.mxu0 %v6462
      %v6521 = vpop.f32.mrf.mxu0
      %v6522 = vadd.f32 %v6318, %v6521
      %6523 = vmatmul.f32.gmra.mxu0 %v6464
      %v6524 = vpop.f32.mrf.mxu0
      %v6525 = vadd.f32 %v6321, %v6524
      %6526 = vmatmul.f32.gmra.mxu0 %v6466
      %v6527 = vpop.f32.mrf.mxu0
      %v6528 = vadd.f32 %v6324, %v6527
      %6529 = vmatmul.f32.gmra.mxu0 %v6468
      %v6530 = vpop.f32.mrf.mxu0
      %v6531 = vadd.f32 %v6327, %v6530
      %6532 = vmatmul.f32.gmra.mxu0 %v6470
      %v6533 = vpop.f32.mrf.mxu0
      %v6534 = vadd.f32 %v6330, %v6533
      %6535 = vmatmul.f32.gmra.mxu0 %v6472
      %v6536 = vpop.f32.mrf.mxu0
      %v6537 = vadd.f32 %v6333, %v6536
      %6538 = vmatmul.f32.gmra.mxu0 %v6474
      %v6539 = vpop.f32.mrf.mxu0
      %v6540 = vadd.f32 %v6336, %v6539
      %6541 = vmatmul.f32.gmra.mxu0 %v6476
      %v6542 = vpop.f32.mrf.mxu0
      %v6543 = vadd.f32 %v6339, %v6542
      %6544 = vmatmul.f32.gmra.mxu0 %v6478
      %v6545 = vpop.f32.mrf.mxu0
      %v6546 = vadd.f32 %v6342, %v6545
      %6547 = vmatmul.f32.gmra.mxu0 %v6480
      %v6548 = vpop.f32.mrf.mxu0
      %v6549 = vadd.f32 %v6345, %v6548
      %6550 = vmatmul.f32.gmra.mxu0 %v6482
      %v6551 = vpop.f32.mrf.mxu0
      %v6552 = vadd.f32 %v6348, %v6551
      %6553 = vmatmul.f32.gmra.mxu0 %v6484
      %v6554 = vpop.f32.mrf.mxu0
      %v6555 = vadd.f32 %v6351, %v6554
      %6556 = vdwg.mxu0
      %v6575 = vrot.slane %v6504, 4
      %v6576 = vrot.slane %v6507, 4
      %v6577 = vrot.slane %v6510, 4
      %v6578 = vrot.slane %v6513, 4
      %v6579 = vrot.slane %v6516, 4
      %v6580 = vrot.slane %v6519, 4
      %v6581 = vrot.slane %v6522, 4
      %v6582 = vrot.slane %v6525, 4
      %v6583 = vrot.slane %v6528, 4
      %v6584 = vrot.slane %v6531, 4
      %v6585 = vrot.slane %v6534, 4
      %v6586 = vrot.slane %v6537, 4
      %v6587 = vrot.slane %v6540, 4
      %v6588 = vrot.slane %v6543, 4
      %v6589 = vrot.slane %v6546, 4
      %v6590 = vrot.slane %v6549, 4
      %v6591 = vrot.slane %v6552, 4
      %v6592 = vrot.slane %v6555, 4
      %s6611 = scalar_lea.vmem %s2, 16
      %v6612 = vld [vmem:[%s6611] sm:$0xff]
      %6613 = vst [vmem:[#allocation1] ss:$4 sm:$0xff] %v5736
      %s6614 = scalar_lea.vmem [#allocation1], 1
      %6615 = vst [vmem:[%s6614] ss:$4 sm:$0xff] %v5737
      %s6616 = scalar_lea.vmem [#allocation1], 2
      %6617 = vst [vmem:[%s6616] ss:$4 sm:$0xff] %v5738
      %s6618 = scalar_lea.vmem [#allocation1], 3
      %6619 = vst [vmem:[%s6618] ss:$4 sm:$0xff] %v5739
      %s6620 = scalar_lea.vmem [#allocation1], 32
      %6621 = vst [vmem:[%s6620] ss:$4 sm:$0xff] %v5740
      %s6622 = scalar_lea.vmem [#allocation1], 33
      %6623 = vst [vmem:[%s6622] ss:$4 sm:$0xff] %v5741
      %s6624 = scalar_lea.vmem [#allocation1], 34
      %6625 = vst [vmem:[%s6624] ss:$4 sm:$0xff] %v5743
      %s6626 = scalar_lea.vmem [#allocation1], 35
      %6627 = vst [vmem:[%s6626] ss:$4 sm:$0xff] %v5744
      %v6628 = vld.sshfl [vmem:[#allocation1] sm:$0xff pattern:$0x73625140]
      %v6629 = vld.sshfl [vmem:[#allocation1 + $0x20] sm:$0xff pattern:$0x73625140]
      %6630 = vst [vmem:[#allocation1] ss:$4 sm:$0xff] %v5745
      %6631 = vst [vmem:[%s6614] ss:$4 sm:$0xff] %v5746
      %6632 = vst [vmem:[%s6616] ss:$4 sm:$0xff] %v5747
      %6633 = vst [vmem:[%s6618] ss:$4 sm:$0xff] %v5748
      %6634 = vst [vmem:[%s6620] ss:$4 sm:$0xff] %v5750
      %6635 = vst [vmem:[%s6622] ss:$4 sm:$0xff] %v5751
      %6636 = vst [vmem:[%s6624] ss:$4 sm:$0xff] %v5752
      %6637 = vst [vmem:[%s6626] ss:$4 sm:$0xff] %v5753
      %v6638 = vld.sshfl [vmem:[#allocation1] sm:$0xff pattern:$0x73625140]
      %v6639 = vld.sshfl [vmem:[#allocation1 + $0x20] sm:$0xff pattern:$0x73625140]
      %6640 = vst [vmem:[#allocation1] ss:$4 sm:$0xff] %v5754
      %6641 = vst [vmem:[%s6614] ss:$4 sm:$0xff] %v5755
      %6642 = vst [vmem:[%s6616] ss:$4 sm:$0xff] %v5757
      %6643 = vst [vmem:[%s6618] ss:$4 sm:$0xff] %v5758
      %6644 = vst [vmem:[%s6620] ss:$4 sm:$0xff] %v5759
      %6645 = vst [vmem:[%s6622] ss:$4 sm:$0xff] %v5760
      %6646 = vst [vmem:[%s6624] ss:$4 sm:$0xff] %v5761
      %6647 = vst [vmem:[%s6626] ss:$4 sm:$0xff] %v5762
      %v6648 = vld.sshfl [vmem:[#allocation1] sm:$0xff pattern:$0x73625140]
      %v6649 = vld.sshfl [vmem:[#allocation1 + $0x20] sm:$0xff pattern:$0x73625140]
      %6650 = vst [vmem:[#allocation1] ss:$4 sm:$0xff] %v5764
      %6651 = vst [vmem:[%s6614] ss:$4 sm:$0xff] %v5765
      %6652 = vst [vmem:[%s6616] ss:$4 sm:$0xff] %v5766
      %6653 = vst [vmem:[%s6618] ss:$4 sm:$0xff] %v5767
      %6654 = vst [vmem:[%s6620] ss:$4 sm:$0xff] %v5768
      %6655 = vst [vmem:[%s6622] ss:$4 sm:$0xff] %v5769
      %6656 = vst [vmem:[%s6624] ss:$4 sm:$0xff] %v5771
      %6657 = vst [vmem:[%s6626] ss:$4 sm:$0xff] %v5772
      %v6658 = vld.sshfl [vmem:[#allocation1] sm:$0xff pattern:$0x73625140]
      %v6659 = vld.sshfl [vmem:[#allocation1 + $0x20] sm:$0xff pattern:$0x73625140]
      %6660 = vst [vmem:[#allocation1] ss:$4 sm:$0xff] %v5773
      %6661 = vst [vmem:[%s6614] ss:$4 sm:$0xff] %v5774
      %6662 = vst [vmem:[%s6616] ss:$4 sm:$0xff] %v5775
      %6663 = vst [vmem:[%s6618] ss:$4 sm:$0xff] %v5776
      %6664 = vst [vmem:[%s6620] ss:$4 sm:$0xff] %v5778
      %6665 = vst [vmem:[%s6622] ss:$4 sm:$0xff] %v5779
      %6666 = vst [vmem:[%s6624] ss:$4 sm:$0xff] %v5780
      %6667 = vst [vmem:[%s6626] ss:$4 sm:$0xff] %v5781
      %v6668 = vld.sshfl [vmem:[#allocation1] sm:$0xff pattern:$0x73625140]
      %v6669 = vld.sshfl [vmem:[#allocation1 + $0x20] sm:$0xff pattern:$0x73625140]
      %6670 = vst [vmem:[#allocation1] ss:$4 sm:$0xff] %v5782
      %6671 = vst [vmem:[%s6614] ss:$4 sm:$0xff] %v5783
      %6672 = vst [vmem:[%s6616] ss:$4 sm:$0xff] %v5785
      %6673 = vst [vmem:[%s6618] ss:$4 sm:$0xff] %v5786
      %6674 = vst [vmem:[%s6620] ss:$4 sm:$0xff] %v5787
      %6675 = vst [vmem:[%s6622] ss:$4 sm:$0xff] %v5788
      %6676 = vst [vmem:[%s6624] ss:$4 sm:$0xff] %v5789
      %6677 = vst [vmem:[%s6626] ss:$4 sm:$0xff] %v5790
      %v6678 = vld.sshfl [vmem:[#allocation1] sm:$0xff pattern:$0x73625140]
      %v6679 = vld.sshfl [vmem:[#allocation1 + $0x20] sm:$0xff pattern:$0x73625140]
      %6680 = vst [vmem:[#allocation1] ss:$4 sm:$0xff] %v5792
      %6681 = vst [vmem:[%s6614] ss:$4 sm:$0xff] %v5793
      %6682 = vst [vmem:[%s6616] ss:$4 sm:$0xff] %v5794
      %6683 = vst [vmem:[%s6618] ss:$4 sm:$0xff] %v5795
      %6684 = vst [vmem:[%s6620] ss:$4 sm:$0xff] %v5796
      %6685 = vst [vmem:[%s6622] ss:$4 sm:$0xff] %v5797
      %6686 = vst [vmem:[%s6624] ss:$4 sm:$0xff] %v5799
      %6687 = vst [vmem:[%s6626] ss:$4 sm:$0xff] %v5800
      %v6688 = vld.sshfl [vmem:[#allocation1] sm:$0xff pattern:$0x73625140]
      %v6689 = vld.sshfl [vmem:[#allocation1 + $0x20] sm:$0xff pattern:$0x73625140]
      %6690 = vst [vmem:[#allocation1] ss:$4 sm:$0xff] %v5801
      %6691 = vst [vmem:[%s6614] ss:$4 sm:$0xff] %v5802
      %6692 = vst [vmem:[%s6616] ss:$4 sm:$0xff] %v5803
      %6693 = vst [vmem:[%s6618] ss:$4 sm:$0xff] %v5804
      %6694 = vst [vmem:[%s6620] ss:$4 sm:$0xff] %v5806
      %6695 = vst [vmem:[%s6622] ss:$4 sm:$0xff] %v5807
      %6696 = vst [vmem:[%s6624] ss:$4 sm:$0xff] %v5808
      %6697 = vst [vmem:[%s6626] ss:$4 sm:$0xff] %v5809
      %v6698 = vld.sshfl [vmem:[#allocation1] sm:$0xff pattern:$0x73625140]
      %v6699 = vld.sshfl [vmem:[#allocation1 + $0x20] sm:$0xff pattern:$0x73625140]
      %6700 = vst [vmem:[#allocation1] ss:$4 sm:$0xff] %v5810
      %6701 = vst [vmem:[%s6614] ss:$4 sm:$0xff] %v5811
      %6702 = vst [vmem:[%s6616] ss:$4 sm:$0xff] %v5813
      %6703 = vst [vmem:[%s6618] ss:$4 sm:$0xff] %v5814
      %6704 = vst [vmem:[%s6620] ss:$4 sm:$0xff] %v5815
      %6705 = vst [vmem:[%s6622] ss:$4 sm:$0xff] %v5816
      %6706 = vst [vmem:[%s6624] ss:$4 sm:$0xff] %v5817
      %6707 = vst [vmem:[%s6626] ss:$4 sm:$0xff] %v5818
      %v6708 = vld.sshfl [vmem:[#allocation1] sm:$0xff pattern:$0x73625140]
      %v6709 = vld.sshfl [vmem:[#allocation1 + $0x20] sm:$0xff pattern:$0x73625140]
      %v6710 = vsel %vm6245, %v6628, 0
      %v6712 = vsel %vm6245, %v6629, 0
      %v6714 = vsel %vm6245, %v6638, 0
      %v6716 = vsel %vm6245, %v6639, 0
      %v6718 = vsel %vm6245, %v6648, 0
      %v6720 = vsel %vm6245, %v6649, 0
      %v6722 = vsel %vm6245, %v6658, 0
      %v6724 = vsel %vm6245, %v6659, 0
      %v6726 = vsel %vm6245, %v6668, 0
      %v6728 = vsel %vm6245, %v6669, 0
      %v6730 = vsel %vm6245, %v6678, 0
      %v6732 = vsel %vm6245, %v6679, 0
      %v6734 = vsel %vm6245, %v6688, 0
      %v6736 = vsel %vm6245, %v6689, 0
      %v6738 = vsel %vm6245, %v6698, 0
      %v6740 = vsel %vm6245, %v6699, 0
      %v6742 = vsel %vm6245, %v6708, 0
      %v6744 = vsel %vm6245, %v6709, 0
      %6746 = vmatpush.msra.mxu0 0.0
      %6747 = vmatpush.msra.mxu0 0.0
      %6748 = vmatpush.msra.mxu0 0.0
      %6749 = vmatpush.msra.mxu0 0.0
      %6750 = vmatpush.msra.mxu0 0.0
      %6751 = vmatpush.msra.mxu0 0.0
      %6752 = vmatpush.msra.mxu0 0.0
      %6753 = vmatpush.msra.mxu0 0.0
      %6754 = vmatpush.msra.mxu0 0.0
      %6755 = vmatpush.msra.mxu0 0.0
      %6756 = vmatpush.msra.mxu0 0.0
      %6757 = vmatpush.msra.mxu0 0.0
      %6758 = vmatpush.msra.mxu0 0.0
      %6759 = vmatpush.msra.mxu0 0.0
      %6760 = vmatpush.msra.mxu0 0.0
      %6761 = vmatpush.msra.mxu0 %v6612
      %6762 = vmatmul.f32.gmra.mxu0 %v6710
      %v6763 = vpop.f32.mrf.mxu0
      %v6764 = vadd.f32 0.0, %v6763
      %6765 = vmatmul.f32.gmra.mxu0 %v6712
      %v6766 = vpop.f32.mrf.mxu0
      %v6767 = vadd.f32 0.0, %v6766
      %6768 = vmatmul.f32.gmra.mxu0 %v6714
      %v6769 = vpop.f32.mrf.mxu0
      %v6770 = vadd.f32 0.0, %v6769
      %6771 = vmatmul.f32.gmra.mxu0 %v6716
      %v6772 = vpop.f32.mrf.mxu0
      %v6773 = vadd.f32 0.0, %v6772
      %6774 = vmatmul.f32.gmra.mxu0 %v6718
      %v6775 = vpop.f32.mrf.mxu0
      %v6776 = vadd.f32 0.0, %v6775
      %6777 = vmatmul.f32.gmra.mxu0 %v6720
      %v6778 = vpop.f32.mrf.mxu0
      %v6779 = vadd.f32 0.0, %v6778
      %6780 = vmatmul.f32.gmra.mxu0 %v6722
      %v6781 = vpop.f32.mrf.mxu0
      %v6782 = vadd.f32 0.0, %v6781
      %6783 = vmatmul.f32.gmra.mxu0 %v6724
      %v6784 = vpop.f32.mrf.mxu0
      %v6785 = vadd.f32 0.0, %v6784
      %6786 = vmatmul.f32.gmra.mxu0 %v6726
      %v6787 = vpop.f32.mrf.mxu0
      %v6788 = vadd.f32 0.0, %v6787
      %6789 = vmatmul.f32.gmra.mxu0 %v6728
      %v6790 = vpop.f32.mrf.mxu0
      %v6791 = vadd.f32 0.0, %v6790
      %6792 = vmatmul.f32.gmra.mxu0 %v6730
      %v6793 = vpop.f32.mrf.mxu0
      %v6794 = vadd.f32 0.0, %v6793
      %6795 = vmatmul.f32.gmra.mxu0 %v6732
      %v6796 = vpop.f32.mrf.mxu0
      %v6797 = vadd.f32 0.0, %v6796
      %6798 = vmatmul.f32.gmra.mxu0 %v6734
      %v6799 = vpop.f32.mrf.mxu0
      %v6800 = vadd.f32 0.0, %v6799
      %6801 = vmatmul.f32.gmra.mxu0 %v6736
      %v6802 = vpop.f32.mrf.mxu0
      %v6803 = vadd.f32 0.0, %v6802
      %6804 = vmatmul.f32.gmra.mxu0 %v6738
      %v6805 = vpop.f32.mrf.mxu0
      %v6806 = vadd.f32 0.0, %v6805
      %6807 = vmatmul.f32.gmra.mxu0 %v6740
      %v6808 = vpop.f32.mrf.mxu0
      %v6809 = vadd.f32 0.0, %v6808
      %6810 = vmatmul.f32.gmra.mxu0 %v6742
      %v6811 = vpop.f32.mrf.mxu0
      %v6812 = vadd.f32 0.0, %v6811
      %6813 = vmatmul.f32.gmra.mxu0 %v6744
      %v6814 = vpop.f32.mrf.mxu0
      %v6815 = vadd.f32 0.0, %v6814
      %6816 = vdwg.mxu0
      %v6835 = vrot.slane %v6764, 4
      %v6836 = vrot.slane %v6767, 4
      %v6837 = vrot.slane %v6770, 4
      %v6838 = vrot.slane %v6773, 4
      %v6839 = vrot.slane %v6776, 4
      %v6840 = vrot.slane %v6779, 4
      %v6841 = vrot.slane %v6782, 4
      %v6842 = vrot.slane %v6785, 4
      %v6843 = vrot.slane %v6788, 4
      %v6844 = vrot.slane %v6791, 4
      %v6845 = vrot.slane %v6794, 4
      %v6846 = vrot.slane %v6797, 4
      %v6847 = vrot.slane %v6800, 4
      %v6848 = vrot.slane %v6803, 4
      %v6849 = vrot.slane %v6806, 4
      %v6850 = vrot.slane %v6809, 4
      %v6851 = vrot.slane %v6812, 4
      %v6852 = vrot.slane %v6815, 4
      %v6871 = vadd.f32 %v6504, %v6764
      %v6872 = vadd.f32 %v6575, %v6835
      %v6873 = vadd.f32 %v6507, %v6767
      %v6874 = vadd.f32 %v6576, %v6836
      %v6875 = vadd.f32 %v6510, %v6770
      %v6876 = vadd.f32 %v6577, %v6837
      %v6877 = vadd.f32 %v6513, %v6773
      %v6878 = vadd.f32 %v6578, %v6838
      %v6879 = vadd.f32 %v6516, %v6776
      %v6880 = vadd.f32 %v6579, %v6839
      %v6881 = vadd.f32 %v6519, %v6779
      %v6882 = vadd.f32 %v6580, %v6840
      %v6883 = vadd.f32 %v6522, %v6782
      %v6884 = vadd.f32 %v6581, %v6841
      %v6885 = vadd.f32 %v6525, %v6785
      %v6886 = vadd.f32 %v6582, %v6842
      %v6887 = vadd.f32 %v6528, %v6788
      %v6888 = vadd.f32 %v6583, %v6843
      %v6889 = vadd.f32 %v6531, %v6791
      %v6890 = vadd.f32 %v6584, %v6844
      %v6891 = vadd.f32 %v6534, %v6794
      %v6892 = vadd.f32 %v6585, %v6845
      %v6893 = vadd.f32 %v6537, %v6797
      %v6894 = vadd.f32 %v6586, %v6846
      %v6895 = vadd.f32 %v6540, %v6800
      %v6896 = vadd.f32 %v6587, %v6847
      %v6897 = vadd.f32 %v6543, %v6803
      %v6898 = vadd.f32 %v6588, %v6848
      %v6899 = vadd.f32 %v6546, %v6806
      %v6900 = vadd.f32 %v6589, %v6849
      %v6901 = vadd.f32 %v6549, %v6809
      %v6902 = vadd.f32 %v6590, %v6850
      %v6903 = vadd.f32 %v6552, %v6812
      %v6904 = vadd.f32 %v6591, %v6851
      %v6905 = vadd.f32 %v6555, %v6815
      %v6906 = vadd.f32 %v6592, %v6852
      %s6907 = scalar_lea.vmem %s2, 24
      %v6908 = vld [vmem:[%s6907] sm:$0xff]
      %6915 = vst [vmem:[#allocation1] ss:$4 sm:$0xff] %v5742
      %s6916 = scalar_lea.vmem [#allocation1], 1
      %6917 = vst [vmem:[%s6916] ss:$4 sm:$0xff] %v5743
      %s6918 = scalar_lea.vmem [#allocation1], 2
      %6919 = vst [vmem:[%s6918] ss:$4 sm:$0xff] %v5744
      %s6920 = scalar_lea.vmem [#allocation1], 3
      %6921 = vst [vmem:[%s6920] ss:$4 sm:$0xff] %v5745
      %s6922 = scalar_lea.vmem [#allocation1], 32
      %6923 = vst [vmem:[%s6922] ss:$4 sm:$0xff] %v5746
      %s6924 = scalar_lea.vmem [#allocation1], 33
      %6925 = vst [vmem:[%s6924] ss:$4 sm:$0xff] %v5747
      %s6926 = scalar_lea.vmem [#allocation1], 34
      %6927 = vst [vmem:[%s6926] ss:$4 sm:$0xff] %v5749
      %s6928 = scalar_lea.vmem [#allocation1], 35
      %6929 = vst [vmem:[%s6928] ss:$4 sm:$0xff] %v5750
      %v6930 = vld.sshfl [vmem:[#allocation1] sm:$0xff pattern:$0x73625140]
      %v6931 = vld.sshfl [vmem:[#allocation1 + $0x20] sm:$0xff pattern:$0x73625140]
      %6932 = vst [vmem:[#allocation1] ss:$4 sm:$0xff] %v5751
      %6933 = vst [vmem:[%s6916] ss:$4 sm:$0xff] %v5752
      %6934 = vst [vmem:[%s6918] ss:$4 sm:$0xff] %v5753
      %6935 = vst [vmem:[%s6920] ss:$4 sm:$0xff] %v5754
      %6936 = vst [vmem:[%s6922] ss:$4 sm:$0xff] %v5756
      %6937 = vst [vmem:[%s6924] ss:$4 sm:$0xff] %v5757
      %6938 = vst [vmem:[%s6926] ss:$4 sm:$0xff] %v5758
      %6939 = vst [vmem:[%s6928] ss:$4 sm:$0xff] %v5759
      %v6940 = vld.sshfl [vmem:[#allocation1] sm:$0xff pattern:$0x73625140]
      %v6941 = vld.sshfl [vmem:[#allocation1 + $0x20] sm:$0xff pattern:$0x73625140]
      %6942 = vst [vmem:[#allocation1] ss:$4 sm:$0xff] %v5760
      %6943 = vst [vmem:[%s6916] ss:$4 sm:$0xff] %v5761
      %6944 = vst [vmem:[%s6918] ss:$4 sm:$0xff] %v5763
      %6945 = vst [vmem:[%s6920] ss:$4 sm:$0xff] %v5764
      %6946 = vst [vmem:[%s6922] ss:$4 sm:$0xff] %v5765
      %6947 = vst [vmem:[%s6924] ss:$4 sm:$0xff] %v5766
      %6948 = vst [vmem:[%s6926] ss:$4 sm:$0xff] %v5767
      %6949 = vst [vmem:[%s6928] ss:$4 sm:$0xff] %v5768
      %v6950 = vld.sshfl [vmem:[#allocation1] sm:$0xff pattern:$0x73625140]
      %v6951 = vld.sshfl [vmem:[#allocation1 + $0x20] sm:$0xff pattern:$0x73625140]
      %6952 = vst [vmem:[#allocation1] ss:$4 sm:$0xff] %v5770
      %6953 = vst [vmem:[%s6916] ss:$4 sm:$0xff] %v5771
      %6954 = vst [vmem:[%s6918] ss:$4 sm:$0xff] %v5772
      %6955 = vst [vmem:[%s6920] ss:$4 sm:$0xff] %v5773
      %6956 = vst [vmem:[%s6922] ss:$4 sm:$0xff] %v5774
      %6957 = vst [vmem:[%s6924] ss:$4 sm:$0xff] %v5775
      %6958 = vst [vmem:[%s6926] ss:$4 sm:$0xff] %v5777
      %6959 = vst [vmem:[%s6928] ss:$4 sm:$0xff] %v5778
      %v6960 = vld.sshfl [vmem:[#allocation1] sm:$0xff pattern:$0x73625140]
      %v6961 = vld.sshfl [vmem:[#allocation1 + $0x20] sm:$0xff pattern:$0x73625140]
      %6962 = vst [vmem:[#allocation1] ss:$4 sm:$0xff] %v5779
      %6963 = vst [vmem:[%s6916] ss:$4 sm:$0xff] %v5780
      %6964 = vst [vmem:[%s6918] ss:$4 sm:$0xff] %v5781
      %6965 = vst [vmem:[%s6920] ss:$4 sm:$0xff] %v5782
      %6966 = vst [vmem:[%s6922] ss:$4 sm:$0xff] %v5784
      %6967 = vst [vmem:[%s6924] ss:$4 sm:$0xff] %v5785
      %6968 = vst [vmem:[%s6926] ss:$4 sm:$0xff] %v5786
      %6969 = vst [vmem:[%s6928] ss:$4 sm:$0xff] %v5787
      %v6970 = vld.sshfl [vmem:[#allocation1] sm:$0xff pattern:$0x73625140]
      %v6971 = vld.sshfl [vmem:[#allocation1 + $0x20] sm:$0xff pattern:$0x73625140]
      %6972 = vst [vmem:[#allocation1] ss:$4 sm:$0xff] %v5788
      %6973 = vst [vmem:[%s6916] ss:$4 sm:$0xff] %v5789
      %6974 = vst [vmem:[%s6918] ss:$4 sm:$0xff] %v5791
      %6975 = vst [vmem:[%s6920] ss:$4 sm:$0xff] %v5792
      %6976 = vst [vmem:[%s6922] ss:$4 sm:$0xff] %v5793
      %6977 = vst [vmem:[%s6924] ss:$4 sm:$0xff] %v5794
      %6978 = vst [vmem:[%s6926] ss:$4 sm:$0xff] %v5795
      %6979 = vst [vmem:[%s6928] ss:$4 sm:$0xff] %v5796
      %v6980 = vld.sshfl [vmem:[#allocation1] sm:$0xff pattern:$0x73625140]
      %v6981 = vld.sshfl [vmem:[#allocation1 + $0x20] sm:$0xff pattern:$0x73625140]
      %6982 = vst [vmem:[#allocation1] ss:$4 sm:$0xff] %v5798
      %6983 = vst [vmem:[%s6916] ss:$4 sm:$0xff] %v5799
      %6984 = vst [vmem:[%s6918] ss:$4 sm:$0xff] %v5800
      %6985 = vst [vmem:[%s6920] ss:$4 sm:$0xff] %v5801
      %6986 = vst [vmem:[%s6922] ss:$4 sm:$0xff] %v5802
      %6987 = vst [vmem:[%s6924] ss:$4 sm:$0xff] %v5803
      %6988 = vst [vmem:[%s6926] ss:$4 sm:$0xff] %v5805
      %6989 = vst [vmem:[%s6928] ss:$4 sm:$0xff] %v5806
      %v6990 = vld.sshfl [vmem:[#allocation1] sm:$0xff pattern:$0x73625140]
      %v6991 = vld.sshfl [vmem:[#allocation1 + $0x20] sm:$0xff pattern:$0x73625140]
      %6992 = vst [vmem:[#allocation1] ss:$4 sm:$0xff] %v5807
      %6993 = vst [vmem:[%s6916] ss:$4 sm:$0xff] %v5808
      %6994 = vst [vmem:[%s6918] ss:$4 sm:$0xff] %v5809
      %6995 = vst [vmem:[%s6920] ss:$4 sm:$0xff] %v5810
      %6996 = vst [vmem:[%s6922] ss:$4 sm:$0xff] %v5812
      %6997 = vst [vmem:[%s6924] ss:$4 sm:$0xff] %v5813
      %6998 = vst [vmem:[%s6926] ss:$4 sm:$0xff] %v5814
      %6999 = vst [vmem:[%s6928] ss:$4 sm:$0xff] %v5815
      %v7000 = vld.sshfl [vmem:[#allocation1] sm:$0xff pattern:$0x73625140]
      %v7001 = vld.sshfl [vmem:[#allocation1 + $0x20] sm:$0xff pattern:$0x73625140]
      %7002 = vst [vmem:[#allocation1] ss:$4 sm:$0xff] %v5816
      %7003 = vst [vmem:[%s6916] ss:$4 sm:$0xff] %v5817
      %7004 = vst [vmem:[%s6918] ss:$4 sm:$0xff] %v5819
      %7005 = vst [vmem:[%s6920] ss:$4 sm:$0xff] %v5820
      %7006 = vst [vmem:[%s6922] ss:$4 sm:$0xff] %v5821
      %7007 = vst [vmem:[%s6924] ss:$4 sm:$0xff] %v5822
      %7008 = vst [vmem:[%s6926] ss:$4 sm:$0xff] %v5823
      %7009 = vst [vmem:[%s6928] ss:$4 sm:$0xff] %v5824
      %v7010 = vld.sshfl [vmem:[#allocation1] sm:$0xff pattern:$0x73625140]
      %v7011 = vld.sshfl [vmem:[#allocation1 + $0x20] sm:$0xff pattern:$0x73625140]
      %v7012 = vsel %vm6245, %v6930, 0
      %v7014 = vsel %vm6245, %v6931, 0
      %v7016 = vsel %vm6245, %v6940, 0
      %v7018 = vsel %vm6245, %v6941, 0
      %v7020 = vsel %vm6245, %v6950, 0
      %v7022 = vsel %vm6245, %v6951, 0
      %v7024 = vsel %vm6245, %v6960, 0
      %v7026 = vsel %vm6245, %v6961, 0
      %v7028 = vsel %vm6245, %v6970, 0
      %v7030 = vsel %vm6245, %v6971, 0
      %v7032 = vsel %vm6245, %v6980, 0
      %v7034 = vsel %vm6245, %v6981, 0
      %v7036 = vsel %vm6245, %v6990, 0
      %v7038 = vsel %vm6245, %v6991, 0
      %v7040 = vsel %vm6245, %v7000, 0
      %v7042 = vsel %vm6245, %v7001, 0
      %v7044 = vsel %vm6245, %v7010, 0
      %v7046 = vsel %vm6245, %v7011, 0
      %7048 = vmatpush.msra.mxu0 0.0
      %7049 = vmatpush.msra.mxu0 0.0
      %7050 = vmatpush.msra.mxu0 0.0
      %7051 = vmatpush.msra.mxu0 0.0
      %7052 = vmatpush.msra.mxu0 0.0
      %7053 = vmatpush.msra.mxu0 0.0
      %7054 = vmatpush.msra.mxu0 0.0
      %7055 = vmatpush.msra.mxu0 0.0
      %7056 = vmatpush.msra.mxu0 0.0
      %7057 = vmatpush.msra.mxu0 0.0
      %7058 = vmatpush.msra.mxu0 0.0
      %7059 = vmatpush.msra.mxu0 0.0
      %7060 = vmatpush.msra.mxu0 0.0
      %7061 = vmatpush.msra.mxu0 0.0
      %7062 = vmatpush.msra.mxu0 0.0
      %7063 = vmatpush.msra.mxu0 %v6908
      %7064 = vmatmul.f32.gmra.mxu0 %v7012
      %v7065 = vpop.f32.mrf.mxu0
      %v7066 = vadd.f32 0.0, %v7065
      %7067 = vmatmul.f32.gmra.mxu0 %v7014
      %v7068 = vpop.f32.mrf.mxu0
      %v7069 = vadd.f32 0.0, %v7068
      %7070 = vmatmul.f32.gmra.mxu0 %v7016
      %v7071 = vpop.f32.mrf.mxu0
      %v7072 = vadd.f32 0.0, %v7071
      %7073 = vmatmul.f32.gmra.mxu0 %v7018
      %v7074 = vpop.f32.mrf.mxu0
      %v7075 = vadd.f32 0.0, %v7074
      %7076 = vmatmul.f32.gmra.mxu0 %v7020
      %v7077 = vpop.f32.mrf.mxu0
      %v7078 = vadd.f32 0.0, %v7077
      %7079 = vmatmul.f32.gmra.mxu0 %v7022
      %v7080 = vpop.f32.mrf.mxu0
      %v7081 = vadd.f32 0.0, %v7080
      %7082 = vmatmul.f32.gmra.mxu0 %v7024
      %v7083 = vpop.f32.mrf.mxu0
      %v7084 = vadd.f32 0.0, %v7083
      %7085 = vmatmul.f32.gmra.mxu0 %v7026
      %v7086 = vpop.f32.mrf.mxu0
      %v7087 = vadd.f32 0.0, %v7086
      %7088 = vmatmul.f32.gmra.mxu0 %v7028
      %v7089 = vpop.f32.mrf.mxu0
      %v7090 = vadd.f32 0.0, %v7089
      %7091 = vmatmul.f32.gmra.mxu0 %v7030
      %v7092 = vpop.f32.mrf.mxu0
      %v7093 = vadd.f32 0.0, %v7092
      %7094 = vmatmul.f32.gmra.mxu0 %v7032
      %v7095 = vpop.f32.mrf.mxu0
      %v7096 = vadd.f32 0.0, %v7095
      %7097 = vmatmul.f32.gmra.mxu0 %v7034
      %v7098 = vpop.f32.mrf.mxu0
      %v7099 = vadd.f32 0.0, %v7098
      %7100 = vmatmul.f32.gmra.mxu0 %v7036
      %v7101 = vpop.f32.mrf.mxu0
      %v7102 = vadd.f32 0.0, %v7101
      %7103 = vmatmul.f32.gmra.mxu0 %v7038
      %v7104 = vpop.f32.mrf.mxu0
      %v7105 = vadd.f32 0.0, %v7104
      %7106 = vmatmul.f32.gmra.mxu0 %v7040
      %v7107 = vpop.f32.mrf.mxu0
      %v7108 = vadd.f32 0.0, %v7107
      %7109 = vmatmul.f32.gmra.mxu0 %v7042
      %v7110 = vpop.f32.mrf.mxu0
      %v7111 = vadd.f32 0.0, %v7110
      %7112 = vmatmul.f32.gmra.mxu0 %v7044
      %v7113 = vpop.f32.mrf.mxu0
      %v7114 = vadd.f32 0.0, %v7113
      %7115 = vmatmul.f32.gmra.mxu0 %v7046
      %v7116 = vpop.f32.mrf.mxu0
      %v7117 = vadd.f32 0.0, %v7116
      %7118 = vdwg.mxu0
      %v7137 = vrot.slane %v7066, 4
      %v7138 = vrot.slane %v7069, 4
      %v7139 = vrot.slane %v7072, 4
      %v7140 = vrot.slane %v7075, 4
      %v7141 = vrot.slane %v7078, 4
      %v7142 = vrot.slane %v7081, 4
      %v7143 = vrot.slane %v7084, 4
      %v7144 = vrot.slane %v7087, 4
      %v7145 = vrot.slane %v7090, 4
      %v7146 = vrot.slane %v7093, 4
      %v7147 = vrot.slane %v7096, 4
      %v7148 = vrot.slane %v7099, 4
      %v7149 = vrot.slane %v7102, 4
      %v7150 = vrot.slane %v7105, 4
      %v7151 = vrot.slane %v7108, 4
      %v7152 = vrot.slane %v7111, 4
      %v7153 = vrot.slane %v7114, 4
      %v7154 = vrot.slane %v7117, 4
      %v7173 = vadd.f32 %v6871, %v7066
      %v7174 = vadd.f32 %v6872, %v7137
      %v7175 = vadd.f32 %v6873, %v7069
      %v7176 = vadd.f32 %v6874, %v7138
      %v7177 = vadd.f32 %v6875, %v7072
      %v7178 = vadd.f32 %v6876, %v7139
      %v7179 = vadd.f32 %v6877, %v7075
      %v7180 = vadd.f32 %v6878, %v7140
      %v7181 = vadd.f32 %v6879, %v7078
      %v7182 = vadd.f32 %v6880, %v7141
      %v7183 = vadd.f32 %v6881, %v7081
      %v7184 = vadd.f32 %v6882, %v7142
      %v7185 = vadd.f32 %v6883, %v7084
      %v7186 = vadd.f32 %v6884, %v7143
      %v7187 = vadd.f32 %v6885, %v7087
      %v7188 = vadd.f32 %v6886, %v7144
      %v7189 = vadd.f32 %v6887, %v7090
      %v7190 = vadd.f32 %v6888, %v7145
      %v7191 = vadd.f32 %v6889, %v7093
      %v7192 = vadd.f32 %v6890, %v7146
      %v7193 = vadd.f32 %v6891, %v7096
      %v7194 = vadd.f32 %v6892, %v7147
      %v7195 = vadd.f32 %v6893, %v7099
      %v7196 = vadd.f32 %v6894, %v7148
      %v7197 = vadd.f32 %v6895, %v7102
      %v7198 = vadd.f32 %v6896, %v7149
      %v7199 = vadd.f32 %v6897, %v7105
      %v7200 = vadd.f32 %v6898, %v7150
      %v7201 = vadd.f32 %v6899, %v7108
      %v7202 = vadd.f32 %v6900, %v7151
      %v7203 = vadd.f32 %v6901, %v7111
      %v7204 = vadd.f32 %v6902, %v7152
      %v7205 = vadd.f32 %v6903, %v7114
      %v7206 = vadd.f32 %v6904, %v7153
      %v7207 = vadd.f32 %v6905, %v7117
      %v7208 = vadd.f32 %v6906, %v7154
      %s7209 = scalar_lea.vmem %s2, 32
      %v7210 = vld [vmem:[%s7209] sm:$0xff]
      %v7212 = vrot.slane %v5819, 7
      %v7213 = vrot.slane %v7212, 2
      %v7214 = vrot.slane %v5820, 7
      %v7215 = vsel %vm324, %v7213, %v7214
      %v7216 = vrot.slane %v7214, 2
      %v7217 = vrot.slane %v5821, 7
      %v7218 = vsel %vm324, %v7216, %v7217
      %v7219 = vrot.slane %v7217, 2
      %v7220 = vrot.slane %v5822, 7
      %v7221 = vsel %vm324, %v7219, %v7220
      %v7222 = vrot.slane %v7220, 2
      %v7223 = vrot.slane %v5823, 7
      %v7224 = vsel %vm324, %v7222, %v7223
      %v7225 = vrot.slane %v7223, 2
      %v7226 = vrot.slane %v5824, 7
      %v7227 = vsel %vm324, %v7225, %v7226
      %v7228 = vrot.slane %v7226, 2
      %v7229 = vrot.slane %v5825, 7
      %v7230 = vsel %vm324, %v7228, %v7229
      %7231 = vst [vmem:[#allocation1] ss:$4 sm:$0xff] %v5942
      %s7232 = scalar_lea.vmem [#allocation1], 1
      %7233 = vst [vmem:[%s7232] ss:$4 sm:$0xff] %v5945
      %s7234 = scalar_lea.vmem [#allocation1], 2
      %7235 = vst [vmem:[%s7234] ss:$4 sm:$0xff] %v5948
      %s7236 = scalar_lea.vmem [#allocation1], 3
      %7237 = vst [vmem:[%s7236] ss:$4 sm:$0xff] %v5951
      %s7238 = scalar_lea.vmem [#allocation1], 32
      %7239 = vst [vmem:[%s7238] ss:$4 sm:$0xff] %v5954
      %s7240 = scalar_lea.vmem [#allocation1], 33
      %7241 = vst [vmem:[%s7240] ss:$4 sm:$0xff] %v5957
      %s7242 = scalar_lea.vmem [#allocation1], 34
      %7243 = vst [vmem:[%s7242] ss:$4 sm:$0xff] %v5961
      %s7244 = scalar_lea.vmem [#allocation1], 35
      %7245 = vst [vmem:[%s7244] ss:$4 sm:$0xff] %v5964
      %v7246 = vld.sshfl [vmem:[#allocation1] sm:$0xff pattern:$0x73625140]
      %v7247 = vld.sshfl [vmem:[#allocation1 + $0x20] sm:$0xff pattern:$0x73625140]
      %7248 = vst [vmem:[#allocation1] ss:$4 sm:$0xff] %v5967
      %7249 = vst [vmem:[%s7232] ss:$4 sm:$0xff] %v5970
      %7250 = vst [vmem:[%s7234] ss:$4 sm:$0xff] %v5973
      %7251 = vst [vmem:[%s7236] ss:$4 sm:$0xff] %v5976
      %7252 = vst [vmem:[%s7238] ss:$4 sm:$0xff] %v5980
      %7253 = vst [vmem:[%s7240] ss:$4 sm:$0xff] %v5983
      %7254 = vst [vmem:[%s7242] ss:$4 sm:$0xff] %v5986
      %7255 = vst [vmem:[%s7244] ss:$4 sm:$0xff] %v5989
      %v7256 = vld.sshfl [vmem:[#allocation1] sm:$0xff pattern:$0x73625140]
      %v7257 = vld.sshfl [vmem:[#allocation1 + $0x20] sm:$0xff pattern:$0x73625140]
      %7258 = vst [vmem:[#allocation1] ss:$4 sm:$0xff] %v5992
      %7259 = vst [vmem:[%s7232] ss:$4 sm:$0xff] %v5995
      %7260 = vst [vmem:[%s7234] ss:$4 sm:$0xff] %v5999
      %7261 = vst [vmem:[%s7236] ss:$4 sm:$0xff] %v6002
      %7262 = vst [vmem:[%s7238] ss:$4 sm:$0xff] %v6005
      %7263 = vst [vmem:[%s7240] ss:$4 sm:$0xff] %v6008
      %7264 = vst [vmem:[%s7242] ss:$4 sm:$0xff] %v6011
      %7265 = vst [vmem:[%s7244] ss:$4 sm:$0xff] %v6014
      %v7266 = vld.sshfl [vmem:[#allocation1] sm:$0xff pattern:$0x73625140]
      %v7267 = vld.sshfl [vmem:[#allocation1 + $0x20] sm:$0xff pattern:$0x73625140]
      %7268 = vst [vmem:[#allocation1] ss:$4 sm:$0xff] %v6018
      %7269 = vst [vmem:[%s7232] ss:$4 sm:$0xff] %v6021
      %7270 = vst [vmem:[%s7234] ss:$4 sm:$0xff] %v6024
      %7271 = vst [vmem:[%s7236] ss:$4 sm:$0xff] %v6027
      %7272 = vst [vmem:[%s7238] ss:$4 sm:$0xff] %v6030
      %7273 = vst [vmem:[%s7240] ss:$4 sm:$0xff] %v6033
      %7274 = vst [vmem:[%s7242] ss:$4 sm:$0xff] %v6037
      %7275 = vst [vmem:[%s7244] ss:$4 sm:$0xff] %v6040
      %v7276 = vld.sshfl [vmem:[#allocation1] sm:$0xff pattern:$0x73625140]
      %v7277 = vld.sshfl [vmem:[#allocation1 + $0x20] sm:$0xff pattern:$0x73625140]
      %7278 = vst [vmem:[#allocation1] ss:$4 sm:$0xff] %v6043
      %7279 = vst [vmem:[%s7232] ss:$4 sm:$0xff] %v6046
      %7280 = vst [vmem:[%s7234] ss:$4 sm:$0xff] %v6049
      %7281 = vst [vmem:[%s7236] ss:$4 sm:$0xff] %v6052
      %7282 = vst [vmem:[%s7238] ss:$4 sm:$0xff] %v6056
      %7283 = vst [vmem:[%s7240] ss:$4 sm:$0xff] %v6059
      %7284 = vst [vmem:[%s7242] ss:$4 sm:$0xff] %v6062
      %7285 = vst [vmem:[%s7244] ss:$4 sm:$0xff] %v6065
      %v7286 = vld.sshfl [vmem:[#allocation1] sm:$0xff pattern:$0x73625140]
      %v7287 = vld.sshfl [vmem:[#allocation1 + $0x20] sm:$0xff pattern:$0x73625140]
      %7288 = vst [vmem:[#allocation1] ss:$4 sm:$0xff] %v6068
      %7289 = vst [vmem:[%s7232] ss:$4 sm:$0xff] %v6071
      %7290 = vst [vmem:[%s7234] ss:$4 sm:$0xff] %v6075
      %7291 = vst [vmem:[%s7236] ss:$4 sm:$0xff] %v6078
      %7292 = vst [vmem:[%s7238] ss:$4 sm:$0xff] %v6081
      %7293 = vst [vmem:[%s7240] ss:$4 sm:$0xff] %v6084
      %7294 = vst [vmem:[%s7242] ss:$4 sm:$0xff] %v6087
      %7295 = vst [vmem:[%s7244] ss:$4 sm:$0xff] %v6090
      %v7296 = vld.sshfl [vmem:[#allocation1] sm:$0xff pattern:$0x73625140]
      %v7297 = vld.sshfl [vmem:[#allocation1 + $0x20] sm:$0xff pattern:$0x73625140]
      %7298 = vst [vmem:[#allocation1] ss:$4 sm:$0xff] %v6094
      %7299 = vst [vmem:[%s7232] ss:$4 sm:$0xff] %v6097
      %7300 = vst [vmem:[%s7234] ss:$4 sm:$0xff] %v6100
      %7301 = vst [vmem:[%s7236] ss:$4 sm:$0xff] %v6103
      %7302 = vst [vmem:[%s7238] ss:$4 sm:$0xff] %v6106
      %7303 = vst [vmem:[%s7240] ss:$4 sm:$0xff] %v6109
      %7304 = vst [vmem:[%s7242] ss:$4 sm:$0xff] %v6113
      %7305 = vst [vmem:[%s7244] ss:$4 sm:$0xff] %v6116
      %v7306 = vld.sshfl [vmem:[#allocation1] sm:$0xff pattern:$0x73625140]
      %v7307 = vld.sshfl [vmem:[#allocation1 + $0x20] sm:$0xff pattern:$0x73625140]
      %7308 = vst [vmem:[#allocation1] ss:$4 sm:$0xff] %v6119
      %7309 = vst [vmem:[%s7232] ss:$4 sm:$0xff] %v6122
      %7310 = vst [vmem:[%s7234] ss:$4 sm:$0xff] %v6125
      %7311 = vst [vmem:[%s7236] ss:$4 sm:$0xff] %v6128
      %7312 = vst [vmem:[%s7238] ss:$4 sm:$0xff] %v6132
      %7313 = vst [vmem:[%s7240] ss:$4 sm:$0xff] %v6135
      %7314 = vst [vmem:[%s7242] ss:$4 sm:$0xff] %v6138
      %7315 = vst [vmem:[%s7244] ss:$4 sm:$0xff] %v6141
      %v7316 = vld.sshfl [vmem:[#allocation1] sm:$0xff pattern:$0x73625140]
      %v7317 = vld.sshfl [vmem:[#allocation1 + $0x20] sm:$0xff pattern:$0x73625140]
      %7318 = vst [vmem:[#allocation1] ss:$4 sm:$0xff] %v6144
      %7319 = vst [vmem:[%s7232] ss:$4 sm:$0xff] %v6147
      %7320 = vst [vmem:[%s7234] ss:$4 sm:$0xff] %v7215
      %7321 = vst [vmem:[%s7236] ss:$4 sm:$0xff] %v7218
      %7322 = vst [vmem:[%s7238] ss:$4 sm:$0xff] %v7221
      %7323 = vst [vmem:[%s7240] ss:$4 sm:$0xff] %v7224
      %7324 = vst [vmem:[%s7242] ss:$4 sm:$0xff] %v7227
      %7325 = vst [vmem:[%s7244] ss:$4 sm:$0xff] %v7230
      %v7326 = vld.sshfl [vmem:[#allocation1] sm:$0xff pattern:$0x73625140]
      %v7327 = vld.sshfl [vmem:[#allocation1 + $0x20] sm:$0xff pattern:$0x73625140]
      %v7328 = vsel %vm6245, %v7246, 0
      %v7330 = vsel %vm6245, %v7247, 0
      %v7332 = vsel %vm6245, %v7256, 0
      %v7334 = vsel %vm6245, %v7257, 0
      %v7336 = vsel %vm6245, %v7266, 0
      %v7338 = vsel %vm6245, %v7267, 0
      %v7340 = vsel %vm6245, %v7276, 0
      %v7342 = vsel %vm6245, %v7277, 0
      %v7344 = vsel %vm6245, %v7286, 0
      %v7346 = vsel %vm6245, %v7287, 0
      %v7348 = vsel %vm6245, %v7296, 0
      %v7350 = vsel %vm6245, %v7297, 0
      %v7352 = vsel %vm6245, %v7306, 0
      %v7354 = vsel %vm6245, %v7307, 0
      %v7356 = vsel %vm6245, %v7316, 0
      %v7358 = vsel %vm6245, %v7317, 0
      %v7360 = vsel %vm6245, %v7326, 0
      %v7362 = vsel %vm6245, %v7327, 0
      %7364 = vmatpush.msra.mxu0 0.0
      %7365 = vmatpush.msra.mxu0 0.0
      %7366 = vmatpush.msra.mxu0 0.0
      %7367 = vmatpush.msra.mxu0 0.0
      %7368 = vmatpush.msra.mxu0 0.0
      %7369 = vmatpush.msra.mxu0 0.0
      %7370 = vmatpush.msra.mxu0 0.0
      %7371 = vmatpush.msra.mxu0 0.0
      %7372 = vmatpush.msra.mxu0 0.0
      %7373 = vmatpush.msra.mxu0 0.0
      %7374 = vmatpush.msra.mxu0 0.0
      %7375 = vmatpush.msra.mxu0 0.0
      %7376 = vmatpush.msra.mxu0 0.0
      %7377 = vmatpush.msra.mxu0 0.0
      %7378 = vmatpush.msra.mxu0 0.0
      %7379 = vmatpush.msra.mxu0 %v7210
      %7380 = vmatmul.f32.gmra.mxu0 %v7328
      %v7381 = vpop.f32.mrf.mxu0
      %v7382 = vadd.f32 0.0, %v7381
      %7383 = vmatmul.f32.gmra.mxu0 %v7330
      %v7384 = vpop.f32.mrf.mxu0
      %v7385 = vadd.f32 0.0, %v7384
      %7386 = vmatmul.f32.gmra.mxu0 %v7332
      %v7387 = vpop.f32.mrf.mxu0
      %v7388 = vadd.f32 0.0, %v7387
      %7389 = vmatmul.f32.gmra.mxu0 %v7334
      %v7390 = vpop.f32.mrf.mxu0
      %v7391 = vadd.f32 0.0, %v7390
      %7392 = vmatmul.f32.gmra.mxu0 %v7336
      %v7393 = vpop.f32.mrf.mxu0
      %v7394 = vadd.f32 0.0, %v7393
      %7395 = vmatmul.f32.gmra.mxu0 %v7338
      %v7396 = vpop.f32.mrf.mxu0
      %v7397 = vadd.f32 0.0, %v7396
      %7398 = vmatmul.f32.gmra.mxu0 %v7340
      %v7399 = vpop.f32.mrf.mxu0
      %v7400 = vadd.f32 0.0, %v7399
      %7401 = vmatmul.f32.gmra.mxu0 %v7342
      %v7402 = vpop.f32.mrf.mxu0
      %v7403 = vadd.f32 0.0, %v7402
      %7404 = vmatmul.f32.gmra.mxu0 %v7344
      %v7405 = vpop.f32.mrf.mxu0
      %v7406 = vadd.f32 0.0, %v7405
      %7407 = vmatmul.f32.gmra.mxu0 %v7346
      %v7408 = vpop.f32.mrf.mxu0
      %v7409 = vadd.f32 0.0, %v7408
      %7410 = vmatmul.f32.gmra.mxu0 %v7348
      %v7411 = vpop.f32.mrf.mxu0
      %v7412 = vadd.f32 0.0, %v7411
      %7413 = vmatmul.f32.gmra.mxu0 %v7350
      %v7414 = vpop.f32.mrf.mxu0
      %v7415 = vadd.f32 0.0, %v7414
      %7416 = vmatmul.f32.gmra.mxu0 %v7352
      %v7417 = vpop.f32.mrf.mxu0
      %v7418 = vadd.f32 0.0, %v7417
      %7419 = vmatmul.f32.gmra.mxu0 %v7354
      %v7420 = vpop.f32.mrf.mxu0
      %v7421 = vadd.f32 0.0, %v7420
      %7422 = vmatmul.f32.gmra.mxu0 %v7356
      %v7423 = vpop.f32.mrf.mxu0
      %v7424 = vadd.f32 0.0, %v7423
      %7425 = vmatmul.f32.gmra.mxu0 %v7358
      %v7426 = vpop.f32.mrf.mxu0
      %v7427 = vadd.f32 0.0, %v7426
      %7428 = vmatmul.f32.gmra.mxu0 %v7360
      %v7429 = vpop.f32.mrf.mxu0
      %v7430 = vadd.f32 0.0, %v7429
      %7431 = vmatmul.f32.gmra.mxu0 %v7362
      %v7432 = vpop.f32.mrf.mxu0
      %v7433 = vadd.f32 0.0, %v7432
      %7434 = vdwg.mxu0
      %v7453 = vrot.slane %v7382, 4
      %v7454 = vrot.slane %v7385, 4
      %v7455 = vrot.slane %v7388, 4
      %v7456 = vrot.slane %v7391, 4
      %v7457 = vrot.slane %v7394, 4
      %v7458 = vrot.slane %v7397, 4
      %v7459 = vrot.slane %v7400, 4
      %v7460 = vrot.slane %v7403, 4
      %v7461 = vrot.slane %v7406, 4
      %v7462 = vrot.slane %v7409, 4
      %v7463 = vrot.slane %v7412, 4
      %v7464 = vrot.slane %v7415, 4
      %v7465 = vrot.slane %v7418, 4
      %v7466 = vrot.slane %v7421, 4
      %v7467 = vrot.slane %v7424, 4
      %v7468 = vrot.slane %v7427, 4
      %v7469 = vrot.slane %v7430, 4
      %v7470 = vrot.slane %v7433, 4
      %v7489 = vadd.f32 %v7173, %v7382
      %v7490 = vadd.f32 %v7174, %v7453
      %v7491 = vadd.f32 %v7175, %v7385
      %v7492 = vadd.f32 %v7176, %v7454
      %v7493 = vadd.f32 %v7177, %v7388
      %v7494 = vadd.f32 %v7178, %v7455
      %v7495 = vadd.f32 %v7179, %v7391
      %v7496 = vadd.f32 %v7180, %v7456
      %v7497 = vadd.f32 %v7181, %v7394
      %v7498 = vadd.f32 %v7182, %v7457
      %v7499 = vadd.f32 %v7183, %v7397
      %v7500 = vadd.f32 %v7184, %v7458
      %v7501 = vadd.f32 %v7185, %v7400
      %v7502 = vadd.f32 %v7186, %v7459
      %v7503 = vadd.f32 %v7187, %v7403
      %v7504 = vadd.f32 %v7188, %v7460
      %v7505 = vadd.f32 %v7189, %v7406
      %v7506 = vadd.f32 %v7190, %v7461
      %v7507 = vadd.f32 %v7191, %v7409
      %v7508 = vadd.f32 %v7192, %v7462
      %v7509 = vadd.f32 %v7193, %v7412
      %v7510 = vadd.f32 %v7194, %v7463
      %v7511 = vadd.f32 %v7195, %v7415
      %v7512 = vadd.f32 %v7196, %v7464
      %v7513 = vadd.f32 %v7197, %v7418
      %v7514 = vadd.f32 %v7198, %v7465
      %v7515 = vadd.f32 %v7199, %v7421
      %v7516 = vadd.f32 %v7200, %v7466
      %v7517 = vadd.f32 %v7201, %v7424
      %v7518 = vadd.f32 %v7202, %v7467
      %v7519 = vadd.f32 %v7203, %v7427
      %v7520 = vadd.f32 %v7204, %v7468
      %v7521 = vadd.f32 %v7205, %v7430
      %v7522 = vadd.f32 %v7206, %v7469
      %v7523 = vadd.f32 %v7207, %v7433
      %v7524 = vadd.f32 %v7208, %v7470
      %s7525 = scalar_lea.vmem %s2, 40
      %v7526 = vld [vmem:[%s7525] sm:$0xff]
      %7527 = vst [vmem:[#allocation1] ss:$4 sm:$0xff] %v5743
      %s7528 = scalar_lea.vmem [#allocation1], 1
      %7529 = vst [vmem:[%s7528] ss:$4 sm:$0xff] %v5744
      %s7530 = scalar_lea.vmem [#allocation1], 2
      %7531 = vst [vmem:[%s7530] ss:$4 sm:$0xff] %v5745
      %s7532 = scalar_lea.vmem [#allocation1], 3
      %7533 = vst [vmem:[%s7532] ss:$4 sm:$0xff] %v5746
      %s7534 = scalar_lea.vmem [#allocation1], 32
      %7535 = vst [vmem:[%s7534] ss:$4 sm:$0xff] %v5747
      %s7536 = scalar_lea.vmem [#allocation1], 33
      %7537 = vst [vmem:[%s7536] ss:$4 sm:$0xff] %v5748
      %s7538 = scalar_lea.vmem [#allocation1], 34
      %7539 = vst [vmem:[%s7538] ss:$4 sm:$0xff] %v5750
      %s7540 = scalar_lea.vmem [#allocation1], 35
      %7541 = vst [vmem:[%s7540] ss:$4 sm:$0xff] %v5751
      %v7542 = vld.sshfl [vmem:[#allocation1] sm:$0xff pattern:$0x73625140]
      %v7543 = vld.sshfl [vmem:[#allocation1 + $0x20] sm:$0xff pattern:$0x73625140]
      %7544 = vst [vmem:[#allocation1] ss:$4 sm:$0xff] %v5752
      %7545 = vst [vmem:[%s7528] ss:$4 sm:$0xff] %v5753
      %7546 = vst [vmem:[%s7530] ss:$4 sm:$0xff] %v5754
      %7547 = vst [vmem:[%s7532] ss:$4 sm:$0xff] %v5755
      %7548 = vst [vmem:[%s7534] ss:$4 sm:$0xff] %v5757
      %7549 = vst [vmem:[%s7536] ss:$4 sm:$0xff] %v5758
      %7550 = vst [vmem:[%s7538] ss:$4 sm:$0xff] %v5759
      %7551 = vst [vmem:[%s7540] ss:$4 sm:$0xff] %v5760
      %v7552 = vld.sshfl [vmem:[#allocation1] sm:$0xff pattern:$0x73625140]
      %v7553 = vld.sshfl [vmem:[#allocation1 + $0x20] sm:$0xff pattern:$0x73625140]
      %7554 = vst [vmem:[#allocation1] ss:$4 sm:$0xff] %v5761
      %7555 = vst [vmem:[%s7528] ss:$4 sm:$0xff] %v5762
      %7556 = vst [vmem:[%s7530] ss:$4 sm:$0xff] %v5764
      %7557 = vst [vmem:[%s7532] ss:$4 sm:$0xff] %v5765
      %7558 = vst [vmem:[%s7534] ss:$4 sm:$0xff] %v5766
      %7559 = vst [vmem:[%s7536] ss:$4 sm:$0xff] %v5767
      %7560 = vst [vmem:[%s7538] ss:$4 sm:$0xff] %v5768
      %7561 = vst [vmem:[%s7540] ss:$4 sm:$0xff] %v5769
      %v7562 = vld.sshfl [vmem:[#allocation1] sm:$0xff pattern:$0x73625140]
      %v7563 = vld.sshfl [vmem:[#allocation1 + $0x20] sm:$0xff pattern:$0x73625140]
      %7564 = vst [vmem:[#allocation1] ss:$4 sm:$0xff] %v5771
      %7565 = vst [vmem:[%s7528] ss:$4 sm:$0xff] %v5772
      %7566 = vst [vmem:[%s7530] ss:$4 sm:$0xff] %v5773
      %7567 = vst [vmem:[%s7532] ss:$4 sm:$0xff] %v5774
      %7568 = vst [vmem:[%s7534] ss:$4 sm:$0xff] %v5775
      %7569 = vst [vmem:[%s7536] ss:$4 sm:$0xff] %v5776
      %7570 = vst [vmem:[%s7538] ss:$4 sm:$0xff] %v5778
      %7571 = vst [vmem:[%s7540] ss:$4 sm:$0xff] %v5779
      %v7572 = vld.sshfl [vmem:[#allocation1] sm:$0xff pattern:$0x73625140]
      %v7573 = vld.sshfl [vmem:[#allocation1 + $0x20] sm:$0xff pattern:$0x73625140]
      %7574 = vst [vmem:[#allocation1] ss:$4 sm:$0xff] %v5780
      %7575 = vst [vmem:[%s7528] ss:$4 sm:$0xff] %v5781
      %7576 = vst [vmem:[%s7530] ss:$4 sm:$0xff] %v5782
      %7577 = vst [vmem:[%s7532] ss:$4 sm:$0xff] %v5783
      %7578 = vst [vmem:[%s7534] ss:$4 sm:$0xff] %v5785
      %7579 = vst [vmem:[%s7536] ss:$4 sm:$0xff] %v5786
      %7580 = vst [vmem:[%s7538] ss:$4 sm:$0xff] %v5787
      %7581 = vst [vmem:[%s7540] ss:$4 sm:$0xff] %v5788
      %v7582 = vld.sshfl [vmem:[#allocation1] sm:$0xff pattern:$0x73625140]
      %v7583 = vld.sshfl [vmem:[#allocation1 + $0x20] sm:$0xff pattern:$0x73625140]
      %7584 = vst [vmem:[#allocation1] ss:$4 sm:$0xff] %v5789
      %7585 = vst [vmem:[%s7528] ss:$4 sm:$0xff] %v5790
      %7586 = vst [vmem:[%s7530] ss:$4 sm:$0xff] %v5792
      %7587 = vst [vmem:[%s7532] ss:$4 sm:$0xff] %v5793
      %7588 = vst [vmem:[%s7534] ss:$4 sm:$0xff] %v5794
      %7589 = vst [vmem:[%s7536] ss:$4 sm:$0xff] %v5795
      %7590 = vst [vmem:[%s7538] ss:$4 sm:$0xff] %v5796
      %7591 = vst [vmem:[%s7540] ss:$4 sm:$0xff] %v5797
      %v7592 = vld.sshfl [vmem:[#allocation1] sm:$0xff pattern:$0x73625140]
      %v7593 = vld.sshfl [vmem:[#allocation1 + $0x20] sm:$0xff pattern:$0x73625140]
      %7594 = vst [vmem:[#allocation1] ss:$4 sm:$0xff] %v5799
      %7595 = vst [vmem:[%s7528] ss:$4 sm:$0xff] %v5800
      %7596 = vst [vmem:[%s7530] ss:$4 sm:$0xff] %v5801
      %7597 = vst [vmem:[%s7532] ss:$4 sm:$0xff] %v5802
      %7598 = vst [vmem:[%s7534] ss:$4 sm:$0xff] %v5803
      %7599 = vst [vmem:[%s7536] ss:$4 sm:$0xff] %v5804
      %7600 = vst [vmem:[%s7538] ss:$4 sm:$0xff] %v5806
      %7601 = vst [vmem:[%s7540] ss:$4 sm:$0xff] %v5807
      %v7602 = vld.sshfl [vmem:[#allocation1] sm:$0xff pattern:$0x73625140]
      %v7603 = vld.sshfl [vmem:[#allocation1 + $0x20] sm:$0xff pattern:$0x73625140]
      %7604 = vst [vmem:[#allocation1] ss:$4 sm:$0xff] %v5808
      %7605 = vst [vmem:[%s7528] ss:$4 sm:$0xff] %v5809
      %7606 = vst [vmem:[%s7530] ss:$4 sm:$0xff] %v5810
      %7607 = vst [vmem:[%s7532] ss:$4 sm:$0xff] %v5811
      %7608 = vst [vmem:[%s7534] ss:$4 sm:$0xff] %v5813
      %7609 = vst [vmem:[%s7536] ss:$4 sm:$0xff] %v5814
      %7610 = vst [vmem:[%s7538] ss:$4 sm:$0xff] %v5815
      %7611 = vst [vmem:[%s7540] ss:$4 sm:$0xff] %v5816
      %v7612 = vld.sshfl [vmem:[#allocation1] sm:$0xff pattern:$0x73625140]
      %v7613 = vld.sshfl [vmem:[#allocation1 + $0x20] sm:$0xff pattern:$0x73625140]
      %7614 = vst [vmem:[#allocation1] ss:$4 sm:$0xff] %v5817
      %7615 = vst [vmem:[%s7528] ss:$4 sm:$0xff] %v5818
      %7616 = vst [vmem:[%s7530] ss:$4 sm:$0xff] %v5820
      %7617 = vst [vmem:[%s7532] ss:$4 sm:$0xff] %v5821
      %7618 = vst [vmem:[%s7534] ss:$4 sm:$0xff] %v5822
      %7619 = vst [vmem:[%s7536] ss:$4 sm:$0xff] %v5823
      %7620 = vst [vmem:[%s7538] ss:$4 sm:$0xff] %v5824
      %7621 = vst [vmem:[%s7540] ss:$4 sm:$0xff] %v5825
      %v7622 = vld.sshfl [vmem:[#allocation1] sm:$0xff pattern:$0x73625140]
      %v7623 = vld.sshfl [vmem:[#allocation1 + $0x20] sm:$0xff pattern:$0x73625140]
      %v7624 = vsel %vm6245, %v7542, 0
      %v7626 = vsel %vm6245, %v7543, 0
      %v7628 = vsel %vm6245, %v7552, 0
      %v7630 = vsel %vm6245, %v7553, 0
      %v7632 = vsel %vm6245, %v7562, 0
      %v7634 = vsel %vm6245, %v7563, 0
      %v7636 = vsel %vm6245, %v7572, 0
      %v7638 = vsel %vm6245, %v7573, 0
      %v7640 = vsel %vm6245, %v7582, 0
      %v7642 = vsel %vm6245, %v7583, 0
      %v7644 = vsel %vm6245, %v7592, 0
      %v7646 = vsel %vm6245, %v7593, 0
      %v7648 = vsel %vm6245, %v7602, 0
      %v7650 = vsel %vm6245, %v7603, 0
      %v7652 = vsel %vm6245, %v7612, 0
      %v7654 = vsel %vm6245, %v7613, 0
      %v7656 = vsel %vm6245, %v7622, 0
      %v7658 = vsel %vm6245, %v7623, 0
      %7660 = vmatpush.msra.mxu0 0.0
      %7661 = vmatpush.msra.mxu0 0.0
      %7662 = vmatpush.msra.mxu0 0.0
      %7663 = vmatpush.msra.mxu0 0.0
      %7664 = vmatpush.msra.mxu0 0.0
      %7665 = vmatpush.msra.mxu0 0.0
      %7666 = vmatpush.msra.mxu0 0.0
      %7667 = vmatpush.msra.mxu0 0.0
      %7668 = vmatpush.msra.mxu0 0.0
      %7669 = vmatpush.msra.mxu0 0.0
      %7670 = vmatpush.msra.mxu0 0.0
      %7671 = vmatpush.msra.mxu0 0.0
      %7672 = vmatpush.msra.mxu0 0.0
      %7673 = vmatpush.msra.mxu0 0.0
      %7674 = vmatpush.msra.mxu0 0.0
      %7675 = vmatpush.msra.mxu0 %v7526
      %7676 = vmatmul.f32.gmra.mxu0 %v7624
      %v7677 = vpop.f32.mrf.mxu0
      %v7678 = vadd.f32 0.0, %v7677
      %7679 = vmatmul.f32.gmra.mxu0 %v7626
      %v7680 = vpop.f32.mrf.mxu0
      %v7681 = vadd.f32 0.0, %v7680
      %7682 = vmatmul.f32.gmra.mxu0 %v7628
      %v7683 = vpop.f32.mrf.mxu0
      %v7684 = vadd.f32 0.0, %v7683
      %7685 = vmatmul.f32.gmra.mxu0 %v7630
      %v7686 = vpop.f32.mrf.mxu0
      %v7687 = vadd.f32 0.0, %v7686
      %7688 = vmatmul.f32.gmra.mxu0 %v7632
      %v7689 = vpop.f32.mrf.mxu0
      %v7690 = vadd.f32 0.0, %v7689
      %7691 = vmatmul.f32.gmra.mxu0 %v7634
      %v7692 = vpop.f32.mrf.mxu0
      %v7693 = vadd.f32 0.0, %v7692
      %7694 = vmatmul.f32.gmra.mxu0 %v7636
      %v7695 = vpop.f32.mrf.mxu0
      %v7696 = vadd.f32 0.0, %v7695
      %7697 = vmatmul.f32.gmra.mxu0 %v7638
      %v7698 = vpop.f32.mrf.mxu0
      %v7699 = vadd.f32 0.0, %v7698
      %7700 = vmatmul.f32.gmra.mxu0 %v7640
      %v7701 = vpop.f32.mrf.mxu0
      %v7702 = vadd.f32 0.0, %v7701
      %7703 = vmatmul.f32.gmra.mxu0 %v7642
      %v7704 = vpop.f32.mrf.mxu0
      %v7705 = vadd.f32 0.0, %v7704
      %7706 = vmatmul.f32.gmra.mxu0 %v7644
      %v7707 = vpop.f32.mrf.mxu0
      %v7708 = vadd.f32 0.0, %v7707
      %7709 = vmatmul.f32.gmra.mxu0 %v7646
      %v7710 = vpop.f32.mrf.mxu0
      %v7711 = vadd.f32 0.0, %v7710
      %7712 = vmatmul.f32.gmra.mxu0 %v7648
      %v7713 = vpop.f32.mrf.mxu0
      %v7714 = vadd.f32 0.0, %v7713
      %7715 = vmatmul.f32.gmra.mxu0 %v7650
      %v7716 = vpop.f32.mrf.mxu0
      %v7717 = vadd.f32 0.0, %v7716
      %7718 = vmatmul.f32.gmra.mxu0 %v7652
      %v7719 = vpop.f32.mrf.mxu0
      %v7720 = vadd.f32 0.0, %v7719
      %7721 = vmatmul.f32.gmra.mxu0 %v7654
      %v7722 = vpop.f32.mrf.mxu0
      %v7723 = vadd.f32 0.0, %v7722
      %7724 = vmatmul.f32.gmra.mxu0 %v7656
      %v7725 = vpop.f32.mrf.mxu0
      %v7726 = vadd.f32 0.0, %v7725
      %7727 = vmatmul.f32.gmra.mxu0 %v7658
      %v7728 = vpop.f32.mrf.mxu0
      %v7729 = vadd.f32 0.0, %v7728
      %7730 = vdwg.mxu0
      %v7749 = vrot.slane %v7678, 4
      %v7750 = vrot.slane %v7681, 4
      %v7751 = vrot.slane %v7684, 4
      %v7752 = vrot.slane %v7687, 4
      %v7753 = vrot.slane %v7690, 4
      %v7754 = vrot.slane %v7693, 4
      %v7755 = vrot.slane %v7696, 4
      %v7756 = vrot.slane %v7699, 4
      %v7757 = vrot.slane %v7702, 4
      %v7758 = vrot.slane %v7705, 4
      %v7759 = vrot.slane %v7708, 4
      %v7760 = vrot.slane %v7711, 4
      %v7761 = vrot.slane %v7714, 4
      %v7762 = vrot.slane %v7717, 4
      %v7763 = vrot.slane %v7720, 4
      %v7764 = vrot.slane %v7723, 4
      %v7765 = vrot.slane %v7726, 4
      %v7766 = vrot.slane %v7729, 4
      %v7785 = vadd.f32 %v7489, %v7678
      %v7786 = vadd.f32 %v7490, %v7749
      %v7787 = vadd.f32 %v7491, %v7681
      %v7788 = vadd.f32 %v7492, %v7750
      %v7789 = vadd.f32 %v7493, %v7684
      %v7790 = vadd.f32 %v7494, %v7751
      %v7791 = vadd.f32 %v7495, %v7687
      %v7792 = vadd.f32 %v7496, %v7752
      %v7793 = vadd.f32 %v7497, %v7690
      %v7794 = vadd.f32 %v7498, %v7753
      %v7795 = vadd.f32 %v7499, %v7693
      %v7796 = vadd.f32 %v7500, %v7754
      %v7797 = vadd.f32 %v7501, %v7696
      %v7798 = vadd.f32 %v7502, %v7755
      %v7799 = vadd.f32 %v7503, %v7699
      %v7800 = vadd.f32 %v7504, %v7756
      %v7801 = vadd.f32 %v7505, %v7702
      %v7802 = vadd.f32 %v7506, %v7757
      %v7803 = vadd.f32 %v7507, %v7705
      %v7804 = vadd.f32 %v7508, %v7758
      %v7805 = vadd.f32 %v7509, %v7708
      %v7806 = vadd.f32 %v7510, %v7759
      %v7807 = vadd.f32 %v7511, %v7711
      %v7808 = vadd.f32 %v7512, %v7760
      %v7809 = vadd.f32 %v7513, %v7714
      %v7810 = vadd.f32 %v7514, %v7761
      %v7811 = vadd.f32 %v7515, %v7717
      %v7812 = vadd.f32 %v7516, %v7762
      %v7813 = vadd.f32 %v7517, %v7720
      %v7814 = vadd.f32 %v7518, %v7763
      %v7815 = vadd.f32 %v7519, %v7723
      %v7816 = vadd.f32 %v7520, %v7764
      %v7817 = vadd.f32 %v7521, %v7726
      %v7818 = vadd.f32 %v7522, %v7765
      %v7819 = vadd.f32 %v7523, %v7729
      %v7820 = vadd.f32 %v7524, %v7766
      %s7821 = scalar_lea.vmem %s2, 48
      %v7822 = vld [vmem:[%s7821] sm:$0xff]
      %7829 = vst [vmem:[#allocation1] ss:$4 sm:$0xff] %v5749
      %s7830 = scalar_lea.vmem [#allocation1], 1
      %7831 = vst [vmem:[%s7830] ss:$4 sm:$0xff] %v5750
      %s7832 = scalar_lea.vmem [#allocation1], 2
      %7833 = vst [vmem:[%s7832] ss:$4 sm:$0xff] %v5751
      %s7834 = scalar_lea.vmem [#allocation1], 3
      %7835 = vst [vmem:[%s7834] ss:$4 sm:$0xff] %v5752
      %s7836 = scalar_lea.vmem [#allocation1], 32
      %7837 = vst [vmem:[%s7836] ss:$4 sm:$0xff] %v5753
      %s7838 = scalar_lea.vmem [#allocation1], 33
      %7839 = vst [vmem:[%s7838] ss:$4 sm:$0xff] %v5754
      %s7840 = scalar_lea.vmem [#allocation1], 34
      %7841 = vst [vmem:[%s7840] ss:$4 sm:$0xff] %v5756
      %s7842 = scalar_lea.vmem [#allocation1], 35
      %7843 = vst [vmem:[%s7842] ss:$4 sm:$0xff] %v5757
      %v7844 = vld.sshfl [vmem:[#allocation1] sm:$0xff pattern:$0x73625140]
      %v7845 = vld.sshfl [vmem:[#allocation1 + $0x20] sm:$0xff pattern:$0x73625140]
      %7846 = vst [vmem:[#allocation1] ss:$4 sm:$0xff] %v5758
      %7847 = vst [vmem:[%s7830] ss:$4 sm:$0xff] %v5759
      %7848 = vst [vmem:[%s7832] ss:$4 sm:$0xff] %v5760
      %7849 = vst [vmem:[%s7834] ss:$4 sm:$0xff] %v5761
      %7850 = vst [vmem:[%s7836] ss:$4 sm:$0xff] %v5763
      %7851 = vst [vmem:[%s7838] ss:$4 sm:$0xff] %v5764
      %7852 = vst [vmem:[%s7840] ss:$4 sm:$0xff] %v5765
      %7853 = vst [vmem:[%s7842] ss:$4 sm:$0xff] %v5766
      %v7854 = vld.sshfl [vmem:[#allocation1] sm:$0xff pattern:$0x73625140]
      %v7855 = vld.sshfl [vmem:[#allocation1 + $0x20] sm:$0xff pattern:$0x73625140]
      %7856 = vst [vmem:[#allocation1] ss:$4 sm:$0xff] %v5767
      %7857 = vst [vmem:[%s7830] ss:$4 sm:$0xff] %v5768
      %7858 = vst [vmem:[%s7832] ss:$4 sm:$0xff] %v5770
      %7859 = vst [vmem:[%s7834] ss:$4 sm:$0xff] %v5771
      %7860 = vst [vmem:[%s7836] ss:$4 sm:$0xff] %v5772
      %7861 = vst [vmem:[%s7838] ss:$4 sm:$0xff] %v5773
      %7862 = vst [vmem:[%s7840] ss:$4 sm:$0xff] %v5774
      %7863 = vst [vmem:[%s7842] ss:$4 sm:$0xff] %v5775
      %v7864 = vld.sshfl [vmem:[#allocation1] sm:$0xff pattern:$0x73625140]
      %v7865 = vld.sshfl [vmem:[#allocation1 + $0x20] sm:$0xff pattern:$0x73625140]
      %7866 = vst [vmem:[#allocation1] ss:$4 sm:$0xff] %v5777
      %7867 = vst [vmem:[%s7830] ss:$4 sm:$0xff] %v5778
      %7868 = vst [vmem:[%s7832] ss:$4 sm:$0xff] %v5779
      %7869 = vst [vmem:[%s7834] ss:$4 sm:$0xff] %v5780
      %7870 = vst [vmem:[%s7836] ss:$4 sm:$0xff] %v5781
      %7871 = vst [vmem:[%s7838] ss:$4 sm:$0xff] %v5782
      %7872 = vst [vmem:[%s7840] ss:$4 sm:$0xff] %v5784
      %7873 = vst [vmem:[%s7842] ss:$4 sm:$0xff] %v5785
      %v7874 = vld.sshfl [vmem:[#allocation1] sm:$0xff pattern:$0x73625140]
      %v7875 = vld.sshfl [vmem:[#allocation1 + $0x20] sm:$0xff pattern:$0x73625140]
      %7876 = vst [vmem:[#allocation1] ss:$4 sm:$0xff] %v5786
      %7877 = vst [vmem:[%s7830] ss:$4 sm:$0xff] %v5787
      %7878 = vst [vmem:[%s7832] ss:$4 sm:$0xff] %v5788
      %7879 = vst [vmem:[%s7834] ss:$4 sm:$0xff] %v5789
      %7880 = vst [vmem:[%s7836] ss:$4 sm:$0xff] %v5791
      %7881 = vst [vmem:[%s7838] ss:$4 sm:$0xff] %v5792
      %7882 = vst [vmem:[%s7840] ss:$4 sm:$0xff] %v5793
      %7883 = vst [vmem:[%s7842] ss:$4 sm:$0xff] %v5794
      %v7884 = vld.sshfl [vmem:[#allocation1] sm:$0xff pattern:$0x73625140]
      %v7885 = vld.sshfl [vmem:[#allocation1 + $0x20] sm:$0xff pattern:$0x73625140]
      %7886 = vst [vmem:[#allocation1] ss:$4 sm:$0xff] %v5795
      %7887 = vst [vmem:[%s7830] ss:$4 sm:$0xff] %v5796
      %7888 = vst [vmem:[%s7832] ss:$4 sm:$0xff] %v5798
      %7889 = vst [vmem:[%s7834] ss:$4 sm:$0xff] %v5799
      %7890 = vst [vmem:[%s7836] ss:$4 sm:$0xff] %v5800
      %7891 = vst [vmem:[%s7838] ss:$4 sm:$0xff] %v5801
      %7892 = vst [vmem:[%s7840] ss:$4 sm:$0xff] %v5802
      %7893 = vst [vmem:[%s7842] ss:$4 sm:$0xff] %v5803
      %v7894 = vld.sshfl [vmem:[#allocation1] sm:$0xff pattern:$0x73625140]
      %v7895 = vld.sshfl [vmem:[#allocation1 + $0x20] sm:$0xff pattern:$0x73625140]
      %7896 = vst [vmem:[#allocation1] ss:$4 sm:$0xff] %v5805
      %7897 = vst [vmem:[%s7830] ss:$4 sm:$0xff] %v5806
      %7898 = vst [vmem:[%s7832] ss:$4 sm:$0xff] %v5807
      %7899 = vst [vmem:[%s7834] ss:$4 sm:$0xff] %v5808
      %7900 = vst [vmem:[%s7836] ss:$4 sm:$0xff] %v5809
      %7901 = vst [vmem:[%s7838] ss:$4 sm:$0xff] %v5810
      %7902 = vst [vmem:[%s7840] ss:$4 sm:$0xff] %v5812
      %7903 = vst [vmem:[%s7842] ss:$4 sm:$0xff] %v5813
      %v7904 = vld.sshfl [vmem:[#allocation1] sm:$0xff pattern:$0x73625140]
      %v7905 = vld.sshfl [vmem:[#allocation1 + $0x20] sm:$0xff pattern:$0x73625140]
      %7906 = vst [vmem:[#allocation1] ss:$4 sm:$0xff] %v5814
      %7907 = vst [vmem:[%s7830] ss:$4 sm:$0xff] %v5815
      %7908 = vst [vmem:[%s7832] ss:$4 sm:$0xff] %v5816
      %7909 = vst [vmem:[%s7834] ss:$4 sm:$0xff] %v5817
      %7910 = vst [vmem:[%s7836] ss:$4 sm:$0xff] %v5819
      %7911 = vst [vmem:[%s7838] ss:$4 sm:$0xff] %v5820
      %7912 = vst [vmem:[%s7840] ss:$4 sm:$0xff] %v5821
      %7913 = vst [vmem:[%s7842] ss:$4 sm:$0xff] %v5822
      %v7914 = vld.sshfl [vmem:[#allocation1] sm:$0xff pattern:$0x73625140]
      %v7915 = vld.sshfl [vmem:[#allocation1 + $0x20] sm:$0xff pattern:$0x73625140]
      %7916 = vst [vmem:[#allocation1] ss:$4 sm:$0xff] %v5823
      %7917 = vst [vmem:[%s7830] ss:$4 sm:$0xff] %v5824
      %7918 = vst [vmem:[%s7832] ss:$4 sm:$0xff] %v5826
      %7919 = vst [vmem:[%s7834] ss:$4 sm:$0xff] %v5827
      %7920 = vst [vmem:[%s7836] ss:$4 sm:$0xff] %v5828
      %7921 = vst [vmem:[%s7838] ss:$4 sm:$0xff] %v5829
      %7922 = vst [vmem:[%s7840] ss:$4 sm:$0xff] %v5830
      %7923 = vst [vmem:[%s7842] ss:$4 sm:$0xff] %v5831
      %v7924 = vld.sshfl [vmem:[#allocation1] sm:$0xff pattern:$0x73625140]
      %v7925 = vld.sshfl [vmem:[#allocation1 + $0x20] sm:$0xff pattern:$0x73625140]
      %v7926 = vsel %vm6245, %v7844, 0
      %v7928 = vsel %vm6245, %v7845, 0
      %v7930 = vsel %vm6245, %v7854, 0
      %v7932 = vsel %vm6245, %v7855, 0
      %v7934 = vsel %vm6245, %v7864, 0
      %v7936 = vsel %vm6245, %v7865, 0
      %v7938 = vsel %vm6245, %v7874, 0
      %v7940 = vsel %vm6245, %v7875, 0
      %v7942 = vsel %vm6245, %v7884, 0
      %v7944 = vsel %vm6245, %v7885, 0
      %v7946 = vsel %vm6245, %v7894, 0
      %v7948 = vsel %vm6245, %v7895, 0
      %v7950 = vsel %vm6245, %v7904, 0
      %v7952 = vsel %vm6245, %v7905, 0
      %v7954 = vsel %vm6245, %v7914, 0
      %v7956 = vsel %vm6245, %v7915, 0
      %v7958 = vsel %vm6245, %v7924, 0
      %v7960 = vsel %vm6245, %v7925, 0
      %7962 = vmatpush.msra.mxu0 0.0
      %7963 = vmatpush.msra.mxu0 0.0
      %7964 = vmatpush.msra.mxu0 0.0
      %7965 = vmatpush.msra.mxu0 0.0
      %7966 = vmatpush.msra.mxu0 0.0
      %7967 = vmatpush.msra.mxu0 0.0
      %7968 = vmatpush.msra.mxu0 0.0
      %7969 = vmatpush.msra.mxu0 0.0
      %7970 = vmatpush.msra.mxu0 0.0
      %7971 = vmatpush.msra.mxu0 0.0
      %7972 = vmatpush.msra.mxu0 0.0
      %7973 = vmatpush.msra.mxu0 0.0
      %7974 = vmatpush.msra.mxu0 0.0
      %7975 = vmatpush.msra.mxu0 0.0
      %7976 = vmatpush.msra.mxu0 0.0
      %7977 = vmatpush.msra.mxu0 %v7822
      %7978 = vmatmul.f32.gmra.mxu0 %v7926
      %v7979 = vpop.f32.mrf.mxu0
      %v7980 = vadd.f32 0.0, %v7979
      %7981 = vmatmul.f32.gmra.mxu0 %v7928
      %v7982 = vpop.f32.mrf.mxu0
      %v7983 = vadd.f32 0.0, %v7982
      %7984 = vmatmul.f32.gmra.mxu0 %v7930
      %v7985 = vpop.f32.mrf.mxu0
      %v7986 = vadd.f32 0.0, %v7985
      %7987 = vmatmul.f32.gmra.mxu0 %v7932
      %v7988 = vpop.f32.mrf.mxu0
      %v7989 = vadd.f32 0.0, %v7988
      %7990 = vmatmul.f32.gmra.mxu0 %v7934
      %v7991 = vpop.f32.mrf.mxu0
      %v7992 = vadd.f32 0.0, %v7991
      %7993 = vmatmul.f32.gmra.mxu0 %v7936
      %v7994 = vpop.f32.mrf.mxu0
      %v7995 = vadd.f32 0.0, %v7994
      %7996 = vmatmul.f32.gmra.mxu0 %v7938
      %v7997 = vpop.f32.mrf.mxu0
      %v7998 = vadd.f32 0.0, %v7997
      %7999 = vmatmul.f32.gmra.mxu0 %v7940
      %v8000 = vpop.f32.mrf.mxu0
      %v8001 = vadd.f32 0.0, %v8000
      %8002 = vmatmul.f32.gmra.mxu0 %v7942
      %v8003 = vpop.f32.mrf.mxu0
      %v8004 = vadd.f32 0.0, %v8003
      %8005 = vmatmul.f32.gmra.mxu0 %v7944
      %v8006 = vpop.f32.mrf.mxu0
      %v8007 = vadd.f32 0.0, %v8006
      %8008 = vmatmul.f32.gmra.mxu0 %v7946
      %v8009 = vpop.f32.mrf.mxu0
      %v8010 = vadd.f32 0.0, %v8009
      %8011 = vmatmul.f32.gmra.mxu0 %v7948
      %v8012 = vpop.f32.mrf.mxu0
      %v8013 = vadd.f32 0.0, %v8012
      %8014 = vmatmul.f32.gmra.mxu0 %v7950
      %v8015 = vpop.f32.mrf.mxu0
      %v8016 = vadd.f32 0.0, %v8015
      %8017 = vmatmul.f32.gmra.mxu0 %v7952
      %v8018 = vpop.f32.mrf.mxu0
      %v8019 = vadd.f32 0.0, %v8018
      %8020 = vmatmul.f32.gmra.mxu0 %v7954
      %v8021 = vpop.f32.mrf.mxu0
      %v8022 = vadd.f32 0.0, %v8021
      %8023 = vmatmul.f32.gmra.mxu0 %v7956
      %v8024 = vpop.f32.mrf.mxu0
      %v8025 = vadd.f32 0.0, %v8024
      %8026 = vmatmul.f32.gmra.mxu0 %v7958
      %v8027 = vpop.f32.mrf.mxu0
      %v8028 = vadd.f32 0.0, %v8027
      %8029 = vmatmul.f32.gmra.mxu0 %v7960
      %v8030 = vpop.f32.mrf.mxu0
      %v8031 = vadd.f32 0.0, %v8030
      %8032 = vdwg.mxu0
      %v8051 = vrot.slane %v7980, 4
      %v8052 = vrot.slane %v7983, 4
      %v8053 = vrot.slane %v7986, 4
      %v8054 = vrot.slane %v7989, 4
      %v8055 = vrot.slane %v7992, 4
      %v8056 = vrot.slane %v7995, 4
      %v8057 = vrot.slane %v7998, 4
      %v8058 = vrot.slane %v8001, 4
      %v8059 = vrot.slane %v8004, 4
      %v8060 = vrot.slane %v8007, 4
      %v8061 = vrot.slane %v8010, 4
      %v8062 = vrot.slane %v8013, 4
      %v8063 = vrot.slane %v8016, 4
      %v8064 = vrot.slane %v8019, 4
      %v8065 = vrot.slane %v8022, 4
      %v8066 = vrot.slane %v8025, 4
      %v8067 = vrot.slane %v8028, 4
      %v8068 = vrot.slane %v8031, 4
      %v8087 = vadd.f32 %v7785, %v7980
      %v8088 = vadd.f32 %v7786, %v8051
      %v8089 = vadd.f32 %v7787, %v7983
      %v8090 = vadd.f32 %v7788, %v8052
      %v8091 = vadd.f32 %v7789, %v7986
      %v8092 = vadd.f32 %v7790, %v8053
      %v8093 = vadd.f32 %v7791, %v7989
      %v8094 = vadd.f32 %v7792, %v8054
      %v8095 = vadd.f32 %v7793, %v7992
      %v8096 = vadd.f32 %v7794, %v8055
      %v8097 = vadd.f32 %v7795, %v7995
      %v8098 = vadd.f32 %v7796, %v8056
      %v8099 = vadd.f32 %v7797, %v7998
      %v8100 = vadd.f32 %v7798, %v8057
      %v8101 = vadd.f32 %v7799, %v8001
      %v8102 = vadd.f32 %v7800, %v8058
      %v8103 = vadd.f32 %v7801, %v8004
      %v8104 = vadd.f32 %v7802, %v8059
      %v8105 = vadd.f32 %v7803, %v8007
      %v8106 = vadd.f32 %v7804, %v8060
      %v8107 = vadd.f32 %v7805, %v8010
      %v8108 = vadd.f32 %v7806, %v8061
      %v8109 = vadd.f32 %v7807, %v8013
      %v8110 = vadd.f32 %v7808, %v8062
      %v8111 = vadd.f32 %v7809, %v8016
      %v8112 = vadd.f32 %v7810, %v8063
      %v8113 = vadd.f32 %v7811, %v8019
      %v8114 = vadd.f32 %v7812, %v8064
      %v8115 = vadd.f32 %v7813, %v8022
      %v8116 = vadd.f32 %v7814, %v8065
      %v8117 = vadd.f32 %v7815, %v8025
      %v8118 = vadd.f32 %v7816, %v8066
      %v8119 = vadd.f32 %v7817, %v8028
      %v8120 = vadd.f32 %v7818, %v8067
      %v8121 = vadd.f32 %v7819, %v8031
      %v8122 = vadd.f32 %v7820, %v8068
      %s8123 = scalar_lea.vmem %s2, 56
      %v8124 = vld [vmem:[%s8123] sm:$0xff]
      %v8126 = vrot.slane %v5826, 7
      %v8127 = vrot.slane %v8126, 2
      %v8128 = vrot.slane %v5827, 7
      %v8129 = vsel %vm324, %v8127, %v8128
      %v8130 = vrot.slane %v8128, 2
      %v8131 = vrot.slane %v5828, 7
      %v8132 = vsel %vm324, %v8130, %v8131
      %v8133 = vrot.slane %v8131, 2
      %v8134 = vrot.slane %v5829, 7
      %v8135 = vsel %vm324, %v8133, %v8134
      %v8136 = vrot.slane %v8134, 2
      %v8137 = vrot.slane %v5830, 7
      %v8138 = vsel %vm324, %v8136, %v8137
      %v8139 = vrot.slane %v8137, 2
      %v8140 = vrot.slane %v5831, 7
      %v8141 = vsel %vm324, %v8139, %v8140
      %v8142 = vrot.slane %v8140, 2
      %v8143 = vrot.slane %v5832, 7
      %v8144 = vsel %vm324, %v8142, %v8143
      %8145 = vst [vmem:[#allocation1] ss:$4 sm:$0xff] %v5961
      %s8146 = scalar_lea.vmem [#allocation1], 1
      %8147 = vst [vmem:[%s8146] ss:$4 sm:$0xff] %v5964
      %s8148 = scalar_lea.vmem [#allocation1], 2
      %8149 = vst [vmem:[%s8148] ss:$4 sm:$0xff] %v5967
      %s8150 = scalar_lea.vmem [#allocation1], 3
      %8151 = vst [vmem:[%s8150] ss:$4 sm:$0xff] %v5970
      %s8152 = scalar_lea.vmem [#allocation1], 32
      %8153 = vst [vmem:[%s8152] ss:$4 sm:$0xff] %v5973
      %s8154 = scalar_lea.vmem [#allocation1], 33
      %8155 = vst [vmem:[%s8154] ss:$4 sm:$0xff] %v5976
      %s8156 = scalar_lea.vmem [#allocation1], 34
      %8157 = vst [vmem:[%s8156] ss:$4 sm:$0xff] %v5980
      %s8158 = scalar_lea.vmem [#allocation1], 35
      %8159 = vst [vmem:[%s8158] ss:$4 sm:$0xff] %v5983
      %v8160 = vld.sshfl [vmem:[#allocation1] sm:$0xff pattern:$0x73625140]
      %v8161 = vld.sshfl [vmem:[#allocation1 + $0x20] sm:$0xff pattern:$0x73625140]
      %8162 = vst [vmem:[#allocation1] ss:$4 sm:$0xff] %v5986
      %8163 = vst [vmem:[%s8146] ss:$4 sm:$0xff] %v5989
      %8164 = vst [vmem:[%s8148] ss:$4 sm:$0xff] %v5992
      %8165 = vst [vmem:[%s8150] ss:$4 sm:$0xff] %v5995
      %8166 = vst [vmem:[%s8152] ss:$4 sm:$0xff] %v5999
      %8167 = vst [vmem:[%s8154] ss:$4 sm:$0xff] %v6002
      %8168 = vst [vmem:[%s8156] ss:$4 sm:$0xff] %v6005
      %8169 = vst [vmem:[%s8158] ss:$4 sm:$0xff] %v6008
      %v8170 = vld.sshfl [vmem:[#allocation1] sm:$0xff pattern:$0x73625140]
      %v8171 = vld.sshfl [vmem:[#allocation1 + $0x20] sm:$0xff pattern:$0x73625140]
      %8172 = vst [vmem:[#allocation1] ss:$4 sm:$0xff] %v6011
      %8173 = vst [vmem:[%s8146] ss:$4 sm:$0xff] %v6014
      %8174 = vst [vmem:[%s8148] ss:$4 sm:$0xff] %v6018
      %8175 = vst [vmem:[%s8150] ss:$4 sm:$0xff] %v6021
      %8176 = vst [vmem:[%s8152] ss:$4 sm:$0xff] %v6024
      %8177 = vst [vmem:[%s8154] ss:$4 sm:$0xff] %v6027
      %8178 = vst [vmem:[%s8156] ss:$4 sm:$0xff] %v6030
      %8179 = vst [vmem:[%s8158] ss:$4 sm:$0xff] %v6033
      %v8180 = vld.sshfl [vmem:[#allocation1] sm:$0xff pattern:$0x73625140]
      %v8181 = vld.sshfl [vmem:[#allocation1 + $0x20] sm:$0xff pattern:$0x73625140]
      %8182 = vst [vmem:[#allocation1] ss:$4 sm:$0xff] %v6037
      %8183 = vst [vmem:[%s8146] ss:$4 sm:$0xff] %v6040
      %8184 = vst [vmem:[%s8148] ss:$4 sm:$0xff] %v6043
      %8185 = vst [vmem:[%s8150] ss:$4 sm:$0xff] %v6046
      %8186 = vst [vmem:[%s8152] ss:$4 sm:$0xff] %v6049
      %8187 = vst [vmem:[%s8154] ss:$4 sm:$0xff] %v6052
      %8188 = vst [vmem:[%s8156] ss:$4 sm:$0xff] %v6056
      %8189 = vst [vmem:[%s8158] ss:$4 sm:$0xff] %v6059
      %v8190 = vld.sshfl [vmem:[#allocation1] sm:$0xff pattern:$0x73625140]
      %v8191 = vld.sshfl [vmem:[#allocation1 + $0x20] sm:$0xff pattern:$0x73625140]
      %8192 = vst [vmem:[#allocation1] ss:$4 sm:$0xff] %v6062
      %8193 = vst [vmem:[%s8146] ss:$4 sm:$0xff] %v6065
      %8194 = vst [vmem:[%s8148] ss:$4 sm:$0xff] %v6068
      %8195 = vst [vmem:[%s8150] ss:$4 sm:$0xff] %v6071
      %8196 = vst [vmem:[%s8152] ss:$4 sm:$0xff] %v6075
      %8197 = vst [vmem:[%s8154] ss:$4 sm:$0xff] %v6078
      %8198 = vst [vmem:[%s8156] ss:$4 sm:$0xff] %v6081
      %8199 = vst [vmem:[%s8158] ss:$4 sm:$0xff] %v6084
      %v8200 = vld.sshfl [vmem:[#allocation1] sm:$0xff pattern:$0x73625140]
      %v8201 = vld.sshfl [vmem:[#allocation1 + $0x20] sm:$0xff pattern:$0x73625140]
      %8202 = vst [vmem:[#allocation1] ss:$4 sm:$0xff] %v6087
      %8203 = vst [vmem:[%s8146] ss:$4 sm:$0xff] %v6090
      %8204 = vst [vmem:[%s8148] ss:$4 sm:$0xff] %v6094
      %8205 = vst [vmem:[%s8150] ss:$4 sm:$0xff] %v6097
      %8206 = vst [vmem:[%s8152] ss:$4 sm:$0xff] %v6100
      %8207 = vst [vmem:[%s8154] ss:$4 sm:$0xff] %v6103
      %8208 = vst [vmem:[%s8156] ss:$4 sm:$0xff] %v6106
      %8209 = vst [vmem:[%s8158] ss:$4 sm:$0xff] %v6109
      %v8210 = vld.sshfl [vmem:[#allocation1] sm:$0xff pattern:$0x73625140]
      %v8211 = vld.sshfl [vmem:[#allocation1 + $0x20] sm:$0xff pattern:$0x73625140]
      %8212 = vst [vmem:[#allocation1] ss:$4 sm:$0xff] %v6113
      %8213 = vst [vmem:[%s8146] ss:$4 sm:$0xff] %v6116
      %8214 = vst [vmem:[%s8148] ss:$4 sm:$0xff] %v6119
      %8215 = vst [vmem:[%s8150] ss:$4 sm:$0xff] %v6122
      %8216 = vst [vmem:[%s8152] ss:$4 sm:$0xff] %v6125
      %8217 = vst [vmem:[%s8154] ss:$4 sm:$0xff] %v6128
      %8218 = vst [vmem:[%s8156] ss:$4 sm:$0xff] %v6132
      %8219 = vst [vmem:[%s8158] ss:$4 sm:$0xff] %v6135
      %v8220 = vld.sshfl [vmem:[#allocation1] sm:$0xff pattern:$0x73625140]
      %v8221 = vld.sshfl [vmem:[#allocation1 + $0x20] sm:$0xff pattern:$0x73625140]
      %8222 = vst [vmem:[#allocation1] ss:$4 sm:$0xff] %v6138
      %8223 = vst [vmem:[%s8146] ss:$4 sm:$0xff] %v6141
      %8224 = vst [vmem:[%s8148] ss:$4 sm:$0xff] %v6144
      %8225 = vst [vmem:[%s8150] ss:$4 sm:$0xff] %v6147
      %8226 = vst [vmem:[%s8152] ss:$4 sm:$0xff] %v7215
      %8227 = vst [vmem:[%s8154] ss:$4 sm:$0xff] %v7218
      %8228 = vst [vmem:[%s8156] ss:$4 sm:$0xff] %v7221
      %8229 = vst [vmem:[%s8158] ss:$4 sm:$0xff] %v7224
      %v8230 = vld.sshfl [vmem:[#allocation1] sm:$0xff pattern:$0x73625140]
      %v8231 = vld.sshfl [vmem:[#allocation1 + $0x20] sm:$0xff pattern:$0x73625140]
      %8232 = vst [vmem:[#allocation1] ss:$4 sm:$0xff] %v7227
      %8233 = vst [vmem:[%s8146] ss:$4 sm:$0xff] %v7230
      %8234 = vst [vmem:[%s8148] ss:$4 sm:$0xff] %v8129
      %8235 = vst [vmem:[%s8150] ss:$4 sm:$0xff] %v8132
      %8236 = vst [vmem:[%s8152] ss:$4 sm:$0xff] %v8135
      %8237 = vst [vmem:[%s8154] ss:$4 sm:$0xff] %v8138
      %8238 = vst [vmem:[%s8156] ss:$4 sm:$0xff] %v8141
      %8239 = vst [vmem:[%s8158] ss:$4 sm:$0xff] %v8144
      %v8240 = vld.sshfl [vmem:[#allocation1] sm:$0xff pattern:$0x73625140]
      %v8241 = vld.sshfl [vmem:[#allocation1 + $0x20] sm:$0xff pattern:$0x73625140]
      %v8242 = vsel %vm6245, %v8160, 0
      %v8244 = vsel %vm6245, %v8161, 0
      %v8246 = vsel %vm6245, %v8170, 0
      %v8248 = vsel %vm6245, %v8171, 0
      %v8250 = vsel %vm6245, %v8180, 0
      %v8252 = vsel %vm6245, %v8181, 0
      %v8254 = vsel %vm6245, %v8190, 0
      %v8256 = vsel %vm6245, %v8191, 0
      %v8258 = vsel %vm6245, %v8200, 0
      %v8260 = vsel %vm6245, %v8201, 0
      %v8262 = vsel %vm6245, %v8210, 0
      %v8264 = vsel %vm6245, %v8211, 0
      %v8266 = vsel %vm6245, %v8220, 0
      %v8268 = vsel %vm6245, %v8221, 0
      %v8270 = vsel %vm6245, %v8230, 0
      %v8272 = vsel %vm6245, %v8231, 0
      %v8274 = vsel %vm6245, %v8240, 0
      %v8276 = vsel %vm6245, %v8241, 0
      %8278 = vmatpush.msra.mxu0 0.0
      %8279 = vmatpush.msra.mxu0 0.0
      %8280 = vmatpush.msra.mxu0 0.0
      %8281 = vmatpush.msra.mxu0 0.0
      %8282 = vmatpush.msra.mxu0 0.0
      %8283 = vmatpush.msra.mxu0 0.0
      %8284 = vmatpush.msra.mxu0 0.0
      %8285 = vmatpush.msra.mxu0 0.0
      %8286 = vmatpush.msra.mxu0 0.0
      %8287 = vmatpush.msra.mxu0 0.0
      %8288 = vmatpush.msra.mxu0 0.0
      %8289 = vmatpush.msra.mxu0 0.0
      %8290 = vmatpush.msra.mxu0 0.0
      %8291 = vmatpush.msra.mxu0 0.0
      %8292 = vmatpush.msra.mxu0 0.0
      %8293 = vmatpush.msra.mxu0 %v8124
      %8294 = vmatmul.f32.gmra.mxu0 %v8242
      %v8295 = vpop.f32.mrf.mxu0
      %v8296 = vadd.f32 0.0, %v8295
      %8297 = vmatmul.f32.gmra.mxu0 %v8244
      %v8298 = vpop.f32.mrf.mxu0
      %v8299 = vadd.f32 0.0, %v8298
      %8300 = vmatmul.f32.gmra.mxu0 %v8246
      %v8301 = vpop.f32.mrf.mxu0
      %v8302 = vadd.f32 0.0, %v8301
      %8303 = vmatmul.f32.gmra.mxu0 %v8248
      %v8304 = vpop.f32.mrf.mxu0
      %v8305 = vadd.f32 0.0, %v8304
      %8306 = vmatmul.f32.gmra.mxu0 %v8250
      %v8307 = vpop.f32.mrf.mxu0
      %v8308 = vadd.f32 0.0, %v8307
      %8309 = vmatmul.f32.gmra.mxu0 %v8252
      %v8310 = vpop.f32.mrf.mxu0
      %v8311 = vadd.f32 0.0, %v8310
      %8312 = vmatmul.f32.gmra.mxu0 %v8254
      %v8313 = vpop.f32.mrf.mxu0
      %v8314 = vadd.f32 0.0, %v8313
      %8315 = vmatmul.f32.gmra.mxu0 %v8256
      %v8316 = vpop.f32.mrf.mxu0
      %v8317 = vadd.f32 0.0, %v8316
      %8318 = vmatmul.f32.gmra.mxu0 %v8258
      %v8319 = vpop.f32.mrf.mxu0
      %v8320 = vadd.f32 0.0, %v8319
      %8321 = vmatmul.f32.gmra.mxu0 %v8260
      %v8322 = vpop.f32.mrf.mxu0
      %v8323 = vadd.f32 0.0, %v8322
      %8324 = vmatmul.f32.gmra.mxu0 %v8262
      %v8325 = vpop.f32.mrf.mxu0
      %v8326 = vadd.f32 0.0, %v8325
      %8327 = vmatmul.f32.gmra.mxu0 %v8264
      %v8328 = vpop.f32.mrf.mxu0
      %v8329 = vadd.f32 0.0, %v8328
      %8330 = vmatmul.f32.gmra.mxu0 %v8266
      %v8331 = vpop.f32.mrf.mxu0
      %v8332 = vadd.f32 0.0, %v8331
      %8333 = vmatmul.f32.gmra.mxu0 %v8268
      %v8334 = vpop.f32.mrf.mxu0
      %v8335 = vadd.f32 0.0, %v8334
      %8336 = vmatmul.f32.gmra.mxu0 %v8270
      %v8337 = vpop.f32.mrf.mxu0
      %v8338 = vadd.f32 0.0, %v8337
      %8339 = vmatmul.f32.gmra.mxu0 %v8272
      %v8340 = vpop.f32.mrf.mxu0
      %v8341 = vadd.f32 0.0, %v8340
      %8342 = vmatmul.f32.gmra.mxu0 %v8274
      %v8343 = vpop.f32.mrf.mxu0
      %v8344 = vadd.f32 0.0, %v8343
      %8345 = vmatmul.f32.gmra.mxu0 %v8276
      %v8346 = vpop.f32.mrf.mxu0
      %v8347 = vadd.f32 0.0, %v8346
      %8348 = vdwg.mxu0
      %v8367 = vrot.slane %v8296, 4
      %v8368 = vrot.slane %v8299, 4
      %v8369 = vrot.slane %v8302, 4
      %v8370 = vrot.slane %v8305, 4
      %v8371 = vrot.slane %v8308, 4
      %v8372 = vrot.slane %v8311, 4
      %v8373 = vrot.slane %v8314, 4
      %v8374 = vrot.slane %v8317, 4
      %v8375 = vrot.slane %v8320, 4
      %v8376 = vrot.slane %v8323, 4
      %v8377 = vrot.slane %v8326, 4
      %v8378 = vrot.slane %v8329, 4
      %v8379 = vrot.slane %v8332, 4
      %v8380 = vrot.slane %v8335, 4
      %v8381 = vrot.slane %v8338, 4
      %v8382 = vrot.slane %v8341, 4
      %v8383 = vrot.slane %v8344, 4
      %v8384 = vrot.slane %v8347, 4
      %v8403 = vadd.f32 %v8087, %v8296
      %v8404 = vadd.f32 %v8088, %v8367
      %v8405 = vadd.f32 %v8089, %v8299
      %v8406 = vadd.f32 %v8090, %v8368
      %v8407 = vadd.f32 %v8091, %v8302
      %v8408 = vadd.f32 %v8092, %v8369
      %v8409 = vadd.f32 %v8093, %v8305
      %v8410 = vadd.f32 %v8094, %v8370
      %v8411 = vadd.f32 %v8095, %v8308
      %v8412 = vadd.f32 %v8096, %v8371
      %v8413 = vadd.f32 %v8097, %v8311
      %v8414 = vadd.f32 %v8098, %v8372
      %v8415 = vadd.f32 %v8099, %v8314
      %v8416 = vadd.f32 %v8100, %v8373
      %v8417 = vadd.f32 %v8101, %v8317
      %v8418 = vadd.f32 %v8102, %v8374
      %v8419 = vadd.f32 %v8103, %v8320
      %v8420 = vadd.f32 %v8104, %v8375
      %v8421 = vadd.f32 %v8105, %v8323
      %v8422 = vadd.f32 %v8106, %v8376
      %v8423 = vadd.f32 %v8107, %v8326
      %v8424 = vadd.f32 %v8108, %v8377
      %v8425 = vadd.f32 %v8109, %v8329
      %v8426 = vadd.f32 %v8110, %v8378
      %v8427 = vadd.f32 %v8111, %v8332
      %v8428 = vadd.f32 %v8112, %v8379
      %v8429 = vadd.f32 %v8113, %v8335
      %v8430 = vadd.f32 %v8114, %v8380
      %v8431 = vadd.f32 %v8115, %v8338
      %v8432 = vadd.f32 %v8116, %v8381
      %v8433 = vadd.f32 %v8117, %v8341
      %v8434 = vadd.f32 %v8118, %v8382
      %v8435 = vadd.f32 %v8119, %v8344
      %v8436 = vadd.f32 %v8120, %v8383
      %v8437 = vadd.f32 %v8121, %v8347
      %v8438 = vadd.f32 %v8122, %v8384
      %s8439 = scalar_lea.vmem %s2, 64
      %v8440 = vld [vmem:[%s8439] sm:$0xff]
      %8441 = vst [vmem:[#allocation1] ss:$4 sm:$0xff] %v5750
      %s8442 = scalar_lea.vmem [#allocation1], 1
      %8443 = vst [vmem:[%s8442] ss:$4 sm:$0xff] %v5751
      %s8444 = scalar_lea.vmem [#allocation1], 2
      %8445 = vst [vmem:[%s8444] ss:$4 sm:$0xff] %v5752
      %s8446 = scalar_lea.vmem [#allocation1], 3
      %8447 = vst [vmem:[%s8446] ss:$4 sm:$0xff] %v5753
      %s8448 = scalar_lea.vmem [#allocation1], 32
      %8449 = vst [vmem:[%s8448] ss:$4 sm:$0xff] %v5754
      %s8450 = scalar_lea.vmem [#allocation1], 33
      %8451 = vst [vmem:[%s8450] ss:$4 sm:$0xff] %v5755
      %s8452 = scalar_lea.vmem [#allocation1], 34
      %8453 = vst [vmem:[%s8452] ss:$4 sm:$0xff] %v5757
      %s8454 = scalar_lea.vmem [#allocation1], 35
      %8455 = vst [vmem:[%s8454] ss:$4 sm:$0xff] %v5758
      %v8456 = vld.sshfl [vmem:[#allocation1] sm:$0xff pattern:$0x73625140]
      %v8457 = vld.sshfl [vmem:[#allocation1 + $0x20] sm:$0xff pattern:$0x73625140]
      %8458 = vst [vmem:[#allocation1] ss:$4 sm:$0xff] %v5759
      %8459 = vst [vmem:[%s8442] ss:$4 sm:$0xff] %v5760
      %8460 = vst [vmem:[%s8444] ss:$4 sm:$0xff] %v5761
      %8461 = vst [vmem:[%s8446] ss:$4 sm:$0xff] %v5762
      %8462 = vst [vmem:[%s8448] ss:$4 sm:$0xff] %v5764
      %8463 = vst [vmem:[%s8450] ss:$4 sm:$0xff] %v5765
      %8464 = vst [vmem:[%s8452] ss:$4 sm:$0xff] %v5766
      %8465 = vst [vmem:[%s8454] ss:$4 sm:$0xff] %v5767
      %v8466 = vld.sshfl [vmem:[#allocation1] sm:$0xff pattern:$0x73625140]
      %v8467 = vld.sshfl [vmem:[#allocation1 + $0x20] sm:$0xff pattern:$0x73625140]
      %8468 = vst [vmem:[#allocation1] ss:$4 sm:$0xff] %v5768
      %8469 = vst [vmem:[%s8442] ss:$4 sm:$0xff] %v5769
      %8470 = vst [vmem:[%s8444] ss:$4 sm:$0xff] %v5771
      %8471 = vst [vmem:[%s8446] ss:$4 sm:$0xff] %v5772
      %8472 = vst [vmem:[%s8448] ss:$4 sm:$0xff] %v5773
      %8473 = vst [vmem:[%s8450] ss:$4 sm:$0xff] %v5774
      %8474 = vst [vmem:[%s8452] ss:$4 sm:$0xff] %v5775
      %8475 = vst [vmem:[%s8454] ss:$4 sm:$0xff] %v5776
      %v8476 = vld.sshfl [vmem:[#allocation1] sm:$0xff pattern:$0x73625140]
      %v8477 = vld.sshfl [vmem:[#allocation1 + $0x20] sm:$0xff pattern:$0x73625140]
      %8478 = vst [vmem:[#allocation1] ss:$4 sm:$0xff] %v5778
      %8479 = vst [vmem:[%s8442] ss:$4 sm:$0xff] %v5779
      %8480 = vst [vmem:[%s8444] ss:$4 sm:$0xff] %v5780
      %8481 = vst [vmem:[%s8446] ss:$4 sm:$0xff] %v5781
      %8482 = vst [vmem:[%s8448] ss:$4 sm:$0xff] %v5782
      %8483 = vst [vmem:[%s8450] ss:$4 sm:$0xff] %v5783
      %8484 = vst [vmem:[%s8452] ss:$4 sm:$0xff] %v5785
      %8485 = vst [vmem:[%s8454] ss:$4 sm:$0xff] %v5786
      %v8486 = vld.sshfl [vmem:[#allocation1] sm:$0xff pattern:$0x73625140]
      %v8487 = vld.sshfl [vmem:[#allocation1 + $0x20] sm:$0xff pattern:$0x73625140]
      %8488 = vst [vmem:[#allocation1] ss:$4 sm:$0xff] %v5787
      %8489 = vst [vmem:[%s8442] ss:$4 sm:$0xff] %v5788
      %8490 = vst [vmem:[%s8444] ss:$4 sm:$0xff] %v5789
      %8491 = vst [vmem:[%s8446] ss:$4 sm:$0xff] %v5790
      %8492 = vst [vmem:[%s8448] ss:$4 sm:$0xff] %v5792
      %8493 = vst [vmem:[%s8450] ss:$4 sm:$0xff] %v5793
      %8494 = vst [vmem:[%s8452] ss:$4 sm:$0xff] %v5794
      %8495 = vst [vmem:[%s8454] ss:$4 sm:$0xff] %v5795
      %v8496 = vld.sshfl [vmem:[#allocation1] sm:$0xff pattern:$0x73625140]
      %v8497 = vld.sshfl [vmem:[#allocation1 + $0x20] sm:$0xff pattern:$0x73625140]
      %8498 = vst [vmem:[#allocation1] ss:$4 sm:$0xff] %v5796
      %8499 = vst [vmem:[%s8442] ss:$4 sm:$0xff] %v5797
      %8500 = vst [vmem:[%s8444] ss:$4 sm:$0xff] %v5799
      %8501 = vst [vmem:[%s8446] ss:$4 sm:$0xff] %v5800
      %8502 = vst [vmem:[%s8448] ss:$4 sm:$0xff] %v5801
      %8503 = vst [vmem:[%s8450] ss:$4 sm:$0xff] %v5802
      %8504 = vst [vmem:[%s8452] ss:$4 sm:$0xff] %v5803
      %8505 = vst [vmem:[%s8454] ss:$4 sm:$0xff] %v5804
      %v8506 = vld.sshfl [vmem:[#allocation1] sm:$0xff pattern:$0x73625140]
      %v8507 = vld.sshfl [vmem:[#allocation1 + $0x20] sm:$0xff pattern:$0x73625140]
      %8508 = vst [vmem:[#allocation1] ss:$4 sm:$0xff] %v5806
      %8509 = vst [vmem:[%s8442] ss:$4 sm:$0xff] %v5807
      %8510 = vst [vmem:[%s8444] ss:$4 sm:$0xff] %v5808
      %8511 = vst [vmem:[%s8446] ss:$4 sm:$0xff] %v5809
      %8512 = vst [vmem:[%s8448] ss:$4 sm:$0xff] %v5810
      %8513 = vst [vmem:[%s8450] ss:$4 sm:$0xff] %v5811
      %8514 = vst [vmem:[%s8452] ss:$4 sm:$0xff] %v5813
      %8515 = vst [vmem:[%s8454] ss:$4 sm:$0xff] %v5814
      %v8516 = vld.sshfl [vmem:[#allocation1] sm:$0xff pattern:$0x73625140]
      %v8517 = vld.sshfl [vmem:[#allocation1 + $0x20] sm:$0xff pattern:$0x73625140]
      %8518 = vst [vmem:[#allocation1] ss:$4 sm:$0xff] %v5815
      %8519 = vst [vmem:[%s8442] ss:$4 sm:$0xff] %v5816
      %8520 = vst [vmem:[%s8444] ss:$4 sm:$0xff] %v5817
      %8521 = vst [vmem:[%s8446] ss:$4 sm:$0xff] %v5818
      %8522 = vst [vmem:[%s8448] ss:$4 sm:$0xff] %v5820
      %8523 = vst [vmem:[%s8450] ss:$4 sm:$0xff] %v5821
      %8524 = vst [vmem:[%s8452] ss:$4 sm:$0xff] %v5822
      %8525 = vst [vmem:[%s8454] ss:$4 sm:$0xff] %v5823
      %v8526 = vld.sshfl [vmem:[#allocation1] sm:$0xff pattern:$0x73625140]
      %v8527 = vld.sshfl [vmem:[#allocation1 + $0x20] sm:$0xff pattern:$0x73625140]
      %8528 = vst [vmem:[#allocation1] ss:$4 sm:$0xff] %v5824
      %8529 = vst [vmem:[%s8442] ss:$4 sm:$0xff] %v5825
      %8530 = vst [vmem:[%s8444] ss:$4 sm:$0xff] %v5827
      %8531 = vst [vmem:[%s8446] ss:$4 sm:$0xff] %v5828
      %8532 = vst [vmem:[%s8448] ss:$4 sm:$0xff] %v5829
      %8533 = vst [vmem:[%s8450] ss:$4 sm:$0xff] %v5830
      %8534 = vst [vmem:[%s8452] ss:$4 sm:$0xff] %v5831
      %8535 = vst [vmem:[%s8454] ss:$4 sm:$0xff] %v5832
      %v8536 = vld.sshfl [vmem:[#allocation1] sm:$0xff pattern:$0x73625140]
      %v8537 = vld.sshfl [vmem:[#allocation1 + $0x20] sm:$0xff pattern:$0x73625140]
      %v8538 = vsel %vm6245, %v8456, 0
      %v8540 = vsel %vm6245, %v8457, 0
      %v8542 = vsel %vm6245, %v8466, 0
      %v8544 = vsel %vm6245, %v8467, 0
      %v8546 = vsel %vm6245, %v8476, 0
      %v8548 = vsel %vm6245, %v8477, 0
      %v8550 = vsel %vm6245, %v8486, 0
      %v8552 = vsel %vm6245, %v8487, 0
      %v8554 = vsel %vm6245, %v8496, 0
      %v8556 = vsel %vm6245, %v8497, 0
      %v8558 = vsel %vm6245, %v8506, 0
      %v8560 = vsel %vm6245, %v8507, 0
      %v8562 = vsel %vm6245, %v8516, 0
      %v8564 = vsel %vm6245, %v8517, 0
      %v8566 = vsel %vm6245, %v8526, 0
      %v8568 = vsel %vm6245, %v8527, 0
      %v8570 = vsel %vm6245, %v8536, 0
      %v8572 = vsel %vm6245, %v8537, 0
      %8574 = vmatpush.msra.mxu0 0.0
      %8575 = vmatpush.msra.mxu0 0.0
      %8576 = vmatpush.msra.mxu0 0.0
      %8577 = vmatpush.msra.mxu0 0.0
      %8578 = vmatpush.msra.mxu0 0.0
      %8579 = vmatpush.msra.mxu0 0.0
      %8580 = vmatpush.msra.mxu0 0.0
      %8581 = vmatpush.msra.mxu0 0.0
      %8582 = vmatpush.msra.mxu0 0.0
      %8583 = vmatpush.msra.mxu0 0.0
      %8584 = vmatpush.msra.mxu0 0.0
      %8585 = vmatpush.msra.mxu0 0.0
      %8586 = vmatpush.msra.mxu0 0.0
      %8587 = vmatpush.msra.mxu0 0.0
      %8588 = vmatpush.msra.mxu0 0.0
      %8589 = vmatpush.msra.mxu0 %v8440
      %8590 = vmatmul.f32.gmra.mxu0 %v8538
      %v8591 = vpop.f32.mrf.mxu0
      %v8592 = vadd.f32 0.0, %v8591
      %8593 = vmatmul.f32.gmra.mxu0 %v8540
      %v8594 = vpop.f32.mrf.mxu0
      %v8595 = vadd.f32 0.0, %v8594
      %8596 = vmatmul.f32.gmra.mxu0 %v8542
      %v8597 = vpop.f32.mrf.mxu0
      %v8598 = vadd.f32 0.0, %v8597
      %8599 = vmatmul.f32.gmra.mxu0 %v8544
      %v8600 = vpop.f32.mrf.mxu0
      %v8601 = vadd.f32 0.0, %v8600
      %8602 = vmatmul.f32.gmra.mxu0 %v8546
      %v8603 = vpop.f32.mrf.mxu0
      %v8604 = vadd.f32 0.0, %v8603
      %8605 = vmatmul.f32.gmra.mxu0 %v8548
      %v8606 = vpop.f32.mrf.mxu0
      %v8607 = vadd.f32 0.0, %v8606
      %8608 = vmatmul.f32.gmra.mxu0 %v8550
      %v8609 = vpop.f32.mrf.mxu0
      %v8610 = vadd.f32 0.0, %v8609
      %8611 = vmatmul.f32.gmra.mxu0 %v8552
      %v8612 = vpop.f32.mrf.mxu0
      %v8613 = vadd.f32 0.0, %v8612
      %8614 = vmatmul.f32.gmra.mxu0 %v8554
      %v8615 = vpop.f32.mrf.mxu0
      %v8616 = vadd.f32 0.0, %v8615
      %8617 = vmatmul.f32.gmra.mxu0 %v8556
      %v8618 = vpop.f32.mrf.mxu0
      %v8619 = vadd.f32 0.0, %v8618
      %8620 = vmatmul.f32.gmra.mxu0 %v8558
      %v8621 = vpop.f32.mrf.mxu0
      %v8622 = vadd.f32 0.0, %v8621
      %8623 = vmatmul.f32.gmra.mxu0 %v8560
      %v8624 = vpop.f32.mrf.mxu0
      %v8625 = vadd.f32 0.0, %v8624
      %8626 = vmatmul.f32.gmra.mxu0 %v8562
      %v8627 = vpop.f32.mrf.mxu0
      %v8628 = vadd.f32 0.0, %v8627
      %8629 = vmatmul.f32.gmra.mxu0 %v8564
      %v8630 = vpop.f32.mrf.mxu0
      %v8631 = vadd.f32 0.0, %v8630
      %8632 = vmatmul.f32.gmra.mxu0 %v8566
      %v8633 = vpop.f32.mrf.mxu0
      %v8634 = vadd.f32 0.0, %v8633
      %8635 = vmatmul.f32.gmra.mxu0 %v8568
      %v8636 = vpop.f32.mrf.mxu0
      %v8637 = vadd.f32 0.0, %v8636
      %8638 = vmatmul.f32.gmra.mxu0 %v8570
      %v8639 = vpop.f32.mrf.mxu0
      %v8640 = vadd.f32 0.0, %v8639
      %8641 = vmatmul.f32.gmra.mxu0 %v8572
      %v8642 = vpop.f32.mrf.mxu0
      %v8643 = vadd.f32 0.0, %v8642
      %8644 = vdwg.mxu0
      %v8663 = vrot.slane %v8592, 4
      %v8664 = vrot.slane %v8595, 4
      %v8665 = vrot.slane %v8598, 4
      %v8666 = vrot.slane %v8601, 4
      %v8667 = vrot.slane %v8604, 4
      %v8668 = vrot.slane %v8607, 4
      %v8669 = vrot.slane %v8610, 4
      %v8670 = vrot.slane %v8613, 4
      %v8671 = vrot.slane %v8616, 4
      %v8672 = vrot.slane %v8619, 4
      %v8673 = vrot.slane %v8622, 4
      %v8674 = vrot.slane %v8625, 4
      %v8675 = vrot.slane %v8628, 4
      %v8676 = vrot.slane %v8631, 4
      %v8677 = vrot.slane %v8634, 4
      %v8678 = vrot.slane %v8637, 4
      %v8679 = vrot.slane %v8640, 4
      %v8680 = vrot.slane %v8643, 4
      %v8699 = vadd.f32 %v8403, %v8592
      %v8700 = vadd.f32 %v8404, %v8663
      %v8701 = vadd.f32 %v8405, %v8595
      %v8702 = vadd.f32 %v8406, %v8664
      %v8703 = vadd.f32 %v8407, %v8598
      %v8704 = vadd.f32 %v8408, %v8665
      %v8705 = vadd.f32 %v8409, %v8601
      %v8706 = vadd.f32 %v8410, %v8666
      %v8707 = vadd.f32 %v8411, %v8604
      %v8708 = vadd.f32 %v8412, %v8667
      %v8709 = vadd.f32 %v8413, %v8607
      %v8710 = vadd.f32 %v8414, %v8668
      %v8711 = vadd.f32 %v8415, %v8610
      %v8712 = vadd.f32 %v8416, %v8669
      %v8713 = vadd.f32 %v8417, %v8613
      %v8714 = vadd.f32 %v8418, %v8670
      %v8715 = vadd.f32 %v8419, %v8616
      %v8716 = vadd.f32 %v8420, %v8671
      %v8717 = vadd.f32 %v8421, %v8619
      %v8718 = vadd.f32 %v8422, %v8672
      %v8719 = vadd.f32 %v8423, %v8622
      %v8720 = vadd.f32 %v8424, %v8673
      %v8721 = vadd.f32 %v8425, %v8625
      %v8722 = vadd.f32 %v8426, %v8674
      %v8723 = vadd.f32 %v8427, %v8628
      %v8724 = vadd.f32 %v8428, %v8675
      %v8725 = vadd.f32 %v8429, %v8631
      %v8726 = vadd.f32 %v8430, %v8676
      %v8727 = vadd.f32 %v8431, %v8634
      %v8728 = vadd.f32 %v8432, %v8677
      %v8729 = vadd.f32 %v8433, %v8637
      %v8730 = vadd.f32 %v8434, %v8678
      %v8731 = vadd.f32 %v8435, %v8640
      %v8732 = vadd.f32 %v8436, %v8679
      %v8733 = vadd.f32 %v8437, %v8643
      %v8734 = vadd.f32 %v8438, %v8680
      %8771 = vst [vmem:[#allocation1] ss:$2 sm:$0xff] %v8699
      %s8772 = scalar_lea.vmem [#allocation1], 1
      %8773 = vst [vmem:[%s8772] ss:$2 sm:$0xff] %v8700
      %s8774 = scalar_lea.vmem [#allocation1], 16
      %8775 = vst [vmem:[%s8774] ss:$2 sm:$0xff] %v8701
      %v8776 = vld.sshfl [vmem:[#allocation1] sm:$0xff pattern:$0x75316420]
      %v8777 = vld.sshfl [vmem:[#allocation1 + $0x10] sm:$0xff pattern:$0x75316420]
      %s8778 = scalar_lea.vmem [#allocation1], 32
      %8779 = vst [vmem:[%s8778] ss:$2 sm:$0xff] %v8702
      %s8780 = scalar_lea.vmem [#allocation1], 33
      %8781 = vst [vmem:[%s8780] ss:$2 sm:$0xff] %v8703
      %s8782 = scalar_lea.vmem [#allocation1], 48
      %8783 = vst [vmem:[%s8782] ss:$2 sm:$0xff] %v8704
      %v8784 = vld.sshfl [vmem:[#allocation1 + $0x20] sm:$0xff pattern:$0x75316420]
      %v8785 = vld.sshfl [vmem:[#allocation1 + $0x30] sm:$0xff pattern:$0x75316420]
      %8786 = vst [vmem:[#allocation1] ss:$2 sm:$0xff] %v8705
      %8787 = vst [vmem:[%s8772] ss:$2 sm:$0xff] %v8706
      %8788 = vst [vmem:[%s8774] ss:$2 sm:$0xff] %v8707
      %v8789 = vld.sshfl [vmem:[#allocation1] sm:$0xff pattern:$0x75316420]
      %v8790 = vld.sshfl [vmem:[#allocation1 + $0x10] sm:$0xff pattern:$0x75316420]
      %8791 = vst [vmem:[%s8778] ss:$2 sm:$0xff] %v8708
      %8792 = vst [vmem:[%s8780] ss:$2 sm:$0xff] %v8709
      %8793 = vst [vmem:[%s8782] ss:$2 sm:$0xff] %v8710
      %v8794 = vld.sshfl [vmem:[#allocation1 + $0x20] sm:$0xff pattern:$0x75316420]
      %v8795 = vld.sshfl [vmem:[#allocation1 + $0x30] sm:$0xff pattern:$0x75316420]
      %8796 = vst [vmem:[#allocation1] ss:$2 sm:$0xff] %v8711
      %8797 = vst [vmem:[%s8772] ss:$2 sm:$0xff] %v8712
      %8798 = vst [vmem:[%s8774] ss:$2 sm:$0xff] %v8713
      %v8799 = vld.sshfl [vmem:[#allocation1] sm:$0xff pattern:$0x75316420]
      %v8800 = vld.sshfl [vmem:[#allocation1 + $0x10] sm:$0xff pattern:$0x75316420]
      %8801 = vst [vmem:[%s8778] ss:$2 sm:$0xff] %v8714
      %8802 = vst [vmem:[%s8780] ss:$2 sm:$0xff] %v8715
      %8803 = vst [vmem:[%s8782] ss:$2 sm:$0xff] %v8716
      %v8804 = vld.sshfl [vmem:[#allocation1 + $0x20] sm:$0xff pattern:$0x75316420]
      %v8805 = vld.sshfl [vmem:[#allocation1 + $0x30] sm:$0xff pattern:$0x75316420]
      %8806 = vst [vmem:[#allocation1] ss:$2 sm:$0xff] %v8717
      %8807 = vst [vmem:[%s8772] ss:$2 sm:$0xff] %v8718
      %8808 = vst [vmem:[%s8774] ss:$2 sm:$0xff] %v8719
      %v8809 = vld.sshfl [vmem:[#allocation1] sm:$0xff pattern:$0x75316420]
      %v8810 = vld.sshfl [vmem:[#allocation1 + $0x10] sm:$0xff pattern:$0x75316420]
      %8811 = vst [vmem:[%s8778] ss:$2 sm:$0xff] %v8720
      %8812 = vst [vmem:[%s8780] ss:$2 sm:$0xff] %v8721
      %8813 = vst [vmem:[%s8782] ss:$2 sm:$0xff] %v8722
      %v8814 = vld.sshfl [vmem:[#allocation1 + $0x20] sm:$0xff pattern:$0x75316420]
      %v8815 = vld.sshfl [vmem:[#allocation1 + $0x30] sm:$0xff pattern:$0x75316420]
      %8816 = vst [vmem:[#allocation1] ss:$2 sm:$0xff] %v8723
      %8817 = vst [vmem:[%s8772] ss:$2 sm:$0xff] %v8724
      %8818 = vst [vmem:[%s8774] ss:$2 sm:$0xff] %v8725
      %v8819 = vld.sshfl [vmem:[#allocation1] sm:$0xff pattern:$0x75316420]
      %v8820 = vld.sshfl [vmem:[#allocation1 + $0x10] sm:$0xff pattern:$0x75316420]
      %8821 = vst [vmem:[%s8778] ss:$2 sm:$0xff] %v8726
      %8822 = vst [vmem:[%s8780] ss:$2 sm:$0xff] %v8727
      %8823 = vst [vmem:[%s8782] ss:$2 sm:$0xff] %v8728
      %v8824 = vld.sshfl [vmem:[#allocation1 + $0x20] sm:$0xff pattern:$0x75316420]
      %v8825 = vld.sshfl [vmem:[#allocation1 + $0x30] sm:$0xff pattern:$0x75316420]
      %8826 = vst [vmem:[#allocation1] ss:$2 sm:$0xff] %v8729
      %8827 = vst [vmem:[%s8772] ss:$2 sm:$0xff] %v8730
      %8828 = vst [vmem:[%s8774] ss:$2 sm:$0xff] %v8731
      %v8829 = vld.sshfl [vmem:[#allocation1] sm:$0xff pattern:$0x75316420]
      %v8830 = vld.sshfl [vmem:[#allocation1 + $0x10] sm:$0xff pattern:$0x75316420]
      %8831 = vst [vmem:[%s8778] ss:$2 sm:$0xff] %v8732
      %8832 = vst [vmem:[%s8780] ss:$2 sm:$0xff] %v8733
      %8833 = vst [vmem:[%s8782] ss:$2 sm:$0xff] %v8734
      %v8834 = vld.sshfl [vmem:[#allocation1 + $0x20] sm:$0xff pattern:$0x75316420]
      %v8835 = vld.sshfl [vmem:[#allocation1 + $0x30] sm:$0xff pattern:$0x75316420]
      %8860 = vst.msk [vmem:[%s170] sm:$0xff] %vm6245, %v8776
      %vm8861 = vcmask 60416
      %8862 = vst.msk [vmem:[%s170 + $0x8] sm:$0xf] %vm8861, %v8777
      %8863 = vst.msk [vmem:[%s170 + $0x10] sm:$0xff] %vm6245, %v8784
      %8864 = vst.msk [vmem:[%s170 + $0x18] sm:$0xf] %vm8861, %v8785
      %8865 = vst.msk [vmem:[%s170 + $0x20] sm:$0xff] %vm6245, %v8789
      %8866 = vst.msk [vmem:[%s170 + $0x28] sm:$0xf] %vm8861, %v8790
      %8867 = vst.msk [vmem:[%s170 + $0x30] sm:$0xff] %vm6245, %v8794
      %8868 = vst.msk [vmem:[%s170 + $0x38] sm:$0xf] %vm8861, %v8795
      %8869 = vst.msk [vmem:[%s170 + $0x40] sm:$0xff] %vm6245, %v8799
      %8870 = vst.msk [vmem:[%s170 + $0x48] sm:$0xf] %vm8861, %v8800
      %8871 = vst.msk [vmem:[%s170 + $0x50] sm:$0xff] %vm6245, %v8804
      %8872 = vst.msk [vmem:[%s170 + $0x58] sm:$0xf] %vm8861, %v8805
      %8873 = vst.msk [vmem:[%s170 + $0x60] sm:$0xff] %vm6245, %v8809
      %8874 = vst.msk [vmem:[%s170 + $0x68] sm:$0xf] %vm8861, %v8810
      %8875 = vst.msk [vmem:[%s170 + $0x70] sm:$0xff] %vm6245, %v8814
      %8876 = vst.msk [vmem:[%s170 + $0x78] sm:$0xf] %vm8861, %v8815
      %8877 = vst.msk [vmem:[%s170 + $0x80] sm:$0xff] %vm6245, %v8819
      %8878 = vst.msk [vmem:[%s170 + $0x88] sm:$0xf] %vm8861, %v8820
      %8879 = vst.msk [vmem:[%s170 + $0x90] sm:$0xff] %vm6245, %v8824
      %8880 = vst.msk [vmem:[%s170 + $0x98] sm:$0xf] %vm8861, %v8825
      %8881 = vst.msk [vmem:[%s170 + $0xa0] sm:$0xff] %vm6245, %v8829
      %8882 = vst.msk [vmem:[%s170 + $0xa8] sm:$0xf] %vm8861, %v8830
      %8883 = vst.msk [vmem:[%s170 + $0xb0] sm:$0xff] %vm6245, %v8834
      %8884 = vst.msk [vmem:[%s170 + $0xb8] sm:$0xf] %vm8861, %v8835
      %p8885 = scmp.lt.s32.totalorder %s14, 1
      %s8886 = scalar_select %p8885, %s14, 1
      %s8887 = smul.addr %s8886, 24
      %s8888 = smul.addr %s8887, 8
      %s8889 = scalar_lea.vmem %s3, %s8888
      // Predicated region
      $region33: #{dblock_forward.1} parent=31 // pred_check
        %p8890 = pneg %p100
      $region34: #{dblock_forward.1} parent=31 // pred_check_branch
        %8892 = sbr.rel (%p8890) target = $region36
      $region35: #{dblock_forward.1} parent=31 // pred_region
        _
      $region36: #{dblock_forward.1} parent=31 // pred_fallthru
        _
    $region32: #{dblock_forward.1} parent=5 // pred_fallthru
      _
    %p8893 = scmp.le.s32.totalorder 2, %s9
    // Predicated region
    $region37: #{dblock_forward.1} parent=5 // pred_check
      %p8894 = pneg %p8893
    $region38: #{dblock_forward.1} parent=5 // pred_check_branch
      %8896 = sbr.rel (%p8894) target = $region40
    $region39: #{dblock_forward.1} parent=5 // pred_region
      %s8897 = ssub.s32 %s9, 2
      // Predicated region
      $region41: #{dblock_forward.1} parent=39 // pred_check
        %p8898 = pneg %p106
      $region42: #{dblock_forward.1} parent=39 // pred_check_branch
        %8900 = sbr.rel (%p8898) target = $region44
      $region43: #{dblock_forward.1} parent=39 // pred_region
        %p8901 = scmp.lt.s32.totalorder %s15, 1
        %s8902 = scalar_select %p8901, %s15, 1
        %s8903 = smul.addr %s8902, 24
        %s8904 = smul.addr %s8903, 8
        %s8905 = scalar_lea.vmem %s3, %s8904
      $region44: #{dblock_forward.1} parent=39 // pred_fallthru
        _
    $region40: #{dblock_forward.1} parent=5 // pred_fallthru
      _
  $region6: #{dblock_forward.1} parent=0 // loop_footer
    %s13 = sadd.s32 1, %s9
  $region7: #{dblock_forward.1} parent=0 // loop_footer_branch
    %8 = sbr.rel target = $region3
  $region8: #{dblock_forward.1} parent=0 // loop_exit
    _

</llo_original>
